<compile_context>
chip_gen: v7x
topology: tpu7x:2x2x1
jax: 0.10.0
libtpu: 0.0.40
codegen_flags: <defaults>
</compile_context>

<pallas_src>
import functools

import numpy as np
import jax
import jax.numpy as jnp
from jax.experimental import pallas as pl
from jax.experimental.pallas import tpu as pltpu

WINDOW = 13
N_TOKENS = WINDOW * WINDOW            # 169: hard-coded by the module's bias shapes
_CONV_PAD = WINDOW + 1                # 14 = max |token offset| of a 3x3 tap
_CONV_OFFSETS = tuple((a - 1) * WINDOW + (b - 1) for a in range(3) for b in range(3))


# --------------------------------------------------------------------------
# structural constants: border-validity masks for the depthwise 3x3 conv
# --------------------------------------------------------------------------
def _conv_masks():
    """mask[t, p, 0] = 1 iff conv tap t reads an in-bounds pixel for output token p."""
    m = np.zeros((9, N_TOKENS, 1), np.float32)
    for a in range(3):
        for b in range(3):
            t = a * 3 + b
            for i in range(WINDOW):
                for j in range(WINDOW):
                    if 0 <= i + a - 1 < WINDOW and 0 <= j + b - 1 < WINDOW:
                        m[t, i * WINDOW + j, 0] = 1.0
    return m


def _padded_bytes(shape, dtype):
    """Rough VMEM footprint of an array with (8,128)-style tile padding."""
    item = np.dtype(dtype).itemsize
    dims = [int(s) for s in shape]
    if len(dims) < 2:
        dims = [1] * (2 - len(dims)) + dims
    sub = 8 * max(1, 4 // item)
    rows = -(-dims[-2] // sub) * sub
    cols = -(-dims[-1] // 128) * 128
    lead = 1
    for s in dims[:-2]:
        lead *= s
    return lead * rows * cols * item


# --------------------------------------------------------------------------
# fused Pallas kernel: one grid step == block_b batch elements
# --------------------------------------------------------------------------
def _agent_attn_kernel(x_ref, xt_ref, wq_ref, wkt_ref, wqt_ref, wv_ref,
                       wvf_ref, wpf_ref, wph_ref, pb_ref, ab_ref, mw_ref,
                       bdwc_ref, bproj_ref, o_ref, vbuf_ref, *,
                       num_heads, scale, block_b):
    f32, bf16 = jnp.float32, jnp.bfloat16
    n = N_TOKENS

    wpf = wpf_ref[...]                                     # (C, C) bf16
    bdwc = bdwc_ref[...]                                   # (1, C) f32
    bproj = bproj_ref[...]                                 # (1, C) f32

    # Zero the conv scratch once; its 14-row halos stay zero, the middle is
    # overwritten with v for every batch element below.
    vbuf_ref[...] = jnp.zeros_like(vbuf_ref)

    for bi in range(block_b):
        x = x_ref[bi]                                      # (N, C) bf16
        xt = xt_ref[bi]                                    # (C, N) bf16

        # ---- depthwise 3x3 conv on full-channel v (no MXU work) --------------
        v_full = jnp.dot(x, wvf_ref[...], preferred_element_type=f32)   # (N, C)
        vbuf_ref[pl.ds(_CONV_PAD, n), :] = v_full
        dwc = jnp.zeros_like(v_full)
        for t, off in enumerate(_CONV_OFFSETS):
            shifted = vbuf_ref[pl.ds(_CONV_PAD + off, n), :]            # token shift
            dwc = dwc + mw_ref[t] * shifted                             # mask*w folded
        dwc = dwc + bdwc

        # conv contribution projected with a single full-K matmul; second
        # accumulator lets consecutive heads' MXU drains overlap (v5e/v6e MRF).
        acc0 = jnp.dot(dwc.astype(bf16), wpf, preferred_element_type=f32)
        acc1 = jnp.zeros_like(acc0)

        # ---- two-stage agent attention, heads indexed on leading axes --------
        for h in range(num_heads):
            qh = jnp.dot(x, wq_ref[h], preferred_element_type=f32)             # (N, d)
            qs = (qh * scale).astype(bf16)
            kt = jnp.dot(wkt_ref[h], xt, preferred_element_type=f32).astype(bf16)  # (d, N)
            qt = jnp.dot(wqt_ref[h], xt, preferred_element_type=f32).astype(bf16)  # (d, N)
            vh = jnp.dot(x, wv_ref[h], preferred_element_type=f32).astype(bf16)    # (N, d)

            # stage 1: agent tokens (== q; pooling is identity) aggregate k/v
            s1 = jnp.dot(qs, kt, preferred_element_type=f32) + pb_ref[h].astype(f32)
            e1 = jnp.exp(s1 - jnp.max(s1, axis=-1, keepdims=True))
            r1 = pl.reciprocal(jnp.sum(e1, axis=-1, keepdims=True), approx=True)
            agent_v = jnp.dot(e1.astype(bf16), vh, preferred_element_type=f32) * r1

            # stage 2: queries attend to the agent tokens
            s2 = jnp.dot(qs, qt, preferred_element_type=f32) + ab_ref[h].astype(f32)
            e2 = jnp.exp(s2 - jnp.max(s2, axis=-1, keepdims=True))
            r2 = pl.reciprocal(jnp.sum(e2, axis=-1, keepdims=True), approx=True)
            yh = jnp.dot(e2.astype(bf16), agent_v.astype(bf16),
                         preferred_element_type=f32) * r2                       # (N, d)

            contrib = jnp.dot(yh.astype(bf16), wph_ref[h], preferred_element_type=f32)
            if h % 2 == 0:
                acc0 = acc0 + contrib
            else:
                acc1 = acc1 + contrib

        o_ref[bi] = acc0 + acc1 + bproj


# --------------------------------------------------------------------------
# wrapper
# --------------------------------------------------------------------------
def agent_attention(x, p, *, num_heads, block_b=1):
    B, N, C = x.shape
    assert N == N_TOKENS, "module hard-codes n = 13*13 = 169 tokens"
    assert C % num_heads == 0
    assert B % block_b == 0
    H = num_heads
    d = C // H
    scale = d ** (-0.5)
    A = N_TOKENS
    f32, bf16 = jnp.float32, jnp.bfloat16

    # ---- parameter-only precompute (pool / bilinear interpolate are identities) ----
    pos_bias = (p["an_bias"].reshape(H, A, N)
                + (p["ah_bias"] + p["aw_bias"]).reshape(H, A, N)).astype(bf16)       # (H, A, N)
    agent_bias = (jnp.transpose(p["na_bias"].reshape(H, A, N), (0, 2, 1))
                  + (p["ha_bias"] + p["wa_bias"]).reshape(H, N, A)).astype(bf16)     # (H, N, A)

    # head-major weight layouts -> in-kernel head indexing is on the leading axis
    wq = p["wqkv3"][0].reshape(C, H, d)
    wk = p["wqkv3"][1].reshape(C, H, d)
    wv = p["wqkv3"][2].reshape(C, H, d)
    wq_hm = jnp.transpose(wq, (1, 0, 2)).astype(bf16)        # (H, C, d)
    wqt_hm = jnp.transpose(wq, (1, 2, 0)).astype(bf16)       # (H, d, C): agent^T directly
    wkt_hm = jnp.transpose(wk, (1, 2, 0)).astype(bf16)       # (H, d, C): k^T directly
    wv_hm = jnp.transpose(wv, (1, 0, 2)).astype(bf16)        # (H, C, d)
    wv_full = p["wqkv3"][2].astype(bf16)                     # (C, C) for the conv path
    wproj_full = p["proj_w"].astype(bf16)                    # (C, C)
    wproj_hm = p["proj_w"].reshape(H, d, C).astype(bf16)     # (H, d, C)

    # depthwise-conv tables: (border mask * tap weight) folded into one operand
    wd = jnp.transpose(p["dwc_w"][:, 0], (1, 2, 0)).reshape(9, C)                   # (9, C)
    mw = (jnp.asarray(_conv_masks()) * wd[:, None, :]).astype(f32)                  # (9, N, C)
    bdwc = p["dwc_b"].reshape(1, C).astype(f32)
    bproj = p["proj_b"].reshape(1, C).astype(f32)

    x_bf = x.astype(bf16)
    xt_bf = jnp.swapaxes(x, 1, 2).astype(bf16)               # (B, C, N): avoids in-kernel transposes

    const_ops = (wq_hm, wkt_hm, wqt_hm, wv_hm, wv_full, wproj_full, wproj_hm,
                 pos_bias, agent_bias, mw, bdwc, bproj)

    kern = functools.partial(_agent_attn_kernel,
                             num_heads=H, scale=scale, block_b=block_b)

    def full_spec(a):
        nd = a.ndim
        return pl.BlockSpec(a.shape, lambda b, _nd=nd: (0,) * _nd)

    # ---- VMEM budget derived from the padded working set (v7x-safe) ----
    io_bytes = (_padded_bytes((block_b, N, C), bf16)
                + _padded_bytes((block_b, C, N), bf16)
                + _padded_bytes((block_b, N, C), f32))
    const_bytes = sum(_padded_bytes(a.shape, a.dtype) for a in const_ops)
    scratch_bytes = _padded_bytes((N + 2 * _CONV_PAD, C), f32)
    temp_bytes = block_b * (6 * _padded_bytes((N, N), f32)
                            + 16 * _padded_bytes((N, 128), f32))
    vmem_limit = 2 * (io_bytes + const_bytes) + scratch_bytes + temp_bytes + (4 << 20)
    vmem_limit = int(min(60 << 20, max(16 << 20, vmem_limit)))

    param_bytes = sum(int(np.prod(a.shape)) * np.dtype(a.dtype).itemsize
                      for a in const_ops)
    cost = pl.CostEstimate(
        flops=int(B * (14 * N * C * C + 8 * N * N * C)),
        transcendentals=int(B * 2 * H * N * N),
        bytes_accessed=int(2 * B * N * C * 2 + B * N * C * 4 + param_bytes))

    return pl.pallas_call(
        kern,
        out_shape=jax.ShapeDtypeStruct((B, N, C), jnp.float32),
        grid=(B // block_b,),
        in_specs=[pl.BlockSpec((block_b, N, C), lambda b: (b, 0, 0)),
                  pl.BlockSpec((block_b, C, N), lambda b: (b, 0, 0))]
                 + [full_spec(a) for a in const_ops],
        out_specs=pl.BlockSpec((block_b, N, C), lambda b: (b, 0, 0)),
        scratch_shapes=[pltpu.VMEM((N_TOKENS + 2 * _CONV_PAD, C), jnp.float32)],
        compiler_params=pltpu.CompilerParams(
            dimension_semantics=("parallel",),
            vmem_limit_bytes=vmem_limit),
        cost_estimate=cost,
    )(x_bf, xt_bf, *const_ops)


# --------------------------------------------------------------------------
# deterministic synthetic parameters (mirror __init__ shapes)
# --------------------------------------------------------------------------
def init_params(key, dim, num_heads):
    A = N_TOKENS
    ks = jax.random.split(key, 11)
    return dict(
        wqkv3=0.1 * jax.random.normal(ks[0], (3, dim, dim), jnp.float32),
        an_bias=0.02 * jax.random.normal(ks[1], (num_heads, A, WINDOW, WINDOW), jnp.float32),
        na_bias=0.02 * jax.random.normal(ks[2], (num_heads, A, WINDOW, WINDOW), jnp.float32),
        ah_bias=0.02 * jax.random.normal(ks[3], (1, num_heads, A, WINDOW, 1), jnp.float32),
        aw_bias=0.02 * jax.random.normal(ks[4], (1, num_heads, A, 1, WINDOW), jnp.float32),
        ha_bias=0.02 * jax.random.normal(ks[5], (1, num_heads, WINDOW, 1, A), jnp.float32),
        wa_bias=0.02 * jax.random.normal(ks[6], (1, num_heads, 1, WINDOW, A), jnp.float32),
        dwc_w=0.2 * jax.random.normal(ks[7], (dim, 1, 3, 3), jnp.float32),
        dwc_b=0.1 * jax.random.normal(ks[8], (dim,), jnp.float32),
        proj_w=0.1 * jax.random.normal(ks[9], (dim, dim), jnp.float32),
        proj_b=0.1 * jax.random.normal(ks[10], (dim,), jnp.float32),
    )


# --------------------------------------------------------------------------
# pure-JAX reference (mirrors the PyTorch forward) for a sanity check
# --------------------------------------------------------------------------
def _reference(x, p, *, num_heads):
    B, N, C = x.shape
    H, d, A = num_heads, C // num_heads, N_TOKENS
    scale = d ** (-0.5)
    q = x @ p["wqkv3"][0]
    k = x @ p["wqkv3"][1]
    v = x @ p["wqkv3"][2]
    # AdaptiveAvgPool2d((13,13)) over a 13x13 grid is the identity -> agent = q
    agent = q.reshape(B, A, H, d).transpose(0, 2, 1, 3)
    qh = q.reshape(B, N, H, d).transpose(0, 2, 1, 3)
    kh = k.reshape(B, N, H, d).transpose(0, 2, 1, 3)
    vh = v.reshape(B, N, H, d).transpose(0, 2, 1, 3)
    pos_bias = (p["an_bias"].reshape(H, A, N)
                + (p["ah_bias"] + p["aw_bias"]).reshape(H, A, N))
    agent_bias = (jnp.transpose(p["na_bias"].reshape(H, A, N), (0, 2, 1))
                  + (p["ha_bias"] + p["wa_bias"]).reshape(H, N, A))
    agent_attn = jax.nn.softmax(
        jnp.einsum("bhad,bhnd->bhan", agent * scale, kh) + pos_bias[None], axis=-1)
    agent_v = jnp.einsum("bhan,bhnd->bhad", agent_attn, vh)
    q_attn = jax.nn.softmax(
        jnp.einsum("bhnd,bhad->bhna", qh * scale, agent) + agent_bias[None], axis=-1)
    y = jnp.einsum("bhna,bhad->bhnd", q_attn, agent_v)
    y = y.transpose(0, 2, 1, 3).reshape(B, N, C)
    # depthwise 3x3 conv on v (independently checks the halo-shift formulation)
    v_img = v.reshape(B, WINDOW, WINDOW, C)
    w_hwio = jnp.transpose(p["dwc_w"], (2, 3, 1, 0))                 # (3, 3, 1, C)
    dwc = jax.lax.conv_general_dilated(
        v_img, w_hwio, (1, 1), "SAME",
        dimension_numbers=("NHWC", "HWIO", "NHWC"),
        feature_group_count=C) + p["dwc_b"]
    y = y + dwc.reshape(B, N, C)
    return y @ p["proj_w"] + p["proj_b"]


# --------------------------------------------------------------------------
if __name__ == "__main__":
    B = 2
    dim = 16
    num_heads = 4                      # head_dim = 4
    N = N_TOKENS                       # 169 (hard-coded by the module)

    key = jax.random.PRNGKey(0)
    kx, kp = jax.random.split(key)
    x = jax.random.normal(kx, (B, N, dim), jnp.float32)
    params = init_params(kp, dim, num_heads)

    fwd = jax.jit(functools.partial(agent_attention, num_heads=num_heads))
    out = jax.block_until_ready(fwd(x, params))
    assert out.shape == (B, N, dim)

    ref = _reference(x, params, num_heads=num_heads)
    # bf16 MXU operands + approx reciprocal -> ~1e-3 abs error; check against 2e-2.
    if not jnp.allclose(out, ref, atol=2e-2, rtol=2e-2):
        raise AssertionError(
            f"mismatch vs reference, max abs diff = {jnp.max(jnp.abs(out - ref))}")

    print("KERNEL_OK")
</pallas_src>

<mosaic_0001>
module attributes {stable_mosaic.version = 11 : i64} {
  func.func @_agent_attn_kernel(%arg0: i32, %arg1: memref<1x169x16xbf16, #tpu.memory_space<vmem>>, %arg2: memref<1x16x169xbf16, #tpu.memory_space<vmem>>, %arg3: memref<4x16x4xbf16, #tpu.memory_space<vmem>>, %arg4: memref<4x4x16xbf16, #tpu.memory_space<vmem>>, %arg5: memref<4x4x16xbf16, #tpu.memory_space<vmem>>, %arg6: memref<4x16x4xbf16, #tpu.memory_space<vmem>>, %arg7: memref<16x16xbf16, #tpu.memory_space<vmem>>, %arg8: memref<16x16xbf16, #tpu.memory_space<vmem>>, %arg9: memref<4x4x16xbf16, #tpu.memory_space<vmem>>, %arg10: memref<4x169x169xbf16, #tpu.memory_space<vmem>>, %arg11: memref<4x169x169xbf16, #tpu.memory_space<vmem>>, %arg12: memref<9x169x16xf32, #tpu.memory_space<vmem>>, %arg13: memref<1x16xf32, #tpu.memory_space<vmem>>, %arg14: memref<1x16xf32, #tpu.memory_space<vmem>>, %arg15: memref<1x169x16xf32, #tpu.memory_space<vmem>>, %arg16: memref<197x16xf32, #tpu.memory_space<vmem>>) attributes {dimension_semantics = [#tpu.dimension_semantics<parallel>], iteration_bounds = array<i64: 2>, scalar_prefetch = 0 : i64, scratch_operands = 1 : i64, tpu.core_type = #tpu.core_type<tc>, window_params = [{transform_indices = @transform_0, window_bounds = array<i64: 1, 169, 16>}, {transform_indices = @transform_1, window_bounds = array<i64: 1, 16, 169>}, {pipeline_mode = #tpu.pipeline_mode<synchronous>, transform_indices = @transform_2, window_bounds = array<i64: 4, 16, 4>}, {pipeline_mode = #tpu.pipeline_mode<synchronous>, transform_indices = @transform_3, window_bounds = array<i64: 4, 4, 16>}, {pipeline_mode = #tpu.pipeline_mode<synchronous>, transform_indices = @transform_4, window_bounds = array<i64: 4, 4, 16>}, {pipeline_mode = #tpu.pipeline_mode<synchronous>, transform_indices = @transform_5, window_bounds = array<i64: 4, 16, 4>}, {pipeline_mode = #tpu.pipeline_mode<synchronous>, transform_indices = @transform_6, window_bounds = array<i64: 16, 16>}, {pipeline_mode = #tpu.pipeline_mode<synchronous>, transform_indices = @transform_7, window_bounds = array<i64: 16, 16>}, {pipeline_mode = #tpu.pipeline_mode<synchronous>, transform_indices = @transform_8, window_bounds = array<i64: 4, 4, 16>}, {pipeline_mode = #tpu.pipeline_mode<synchronous>, transform_indices = @transform_9, window_bounds = array<i64: 4, 169, 169>}, {pipeline_mode = #tpu.pipeline_mode<synchronous>, transform_indices = @transform_10, window_bounds = array<i64: 4, 169, 169>}, {pipeline_mode = #tpu.pipeline_mode<synchronous>, transform_indices = @transform_11, window_bounds = array<i64: 9, 169, 16>}, {pipeline_mode = #tpu.pipeline_mode<synchronous>, transform_indices = @transform_12, window_bounds = array<i64: 1, 16>}, {pipeline_mode = #tpu.pipeline_mode<synchronous>, transform_indices = @transform_13, window_bounds = array<i64: 1, 16>}, {transform_indices = @transform_14, window_bounds = array<i64: 1, 169, 16>}]} {
    %c0 = arith.constant 0 : index
    %c0_0 = arith.constant 0 : index
    %0 = vector.load %arg8[%c0, %c0_0] : memref<16x16xbf16, #tpu.memory_space<vmem>>, vector<16x16xbf16>
    %c0_1 = arith.constant 0 : index
    %c0_2 = arith.constant 0 : index
    %1 = vector.load %arg13[%c0_1, %c0_2] : memref<1x16xf32, #tpu.memory_space<vmem>>, vector<1x16xf32>
    %c0_3 = arith.constant 0 : index
    %c0_4 = arith.constant 0 : index
    %2 = vector.load %arg14[%c0_3, %c0_4] : memref<1x16xf32, #tpu.memory_space<vmem>>, vector<1x16xf32>
    %cst = arith.constant 0.000000e+00 : f32
    %3 = vector.broadcast %cst : f32 to vector<197x16xf32>
    %c0_5 = arith.constant 0 : index
    %c0_6 = arith.constant 0 : index
    %4 = vector.load %arg16[%c0_5, %c0_6] : memref<197x16xf32, #tpu.memory_space<vmem>>, vector<197x16xf32>
    tpu.vector_store %arg16[%c0_5, %c0_6], %3 {strides = array<i32>} : memref<197x16xf32, #tpu.memory_space<vmem>>, vector<197x16xf32>,
    %c0_7 = arith.constant 0 : index
    %c0_8 = arith.constant 0 : index
    %c0_9 = arith.constant 0 : index
    %5 = vector.load %arg1[%c0_7, %c0_8, %c0_9] : memref<1x169x16xbf16, #tpu.memory_space<vmem>>, vector<1x169x16xbf16>
    %6 = vector.shape_cast %5 : vector<1x169x16xbf16> to vector<169x16xbf16>
    %c0_10 = arith.constant 0 : index
    %c0_11 = arith.constant 0 : index
    %c0_12 = arith.constant 0 : index
    %7 = vector.load %arg2[%c0_10, %c0_11, %c0_12] : memref<1x16x169xbf16, #tpu.memory_space<vmem>>, vector<1x16x169xbf16>
    %8 = vector.shape_cast %7 : vector<1x16x169xbf16> to vector<16x169xbf16>
    %c0_13 = arith.constant 0 : index
    %c0_14 = arith.constant 0 : index
    %9 = vector.load %arg7[%c0_13, %c0_14] : memref<16x16xbf16, #tpu.memory_space<vmem>>, vector<16x16xbf16>
    %cst_15 = arith.constant dense<0.000000e+00> : vector<169x16xf32>
    %10 = tpu.matmul %6, %9, %cst_15 {dimension_numbers = #tpu.dot_dimension_numbers<[1], [0], [0], [1], [0, 0, 1, 1], [], []>} : vector<169x16xbf16>, vector<16x16xbf16>, vector<169x16xf32> -> vector<169x16xf32>
    %c14 = arith.constant 14 : index
    %c0_16 = arith.constant 0 : index
    %11 = vector.load %arg16[%c14, %c0_16] : memref<197x16xf32, #tpu.memory_space<vmem>>, vector<169x16xf32>
    tpu.vector_store %arg16[%c14, %c0_16], %10 {strides = array<i32>} : memref<197x16xf32, #tpu.memory_space<vmem>>, vector<169x16xf32>,
    %cst_17 = arith.constant 0.000000e+00 : f32
    %12 = vector.broadcast %cst_17 : f32 to vector<169x16xf32>
    %c0_18 = arith.constant 0 : index
    %c0_19 = arith.constant 0 : index
    %13 = vector.load %arg16[%c0_18, %c0_19] : memref<197x16xf32, #tpu.memory_space<vmem>>, vector<169x16xf32>
    %c0_20 = arith.constant 0 : index
    %c0_21 = arith.constant 0 : index
    %c0_22 = arith.constant 0 : index
    %14 = vector.load %arg12[%c0_20, %c0_21, %c0_22] : memref<9x169x16xf32, #tpu.memory_space<vmem>>, vector<1x169x16xf32>
    %15 = vector.shape_cast %14 : vector<1x169x16xf32> to vector<169x16xf32>
    %16 = arith.mulf %15, %13 : vector<169x16xf32>
    %17 = arith.addf %12, %16 : vector<169x16xf32>
    %c1 = arith.constant 1 : index
    %c0_23 = arith.constant 0 : index
    %18 = vector.load %arg16[%c1, %c0_23] : memref<197x16xf32, #tpu.memory_space<vmem>>, vector<169x16xf32>
    %c1_24 = arith.constant 1 : index
    %c0_25 = arith.constant 0 : index
    %c0_26 = arith.constant 0 : index
    %19 = vector.load %arg12[%c1_24, %c0_25, %c0_26] : memref<9x169x16xf32, #tpu.memory_space<vmem>>, vector<1x169x16xf32>
    %20 = vector.shape_cast %19 : vector<1x169x16xf32> to vector<169x16xf32>
    %21 = arith.mulf %20, %18 : vector<169x16xf32>
    %22 = arith.addf %17, %21 : vector<169x16xf32>
    %c2 = arith.constant 2 : index
    %c0_27 = arith.constant 0 : index
    %23 = vector.load %arg16[%c2, %c0_27] : memref<197x16xf32, #tpu.memory_space<vmem>>, vector<169x16xf32>
    %c2_28 = arith.constant 2 : index
    %c0_29 = arith.constant 0 : index
    %c0_30 = arith.constant 0 : index
    %24 = vector.load %arg12[%c2_28, %c0_29, %c0_30] : memref<9x169x16xf32, #tpu.memory_space<vmem>>, vector<1x169x16xf32>
    %25 = vector.shape_cast %24 : vector<1x169x16xf32> to vector<169x16xf32>
    %26 = arith.mulf %25, %23 : vector<169x16xf32>
    %27 = arith.addf %22, %26 : vector<169x16xf32>
    %c13 = arith.constant 13 : index
    %c0_31 = arith.constant 0 : index
    %28 = vector.load %arg16[%c13, %c0_31] : memref<197x16xf32, #tpu.memory_space<vmem>>, vector<169x16xf32>
    %c3 = arith.constant 3 : index
    %c0_32 = arith.constant 0 : index
    %c0_33 = arith.constant 0 : index
    %29 = vector.load %arg12[%c3, %c0_32, %c0_33] : memref<9x169x16xf32, #tpu.memory_space<vmem>>, vector<1x169x16xf32>
    %30 = vector.shape_cast %29 : vector<1x169x16xf32> to vector<169x16xf32>
    %31 = arith.mulf %30, %28 : vector<169x16xf32>
    %32 = arith.addf %27, %31 : vector<169x16xf32>
    %c14_34 = arith.constant 14 : index
    %c0_35 = arith.constant 0 : index
    %33 = vector.load %arg16[%c14_34, %c0_35] : memref<197x16xf32, #tpu.memory_space<vmem>>, vector<169x16xf32>
    %c4 = arith.constant 4 : index
    %c0_36 = arith.constant 0 : index
    %c0_37 = arith.constant 0 : index
    %34 = vector.load %arg12[%c4, %c0_36, %c0_37] : memref<9x169x16xf32, #tpu.memory_space<vmem>>, vector<1x169x16xf32>
    %35 = vector.shape_cast %34 : vector<1x169x16xf32> to vector<169x16xf32>
    %36 = arith.mulf %35, %33 : vector<169x16xf32>
    %37 = arith.addf %32, %36 : vector<169x16xf32>
    %c15 = arith.constant 15 : index
    %c0_38 = arith.constant 0 : index
    %38 = vector.load %arg16[%c15, %c0_38] : memref<197x16xf32, #tpu.memory_space<vmem>>, vector<169x16xf32>
    %c5 = arith.constant 5 : index
    %c0_39 = arith.constant 0 : index
    %c0_40 = arith.constant 0 : index
    %39 = vector.load %arg12[%c5, %c0_39, %c0_40] : memref<9x169x16xf32, #tpu.memory_space<vmem>>, vector<1x169x16xf32>
    %40 = vector.shape_cast %39 : vector<1x169x16xf32> to vector<169x16xf32>
    %41 = arith.mulf %40, %38 : vector<169x16xf32>
    %42 = arith.addf %37, %41 : vector<169x16xf32>
    %c26 = arith.constant 26 : index
    %c0_41 = arith.constant 0 : index
    %43 = vector.load %arg16[%c26, %c0_41] : memref<197x16xf32, #tpu.memory_space<vmem>>, vector<169x16xf32>
    %c6 = arith.constant 6 : index
    %c0_42 = arith.constant 0 : index
    %c0_43 = arith.constant 0 : index
    %44 = vector.load %arg12[%c6, %c0_42, %c0_43] : memref<9x169x16xf32, #tpu.memory_space<vmem>>, vector<1x169x16xf32>
    %45 = vector.shape_cast %44 : vector<1x169x16xf32> to vector<169x16xf32>
    %46 = arith.mulf %45, %43 : vector<169x16xf32>
    %47 = arith.addf %42, %46 : vector<169x16xf32>
    %c27 = arith.constant 27 : index
    %c0_44 = arith.constant 0 : index
    %48 = vector.load %arg16[%c27, %c0_44] : memref<197x16xf32, #tpu.memory_space<vmem>>, vector<169x16xf32>
    %c7 = arith.constant 7 : index
    %c0_45 = arith.constant 0 : index
    %c0_46 = arith.constant 0 : index
    %49 = vector.load %arg12[%c7, %c0_45, %c0_46] : memref<9x169x16xf32, #tpu.memory_space<vmem>>, vector<1x169x16xf32>
    %50 = vector.shape_cast %49 : vector<1x169x16xf32> to vector<169x16xf32>
    %51 = arith.mulf %50, %48 : vector<169x16xf32>
    %52 = arith.addf %47, %51 : vector<169x16xf32>
    %c28 = arith.constant 28 : index
    %c0_47 = arith.constant 0 : index
    %53 = vector.load %arg16[%c28, %c0_47] : memref<197x16xf32, #tpu.memory_space<vmem>>, vector<169x16xf32>
    %c8 = arith.constant 8 : index
    %c0_48 = arith.constant 0 : index
    %c0_49 = arith.constant 0 : index
    %54 = vector.load %arg12[%c8, %c0_48, %c0_49] : memref<9x169x16xf32, #tpu.memory_space<vmem>>, vector<1x169x16xf32>
    %55 = vector.shape_cast %54 : vector<1x169x16xf32> to vector<169x16xf32>
    %56 = arith.mulf %55, %53 : vector<169x16xf32>
    %57 = arith.addf %52, %56 : vector<169x16xf32>
    %58 = vector.broadcast %1 : vector<1x16xf32> to vector<169x16xf32>
    %59 = arith.addf %57, %58 : vector<169x16xf32>
    %60 = arith.truncf %59 : vector<169x16xf32> to vector<169x16xbf16>
    %cst_50 = arith.constant dense<0.000000e+00> : vector<169x16xf32>
    %61 = tpu.matmul %60, %0, %cst_50 {dimension_numbers = #tpu.dot_dimension_numbers<[1], [0], [0], [1], [0, 0, 1, 1], [], []>} : vector<169x16xbf16>, vector<16x16xbf16>, vector<169x16xf32> -> vector<169x16xf32>
    %cst_51 = arith.constant 0.000000e+00 : f32
    %62 = vector.broadcast %cst_51 : f32 to vector<169x16xf32>
    %c0_52 = arith.constant 0 : index
    %c0_53 = arith.constant 0 : index
    %c0_54 = arith.constant 0 : index
    %63 = vector.load %arg3[%c0_52, %c0_53, %c0_54] : memref<4x16x4xbf16, #tpu.memory_space<vmem>>, vector<1x16x4xbf16>
    %64 = vector.shape_cast %63 : vector<1x16x4xbf16> to vector<16x4xbf16>
    %cst_55 = arith.constant dense<0.000000e+00> : vector<169x4xf32>
    %65 = tpu.matmul %6, %64, %cst_55 {dimension_numbers = #tpu.dot_dimension_numbers<[1], [0], [0], [1], [0, 0, 1, 1], [], []>} : vector<169x16xbf16>, vector<16x4xbf16>, vector<169x4xf32> -> vector<169x4xf32>
    %cst_56 = arith.constant 5.000000e-01 : f32
    %66 = vector.broadcast %cst_56 : f32 to vector<169x4xf32>
    %67 = arith.mulf %65, %66 : vector<169x4xf32>
    %68 = arith.truncf %67 : vector<169x4xf32> to vector<169x4xbf16>
    %c0_57 = arith.constant 0 : index
    %c0_58 = arith.constant 0 : index
    %c0_59 = arith.constant 0 : index
    %69 = vector.load %arg4[%c0_57, %c0_58, %c0_59] : memref<4x4x16xbf16, #tpu.memory_space<vmem>>, vector<1x4x16xbf16>
    %70 = vector.shape_cast %69 : vector<1x4x16xbf16> to vector<4x16xbf16>
    %cst_60 = arith.constant dense<0.000000e+00> : vector<4x169xf32>
    %71 = tpu.matmul %70, %8, %cst_60 {dimension_numbers = #tpu.dot_dimension_numbers<[1], [0], [0], [1], [0, 0, 1, 1], [], []>} : vector<4x16xbf16>, vector<16x169xbf16>, vector<4x169xf32> -> vector<4x169xf32>
    %72 = arith.truncf %71 : vector<4x169xf32> to vector<4x169xbf16>
    %c0_61 = arith.constant 0 : index
    %c0_62 = arith.constant 0 : index
    %c0_63 = arith.constant 0 : index
    %73 = vector.load %arg5[%c0_61, %c0_62, %c0_63] : memref<4x4x16xbf16, #tpu.memory_space<vmem>>, vector<1x4x16xbf16>
    %74 = vector.shape_cast %73 : vector<1x4x16xbf16> to vector<4x16xbf16>
    %cst_64 = arith.constant dense<0.000000e+00> : vector<4x169xf32>
    %75 = tpu.matmul %74, %8, %cst_64 {dimension_numbers = #tpu.dot_dimension_numbers<[1], [0], [0], [1], [0, 0, 1, 1], [], []>} : vector<4x16xbf16>, vector<16x169xbf16>, vector<4x169xf32> -> vector<4x169xf32>
    %76 = arith.truncf %75 : vector<4x169xf32> to vector<4x169xbf16>
    %c0_65 = arith.constant 0 : index
    %c0_66 = arith.constant 0 : index
    %c0_67 = arith.constant 0 : index
    %77 = vector.load %arg6[%c0_65, %c0_66, %c0_67] : memref<4x16x4xbf16, #tpu.memory_space<vmem>>, vector<1x16x4xbf16>
    %78 = vector.shape_cast %77 : vector<1x16x4xbf16> to vector<16x4xbf16>
    %cst_68 = arith.constant dense<0.000000e+00> : vector<169x4xf32>
    %79 = tpu.matmul %6, %78, %cst_68 {dimension_numbers = #tpu.dot_dimension_numbers<[1], [0], [0], [1], [0, 0, 1, 1], [], []>} : vector<169x16xbf16>, vector<16x4xbf16>, vector<169x4xf32> -> vector<169x4xf32>
    %80 = arith.truncf %79 : vector<169x4xf32> to vector<169x4xbf16>
    %cst_69 = arith.constant dense<0.000000e+00> : vector<169x169xf32>
    %81 = tpu.matmul %68, %72, %cst_69 {dimension_numbers = #tpu.dot_dimension_numbers<[1], [0], [0], [1], [0, 0, 1, 1], [], []>} : vector<169x4xbf16>, vector<4x169xbf16>, vector<169x169xf32> -> vector<169x169xf32>
    %c0_70 = arith.constant 0 : index
    %c0_71 = arith.constant 0 : index
    %c0_72 = arith.constant 0 : index
    %82 = vector.load %arg10[%c0_70, %c0_71, %c0_72] : memref<4x169x169xbf16, #tpu.memory_space<vmem>>, vector<1x169x169xbf16>
    %83 = vector.shape_cast %82 : vector<1x169x169xbf16> to vector<169x169xbf16>
    %84 = arith.extf %83 : vector<169x169xbf16> to vector<169x169xf32>
    %85 = arith.addf %81, %84 : vector<169x169xf32>
    %cst_73 = arith.constant dense<0xFF800000> : vector<169xf32>
    %86 = vector.multi_reduction <maximumf>, %85, %cst_73 [1] : vector<169x169xf32> to vector<169xf32>
    %87 = vector.shape_cast %86 : vector<169xf32> to vector<169x1xf32>
    %88 = vector.broadcast %87 : vector<169x1xf32> to vector<169x169xf32>
    %89 = arith.subf %85, %88 : vector<169x169xf32>
    %90 = math.exp %89 : vector<169x169xf32>
    %cst_74 = arith.constant dense<0.000000e+00> : vector<169xf32>
    %91 = vector.multi_reduction <add>, %90, %cst_74 [1] : vector<169x169xf32> to vector<169xf32>
    %92 = vector.shape_cast %91 : vector<169xf32> to vector<169x1xf32>
    %93 = tpu.reciprocal %92 {approx = true} : vector<169x1xf32> -> vector<169x1xf32>
    %94 = arith.truncf %90 : vector<169x169xf32> to vector<169x169xbf16>
    %cst_75 = arith.constant dense<0.000000e+00> : vector<169x4xf32>
    %95 = tpu.matmul %94, %80, %cst_75 {dimension_numbers = #tpu.dot_dimension_numbers<[1], [0], [0], [1], [0, 0, 1, 1], [], []>} : vector<169x169xbf16>, vector<169x4xbf16>, vector<169x4xf32> -> vector<169x4xf32>
    %96 = vector.broadcast %93 : vector<169x1xf32> to vector<169x4xf32>
    %97 = arith.mulf %95, %96 : vector<169x4xf32>
    %cst_76 = arith.constant dense<0.000000e+00> : vector<169x169xf32>
    %98 = tpu.matmul %68, %76, %cst_76 {dimension_numbers = #tpu.dot_dimension_numbers<[1], [0], [0], [1], [0, 0, 1, 1], [], []>} : vector<169x4xbf16>, vector<4x169xbf16>, vector<169x169xf32> -> vector<169x169xf32>
    %c0_77 = arith.constant 0 : index
    %c0_78 = arith.constant 0 : index
    %c0_79 = arith.constant 0 : index
    %99 = vector.load %arg11[%c0_77, %c0_78, %c0_79] : memref<4x169x169xbf16, #tpu.memory_space<vmem>>, vector<1x169x169xbf16>
    %100 = vector.shape_cast %99 : vector<1x169x169xbf16> to vector<169x169xbf16>
    %101 = arith.extf %100 : vector<169x169xbf16> to vector<169x169xf32>
    %102 = arith.addf %98, %101 : vector<169x169xf32>
    %cst_80 = arith.constant dense<0xFF800000> : vector<169xf32>
    %103 = vector.multi_reduction <maximumf>, %102, %cst_80 [1] : vector<169x169xf32> to vector<169xf32>
    %104 = vector.shape_cast %103 : vector<169xf32> to vector<169x1xf32>
    %105 = vector.broadcast %104 : vector<169x1xf32> to vector<169x169xf32>
    %106 = arith.subf %102, %105 : vector<169x169xf32>
    %107 = math.exp %106 : vector<169x169xf32>
    %cst_81 = arith.constant dense<0.000000e+00> : vector<169xf32>
    %108 = vector.multi_reduction <add>, %107, %cst_81 [1] : vector<169x169xf32> to vector<169xf32>
    %109 = vector.shape_cast %108 : vector<169xf32> to vector<169x1xf32>
    %110 = tpu.reciprocal %109 {approx = true} : vector<169x1xf32> -> vector<169x1xf32>
    %111 = arith.truncf %107 : vector<169x169xf32> to vector<169x169xbf16>
    %112 = arith.truncf %97 : vector<169x4xf32> to vector<169x4xbf16>
    %cst_82 = arith.constant dense<0.000000e+00> : vector<169x4xf32>
    %113 = tpu.matmul %111, %112, %cst_82 {dimension_numbers = #tpu.dot_dimension_numbers<[1], [0], [0], [1], [0, 0, 1, 1], [], []>} : vector<169x169xbf16>, vector<169x4xbf16>, vector<169x4xf32> -> vector<169x4xf32>
    %114 = vector.broadcast %110 : vector<169x1xf32> to vector<169x4xf32>
    %115 = arith.mulf %113, %114 : vector<169x4xf32>
    %116 = arith.truncf %115 : vector<169x4xf32> to vector<169x4xbf16>
    %c0_83 = arith.constant 0 : index
    %c0_84 = arith.constant 0 : index
    %c0_85 = arith.constant 0 : index
    %117 = vector.load %arg9[%c0_83, %c0_84, %c0_85] : memref<4x4x16xbf16, #tpu.memory_space<vmem>>, vector<1x4x16xbf16>
    %118 = vector.shape_cast %117 : vector<1x4x16xbf16> to vector<4x16xbf16>
    %cst_86 = arith.constant dense<0.000000e+00> : vector<169x16xf32>
    %119 = tpu.matmul %116, %118, %cst_86 {dimension_numbers = #tpu.dot_dimension_numbers<[1], [0], [0], [1], [0, 0, 1, 1], [], []>} : vector<169x4xbf16>, vector<4x16xbf16>, vector<169x16xf32> -> vector<169x16xf32>
    %120 = arith.addf %61, %119 : vector<169x16xf32>
    %c1_87 = arith.constant 1 : index
    %c0_88 = arith.constant 0 : index
    %c0_89 = arith.constant 0 : index
    %121 = vector.load %arg3[%c1_87, %c0_88, %c0_89] : memref<4x16x4xbf16, #tpu.memory_space<vmem>>, vector<1x16x4xbf16>
    %122 = vector.shape_cast %121 : vector<1x16x4xbf16> to vector<16x4xbf16>
    %cst_90 = arith.constant dense<0.000000e+00> : vector<169x4xf32>
    %123 = tpu.matmul %6, %122, %cst_90 {dimension_numbers = #tpu.dot_dimension_numbers<[1], [0], [0], [1], [0, 0, 1, 1], [], []>} : vector<169x16xbf16>, vector<16x4xbf16>, vector<169x4xf32> -> vector<169x4xf32>
    %cst_91 = arith.constant 5.000000e-01 : f32
    %124 = vector.broadcast %cst_91 : f32 to vector<169x4xf32>
    %125 = arith.mulf %123, %124 : vector<169x4xf32>
    %126 = arith.truncf %125 : vector<169x4xf32> to vector<169x4xbf16>
    %c1_92 = arith.constant 1 : index
    %c0_93 = arith.constant 0 : index
    %c0_94 = arith.constant 0 : index
    %127 = vector.load %arg4[%c1_92, %c0_93, %c0_94] : memref<4x4x16xbf16, #tpu.memory_space<vmem>>, vector<1x4x16xbf16>
    %128 = vector.shape_cast %127 : vector<1x4x16xbf16> to vector<4x16xbf16>
    %cst_95 = arith.constant dense<0.000000e+00> : vector<4x169xf32>
    %129 = tpu.matmul %128, %8, %cst_95 {dimension_numbers = #tpu.dot_dimension_numbers<[1], [0], [0], [1], [0, 0, 1, 1], [], []>} : vector<4x16xbf16>, vector<16x169xbf16>, vector<4x169xf32> -> vector<4x169xf32>
    %130 = arith.truncf %129 : vector<4x169xf32> to vector<4x169xbf16>
    %c1_96 = arith.constant 1 : index
    %c0_97 = arith.constant 0 : index
    %c0_98 = arith.constant 0 : index
    %131 = vector.load %arg5[%c1_96, %c0_97, %c0_98] : memref<4x4x16xbf16, #tpu.memory_space<vmem>>, vector<1x4x16xbf16>
    %132 = vector.shape_cast %131 : vector<1x4x16xbf16> to vector<4x16xbf16>
    %cst_99 = arith.constant dense<0.000000e+00> : vector<4x169xf32>
    %133 = tpu.matmul %132, %8, %cst_99 {dimension_numbers = #tpu.dot_dimension_numbers<[1], [0], [0], [1], [0, 0, 1, 1], [], []>} : vector<4x16xbf16>, vector<16x169xbf16>, vector<4x169xf32> -> vector<4x169xf32>
    %134 = arith.truncf %133 : vector<4x169xf32> to vector<4x169xbf16>
    %c1_100 = arith.constant 1 : index
    %c0_101 = arith.constant 0 : index
    %c0_102 = arith.constant 0 : index
    %135 = vector.load %arg6[%c1_100, %c0_101, %c0_102] : memref<4x16x4xbf16, #tpu.memory_space<vmem>>, vector<1x16x4xbf16>
    %136 = vector.shape_cast %135 : vector<1x16x4xbf16> to vector<16x4xbf16>
    %cst_103 = arith.constant dense<0.000000e+00> : vector<169x4xf32>
    %137 = tpu.matmul %6, %136, %cst_103 {dimension_numbers = #tpu.dot_dimension_numbers<[1], [0], [0], [1], [0, 0, 1, 1], [], []>} : vector<169x16xbf16>, vector<16x4xbf16>, vector<169x4xf32> -> vector<169x4xf32>
    %138 = arith.truncf %137 : vector<169x4xf32> to vector<169x4xbf16>
    %cst_104 = arith.constant dense<0.000000e+00> : vector<169x169xf32>
    %139 = tpu.matmul %126, %130, %cst_104 {dimension_numbers = #tpu.dot_dimension_numbers<[1], [0], [0], [1], [0, 0, 1, 1], [], []>} : vector<169x4xbf16>, vector<4x169xbf16>, vector<169x169xf32> -> vector<169x169xf32>
    %c1_105 = arith.constant 1 : index
    %c0_106 = arith.constant 0 : index
    %c0_107 = arith.constant 0 : index
    %140 = vector.load %arg10[%c1_105, %c0_106, %c0_107] : memref<4x169x169xbf16, #tpu.memory_space<vmem>>, vector<1x169x169xbf16>
    %141 = vector.shape_cast %140 : vector<1x169x169xbf16> to vector<169x169xbf16>
    %142 = arith.extf %141 : vector<169x169xbf16> to vector<169x169xf32>
    %143 = arith.addf %139, %142 : vector<169x169xf32>
    %cst_108 = arith.constant dense<0xFF800000> : vector<169xf32>
    %144 = vector.multi_reduction <maximumf>, %143, %cst_108 [1] : vector<169x169xf32> to vector<169xf32>
    %145 = vector.shape_cast %144 : vector<169xf32> to vector<169x1xf32>
    %146 = vector.broadcast %145 : vector<169x1xf32> to vector<169x169xf32>
    %147 = arith.subf %143, %146 : vector<169x169xf32>
    %148 = math.exp %147 : vector<169x169xf32>
    %cst_109 = arith.constant dense<0.000000e+00> : vector<169xf32>
    %149 = vector.multi_reduction <add>, %148, %cst_109 [1] : vector<169x169xf32> to vector<169xf32>
    %150 = vector.shape_cast %149 : vector<169xf32> to vector<169x1xf32>
    %151 = tpu.reciprocal %150 {approx = true} : vector<169x1xf32> -> vector<169x1xf32>
    %152 = arith.truncf %148 : vector<169x169xf32> to vector<169x169xbf16>
    %cst_110 = arith.constant dense<0.000000e+00> : vector<169x4xf32>
    %153 = tpu.matmul %152, %138, %cst_110 {dimension_numbers = #tpu.dot_dimension_numbers<[1], [0], [0], [1], [0, 0, 1, 1], [], []>} : vector<169x169xbf16>, vector<169x4xbf16>, vector<169x4xf32> -> vector<169x4xf32>
    %154 = vector.broadcast %151 : vector<169x1xf32> to vector<169x4xf32>
    %155 = arith.mulf %153, %154 : vector<169x4xf32>
    %cst_111 = arith.constant dense<0.000000e+00> : vector<169x169xf32>
    %156 = tpu.matmul %126, %134, %cst_111 {dimension_numbers = #tpu.dot_dimension_numbers<[1], [0], [0], [1], [0, 0, 1, 1], [], []>} : vector<169x4xbf16>, vector<4x169xbf16>, vector<169x169xf32> -> vector<169x169xf32>
    %c1_112 = arith.constant 1 : index
    %c0_113 = arith.constant 0 : index
    %c0_114 = arith.constant 0 : index
    %157 = vector.load %arg11[%c1_112, %c0_113, %c0_114] : memref<4x169x169xbf16, #tpu.memory_space<vmem>>, vector<1x169x169xbf16>
    %158 = vector.shape_cast %157 : vector<1x169x169xbf16> to vector<169x169xbf16>
    %159 = arith.extf %158 : vector<169x169xbf16> to vector<169x169xf32>
    %160 = arith.addf %156, %159 : vector<169x169xf32>
    %cst_115 = arith.constant dense<0xFF800000> : vector<169xf32>
    %161 = vector.multi_reduction <maximumf>, %160, %cst_115 [1] : vector<169x169xf32> to vector<169xf32>
    %162 = vector.shape_cast %161 : vector<169xf32> to vector<169x1xf32>
    %163 = vector.broadcast %162 : vector<169x1xf32> to vector<169x169xf32>
    %164 = arith.subf %160, %163 : vector<169x169xf32>
    %165 = math.exp %164 : vector<169x169xf32>
    %cst_116 = arith.constant dense<0.000000e+00> : vector<169xf32>
    %166 = vector.multi_reduction <add>, %165, %cst_116 [1] : vector<169x169xf32> to vector<169xf32>
    %167 = vector.shape_cast %166 : vector<169xf32> to vector<169x1xf32>
    %168 = tpu.reciprocal %167 {approx = true} : vector<169x1xf32> -> vector<169x1xf32>
    %169 = arith.truncf %165 : vector<169x169xf32> to vector<169x169xbf16>
    %170 = arith.truncf %155 : vector<169x4xf32> to vector<169x4xbf16>
    %cst_117 = arith.constant dense<0.000000e+00> : vector<169x4xf32>
    %171 = tpu.matmul %169, %170, %cst_117 {dimension_numbers = #tpu.dot_dimension_numbers<[1], [0], [0], [1], [0, 0, 1, 1], [], []>} : vector<169x169xbf16>, vector<169x4xbf16>, vector<169x4xf32> -> vector<169x4xf32>
    %172 = vector.broadcast %168 : vector<169x1xf32> to vector<169x4xf32>
    %173 = arith.mulf %171, %172 : vector<169x4xf32>
    %174 = arith.truncf %173 : vector<169x4xf32> to vector<169x4xbf16>
    %c1_118 = arith.constant 1 : index
    %c0_119 = arith.constant 0 : index
    %c0_120 = arith.constant 0 : index
    %175 = vector.load %arg9[%c1_118, %c0_119, %c0_120] : memref<4x4x16xbf16, #tpu.memory_space<vmem>>, vector<1x4x16xbf16>
    %176 = vector.shape_cast %175 : vector<1x4x16xbf16> to vector<4x16xbf16>
    %cst_121 = arith.constant dense<0.000000e+00> : vector<169x16xf32>
    %177 = tpu.matmul %174, %176, %cst_121 {dimension_numbers = #tpu.dot_dimension_numbers<[1], [0], [0], [1], [0, 0, 1, 1], [], []>} : vector<169x4xbf16>, vector<4x16xbf16>, vector<169x16xf32> -> vector<169x16xf32>
    %178 = arith.addf %62, %177 : vector<169x16xf32>
    %c2_122 = arith.constant 2 : index
    %c0_123 = arith.constant 0 : index
    %c0_124 = arith.constant 0 : index
    %179 = vector.load %arg3[%c2_122, %c0_123, %c0_124] : memref<4x16x4xbf16, #tpu.memory_space<vmem>>, vector<1x16x4xbf16>
    %180 = vector.shape_cast %179 : vector<1x16x4xbf16> to vector<16x4xbf16>
    %cst_125 = arith.constant dense<0.000000e+00> : vector<169x4xf32>
    %181 = tpu.matmul %6, %180, %cst_125 {dimension_numbers = #tpu.dot_dimension_numbers<[1], [0], [0], [1], [0, 0, 1, 1], [], []>} : vector<169x16xbf16>, vector<16x4xbf16>, vector<169x4xf32> -> vector<169x4xf32>
    %cst_126 = arith.constant 5.000000e-01 : f32
    %182 = vector.broadcast %cst_126 : f32 to vector<169x4xf32>
    %183 = arith.mulf %181, %182 : vector<169x4xf32>
    %184 = arith.truncf %183 : vector<169x4xf32> to vector<169x4xbf16>
    %c2_127 = arith.constant 2 : index
    %c0_128 = arith.constant 0 : index
    %c0_129 = arith.constant 0 : index
    %185 = vector.load %arg4[%c2_127, %c0_128, %c0_129] : memref<4x4x16xbf16, #tpu.memory_space<vmem>>, vector<1x4x16xbf16>
    %186 = vector.shape_cast %185 : vector<1x4x16xbf16> to vector<4x16xbf16>
    %cst_130 = arith.constant dense<0.000000e+00> : vector<4x169xf32>
    %187 = tpu.matmul %186, %8, %cst_130 {dimension_numbers = #tpu.dot_dimension_numbers<[1], [0], [0], [1], [0, 0, 1, 1], [], []>} : vector<4x16xbf16>, vector<16x169xbf16>, vector<4x169xf32> -> vector<4x169xf32>
    %188 = arith.truncf %187 : vector<4x169xf32> to vector<4x169xbf16>
    %c2_131 = arith.constant 2 : index
    %c0_132 = arith.constant 0 : index
    %c0_133 = arith.constant 0 : index
    %189 = vector.load %arg5[%c2_131, %c0_132, %c0_133] : memref<4x4x16xbf16, #tpu.memory_space<vmem>>, vector<1x4x16xbf16>
    %190 = vector.shape_cast %189 : vector<1x4x16xbf16> to vector<4x16xbf16>
    %cst_134 = arith.constant dense<0.000000e+00> : vector<4x169xf32>
    %191 = tpu.matmul %190, %8, %cst_134 {dimension_numbers = #tpu.dot_dimension_numbers<[1], [0], [0], [1], [0, 0, 1, 1], [], []>} : vector<4x16xbf16>, vector<16x169xbf16>, vector<4x169xf32> -> vector<4x169xf32>
    %192 = arith.truncf %191 : vector<4x169xf32> to vector<4x169xbf16>
    %c2_135 = arith.constant 2 : index
    %c0_136 = arith.constant 0 : index
    %c0_137 = arith.constant 0 : index
    %193 = vector.load %arg6[%c2_135, %c0_136, %c0_137] : memref<4x16x4xbf16, #tpu.memory_space<vmem>>, vector<1x16x4xbf16>
    %194 = vector.shape_cast %193 : vector<1x16x4xbf16> to vector<16x4xbf16>
    %cst_138 = arith.constant dense<0.000000e+00> : vector<169x4xf32>
    %195 = tpu.matmul %6, %194, %cst_138 {dimension_numbers = #tpu.dot_dimension_numbers<[1], [0], [0], [1], [0, 0, 1, 1], [], []>} : vector<169x16xbf16>, vector<16x4xbf16>, vector<169x4xf32> -> vector<169x4xf32>
    %196 = arith.truncf %195 : vector<169x4xf32> to vector<169x4xbf16>
    %cst_139 = arith.constant dense<0.000000e+00> : vector<169x169xf32>
    %197 = tpu.matmul %184, %188, %cst_139 {dimension_numbers = #tpu.dot_dimension_numbers<[1], [0], [0], [1], [0, 0, 1, 1], [], []>} : vector<169x4xbf16>, vector<4x169xbf16>, vector<169x169xf32> -> vector<169x169xf32>
    %c2_140 = arith.constant 2 : index
    %c0_141 = arith.constant 0 : index
    %c0_142 = arith.constant 0 : index
    %198 = vector.load %arg10[%c2_140, %c0_141, %c0_142] : memref<4x169x169xbf16, #tpu.memory_space<vmem>>, vector<1x169x169xbf16>
    %199 = vector.shape_cast %198 : vector<1x169x169xbf16> to vector<169x169xbf16>
    %200 = arith.extf %199 : vector<169x169xbf16> to vector<169x169xf32>
    %201 = arith.addf %197, %200 : vector<169x169xf32>
    %cst_143 = arith.constant dense<0xFF800000> : vector<169xf32>
    %202 = vector.multi_reduction <maximumf>, %201, %cst_143 [1] : vector<169x169xf32> to vector<169xf32>
    %203 = vector.shape_cast %202 : vector<169xf32> to vector<169x1xf32>
    %204 = vector.broadcast %203 : vector<169x1xf32> to vector<169x169xf32>
    %205 = arith.subf %201, %204 : vector<169x169xf32>
    %206 = math.exp %205 : vector<169x169xf32>
    %cst_144 = arith.constant dense<0.000000e+00> : vector<169xf32>
    %207 = vector.multi_reduction <add>, %206, %cst_144 [1] : vector<169x169xf32> to vector<169xf32>
    %208 = vector.shape_cast %207 : vector<169xf32> to vector<169x1xf32>
    %209 = tpu.reciprocal %208 {approx = true} : vector<169x1xf32> -> vector<169x1xf32>
    %210 = arith.truncf %206 : vector<169x169xf32> to vector<169x169xbf16>
    %cst_145 = arith.constant dense<0.000000e+00> : vector<169x4xf32>
    %211 = tpu.matmul %210, %196, %cst_145 {dimension_numbers = #tpu.dot_dimension_numbers<[1], [0], [0], [1], [0, 0, 1, 1], [], []>} : vector<169x169xbf16>, vector<169x4xbf16>, vector<169x4xf32> -> vector<169x4xf32>
    %212 = vector.broadcast %209 : vector<169x1xf32> to vector<169x4xf32>
    %213 = arith.mulf %211, %212 : vector<169x4xf32>
    %cst_146 = arith.constant dense<0.000000e+00> : vector<169x169xf32>
    %214 = tpu.matmul %184, %192, %cst_146 {dimension_numbers = #tpu.dot_dimension_numbers<[1], [0], [0], [1], [0, 0, 1, 1], [], []>} : vector<169x4xbf16>, vector<4x169xbf16>, vector<169x169xf32> -> vector<169x169xf32>
    %c2_147 = arith.constant 2 : index
    %c0_148 = arith.constant 0 : index
    %c0_149 = arith.constant 0 : index
    %215 = vector.load %arg11[%c2_147, %c0_148, %c0_149] : memref<4x169x169xbf16, #tpu.memory_space<vmem>>, vector<1x169x169xbf16>
    %216 = vector.shape_cast %215 : vector<1x169x169xbf16> to vector<169x169xbf16>
    %217 = arith.extf %216 : vector<169x169xbf16> to vector<169x169xf32>
    %218 = arith.addf %214, %217 : vector<169x169xf32>
    %cst_150 = arith.constant dense<0xFF800000> : vector<169xf32>
    %219 = vector.multi_reduction <maximumf>, %218, %cst_150 [1] : vector<169x169xf32> to vector<169xf32>
    %220 = vector.shape_cast %219 : vector<169xf32> to vector<169x1xf32>
    %221 = vector.broadcast %220 : vector<169x1xf32> to vector<169x169xf32>
    %222 = arith.subf %218, %221 : vector<169x169xf32>
    %223 = math.exp %222 : vector<169x169xf32>
    %cst_151 = arith.constant dense<0.000000e+00> : vector<169xf32>
    %224 = vector.multi_reduction <add>, %223, %cst_151 [1] : vector<169x169xf32> to vector<169xf32>
    %225 = vector.shape_cast %224 : vector<169xf32> to vector<169x1xf32>
    %226 = tpu.reciprocal %225 {approx = true} : vector<169x1xf32> -> vector<169x1xf32>
    %227 = arith.truncf %223 : vector<169x169xf32> to vector<169x169xbf16>
    %228 = arith.truncf %213 : vector<169x4xf32> to vector<169x4xbf16>
    %cst_152 = arith.constant dense<0.000000e+00> : vector<169x4xf32>
    %229 = tpu.matmul %227, %228, %cst_152 {dimension_numbers = #tpu.dot_dimension_numbers<[1], [0], [0], [1], [0, 0, 1, 1], [], []>} : vector<169x169xbf16>, vector<169x4xbf16>, vector<169x4xf32> -> vector<169x4xf32>
    %230 = vector.broadcast %226 : vector<169x1xf32> to vector<169x4xf32>
    %231 = arith.mulf %229, %230 : vector<169x4xf32>
    %232 = arith.truncf %231 : vector<169x4xf32> to vector<169x4xbf16>
    %c2_153 = arith.constant 2 : index
    %c0_154 = arith.constant 0 : index
    %c0_155 = arith.constant 0 : index
    %233 = vector.load %arg9[%c2_153, %c0_154, %c0_155] : memref<4x4x16xbf16, #tpu.memory_space<vmem>>, vector<1x4x16xbf16>
    %234 = vector.shape_cast %233 : vector<1x4x16xbf16> to vector<4x16xbf16>
    %cst_156 = arith.constant dense<0.000000e+00> : vector<169x16xf32>
    %235 = tpu.matmul %232, %234, %cst_156 {dimension_numbers = #tpu.dot_dimension_numbers<[1], [0], [0], [1], [0, 0, 1, 1], [], []>} : vector<169x4xbf16>, vector<4x16xbf16>, vector<169x16xf32> -> vector<169x16xf32>
    %236 = arith.addf %120, %235 : vector<169x16xf32>
    %c3_157 = arith.constant 3 : index
    %c0_158 = arith.constant 0 : index
    %c0_159 = arith.constant 0 : index
    %237 = vector.load %arg3[%c3_157, %c0_158, %c0_159] : memref<4x16x4xbf16, #tpu.memory_space<vmem>>, vector<1x16x4xbf16>
    %238 = vector.shape_cast %237 : vector<1x16x4xbf16> to vector<16x4xbf16>
    %cst_160 = arith.constant dense<0.000000e+00> : vector<169x4xf32>
    %239 = tpu.matmul %6, %238, %cst_160 {dimension_numbers = #tpu.dot_dimension_numbers<[1], [0], [0], [1], [0, 0, 1, 1], [], []>} : vector<169x16xbf16>, vector<16x4xbf16>, vector<169x4xf32> -> vector<169x4xf32>
    %cst_161 = arith.constant 5.000000e-01 : f32
    %240 = vector.broadcast %cst_161 : f32 to vector<169x4xf32>
    %241 = arith.mulf %239, %240 : vector<169x4xf32>
    %242 = arith.truncf %241 : vector<169x4xf32> to vector<169x4xbf16>
    %c3_162 = arith.constant 3 : index
    %c0_163 = arith.constant 0 : index
    %c0_164 = arith.constant 0 : index
    %243 = vector.load %arg4[%c3_162, %c0_163, %c0_164] : memref<4x4x16xbf16, #tpu.memory_space<vmem>>, vector<1x4x16xbf16>
    %244 = vector.shape_cast %243 : vector<1x4x16xbf16> to vector<4x16xbf16>
    %cst_165 = arith.constant dense<0.000000e+00> : vector<4x169xf32>
    %245 = tpu.matmul %244, %8, %cst_165 {dimension_numbers = #tpu.dot_dimension_numbers<[1], [0], [0], [1], [0, 0, 1, 1], [], []>} : vector<4x16xbf16>, vector<16x169xbf16>, vector<4x169xf32> -> vector<4x169xf32>
    %246 = arith.truncf %245 : vector<4x169xf32> to vector<4x169xbf16>
    %c3_166 = arith.constant 3 : index
    %c0_167 = arith.constant 0 : index
    %c0_168 = arith.constant 0 : index
    %247 = vector.load %arg5[%c3_166, %c0_167, %c0_168] : memref<4x4x16xbf16, #tpu.memory_space<vmem>>, vector<1x4x16xbf16>
    %248 = vector.shape_cast %247 : vector<1x4x16xbf16> to vector<4x16xbf16>
    %cst_169 = arith.constant dense<0.000000e+00> : vector<4x169xf32>
    %249 = tpu.matmul %248, %8, %cst_169 {dimension_numbers = #tpu.dot_dimension_numbers<[1], [0], [0], [1], [0, 0, 1, 1], [], []>} : vector<4x16xbf16>, vector<16x169xbf16>, vector<4x169xf32> -> vector<4x169xf32>
    %250 = arith.truncf %249 : vector<4x169xf32> to vector<4x169xbf16>
    %c3_170 = arith.constant 3 : index
    %c0_171 = arith.constant 0 : index
    %c0_172 = arith.constant 0 : index
    %251 = vector.load %arg6[%c3_170, %c0_171, %c0_172] : memref<4x16x4xbf16, #tpu.memory_space<vmem>>, vector<1x16x4xbf16>
    %252 = vector.shape_cast %251 : vector<1x16x4xbf16> to vector<16x4xbf16>
    %cst_173 = arith.constant dense<0.000000e+00> : vector<169x4xf32>
    %253 = tpu.matmul %6, %252, %cst_173 {dimension_numbers = #tpu.dot_dimension_numbers<[1], [0], [0], [1], [0, 0, 1, 1], [], []>} : vector<169x16xbf16>, vector<16x4xbf16>, vector<169x4xf32> -> vector<169x4xf32>
    %254 = arith.truncf %253 : vector<169x4xf32> to vector<169x4xbf16>
    %cst_174 = arith.constant dense<0.000000e+00> : vector<169x169xf32>
    %255 = tpu.matmul %242, %246, %cst_174 {dimension_numbers = #tpu.dot_dimension_numbers<[1], [0], [0], [1], [0, 0, 1, 1], [], []>} : vector<169x4xbf16>, vector<4x169xbf16>, vector<169x169xf32> -> vector<169x169xf32>
    %c3_175 = arith.constant 3 : index
    %c0_176 = arith.constant 0 : index
    %c0_177 = arith.constant 0 : index
    %256 = vector.load %arg10[%c3_175, %c0_176, %c0_177] : memref<4x169x169xbf16, #tpu.memory_space<vmem>>, vector<1x169x169xbf16>
    %257 = vector.shape_cast %256 : vector<1x169x169xbf16> to vector<169x169xbf16>
    %258 = arith.extf %257 : vector<169x169xbf16> to vector<169x169xf32>
    %259 = arith.addf %255, %258 : vector<169x169xf32>
    %cst_178 = arith.constant dense<0xFF800000> : vector<169xf32>
    %260 = vector.multi_reduction <maximumf>, %259, %cst_178 [1] : vector<169x169xf32> to vector<169xf32>
    %261 = vector.shape_cast %260 : vector<169xf32> to vector<169x1xf32>
    %262 = vector.broadcast %261 : vector<169x1xf32> to vector<169x169xf32>
    %263 = arith.subf %259, %262 : vector<169x169xf32>
    %264 = math.exp %263 : vector<169x169xf32>
    %cst_179 = arith.constant dense<0.000000e+00> : vector<169xf32>
    %265 = vector.multi_reduction <add>, %264, %cst_179 [1] : vector<169x169xf32> to vector<169xf32>
    %266 = vector.shape_cast %265 : vector<169xf32> to vector<169x1xf32>
    %267 = tpu.reciprocal %266 {approx = true} : vector<169x1xf32> -> vector<169x1xf32>
    %268 = arith.truncf %264 : vector<169x169xf32> to vector<169x169xbf16>
    %cst_180 = arith.constant dense<0.000000e+00> : vector<169x4xf32>
    %269 = tpu.matmul %268, %254, %cst_180 {dimension_numbers = #tpu.dot_dimension_numbers<[1], [0], [0], [1], [0, 0, 1, 1], [], []>} : vector<169x169xbf16>, vector<169x4xbf16>, vector<169x4xf32> -> vector<169x4xf32>
    %270 = vector.broadcast %267 : vector<169x1xf32> to vector<169x4xf32>
    %271 = arith.mulf %269, %270 : vector<169x4xf32>
    %cst_181 = arith.constant dense<0.000000e+00> : vector<169x169xf32>
    %272 = tpu.matmul %242, %250, %cst_181 {dimension_numbers = #tpu.dot_dimension_numbers<[1], [0], [0], [1], [0, 0, 1, 1], [], []>} : vector<169x4xbf16>, vector<4x169xbf16>, vector<169x169xf32> -> vector<169x169xf32>
    %c3_182 = arith.constant 3 : index
    %c0_183 = arith.constant 0 : index
    %c0_184 = arith.constant 0 : index
    %273 = vector.load %arg11[%c3_182, %c0_183, %c0_184] : memref<4x169x169xbf16, #tpu.memory_space<vmem>>, vector<1x169x169xbf16>
    %274 = vector.shape_cast %273 : vector<1x169x169xbf16> to vector<169x169xbf16>
    %275 = arith.extf %274 : vector<169x169xbf16> to vector<169x169xf32>
    %276 = arith.addf %272, %275 : vector<169x169xf32>
    %cst_185 = arith.constant dense<0xFF800000> : vector<169xf32>
    %277 = vector.multi_reduction <maximumf>, %276, %cst_185 [1] : vector<169x169xf32> to vector<169xf32>
    %278 = vector.shape_cast %277 : vector<169xf32> to vector<169x1xf32>
    %279 = vector.broadcast %278 : vector<169x1xf32> to vector<169x169xf32>
    %280 = arith.subf %276, %279 : vector<169x169xf32>
    %281 = math.exp %280 : vector<169x169xf32>
    %cst_186 = arith.constant dense<0.000000e+00> : vector<169xf32>
    %282 = vector.multi_reduction <add>, %281, %cst_186 [1] : vector<169x169xf32> to vector<169xf32>
    %283 = vector.shape_cast %282 : vector<169xf32> to vector<169x1xf32>
    %284 = tpu.reciprocal %283 {approx = true} : vector<169x1xf32> -> vector<169x1xf32>
    %285 = arith.truncf %281 : vector<169x169xf32> to vector<169x169xbf16>
    %286 = arith.truncf %271 : vector<169x4xf32> to vector<169x4xbf16>
    %cst_187 = arith.constant dense<0.000000e+00> : vector<169x4xf32>
    %287 = tpu.matmul %285, %286, %cst_187 {dimension_numbers = #tpu.dot_dimension_numbers<[1], [0], [0], [1], [0, 0, 1, 1], [], []>} : vector<169x169xbf16>, vector<169x4xbf16>, vector<169x4xf32> -> vector<169x4xf32>
    %288 = vector.broadcast %284 : vector<169x1xf32> to vector<169x4xf32>
    %289 = arith.mulf %287, %288 : vector<169x4xf32>
    %290 = arith.truncf %289 : vector<169x4xf32> to vector<169x4xbf16>
    %c3_188 = arith.constant 3 : index
    %c0_189 = arith.constant 0 : index
    %c0_190 = arith.constant 0 : index
    %291 = vector.load %arg9[%c3_188, %c0_189, %c0_190] : memref<4x4x16xbf16, #tpu.memory_space<vmem>>, vector<1x4x16xbf16>
    %292 = vector.shape_cast %291 : vector<1x4x16xbf16> to vector<4x16xbf16>
    %cst_191 = arith.constant dense<0.000000e+00> : vector<169x16xf32>
    %293 = tpu.matmul %290, %292, %cst_191 {dimension_numbers = #tpu.dot_dimension_numbers<[1], [0], [0], [1], [0, 0, 1, 1], [], []>} : vector<169x4xbf16>, vector<4x16xbf16>, vector<169x16xf32> -> vector<169x16xf32>
    %294 = arith.addf %178, %293 : vector<169x16xf32>
    %295 = arith.addf %236, %294 : vector<169x16xf32>
    %296 = vector.broadcast %2 : vector<1x16xf32> to vector<169x16xf32>
    %297 = arith.addf %295, %296 : vector<169x16xf32>
    %c0_192 = arith.constant 0 : index
    %c0_193 = arith.constant 0 : index
    %c0_194 = arith.constant 0 : index
    %298 = vector.load %arg15[%c0_192, %c0_193, %c0_194] : memref<1x169x16xf32, #tpu.memory_space<vmem>>, vector<1x169x16xf32>
    %299 = vector.shape_cast %298 : vector<1x169x16xf32> to vector<169x16xf32>
    %300 = vector.shape_cast %297 : vector<169x16xf32> to vector<1x169x16xf32>
    tpu.vector_store %arg15[%c0_192, %c0_193, %c0_194], %300 {strides = array<i32>} : memref<1x169x16xf32, #tpu.memory_space<vmem>>, vector<1x169x16xf32>,
    return
  }
  func.func @transform_0(%arg0: i32) -> (i32, i32, i32) {
    %c0_i32 = arith.constant 0 : i32
    %c0_i32_0 = arith.constant 0 : i32
    %c0_i32_1 = arith.constant 0 : i32
    return %arg0, %c0_i32, %c0_i32_0 : i32, i32, i32
  }
  func.func @transform_1(%arg0: i32) -> (i32, i32, i32) {
    %c0_i32 = arith.constant 0 : i32
    %c0_i32_0 = arith.constant 0 : i32
    %c0_i32_1 = arith.constant 0 : i32
    return %arg0, %c0_i32, %c0_i32_0 : i32, i32, i32
  }
  func.func @transform_2(%arg0: i32) -> (i32, i32, i32) {
    %c0_i32 = arith.constant 0 : i32
    %c0_i32_0 = arith.constant 0 : i32
    %c0_i32_1 = arith.constant 0 : i32
    %c0_i32_2 = arith.constant 0 : i32
    return %c0_i32, %c0_i32_0, %c0_i32_1 : i32, i32, i32
  }
  func.func @transform_3(%arg0: i32) -> (i32, i32, i32) {
    %c0_i32 = arith.constant 0 : i32
    %c0_i32_0 = arith.constant 0 : i32
    %c0_i32_1 = arith.constant 0 : i32
    %c0_i32_2 = arith.constant 0 : i32
    return %c0_i32, %c0_i32_0, %c0_i32_1 : i32, i32, i32
  }
  func.func @transform_4(%arg0: i32) -> (i32, i32, i32) {
    %c0_i32 = arith.constant 0 : i32
    %c0_i32_0 = arith.constant 0 : i32
    %c0_i32_1 = arith.constant 0 : i32
    %c0_i32_2 = arith.constant 0 : i32
    return %c0_i32, %c0_i32_0, %c0_i32_1 : i32, i32, i32
  }
  func.func @transform_5(%arg0: i32) -> (i32, i32, i32) {
    %c0_i32 = arith.constant 0 : i32
    %c0_i32_0 = arith.constant 0 : i32
    %c0_i32_1 = arith.constant 0 : i32
    %c0_i32_2 = arith.constant 0 : i32
    return %c0_i32, %c0_i32_0, %c0_i32_1 : i32, i32, i32
  }
  func.func @transform_6(%arg0: i32) -> (i32, i32) {
    %c0_i32 = arith.constant 0 : i32
    %c0_i32_0 = arith.constant 0 : i32
    %c0_i32_1 = arith.constant 0 : i32
    return %c0_i32, %c0_i32_0 : i32, i32
  }
  func.func @transform_7(%arg0: i32) -> (i32, i32) {
    %c0_i32 = arith.constant 0 : i32
    %c0_i32_0 = arith.constant 0 : i32
    %c0_i32_1 = arith.constant 0 : i32
    return %c0_i32, %c0_i32_0 : i32, i32
  }
  func.func @transform_8(%arg0: i32) -> (i32, i32, i32) {
    %c0_i32 = arith.constant 0 : i32
    %c0_i32_0 = arith.constant 0 : i32
    %c0_i32_1 = arith.constant 0 : i32
    %c0_i32_2 = arith.constant 0 : i32
    return %c0_i32, %c0_i32_0, %c0_i32_1 : i32, i32, i32
  }
  func.func @transform_9(%arg0: i32) -> (i32, i32, i32) {
    %c0_i32 = arith.constant 0 : i32
    %c0_i32_0 = arith.constant 0 : i32
    %c0_i32_1 = arith.constant 0 : i32
    %c0_i32_2 = arith.constant 0 : i32
    return %c0_i32, %c0_i32_0, %c0_i32_1 : i32, i32, i32
  }
  func.func @transform_10(%arg0: i32) -> (i32, i32, i32) {
    %c0_i32 = arith.constant 0 : i32
    %c0_i32_0 = arith.constant 0 : i32
    %c0_i32_1 = arith.constant 0 : i32
    %c0_i32_2 = arith.constant 0 : i32
    return %c0_i32, %c0_i32_0, %c0_i32_1 : i32, i32, i32
  }
  func.func @transform_11(%arg0: i32) -> (i32, i32, i32) {
    %c0_i32 = arith.constant 0 : i32
    %c0_i32_0 = arith.constant 0 : i32
    %c0_i32_1 = arith.constant 0 : i32
    %c0_i32_2 = arith.constant 0 : i32
    return %c0_i32, %c0_i32_0, %c0_i32_1 : i32, i32, i32
  }
  func.func @transform_12(%arg0: i32) -> (i32, i32) {
    %c0_i32 = arith.constant 0 : i32
    %c0_i32_0 = arith.constant 0 : i32
    %c0_i32_1 = arith.constant 0 : i32
    return %c0_i32, %c0_i32_0 : i32, i32
  }
  func.func @transform_13(%arg0: i32) -> (i32, i32) {
    %c0_i32 = arith.constant 0 : i32
    %c0_i32_0 = arith.constant 0 : i32
    %c0_i32_1 = arith.constant 0 : i32
    return %c0_i32, %c0_i32_0 : i32, i32
  }
  func.func @transform_14(%arg0: i32) -> (i32, i32, i32) {
    %c0_i32 = arith.constant 0 : i32
    %c0_i32_0 = arith.constant 0 : i32
    %c0_i32_1 = arith.constant 0 : i32
    return %arg0, %c0_i32, %c0_i32_0 : i32, i32, i32
  }
}

</mosaic_0001>

<llo_original>
// kernel: mul.11
$region0: #{mul.11}
  %s0 = inlined_call_operand.vmem [shape: f32[3,3,16], index: 0, kind: input, shape index: {}]
  %s1 = inlined_call_operand.vmem [shape: f32[9,16], index: 1, kind: output, shape index: {}]
  $region1: #{mul.11} parent=0
    #allocation0 [shape = 'u8[12288]{0}', space=vmem, size = 0x3000, scoped, tag = 'scoped mem for input reshape']
    %s3 = sshllo.u32 0, 4
    %s4 = smul.addr 4, 2
    %s5 = scalar_lea.vmem %s0, %s4
    %v6 = vld [vmem:[%s5] sm:%s3]
    %s7 = scalar_lea.vmem [#allocation0], 16
    %8 = vst [vmem:[%s7] sm:%s3] %v6
    %s9 = scalar_lea.vmem %s0, 4
    %v10 = vld [vmem:[%s9] sm:%s3]
    %s11 = scalar_lea.vmem [#allocation0], 8
    %12 = vst [vmem:[%s11] sm:%s3] %v10
    %v13 = vld [vmem:[%s0] sm:%s3]
    %14 = vst [vmem:[#allocation0] sm:%s3] %v13
    %v15 = vld [vmem:[#allocation0] sm:$0x7]
    %vm16 = vcmask 130048
    %17 = vst.msk [vmem:[%s1] sm:$0x7] %vm16, %v15
    %s18 = scalar_lea.vmem [#allocation0], 8
    %v19 = vld [vmem:[%s18] sm:$0x7]
    %vm20 = vcmask 130048
    %s21 = scalar_lea.vmem %s1, 3
    %22 = vst.msk [vmem:[%s21] sm:$0x7] %vm20, %v19
    %s23 = scalar_lea.vmem [#allocation0], 16
    %v24 = vld [vmem:[%s23] sm:$0x7]
    %vm25 = vcmask 130048
    %s26 = scalar_lea.vmem %s1, 6
    %27 = vst.msk [vmem:[%s26] sm:$0x7] %vm25, %v24

// kernel: agent_attention.1
$region0: #{agent_attention.1}
  #allocation0 [shape = 'u32[]', space=smem, size = 0x4, offset = 0x4, fixed_abs, tag = 'smem constant byte address 0x4 - core index']
  #allocation1 [shape = 'u32[144,128]{1,0:T(1,128)}', space=vmem, size = 0x12000, scoped, tag = 'internal scratch']
  #allocation2 [shape = 'f32[197,16]{1,0:T(8,128)}', space=vmem, size = 0x19000, scoped, tag = 'scratch operand']
  %s0 = inlined_call_operand.vmem [shape: bf16[2,169,16], index: 0, kind: input, shape index: {}]
  %s1 = inlined_call_operand.vmem [shape: bf16[2,16,169], index: 1, kind: input, shape index: {}]
  %s2 = inlined_call_operand.vmem [shape: bf16[4,16,4], index: 2, kind: input, shape index: {}]
  %s3 = inlined_call_operand.vmem [shape: bf16[4,4,16], index: 3, kind: input, shape index: {}]
  %s4 = inlined_call_operand.vmem [shape: bf16[4,4,16], index: 4, kind: input, shape index: {}]
  %s5 = inlined_call_operand.vmem [shape: bf16[4,16,4], index: 5, kind: input, shape index: {}]
  %s6 = inlined_call_operand.vmem [shape: bf16[16,16], index: 6, kind: input, shape index: {}]
  %s7 = inlined_call_operand.vmem [shape: bf16[16,16], index: 7, kind: input, shape index: {}, may-alias: {7,8}]
  %s8 = inlined_call_operand.vmem [shape: bf16[4,4,16], index: 8, kind: input, shape index: {}, may-alias: {7,8}]
  %s9 = inlined_call_operand.vmem [shape: bf16[4,169,169], index: 9, kind: input, shape index: {}]
  %s10 = inlined_call_operand.vmem [shape: bf16[4,169,169], index: 10, kind: input, shape index: {}]
  %s11 = inlined_call_operand.vmem [shape: f32[9,169,16], index: 11, kind: input, shape index: {}]
  %s12 = inlined_call_operand.vmem [shape: f32[1,16], index: 12, kind: input, shape index: {}]
  %s13 = inlined_call_operand.vmem [shape: f32[1,16], index: 13, kind: input, shape index: {}]
  %s14 = inlined_call_operand.vmem [shape: f32[2,169,16], index: 14, kind: output, shape index: {}]
  %s15 = sld [smem:[#allocation0]]
  $region89: #{agent_attention.1} parent=0
    _
  %s17 = ssub.s32 1, %s15
  %s18 = scalar_select 0, %s17, %s15
  loop: start=0, step=1, limit=4
  $region2: #{agent_attention.1} parent=0 // loop_pre_header
    _
  $region3: #{agent_attention.1} parent=0 // loop_header
    %s20 = sphi 0, %s24
    %p21 = scmp.ge.s32.totalorder %s20, 4
    %s30 = sphi 0, %s32
    %s33 = sphi 0, %s30
    %s34 = sphi 0, %s33
    %s50 = sphi 0, %s34
    %s56 = sphi 0, %s58
    %s59 = sphi 0, %s56
    %s60 = sphi 0, %s59
    %s76 = sphi 0, %s60
    %s80 = sphi 0, %s80
    %s82 = sphi 0, %s80
    %s83 = sphi 0, %s82
    %s97 = sphi 0, %s83
    %s101 = sphi 0, %s101
    %s103 = sphi 0, %s101
    %s104 = sphi 0, %s103
    %s118 = sphi 0, %s104
    %s122 = sphi 0, %s122
    %s124 = sphi 0, %s122
    %s125 = sphi 0, %s124
    %s139 = sphi 0, %s125
    %s143 = sphi 0, %s143
    %s145 = sphi 0, %s143
    %s146 = sphi 0, %s145
    %s160 = sphi 0, %s146
    %s164 = sphi 0, %s164
    %s166 = sphi 0, %s164
    %s167 = sphi 0, %s166
    %s181 = sphi 0, %s167
    %s185 = sphi 0, %s185
    %s187 = sphi 0, %s185
    %s188 = sphi 0, %s187
    %s202 = sphi 0, %s188
    %s206 = sphi 0, %s206
    %s208 = sphi 0, %s206
    %s209 = sphi 0, %s208
    %s223 = sphi 0, %s209
    %s227 = sphi 0, %s227
    %s229 = sphi 0, %s227
    %s230 = sphi 0, %s229
    %s244 = sphi 0, %s230
    %s248 = sphi 0, %s248
    %s250 = sphi 0, %s248
    %s251 = sphi 0, %s250
    %s265 = sphi 0, %s251
    %s269 = sphi 0, %s269
    %s271 = sphi 0, %s269
    %s272 = sphi 0, %s271
    %s286 = sphi 0, %s272
    %s290 = sphi 0, %s290
    %s292 = sphi 0, %s290
    %s293 = sphi 0, %s292
    %s307 = sphi 0, %s293
    %s311 = sphi 0, %s311
    %s313 = sphi 0, %s311
    %s314 = sphi 0, %s313
    %s328 = sphi 0, %s314
    %s334 = sphi 0, %s336
    %s337 = sphi 0, %s334
    %s338 = sphi 0, %s337
    %s354 = sphi 0, %s338
  $region4: #{agent_attention.1} parent=0 // loop_header_branch
    %23 = sbr.rel (%p21) target = $region8
  $region5: #{agent_attention.1} parent=0 // loop_body
    %s25 = ssub.s32 %s20, 1
    %s26 = ssub.s32 %s20, 2
    %s27 = sadd.s32 %s20, 1
    %s28 = ssub.s32 %s20, %s27
    %p29 = scmp.eq.s32.totalorder %s28, 0
    %s31 = sadd.s32 %s30, 1
    %s32 = scalar_select %p29, %s30, %s31
    %p35 = pneg %p29
    %p36 = scmp.eq.s32.totalorder %s20, 1
    %p37 = por %p35, %p36
    %p38 = scmp.ne.s32.totalorder %s30, %s33
    %p39 = scmp.eq.s32.totalorder %s20, 0
    %p40 = por %p38, %p39
    %p41 = scmp.ne.s32.totalorder %s30, %s33
    %p42 = scmp.eq.s32.totalorder %s25, 1
    %p43 = por %p41, %p42
    %p44 = scmp.ne.s32.totalorder %s33, %s34
    %p45 = scmp.eq.s32.totalorder %s25, 0
    %p46 = por %p44, %p45
    %p47 = scmp.ne.s32.totalorder %s33, %s34
    %p48 = scmp.eq.s32.totalorder %s26, 1
    %p49 = por %p47, %p48
    %p51 = scmp.ne.s32.totalorder %s34, %s50
    %p52 = scmp.eq.s32.totalorder %s26, 0
    %p53 = por %p51, %p52
    %s54 = ssub.s32 %s20, %s27
    %p55 = scmp.eq.s32.totalorder %s54, 0
    %s57 = sadd.s32 %s56, 1
    %s58 = scalar_select %p55, %s56, %s57
    %p61 = pneg %p55
    %p62 = scmp.eq.s32.totalorder %s20, 1
    %p63 = por %p61, %p62
    %p64 = scmp.ne.s32.totalorder %s56, %s59
    %p65 = scmp.eq.s32.totalorder %s20, 0
    %p66 = por %p64, %p65
    %p67 = scmp.ne.s32.totalorder %s56, %s59
    %p68 = scmp.eq.s32.totalorder %s25, 1
    %p69 = por %p67, %p68
    %p70 = scmp.ne.s32.totalorder %s59, %s60
    %p71 = scmp.eq.s32.totalorder %s25, 0
    %p72 = por %p70, %p71
    %p73 = scmp.ne.s32.totalorder %s59, %s60
    %p74 = scmp.eq.s32.totalorder %s26, 1
    %p75 = por %p73, %p74
    %p77 = scmp.ne.s32.totalorder %s60, %s76
    %p78 = scmp.eq.s32.totalorder %s26, 0
    %p79 = por %p77, %p78
    %s81 = sadd.s32 %s80, 1
    %p84 = scmp.eq.s32.totalorder %s20, 1
    %p85 = scmp.ne.s32.totalorder %s80, %s82
    %p86 = scmp.eq.s32.totalorder %s20, 0
    %p87 = por %p85, %p86
    %p88 = scmp.ne.s32.totalorder %s80, %s82
    %p89 = scmp.eq.s32.totalorder %s25, 1
    %p90 = por %p88, %p89
    %p91 = scmp.ne.s32.totalorder %s82, %s83
    %p92 = scmp.eq.s32.totalorder %s25, 0
    %p93 = por %p91, %p92
    %p94 = scmp.ne.s32.totalorder %s82, %s83
    %p95 = scmp.eq.s32.totalorder %s26, 1
    %p96 = por %p94, %p95
    %p98 = scmp.ne.s32.totalorder %s83, %s97
    %p99 = scmp.eq.s32.totalorder %s26, 0
    %p100 = por %p98, %p99
    %s102 = sadd.s32 %s101, 1
    %p105 = scmp.eq.s32.totalorder %s20, 1
    %p106 = scmp.ne.s32.totalorder %s101, %s103
    %p107 = scmp.eq.s32.totalorder %s20, 0
    %p108 = por %p106, %p107
    %p109 = scmp.ne.s32.totalorder %s101, %s103
    %p110 = scmp.eq.s32.totalorder %s25, 1
    %p111 = por %p109, %p110
    %p112 = scmp.ne.s32.totalorder %s103, %s104
    %p113 = scmp.eq.s32.totalorder %s25, 0
    %p114 = por %p112, %p113
    %p115 = scmp.ne.s32.totalorder %s103, %s104
    %p116 = scmp.eq.s32.totalorder %s26, 1
    %p117 = por %p115, %p116
    %p119 = scmp.ne.s32.totalorder %s104, %s118
    %p120 = scmp.eq.s32.totalorder %s26, 0
    %p121 = por %p119, %p120
    %s123 = sadd.s32 %s122, 1
    %p126 = scmp.eq.s32.totalorder %s20, 1
    %p127 = scmp.ne.s32.totalorder %s122, %s124
    %p128 = scmp.eq.s32.totalorder %s20, 0
    %p129 = por %p127, %p128
    %p130 = scmp.ne.s32.totalorder %s122, %s124
    %p131 = scmp.eq.s32.totalorder %s25, 1
    %p132 = por %p130, %p131
    %p133 = scmp.ne.s32.totalorder %s124, %s125
    %p134 = scmp.eq.s32.totalorder %s25, 0
    %p135 = por %p133, %p134
    %p136 = scmp.ne.s32.totalorder %s124, %s125
    %p137 = scmp.eq.s32.totalorder %s26, 1
    %p138 = por %p136, %p137
    %p140 = scmp.ne.s32.totalorder %s125, %s139
    %p141 = scmp.eq.s32.totalorder %s26, 0
    %p142 = por %p140, %p141
    %s144 = sadd.s32 %s143, 1
    %p147 = scmp.eq.s32.totalorder %s20, 1
    %p148 = scmp.ne.s32.totalorder %s143, %s145
    %p149 = scmp.eq.s32.totalorder %s20, 0
    %p150 = por %p148, %p149
    %p151 = scmp.ne.s32.totalorder %s143, %s145
    %p152 = scmp.eq.s32.totalorder %s25, 1
    %p153 = por %p151, %p152
    %p154 = scmp.ne.s32.totalorder %s145, %s146
    %p155 = scmp.eq.s32.totalorder %s25, 0
    %p156 = por %p154, %p155
    %p157 = scmp.ne.s32.totalorder %s145, %s146
    %p158 = scmp.eq.s32.totalorder %s26, 1
    %p159 = por %p157, %p158
    %p161 = scmp.ne.s32.totalorder %s146, %s160
    %p162 = scmp.eq.s32.totalorder %s26, 0
    %p163 = por %p161, %p162
    %s165 = sadd.s32 %s164, 1
    %p168 = scmp.eq.s32.totalorder %s20, 1
    %p169 = scmp.ne.s32.totalorder %s164, %s166
    %p170 = scmp.eq.s32.totalorder %s20, 0
    %p171 = por %p169, %p170
    %p172 = scmp.ne.s32.totalorder %s164, %s166
    %p173 = scmp.eq.s32.totalorder %s25, 1
    %p174 = por %p172, %p173
    %p175 = scmp.ne.s32.totalorder %s166, %s167
    %p176 = scmp.eq.s32.totalorder %s25, 0
    %p177 = por %p175, %p176
    %p178 = scmp.ne.s32.totalorder %s166, %s167
    %p179 = scmp.eq.s32.totalorder %s26, 1
    %p180 = por %p178, %p179
    %p182 = scmp.ne.s32.totalorder %s167, %s181
    %p183 = scmp.eq.s32.totalorder %s26, 0
    %p184 = por %p182, %p183
    %s186 = sadd.s32 %s185, 1
    %p189 = scmp.eq.s32.totalorder %s20, 1
    %p190 = scmp.ne.s32.totalorder %s185, %s187
    %p191 = scmp.eq.s32.totalorder %s20, 0
    %p192 = por %p190, %p191
    %p193 = scmp.ne.s32.totalorder %s185, %s187
    %p194 = scmp.eq.s32.totalorder %s25, 1
    %p195 = por %p193, %p194
    %p196 = scmp.ne.s32.totalorder %s187, %s188
    %p197 = scmp.eq.s32.totalorder %s25, 0
    %p198 = por %p196, %p197
    %p199 = scmp.ne.s32.totalorder %s187, %s188
    %p200 = scmp.eq.s32.totalorder %s26, 1
    %p201 = por %p199, %p200
    %p203 = scmp.ne.s32.totalorder %s188, %s202
    %p204 = scmp.eq.s32.totalorder %s26, 0
    %p205 = por %p203, %p204
    %s207 = sadd.s32 %s206, 1
    %p210 = scmp.eq.s32.totalorder %s20, 1
    %p211 = scmp.ne.s32.totalorder %s206, %s208
    %p212 = scmp.eq.s32.totalorder %s20, 0
    %p213 = por %p211, %p212
    %p214 = scmp.ne.s32.totalorder %s206, %s208
    %p215 = scmp.eq.s32.totalorder %s25, 1
    %p216 = por %p214, %p215
    %p217 = scmp.ne.s32.totalorder %s208, %s209
    %p218 = scmp.eq.s32.totalorder %s25, 0
    %p219 = por %p217, %p218
    %p220 = scmp.ne.s32.totalorder %s208, %s209
    %p221 = scmp.eq.s32.totalorder %s26, 1
    %p222 = por %p220, %p221
    %p224 = scmp.ne.s32.totalorder %s209, %s223
    %p225 = scmp.eq.s32.totalorder %s26, 0
    %p226 = por %p224, %p225
    %s228 = sadd.s32 %s227, 1
    %p231 = scmp.eq.s32.totalorder %s20, 1
    %p232 = scmp.ne.s32.totalorder %s227, %s229
    %p233 = scmp.eq.s32.totalorder %s20, 0
    %p234 = por %p232, %p233
    %p235 = scmp.ne.s32.totalorder %s227, %s229
    %p236 = scmp.eq.s32.totalorder %s25, 1
    %p237 = por %p235, %p236
    %p238 = scmp.ne.s32.totalorder %s229, %s230
    %p239 = scmp.eq.s32.totalorder %s25, 0
    %p240 = por %p238, %p239
    %p241 = scmp.ne.s32.totalorder %s229, %s230
    %p242 = scmp.eq.s32.totalorder %s26, 1
    %p243 = por %p241, %p242
    %p245 = scmp.ne.s32.totalorder %s230, %s244
    %p246 = scmp.eq.s32.totalorder %s26, 0
    %p247 = por %p245, %p246
    %s249 = sadd.s32 %s248, 1
    %p252 = scmp.eq.s32.totalorder %s20, 1
    %p253 = scmp.ne.s32.totalorder %s248, %s250
    %p254 = scmp.eq.s32.totalorder %s20, 0
    %p255 = por %p253, %p254
    %p256 = scmp.ne.s32.totalorder %s248, %s250
    %p257 = scmp.eq.s32.totalorder %s25, 1
    %p258 = por %p256, %p257
    %p259 = scmp.ne.s32.totalorder %s250, %s251
    %p260 = scmp.eq.s32.totalorder %s25, 0
    %p261 = por %p259, %p260
    %p262 = scmp.ne.s32.totalorder %s250, %s251
    %p263 = scmp.eq.s32.totalorder %s26, 1
    %p264 = por %p262, %p263
    %p266 = scmp.ne.s32.totalorder %s251, %s265
    %p267 = scmp.eq.s32.totalorder %s26, 0
    %p268 = por %p266, %p267
    %s270 = sadd.s32 %s269, 1
    %p273 = scmp.eq.s32.totalorder %s20, 1
    %p274 = scmp.ne.s32.totalorder %s269, %s271
    %p275 = scmp.eq.s32.totalorder %s20, 0
    %p276 = por %p274, %p275
    %p277 = scmp.ne.s32.totalorder %s269, %s271
    %p278 = scmp.eq.s32.totalorder %s25, 1
    %p279 = por %p277, %p278
    %p280 = scmp.ne.s32.totalorder %s271, %s272
    %p281 = scmp.eq.s32.totalorder %s25, 0
    %p282 = por %p280, %p281
    %p283 = scmp.ne.s32.totalorder %s271, %s272
    %p284 = scmp.eq.s32.totalorder %s26, 1
    %p285 = por %p283, %p284
    %p287 = scmp.ne.s32.totalorder %s272, %s286
    %p288 = scmp.eq.s32.totalorder %s26, 0
    %p289 = por %p287, %p288
    %s291 = sadd.s32 %s290, 1
    %p294 = scmp.eq.s32.totalorder %s20, 1
    %p295 = scmp.ne.s32.totalorder %s290, %s292
    %p296 = scmp.eq.s32.totalorder %s20, 0
    %p297 = por %p295, %p296
    %p298 = scmp.ne.s32.totalorder %s290, %s292
    %p299 = scmp.eq.s32.totalorder %s25, 1
    %p300 = por %p298, %p299
    %p301 = scmp.ne.s32.totalorder %s292, %s293
    %p302 = scmp.eq.s32.totalorder %s25, 0
    %p303 = por %p301, %p302
    %p304 = scmp.ne.s32.totalorder %s292, %s293
    %p305 = scmp.eq.s32.totalorder %s26, 1
    %p306 = por %p304, %p305
    %p308 = scmp.ne.s32.totalorder %s293, %s307
    %p309 = scmp.eq.s32.totalorder %s26, 0
    %p310 = por %p308, %p309
    %s312 = sadd.s32 %s311, 1
    %p315 = scmp.eq.s32.totalorder %s20, 1
    %p316 = scmp.ne.s32.totalorder %s311, %s313
    %p317 = scmp.eq.s32.totalorder %s20, 0
    %p318 = por %p316, %p317
    %p319 = scmp.ne.s32.totalorder %s311, %s313
    %p320 = scmp.eq.s32.totalorder %s25, 1
    %p321 = por %p319, %p320
    %p322 = scmp.ne.s32.totalorder %s313, %s314
    %p323 = scmp.eq.s32.totalorder %s25, 0
    %p324 = por %p322, %p323
    %p325 = scmp.ne.s32.totalorder %s313, %s314
    %p326 = scmp.eq.s32.totalorder %s26, 1
    %p327 = por %p325, %p326
    %p329 = scmp.ne.s32.totalorder %s314, %s328
    %p330 = scmp.eq.s32.totalorder %s26, 0
    %p331 = por %p329, %p330
    %s332 = ssub.s32 %s20, %s27
    %p333 = scmp.eq.s32.totalorder %s332, 0
    %s335 = sadd.s32 %s334, 1
    %s336 = scalar_select %p333, %s334, %s335
    %p339 = pneg %p333
    %p340 = scmp.eq.s32.totalorder %s20, 1
    %p341 = por %p339, %p340
    %p342 = scmp.ne.s32.totalorder %s334, %s337
    %p343 = scmp.eq.s32.totalorder %s20, 0
    %p344 = por %p342, %p343
    %p345 = scmp.ne.s32.totalorder %s334, %s337
    %p346 = scmp.eq.s32.totalorder %s25, 1
    %p347 = por %p345, %p346
    %p348 = scmp.ne.s32.totalorder %s337, %s338
    %p349 = scmp.eq.s32.totalorder %s25, 0
    %p350 = por %p348, %p349
    %p351 = scmp.ne.s32.totalorder %s337, %s338
    %p352 = scmp.eq.s32.totalorder %s26, 1
    %p353 = por %p351, %p352
    %p355 = scmp.ne.s32.totalorder %s338, %s354
    %p356 = scmp.eq.s32.totalorder %s26, 0
    %p357 = por %p355, %p356
    %p358 = scmp.le.s32.totalorder 1, %s20
    %p359 = scmp.lt.s32.totalorder %s20, 3
    %p360 = pnand %p358, %p359
    %p361 = pneg %p360
    // Predicated region
    $region9: #{agent_attention.1} parent=5 // pred_check
      _
    $region10: #{agent_attention.1} parent=5 // pred_check_branch
      %363 = sbr.rel (%p360) target = $region12
    $region11: #{agent_attention.1} parent=5 // pred_region
      %s364 = ssub.s32 %s20, 1
      // Predicated region
      $region13: #{agent_attention.1} parent=11 // pred_check
        %p365 = pneg %p93
      $region14: #{agent_attention.1} parent=11 // pred_check_branch
        %367 = sbr.rel (%p365) target = $region16
      $region15: #{agent_attention.1} parent=11 // pred_region
        _
      $region16: #{agent_attention.1} parent=11 // pred_fallthru
        _
      // Predicated region
      $region17: #{agent_attention.1} parent=11 // pred_check
        %p368 = pneg %p114
      $region18: #{agent_attention.1} parent=11 // pred_check_branch
        %370 = sbr.rel (%p368) target = $region20
      $region19: #{agent_attention.1} parent=11 // pred_region
        _
      $region20: #{agent_attention.1} parent=11 // pred_fallthru
        _
      // Predicated region
      $region21: #{agent_attention.1} parent=11 // pred_check
        %p371 = pneg %p135
      $region22: #{agent_attention.1} parent=11 // pred_check_branch
        %373 = sbr.rel (%p371) target = $region24
      $region23: #{agent_attention.1} parent=11 // pred_region
        _
      $region24: #{agent_attention.1} parent=11 // pred_fallthru
        _
      // Predicated region
      $region25: #{agent_attention.1} parent=11 // pred_check
        %p374 = pneg %p156
      $region26: #{agent_attention.1} parent=11 // pred_check_branch
        %376 = sbr.rel (%p374) target = $region28
      $region27: #{agent_attention.1} parent=11 // pred_region
        _
      $region28: #{agent_attention.1} parent=11 // pred_fallthru
        _
      // Predicated region
      $region29: #{agent_attention.1} parent=11 // pred_check
        %p377 = pneg %p177
      $region30: #{agent_attention.1} parent=11 // pred_check_branch
        %379 = sbr.rel (%p377) target = $region32
      $region31: #{agent_attention.1} parent=11 // pred_region
        _
      $region32: #{agent_attention.1} parent=11 // pred_fallthru
        _
      // Predicated region
      $region33: #{agent_attention.1} parent=11 // pred_check
        %p380 = pneg %p198
      $region34: #{agent_attention.1} parent=11 // pred_check_branch
        %382 = sbr.rel (%p380) target = $region36
      $region35: #{agent_attention.1} parent=11 // pred_region
        _
      $region36: #{agent_attention.1} parent=11 // pred_fallthru
        _
      // Predicated region
      $region37: #{agent_attention.1} parent=11 // pred_check
        %p383 = pneg %p219
      $region38: #{agent_attention.1} parent=11 // pred_check_branch
        %385 = sbr.rel (%p383) target = $region40
      $region39: #{agent_attention.1} parent=11 // pred_region
        _
      $region40: #{agent_attention.1} parent=11 // pred_fallthru
        _
      // Predicated region
      $region41: #{agent_attention.1} parent=11 // pred_check
        %p386 = pneg %p240
      $region42: #{agent_attention.1} parent=11 // pred_check_branch
        %388 = sbr.rel (%p386) target = $region44
      $region43: #{agent_attention.1} parent=11 // pred_region
        _
      $region44: #{agent_attention.1} parent=11 // pred_fallthru
        _
      // Predicated region
      $region45: #{agent_attention.1} parent=11 // pred_check
        %p389 = pneg %p261
      $region46: #{agent_attention.1} parent=11 // pred_check_branch
        %391 = sbr.rel (%p389) target = $region48
      $region47: #{agent_attention.1} parent=11 // pred_region
        _
      $region48: #{agent_attention.1} parent=11 // pred_fallthru
        _
      // Predicated region
      $region49: #{agent_attention.1} parent=11 // pred_check
        %p392 = pneg %p282
      $region50: #{agent_attention.1} parent=11 // pred_check_branch
        %394 = sbr.rel (%p392) target = $region52
      $region51: #{agent_attention.1} parent=11 // pred_region
        _
      $region52: #{agent_attention.1} parent=11 // pred_fallthru
        _
      // Predicated region
      $region53: #{agent_attention.1} parent=11 // pred_check
        %p395 = pneg %p303
      $region54: #{agent_attention.1} parent=11 // pred_check_branch
        %397 = sbr.rel (%p395) target = $region56
      $region55: #{agent_attention.1} parent=11 // pred_region
        _
      $region56: #{agent_attention.1} parent=11 // pred_fallthru
        _
      // Predicated region
      $region57: #{agent_attention.1} parent=11 // pred_check
        %p398 = pneg %p324
      $region58: #{agent_attention.1} parent=11 // pred_check_branch
        %400 = sbr.rel (%p398) target = $region60
      $region59: #{agent_attention.1} parent=11 // pred_region
        _
      $region60: #{agent_attention.1} parent=11 // pred_fallthru
        _
    $region12: #{agent_attention.1} parent=5 // pred_fallthru
      _
    %p401 = scmp.lt.s32.totalorder %s20, 2
    // Predicated region
    $region61: #{agent_attention.1} parent=5 // pred_check
      %p402 = pneg %p401
    $region62: #{agent_attention.1} parent=5 // pred_check_branch
      %404 = sbr.rel (%p402) target = $region64
    $region63: #{agent_attention.1} parent=5 // pred_region
      // Predicated region
      $region65: #{agent_attention.1} parent=63 // pred_check
        %p405 = pneg %p40
      $region66: #{agent_attention.1} parent=63 // pred_check_branch
        %407 = sbr.rel (%p405) target = $region68
      $region67: #{agent_attention.1} parent=63 // pred_region
        %p408 = scmp.lt.s32.totalorder %s20, 1
        %s409 = scalar_select %p408, %s20, 1
        %s410 = smul.addr %s409, 22
        %s411 = smul.addr %s410, 4
        %s412 = scalar_lea.vmem %s0, %s411
      $region68: #{agent_attention.1} parent=63 // pred_fallthru
        _
      // Predicated region
      $region69: #{agent_attention.1} parent=63 // pred_check
        %p413 = pneg %p66
      $region70: #{agent_attention.1} parent=63 // pred_check_branch
        %415 = sbr.rel (%p413) target = $region72
      $region71: #{agent_attention.1} parent=63 // pred_region
        %p416 = scmp.lt.s32.totalorder %s20, 1
        %s417 = scalar_select %p416, %s20, 1
        %s418 = smul.addr %s417, 4
        %s419 = smul.addr %s418, 4
        %s420 = scalar_lea.vmem %s1, %s419
      $region72: #{agent_attention.1} parent=63 // pred_fallthru
        _
    $region64: #{agent_attention.1} parent=5 // pred_fallthru
      _
    %p421 = scmp.le.s32.totalorder 1, %s20
    %p422 = scmp.lt.s32.totalorder %s20, 3
    %p423 = pnand %p421, %p422
    %p424 = pneg %p423
    // Predicated region
    $region73: #{agent_attention.1} parent=5 // pred_check
      _
    $region74: #{agent_attention.1} parent=5 // pred_check_branch
      %426 = sbr.rel (%p423) target = $region76
    $region75: #{agent_attention.1} parent=5 // pred_region
      %s427 = ssub.s32 %s20, 1
      %p428 = scmp.lt.s32.totalorder %s25, 1
      %s429 = scalar_select %p428, %s25, 1
      %s430 = smul.addr %s429, 22
      %s431 = smul.addr %s430, 4
      %s432 = scalar_lea.vmem %s0, %s431
      %p433 = pneg %p46
      %p434 = pneg %p43
      %p435 = scmp.lt.s32.totalorder %s25, 1
      %s436 = scalar_select %p435, %s25, 1
      %s437 = smul.addr %s436, 4
      %s438 = smul.addr %s437, 4
      %s439 = scalar_lea.vmem %s1, %s438
      %p440 = pneg %p72
      %p441 = pneg %p69
      %p442 = pneg %p93
      %p443 = pneg %p90
      %p444 = pneg %p114
      %p445 = pneg %p111
      %p446 = pneg %p135
      %p447 = pneg %p132
      %p448 = pneg %p156
      %p449 = pneg %p153
      %p450 = pneg %p177
      %p451 = pneg %p174
      %p452 = pneg %p198
      %p453 = pneg %p195
      %p454 = pneg %p219
      %p455 = pneg %p216
      %p456 = pneg %p240
      %p457 = pneg %p237
      %p458 = pneg %p261
      %p459 = pneg %p258
      %p460 = pneg %p282
      %p461 = pneg %p279
      %p462 = pneg %p303
      %p463 = pneg %p300
      %p464 = pneg %p324
      %p465 = pneg %p321
      %p466 = pneg %p350
      %p467 = pneg %p347
      %p468 = scmp.lt.s32.totalorder %s25, 1
      %s469 = scalar_select %p468, %s25, 1
      %s470 = smul.addr %s469, 22
      %s471 = smul.addr %s470, 8
      %s472 = scalar_lea.vmem %s14, %s471
      %p473 = scmp.lt.s32.totalorder %s25, 1
      %s474 = scalar_select %p473, %s25, 1
      %s475 = smul.addr %s474, 22
      %s476 = smul.addr %s475, 4
      %s477 = scalar_lea.vmem %s0, %s476
      %p478 = scmp.lt.s32.totalorder %s25, 1
      %s479 = scalar_select %p478, %s25, 1
      %s480 = smul.addr %s479, 4
      %s481 = smul.addr %s480, 4
      %s482 = scalar_lea.vmem %s1, %s481
      %p483 = scmp.lt.s32.totalorder %s25, 1
      %s484 = scalar_select %p483, %s25, 1
      %s485 = smul.addr %s484, 22
      %s486 = smul.addr %s485, 8
      %s487 = scalar_lea.vmem %s14, %s486
      %v489 = vld [vmem:[%s7] sm:$0xf]
      %v490 = vld [vmem:[%s7 + $0x4] sm:$0xf]
      %v491 = vld [vmem:[%s12] sm:$0x1]
      %v492 = vld [vmem:[%s13] sm:$0x1]
      %vm493 = vcmask 130048
      %494 = vst.msk [vmem:[#allocation2] sm:$0xff] %vm493, 0.0
      %495 = vst.msk [vmem:[#allocation2 + $0x8] sm:$0xff] %vm493, 0.0
      %496 = vst.msk [vmem:[#allocation2 + $0x10] sm:$0xff] %vm493, 0.0
      %497 = vst.msk [vmem:[#allocation2 + $0x18] sm:$0xff] %vm493, 0.0
      %498 = vst.msk [vmem:[#allocation2 + $0x20] sm:$0xff] %vm493, 0.0
      %499 = vst.msk [vmem:[#allocation2 + $0x28] sm:$0xff] %vm493, 0.0
      %500 = vst.msk [vmem:[#allocation2 + $0x30] sm:$0xff] %vm493, 0.0
      %501 = vst.msk [vmem:[#allocation2 + $0x38] sm:$0xff] %vm493, 0.0
      %502 = vst.msk [vmem:[#allocation2 + $0x40] sm:$0xff] %vm493, 0.0
      %503 = vst.msk [vmem:[#allocation2 + $0x48] sm:$0xff] %vm493, 0.0
      %504 = vst.msk [vmem:[#allocation2 + $0x50] sm:$0xff] %vm493, 0.0
      %505 = vst.msk [vmem:[#allocation2 + $0x58] sm:$0xff] %vm493, 0.0
      %506 = vst.msk [vmem:[#allocation2 + $0x60] sm:$0xff] %vm493, 0.0
      %507 = vst.msk [vmem:[#allocation2 + $0x68] sm:$0xff] %vm493, 0.0
      %508 = vst.msk [vmem:[#allocation2 + $0x70] sm:$0xff] %vm493, 0.0
      %509 = vst.msk [vmem:[#allocation2 + $0x78] sm:$0xff] %vm493, 0.0
      %510 = vst.msk [vmem:[#allocation2 + $0x80] sm:$0xff] %vm493, 0.0
      %511 = vst.msk [vmem:[#allocation2 + $0x88] sm:$0xff] %vm493, 0.0
      %512 = vst.msk [vmem:[#allocation2 + $0x90] sm:$0xff] %vm493, 0.0
      %513 = vst.msk [vmem:[#allocation2 + $0x98] sm:$0xff] %vm493, 0.0
      %514 = vst.msk [vmem:[#allocation2 + $0xa0] sm:$0xff] %vm493, 0.0
      %515 = vst.msk [vmem:[#allocation2 + $0xa8] sm:$0xff] %vm493, 0.0
      %516 = vst.msk [vmem:[#allocation2 + $0xb0] sm:$0xff] %vm493, 0.0
      %517 = vst.msk [vmem:[#allocation2 + $0xb8] sm:$0xff] %vm493, 0.0
      %vm518 = vcmask 126976
      %519 = vst.msk [vmem:[#allocation2 + $0xc0] sm:$0x1f] %vm518, 0.0
      %v520 = vld [vmem:[%s477] sm:$0xf]
      %v521 = vld [vmem:[%s477 + $0x4] sm:$0xf]
      %v522 = vld [vmem:[%s477 + $0x8] sm:$0xf]
      %v523 = vld [vmem:[%s477 + $0xc] sm:$0xf]
      %v524 = vld [vmem:[%s477 + $0x10] sm:$0xf]
      %v525 = vld [vmem:[%s477 + $0x14] sm:$0xf]
      %v526 = vld [vmem:[%s477 + $0x18] sm:$0xf]
      %v527 = vld [vmem:[%s477 + $0x1c] sm:$0xf]
      %v528 = vld [vmem:[%s477 + $0x20] sm:$0xf]
      %v529 = vld [vmem:[%s477 + $0x24] sm:$0xf]
      %v530 = vld [vmem:[%s477 + $0x28] sm:$0xf]
      %v531 = vld [vmem:[%s477 + $0x2c] sm:$0xf]
      %v532 = vld [vmem:[%s477 + $0x30] sm:$0xf]
      %v533 = vld [vmem:[%s477 + $0x34] sm:$0xf]
      %v534 = vld [vmem:[%s477 + $0x38] sm:$0xf]
      %v535 = vld [vmem:[%s477 + $0x3c] sm:$0xf]
      %v536 = vld [vmem:[%s477 + $0x40] sm:$0xf]
      %v537 = vld [vmem:[%s477 + $0x44] sm:$0xf]
      %v538 = vld [vmem:[%s477 + $0x48] sm:$0xf]
      %v539 = vld [vmem:[%s477 + $0x4c] sm:$0xf]
      %v540 = vld [vmem:[%s477 + $0x50] sm:$0xf]
      %v541 = vld [vmem:[%s477 + $0x54] sm:$0x1]
      %v542 = vld [vmem:[%s482] sm:$0xff]
      %v543 = vld [vmem:[%s482 + $0x8] sm:$0xff]
      %v544 = vld [vmem:[%s6] sm:$0xf]
      %v545 = vld [vmem:[%s6 + $0x4] sm:$0xf]
      %v568 = vunpack.c.l.b16 %v520
      %v569 = vunpack.c.l.b16 %v521
      %v570 = vunpack.c.l.b16 %v522
      %v571 = vunpack.c.l.b16 %v523
      %v572 = vunpack.c.l.b16 %v524
      %v573 = vunpack.c.l.b16 %v525
      %v574 = vunpack.c.l.b16 %v526
      %v575 = vunpack.c.l.b16 %v527
      %v576 = vunpack.c.l.b16 %v528
      %v577 = vunpack.c.l.b16 %v529
      %v578 = vunpack.c.l.b16 %v530
      %v579 = vunpack.c.l.b16 %v531
      %v580 = vunpack.c.l.b16 %v532
      %v581 = vunpack.c.l.b16 %v533
      %v582 = vunpack.c.l.b16 %v534
      %v583 = vunpack.c.l.b16 %v535
      %v584 = vunpack.c.l.b16 %v536
      %v585 = vunpack.c.l.b16 %v537
      %v586 = vunpack.c.l.b16 %v538
      %v587 = vunpack.c.l.b16 %v539
      %v588 = vunpack.c.l.b16 %v540
      %v589 = vunpack.c.l.b16 %v541
      %v590 = vpack.c.b16 %v569, %v568
      %v591 = vpack.c.b16 %v571, %v570
      %v592 = vpack.c.b16 %v573, %v572
      %v593 = vpack.c.b16 %v575, %v574
      %v594 = vpack.c.b16 %v577, %v576
      %v595 = vpack.c.b16 %v579, %v578
      %v596 = vpack.c.b16 %v581, %v580
      %v597 = vpack.c.b16 %v583, %v582
      %v598 = vpack.c.b16 %v585, %v584
      %v599 = vpack.c.b16 %v587, %v586
      %v600 = vpack.c.b16 %v589, %v588
      %v603 = vunpack.c.l.b16 %v544
      %v604 = vunpack.c.l.b16 %v545
      %v605 = vpack.c.b16 %v604, %v603
      %v608 = vsel %vm493, %v590, 0
      %v611 = vsel %vm493, %v591, 0
      %v614 = vsel %vm493, %v592, 0
      %v617 = vsel %vm493, %v593, 0
      %v620 = vsel %vm493, %v594, 0
      %v623 = vsel %vm493, %v595, 0
      %v626 = vsel %vm493, %v596, 0
      %v629 = vsel %vm493, %v597, 0
      %v632 = vsel %vm493, %v598, 0
      %v635 = vsel %vm493, %v599, 0
      %v638 = vsel %vm493, %v600, 0
      %640 = vmatprep.subr.bf16.mxu0 0
      %641 = vmatpush1.bf16.msra.mxu0 %v605
      %642 = vmatprep.subr.bf16.mxu0 0
      %643 = vmatpush1.bf16.msra.mxu0 0
      %644 = vmatprep.subr.bf16.mxu0 0
      %645 = vmatpush1.bf16.msra.mxu0 0
      %646 = vmatprep.subr.bf16.mxu0 0
      %647 = vmatpush1.bf16.msra.mxu0 0
      %648 = vmatprep.subr.bf16.mxu0 0
      %649 = vmatpush1.bf16.msra.mxu0 0
      %650 = vmatprep.subr.bf16.mxu0 0
      %651 = vmatpush1.bf16.msra.mxu0 0
      %652 = vmatprep.subr.bf16.mxu0 0
      %653 = vmatpush1.bf16.msra.mxu0 0
      %654 = vmatprep.subr.bf16.mxu0 0
      %655 = vmatpush1.bf16.msra.mxu0 0
      %656 = vmatprep.subr.bf16.mxu0 0
      %657 = vmatpush1.bf16.msra.mxu0 0
      %658 = vmatprep.subr.bf16.mxu0 0
      %659 = vmatpush1.bf16.msra.mxu0 0
      %660 = vmatprep.subr.bf16.mxu0 0
      %661 = vmatpush1.bf16.msra.mxu0 0
      %662 = vmatprep.subr.bf16.mxu0 0
      %663 = vmatpush1.bf16.msra.mxu0 0
      %664 = vmatprep.subr.bf16.mxu0 0
      %665 = vmatpush1.bf16.msra.mxu0 0
      %666 = vmatprep.subr.bf16.mxu0 0
      %667 = vmatpush1.bf16.msra.mxu0 0
      %668 = vmatprep.subr.bf16.mxu0 0
      %669 = vmatpush1.bf16.msra.mxu0 0
      %670 = vmatprep.subr.bf16.mxu0 0
      %671 = vmatpush1.bf16.msra.mxu0 0
      %672 = vmatprep.mubr.bf16.mxu0 0
      %673 = vmatmul.mubr.bf16.gmra.mrb[0].mxu0 %v608
      %v674 = vpop.f32.mrb[0].mxu0
      %v675 = vadd.f32 0.0, %v674
      %v676 = vpop.f32.mrb[0].mxu0
      %v677 = vpop.f32.mrb[0].mxu0
      %v678 = vadd.f32 0.0, %v677
      %v679 = vpop.f32.mrb[0].mxu0
      %680 = vmatprep.mubr.bf16.mxu0 0
      %681 = vmatmul.mubr.bf16.gmra.mrb[0].mxu0 %v611
      %v682 = vpop.f32.mrb[0].mxu0
      %v683 = vadd.f32 0.0, %v682
      %v684 = vpop.f32.mrb[0].mxu0
      %v685 = vpop.f32.mrb[0].mxu0
      %v686 = vadd.f32 0.0, %v685
      %v687 = vpop.f32.mrb[0].mxu0
      %688 = vmatprep.mubr.bf16.mxu0 0
      %689 = vmatmul.mubr.bf16.gmra.mrb[0].mxu0 %v614
      %v690 = vpop.f32.mrb[0].mxu0
      %v691 = vadd.f32 0.0, %v690
      %v692 = vpop.f32.mrb[0].mxu0
      %v693 = vpop.f32.mrb[0].mxu0
      %v694 = vadd.f32 0.0, %v693
      %v695 = vpop.f32.mrb[0].mxu0
      %696 = vmatprep.mubr.bf16.mxu0 0
      %697 = vmatmul.mubr.bf16.gmra.mrb[0].mxu0 %v617
      %v698 = vpop.f32.mrb[0].mxu0
      %v699 = vadd.f32 0.0, %v698
      %v700 = vpop.f32.mrb[0].mxu0
      %v701 = vpop.f32.mrb[0].mxu0
      %v702 = vadd.f32 0.0, %v701
      %v703 = vpop.f32.mrb[0].mxu0
      %704 = vmatprep.mubr.bf16.mxu0 0
      %705 = vmatmul.mubr.bf16.gmra.mrb[0].mxu0 %v620
      %v706 = vpop.f32.mrb[0].mxu0
      %v707 = vadd.f32 0.0, %v706
      %v708 = vpop.f32.mrb[0].mxu0
      %v709 = vpop.f32.mrb[0].mxu0
      %v710 = vadd.f32 0.0, %v709
      %v711 = vpop.f32.mrb[0].mxu0
      %712 = vmatprep.mubr.bf16.mxu0 0
      %713 = vmatmul.mubr.bf16.gmra.mrb[0].mxu0 %v623
      %v714 = vpop.f32.mrb[0].mxu0
      %v715 = vadd.f32 0.0, %v714
      %v716 = vpop.f32.mrb[0].mxu0
      %v717 = vpop.f32.mrb[0].mxu0
      %v718 = vadd.f32 0.0, %v717
      %v719 = vpop.f32.mrb[0].mxu0
      %720 = vmatprep.mubr.bf16.mxu0 0
      %721 = vmatmul.mubr.bf16.gmra.mrb[0].mxu0 %v626
      %v722 = vpop.f32.mrb[0].mxu0
      %v723 = vadd.f32 0.0, %v722
      %v724 = vpop.f32.mrb[0].mxu0
      %v725 = vpop.f32.mrb[0].mxu0
      %v726 = vadd.f32 0.0, %v725
      %v727 = vpop.f32.mrb[0].mxu0
      %728 = vmatprep.mubr.bf16.mxu0 0
      %729 = vmatmul.mubr.bf16.gmra.mrb[0].mxu0 %v629
      %v730 = vpop.f32.mrb[0].mxu0
      %v731 = vadd.f32 0.0, %v730
      %v732 = vpop.f32.mrb[0].mxu0
      %v733 = vpop.f32.mrb[0].mxu0
      %v734 = vadd.f32 0.0, %v733
      %v735 = vpop.f32.mrb[0].mxu0
      %736 = vmatprep.mubr.bf16.mxu0 0
      %737 = vmatmul.mubr.bf16.gmra.mrb[0].mxu0 %v632
      %v738 = vpop.f32.mrb[0].mxu0
      %v739 = vadd.f32 0.0, %v738
      %v740 = vpop.f32.mrb[0].mxu0
      %v741 = vpop.f32.mrb[0].mxu0
      %v742 = vadd.f32 0.0, %v741
      %v743 = vpop.f32.mrb[0].mxu0
      %744 = vmatprep.mubr.bf16.mxu0 0
      %745 = vmatmul.mubr.bf16.gmra.mrb[0].mxu0 %v635
      %v746 = vpop.f32.mrb[0].mxu0
      %v747 = vadd.f32 0.0, %v746
      %v748 = vpop.f32.mrb[0].mxu0
      %v749 = vpop.f32.mrb[0].mxu0
      %v750 = vadd.f32 0.0, %v749
      %v751 = vpop.f32.mrb[0].mxu0
      %752 = vmatprep.mubr.bf16.mxu0 0
      %753 = vmatmul.mubr.bf16.gmra.mrb[0].mxu0 %v638
      %v754 = vpop.f32.mrb[0].mxu0
      %v755 = vadd.f32 0.0, %v754
      %v756 = vpop.f32.mrb[0].mxu0
      %v757 = vpop.f32.mrb[0].mxu0
      %v758 = vadd.f32 0.0, %v757
      %v759 = vpop.f32.mrb[0].mxu0
      %760 = vdwg.mxu0
      %761 = vst.msk [vmem:[#allocation2 + $0xe] sm:$0xff] %vm493, %v675
      %762 = vst.msk [vmem:[#allocation2 + $0x16] sm:$0xff] %vm493, %v678
      %763 = vst.msk [vmem:[#allocation2 + $0x1e] sm:$0xff] %vm493, %v683
      %764 = vst.msk [vmem:[#allocation2 + $0x26] sm:$0xff] %vm493, %v686
      %765 = vst.msk [vmem:[#allocation2 + $0x2e] sm:$0xff] %vm493, %v691
      %766 = vst.msk [vmem:[#allocation2 + $0x36] sm:$0xff] %vm493, %v694
      %767 = vst.msk [vmem:[#allocation2 + $0x3e] sm:$0xff] %vm493, %v699
      %768 = vst.msk [vmem:[#allocation2 + $0x46] sm:$0xff] %vm493, %v702
      %769 = vst.msk [vmem:[#allocation2 + $0x4e] sm:$0xff] %vm493, %v707
      %770 = vst.msk [vmem:[#allocation2 + $0x56] sm:$0xff] %vm493, %v710
      %771 = vst.msk [vmem:[#allocation2 + $0x5e] sm:$0xff] %vm493, %v715
      %772 = vst.msk [vmem:[#allocation2 + $0x66] sm:$0xff] %vm493, %v718
      %773 = vst.msk [vmem:[#allocation2 + $0x6e] sm:$0xff] %vm493, %v723
      %774 = vst.msk [vmem:[#allocation2 + $0x76] sm:$0xff] %vm493, %v726
      %775 = vst.msk [vmem:[#allocation2 + $0x7e] sm:$0xff] %vm493, %v731
      %776 = vst.msk [vmem:[#allocation2 + $0x86] sm:$0xff] %vm493, %v734
      %777 = vst.msk [vmem:[#allocation2 + $0x8e] sm:$0xff] %vm493, %v739
      %778 = vst.msk [vmem:[#allocation2 + $0x96] sm:$0xff] %vm493, %v742
      %779 = vst.msk [vmem:[#allocation2 + $0x9e] sm:$0xff] %vm493, %v747
      %780 = vst.msk [vmem:[#allocation2 + $0xa6] sm:$0xff] %vm493, %v750
      %781 = vst.msk [vmem:[#allocation2 + $0xae] sm:$0xff] %vm493, %v755
      %vm782 = vcmask 122880
      %783 = vst.msk [vmem:[#allocation2 + $0xb6] sm:$0x1] %vm782, %v758
      %v784 = vld [vmem:[#allocation2] sm:$0xff]
      %v785 = vld [vmem:[#allocation2 + $0x8] sm:$0xff]
      %v786 = vld [vmem:[#allocation2 + $0x10] sm:$0xff]
      %v787 = vld [vmem:[#allocation2 + $0x18] sm:$0xff]
      %v788 = vld [vmem:[#allocation2 + $0x20] sm:$0xff]
      %v789 = vld [vmem:[#allocation2 + $0x28] sm:$0xff]
      %v790 = vld [vmem:[#allocation2 + $0x30] sm:$0xff]
      %v791 = vld [vmem:[#allocation2 + $0x38] sm:$0xff]
      %v792 = vld [vmem:[#allocation2 + $0x40] sm:$0xff]
      %v793 = vld [vmem:[#allocation2 + $0x48] sm:$0xff]
      %v794 = vld [vmem:[#allocation2 + $0x50] sm:$0xff]
      %v795 = vld [vmem:[#allocation2 + $0x58] sm:$0xff]
      %v796 = vld [vmem:[#allocation2 + $0x60] sm:$0xff]
      %v797 = vld [vmem:[#allocation2 + $0x68] sm:$0xff]
      %v798 = vld [vmem:[#allocation2 + $0x70] sm:$0xff]
      %v799 = vld [vmem:[#allocation2 + $0x78] sm:$0xff]
      %v800 = vld [vmem:[#allocation2 + $0x80] sm:$0xff]
      %v801 = vld [vmem:[#allocation2 + $0x88] sm:$0xff]
      %v802 = vld [vmem:[#allocation2 + $0x90] sm:$0xff]
      %v803 = vld [vmem:[#allocation2 + $0x98] sm:$0xff]
      %v804 = vld [vmem:[#allocation2 + $0xa0] sm:$0xff]
      %v805 = vld [vmem:[#allocation2 + $0xa8] sm:$0x1]
      %v806 = vld [vmem:[%s11] sm:$0xff]
      %v807 = vld [vmem:[%s11 + $0x8] sm:$0xff]
      %v808 = vld [vmem:[%s11 + $0x10] sm:$0xff]
      %v809 = vld [vmem:[%s11 + $0x18] sm:$0xff]
      %v810 = vld [vmem:[%s11 + $0x20] sm:$0xff]
      %v811 = vld [vmem:[%s11 + $0x28] sm:$0xff]
      %v812 = vld [vmem:[%s11 + $0x30] sm:$0xff]
      %v813 = vld [vmem:[%s11 + $0x38] sm:$0xff]
      %v814 = vld [vmem:[%s11 + $0x40] sm:$0xff]
      %v815 = vld [vmem:[%s11 + $0x48] sm:$0xff]
      %v816 = vld [vmem:[%s11 + $0x50] sm:$0xff]
      %v817 = vld [vmem:[%s11 + $0x58] sm:$0xff]
      %v818 = vld [vmem:[%s11 + $0x60] sm:$0xff]
      %v819 = vld [vmem:[%s11 + $0x68] sm:$0xff]
      %v820 = vld [vmem:[%s11 + $0x70] sm:$0xff]
      %v821 = vld [vmem:[%s11 + $0x78] sm:$0xff]
      %v822 = vld [vmem:[%s11 + $0x80] sm:$0xff]
      %v823 = vld [vmem:[%s11 + $0x88] sm:$0xff]
      %v824 = vld [vmem:[%s11 + $0x90] sm:$0xff]
      %v825 = vld [vmem:[%s11 + $0x98] sm:$0xff]
      %v826 = vld [vmem:[%s11 + $0xa0] sm:$0xff]
      %v827 = vld [vmem:[%s11 + $0xa8] sm:$0x1]
      %v828 = vmul.f32 %v806, %v784
      %v829 = vmul.f32 %v807, %v785
      %v830 = vmul.f32 %v808, %v786
      %v831 = vmul.f32 %v809, %v787
      %v832 = vmul.f32 %v810, %v788
      %v833 = vmul.f32 %v811, %v789
      %v834 = vmul.f32 %v812, %v790
      %v835 = vmul.f32 %v813, %v791
      %v836 = vmul.f32 %v814, %v792
      %v837 = vmul.f32 %v815, %v793
      %v838 = vmul.f32 %v816, %v794
      %v839 = vmul.f32 %v817, %v795
      %v840 = vmul.f32 %v818, %v796
      %v841 = vmul.f32 %v819, %v797
      %v842 = vmul.f32 %v820, %v798
      %v843 = vmul.f32 %v821, %v799
      %v844 = vmul.f32 %v822, %v800
      %v845 = vmul.f32 %v823, %v801
      %v846 = vmul.f32 %v824, %v802
      %v847 = vmul.f32 %v825, %v803
      %v848 = vmul.f32 %v826, %v804
      %v849 = vmul.f32 %v827, %v805
      %v850 = vadd.f32 %v828, 0.0
      %v851 = vadd.f32 %v829, 0.0
      %v852 = vadd.f32 %v830, 0.0
      %v853 = vadd.f32 %v831, 0.0
      %v854 = vadd.f32 %v832, 0.0
      %v855 = vadd.f32 %v833, 0.0
      %v856 = vadd.f32 %v834, 0.0
      %v857 = vadd.f32 %v835, 0.0
      %v858 = vadd.f32 %v836, 0.0
      %v859 = vadd.f32 %v837, 0.0
      %v860 = vadd.f32 %v838, 0.0
      %v861 = vadd.f32 %v839, 0.0
      %v862 = vadd.f32 %v840, 0.0
      %v863 = vadd.f32 %v841, 0.0
      %v864 = vadd.f32 %v842, 0.0
      %v865 = vadd.f32 %v843, 0.0
      %v866 = vadd.f32 %v844, 0.0
      %v867 = vadd.f32 %v845, 0.0
      %v868 = vadd.f32 %v846, 0.0
      %v869 = vadd.f32 %v847, 0.0
      %v870 = vadd.f32 %v848, 0.0
      %v871 = vadd.f32 %v849, 0.0
      %v872 = vld [vmem:[#allocation2 + $0x1] sm:$0xff]
      %v873 = vld [vmem:[#allocation2 + $0x9] sm:$0xff]
      %v874 = vld [vmem:[#allocation2 + $0x11] sm:$0xff]
      %v875 = vld [vmem:[#allocation2 + $0x19] sm:$0xff]
      %v876 = vld [vmem:[#allocation2 + $0x21] sm:$0xff]
      %v877 = vld [vmem:[#allocation2 + $0x29] sm:$0xff]
      %v878 = vld [vmem:[#allocation2 + $0x31] sm:$0xff]
      %v879 = vld [vmem:[#allocation2 + $0x39] sm:$0xff]
      %v880 = vld [vmem:[#allocation2 + $0x41] sm:$0xff]
      %v881 = vld [vmem:[#allocation2 + $0x49] sm:$0xff]
      %v882 = vld [vmem:[#allocation2 + $0x51] sm:$0xff]
      %v883 = vld [vmem:[#allocation2 + $0x59] sm:$0xff]
      %v884 = vld [vmem:[#allocation2 + $0x61] sm:$0xff]
      %v885 = vld [vmem:[#allocation2 + $0x69] sm:$0xff]
      %v886 = vld [vmem:[#allocation2 + $0x71] sm:$0xff]
      %v887 = vld [vmem:[#allocation2 + $0x79] sm:$0xff]
      %v888 = vld [vmem:[#allocation2 + $0x81] sm:$0xff]
      %v889 = vld [vmem:[#allocation2 + $0x89] sm:$0xff]
      %v890 = vld [vmem:[#allocation2 + $0x91] sm:$0xff]
      %v891 = vld [vmem:[#allocation2 + $0x99] sm:$0xff]
      %v892 = vld [vmem:[#allocation2 + $0xa1] sm:$0xff]
      %v893 = vld [vmem:[#allocation2 + $0xa9] sm:$0x1]
      %s894 = scalar_lea.vmem %s11, 176
      %v895 = vld [vmem:[%s894] sm:$0xff]
      %v896 = vld [vmem:[%s894 + $0x8] sm:$0xff]
      %v897 = vld [vmem:[%s894 + $0x10] sm:$0xff]
      %v898 = vld [vmem:[%s894 + $0x18] sm:$0xff]
      %v899 = vld [vmem:[%s894 + $0x20] sm:$0xff]
      %v900 = vld [vmem:[%s894 + $0x28] sm:$0xff]
      %v901 = vld [vmem:[%s894 + $0x30] sm:$0xff]
      %v902 = vld [vmem:[%s894 + $0x38] sm:$0xff]
      %v903 = vld [vmem:[%s894 + $0x40] sm:$0xff]
      %v904 = vld [vmem:[%s894 + $0x48] sm:$0xff]
      %v905 = vld [vmem:[%s894 + $0x50] sm:$0xff]
      %v906 = vld [vmem:[%s894 + $0x58] sm:$0xff]
      %v907 = vld [vmem:[%s894 + $0x60] sm:$0xff]
      %v908 = vld [vmem:[%s894 + $0x68] sm:$0xff]
      %v909 = vld [vmem:[%s894 + $0x70] sm:$0xff]
      %v910 = vld [vmem:[%s894 + $0x78] sm:$0xff]
      %v911 = vld [vmem:[%s894 + $0x80] sm:$0xff]
      %v912 = vld [vmem:[%s894 + $0x88] sm:$0xff]
      %v913 = vld [vmem:[%s894 + $0x90] sm:$0xff]
      %v914 = vld [vmem:[%s894 + $0x98] sm:$0xff]
      %v915 = vld [vmem:[%s894 + $0xa0] sm:$0xff]
      %v916 = vld [vmem:[%s894 + $0xa8] sm:$0x1]
      %v917 = vmul.f32 %v895, %v872
      %v918 = vmul.f32 %v896, %v873
      %v919 = vmul.f32 %v897, %v874
      %v920 = vmul.f32 %v898, %v875
      %v921 = vmul.f32 %v899, %v876
      %v922 = vmul.f32 %v900, %v877
      %v923 = vmul.f32 %v901, %v878
      %v924 = vmul.f32 %v902, %v879
      %v925 = vmul.f32 %v903, %v880
      %v926 = vmul.f32 %v904, %v881
      %v927 = vmul.f32 %v905, %v882
      %v928 = vmul.f32 %v906, %v883
      %v929 = vmul.f32 %v907, %v884
      %v930 = vmul.f32 %v908, %v885
      %v931 = vmul.f32 %v909, %v886
      %v932 = vmul.f32 %v910, %v887
      %v933 = vmul.f32 %v911, %v888
      %v934 = vmul.f32 %v912, %v889
      %v935 = vmul.f32 %v913, %v890
      %v936 = vmul.f32 %v914, %v891
      %v937 = vmul.f32 %v915, %v892
      %v938 = vmul.f32 %v916, %v893
      %v939 = vadd.f32 %v850, %v917
      %v940 = vadd.f32 %v851, %v918
      %v941 = vadd.f32 %v852, %v919
      %v942 = vadd.f32 %v853, %v920
      %v943 = vadd.f32 %v854, %v921
      %v944 = vadd.f32 %v855, %v922
      %v945 = vadd.f32 %v856, %v923
      %v946 = vadd.f32 %v857, %v924
      %v947 = vadd.f32 %v858, %v925
      %v948 = vadd.f32 %v859, %v926
      %v949 = vadd.f32 %v860, %v927
      %v950 = vadd.f32 %v861, %v928
      %v951 = vadd.f32 %v862, %v929
      %v952 = vadd.f32 %v863, %v930
      %v953 = vadd.f32 %v864, %v931
      %v954 = vadd.f32 %v865, %v932
      %v955 = vadd.f32 %v866, %v933
      %v956 = vadd.f32 %v867, %v934
      %v957 = vadd.f32 %v868, %v935
      %v958 = vadd.f32 %v869, %v936
      %v959 = vadd.f32 %v870, %v937
      %v960 = vadd.f32 %v871, %v938
      %v961 = vld [vmem:[#allocation2 + $0x2] sm:$0xff]
      %v962 = vld [vmem:[#allocation2 + $0xa] sm:$0xff]
      %v963 = vld [vmem:[#allocation2 + $0x12] sm:$0xff]
      %v964 = vld [vmem:[#allocation2 + $0x1a] sm:$0xff]
      %v965 = vld [vmem:[#allocation2 + $0x22] sm:$0xff]
      %v966 = vld [vmem:[#allocation2 + $0x2a] sm:$0xff]
      %v967 = vld [vmem:[#allocation2 + $0x32] sm:$0xff]
      %v968 = vld [vmem:[#allocation2 + $0x3a] sm:$0xff]
      %v969 = vld [vmem:[#allocation2 + $0x42] sm:$0xff]
      %v970 = vld [vmem:[#allocation2 + $0x4a] sm:$0xff]
      %v971 = vld [vmem:[#allocation2 + $0x52] sm:$0xff]
      %v972 = vld [vmem:[#allocation2 + $0x5a] sm:$0xff]
      %v973 = vld [vmem:[#allocation2 + $0x62] sm:$0xff]
      %v974 = vld [vmem:[#allocation2 + $0x6a] sm:$0xff]
      %v975 = vld [vmem:[#allocation2 + $0x72] sm:$0xff]
      %v976 = vld [vmem:[#allocation2 + $0x7a] sm:$0xff]
      %v977 = vld [vmem:[#allocation2 + $0x82] sm:$0xff]
      %v978 = vld [vmem:[#allocation2 + $0x8a] sm:$0xff]
      %v979 = vld [vmem:[#allocation2 + $0x92] sm:$0xff]
      %v980 = vld [vmem:[#allocation2 + $0x9a] sm:$0xff]
      %v981 = vld [vmem:[#allocation2 + $0xa2] sm:$0xff]
      %v982 = vld [vmem:[#allocation2 + $0xaa] sm:$0x1]
      %s983 = scalar_lea.vmem %s11, 352
      %v984 = vld [vmem:[%s983] sm:$0xff]
      %v985 = vld [vmem:[%s983 + $0x8] sm:$0xff]
      %v986 = vld [vmem:[%s983 + $0x10] sm:$0xff]
      %v987 = vld [vmem:[%s983 + $0x18] sm:$0xff]
      %v988 = vld [vmem:[%s983 + $0x20] sm:$0xff]
      %v989 = vld [vmem:[%s983 + $0x28] sm:$0xff]
      %v990 = vld [vmem:[%s983 + $0x30] sm:$0xff]
      %v991 = vld [vmem:[%s983 + $0x38] sm:$0xff]
      %v992 = vld [vmem:[%s983 + $0x40] sm:$0xff]
      %v993 = vld [vmem:[%s983 + $0x48] sm:$0xff]
      %v994 = vld [vmem:[%s983 + $0x50] sm:$0xff]
      %v995 = vld [vmem:[%s983 + $0x58] sm:$0xff]
      %v996 = vld [vmem:[%s983 + $0x60] sm:$0xff]
      %v997 = vld [vmem:[%s983 + $0x68] sm:$0xff]
      %v998 = vld [vmem:[%s983 + $0x70] sm:$0xff]
      %v999 = vld [vmem:[%s983 + $0x78] sm:$0xff]
      %v1000 = vld [vmem:[%s983 + $0x80] sm:$0xff]
      %v1001 = vld [vmem:[%s983 + $0x88] sm:$0xff]
      %v1002 = vld [vmem:[%s983 + $0x90] sm:$0xff]
      %v1003 = vld [vmem:[%s983 + $0x98] sm:$0xff]
      %v1004 = vld [vmem:[%s983 + $0xa0] sm:$0xff]
      %v1005 = vld [vmem:[%s983 + $0xa8] sm:$0x1]
      %v1006 = vmul.f32 %v984, %v961
      %v1007 = vmul.f32 %v985, %v962
      %v1008 = vmul.f32 %v986, %v963
      %v1009 = vmul.f32 %v987, %v964
      %v1010 = vmul.f32 %v988, %v965
      %v1011 = vmul.f32 %v989, %v966
      %v1012 = vmul.f32 %v990, %v967
      %v1013 = vmul.f32 %v991, %v968
      %v1014 = vmul.f32 %v992, %v969
      %v1015 = vmul.f32 %v993, %v970
      %v1016 = vmul.f32 %v994, %v971
      %v1017 = vmul.f32 %v995, %v972
      %v1018 = vmul.f32 %v996, %v973
      %v1019 = vmul.f32 %v997, %v974
      %v1020 = vmul.f32 %v998, %v975
      %v1021 = vmul.f32 %v999, %v976
      %v1022 = vmul.f32 %v1000, %v977
      %v1023 = vmul.f32 %v1001, %v978
      %v1024 = vmul.f32 %v1002, %v979
      %v1025 = vmul.f32 %v1003, %v980
      %v1026 = vmul.f32 %v1004, %v981
      %v1027 = vmul.f32 %v1005, %v982
      %v1028 = vadd.f32 %v939, %v1006
      %v1029 = vadd.f32 %v940, %v1007
      %v1030 = vadd.f32 %v941, %v1008
      %v1031 = vadd.f32 %v942, %v1009
      %v1032 = vadd.f32 %v943, %v1010
      %v1033 = vadd.f32 %v944, %v1011
      %v1034 = vadd.f32 %v945, %v1012
      %v1035 = vadd.f32 %v946, %v1013
      %v1036 = vadd.f32 %v947, %v1014
      %v1037 = vadd.f32 %v948, %v1015
      %v1038 = vadd.f32 %v949, %v1016
      %v1039 = vadd.f32 %v950, %v1017
      %v1040 = vadd.f32 %v951, %v1018
      %v1041 = vadd.f32 %v952, %v1019
      %v1042 = vadd.f32 %v953, %v1020
      %v1043 = vadd.f32 %v954, %v1021
      %v1044 = vadd.f32 %v955, %v1022
      %v1045 = vadd.f32 %v956, %v1023
      %v1046 = vadd.f32 %v957, %v1024
      %v1047 = vadd.f32 %v958, %v1025
      %v1048 = vadd.f32 %v959, %v1026
      %v1049 = vadd.f32 %v960, %v1027
      %v1050 = vld [vmem:[#allocation2 + $0xd] sm:$0xff]
      %v1051 = vld [vmem:[#allocation2 + $0x15] sm:$0xff]
      %v1052 = vld [vmem:[#allocation2 + $0x1d] sm:$0xff]
      %v1053 = vld [vmem:[#allocation2 + $0x25] sm:$0xff]
      %v1054 = vld [vmem:[#allocation2 + $0x2d] sm:$0xff]
      %v1055 = vld [vmem:[#allocation2 + $0x35] sm:$0xff]
      %v1056 = vld [vmem:[#allocation2 + $0x3d] sm:$0xff]
      %v1057 = vld [vmem:[#allocation2 + $0x45] sm:$0xff]
      %v1058 = vld [vmem:[#allocation2 + $0x4d] sm:$0xff]
      %v1059 = vld [vmem:[#allocation2 + $0x55] sm:$0xff]
      %v1060 = vld [vmem:[#allocation2 + $0x5d] sm:$0xff]
      %v1061 = vld [vmem:[#allocation2 + $0x65] sm:$0xff]
      %v1062 = vld [vmem:[#allocation2 + $0x6d] sm:$0xff]
      %v1063 = vld [vmem:[#allocation2 + $0x75] sm:$0xff]
      %v1064 = vld [vmem:[#allocation2 + $0x7d] sm:$0xff]
      %v1065 = vld [vmem:[#allocation2 + $0x85] sm:$0xff]
      %v1066 = vld [vmem:[#allocation2 + $0x8d] sm:$0xff]
      %v1067 = vld [vmem:[#allocation2 + $0x95] sm:$0xff]
      %v1068 = vld [vmem:[#allocation2 + $0x9d] sm:$0xff]
      %v1069 = vld [vmem:[#allocation2 + $0xa5] sm:$0xff]
      %v1070 = vld [vmem:[#allocation2 + $0xad] sm:$0xff]
      %v1071 = vld [vmem:[#allocation2 + $0xb5] sm:$0x1]
      %s1072 = scalar_lea.vmem %s11, 528
      %v1073 = vld [vmem:[%s1072] sm:$0xff]
      %v1074 = vld [vmem:[%s1072 + $0x8] sm:$0xff]
      %v1075 = vld [vmem:[%s1072 + $0x10] sm:$0xff]
      %v1076 = vld [vmem:[%s1072 + $0x18] sm:$0xff]
      %v1077 = vld [vmem:[%s1072 + $0x20] sm:$0xff]
      %v1078 = vld [vmem:[%s1072 + $0x28] sm:$0xff]
      %v1079 = vld [vmem:[%s1072 + $0x30] sm:$0xff]
      %v1080 = vld [vmem:[%s1072 + $0x38] sm:$0xff]
      %v1081 = vld [vmem:[%s1072 + $0x40] sm:$0xff]
      %v1082 = vld [vmem:[%s1072 + $0x48] sm:$0xff]
      %v1083 = vld [vmem:[%s1072 + $0x50] sm:$0xff]
      %v1084 = vld [vmem:[%s1072 + $0x58] sm:$0xff]
      %v1085 = vld [vmem:[%s1072 + $0x60] sm:$0xff]
      %v1086 = vld [vmem:[%s1072 + $0x68] sm:$0xff]
      %v1087 = vld [vmem:[%s1072 + $0x70] sm:$0xff]
      %v1088 = vld [vmem:[%s1072 + $0x78] sm:$0xff]
      %v1089 = vld [vmem:[%s1072 + $0x80] sm:$0xff]
      %v1090 = vld [vmem:[%s1072 + $0x88] sm:$0xff]
      %v1091 = vld [vmem:[%s1072 + $0x90] sm:$0xff]
      %v1092 = vld [vmem:[%s1072 + $0x98] sm:$0xff]
      %v1093 = vld [vmem:[%s1072 + $0xa0] sm:$0xff]
      %v1094 = vld [vmem:[%s1072 + $0xa8] sm:$0x1]
      %v1095 = vmul.f32 %v1073, %v1050
      %v1096 = vmul.f32 %v1074, %v1051
      %v1097 = vmul.f32 %v1075, %v1052
      %v1098 = vmul.f32 %v1076, %v1053
      %v1099 = vmul.f32 %v1077, %v1054
      %v1100 = vmul.f32 %v1078, %v1055
      %v1101 = vmul.f32 %v1079, %v1056
      %v1102 = vmul.f32 %v1080, %v1057
      %v1103 = vmul.f32 %v1081, %v1058
      %v1104 = vmul.f32 %v1082, %v1059
      %v1105 = vmul.f32 %v1083, %v1060
      %v1106 = vmul.f32 %v1084, %v1061
      %v1107 = vmul.f32 %v1085, %v1062
      %v1108 = vmul.f32 %v1086, %v1063
      %v1109 = vmul.f32 %v1087, %v1064
      %v1110 = vmul.f32 %v1088, %v1065
      %v1111 = vmul.f32 %v1089, %v1066
      %v1112 = vmul.f32 %v1090, %v1067
      %v1113 = vmul.f32 %v1091, %v1068
      %v1114 = vmul.f32 %v1092, %v1069
      %v1115 = vmul.f32 %v1093, %v1070
      %v1116 = vmul.f32 %v1094, %v1071
      %v1117 = vadd.f32 %v1028, %v1095
      %v1118 = vadd.f32 %v1029, %v1096
      %v1119 = vadd.f32 %v1030, %v1097
      %v1120 = vadd.f32 %v1031, %v1098
      %v1121 = vadd.f32 %v1032, %v1099
      %v1122 = vadd.f32 %v1033, %v1100
      %v1123 = vadd.f32 %v1034, %v1101
      %v1124 = vadd.f32 %v1035, %v1102
      %v1125 = vadd.f32 %v1036, %v1103
      %v1126 = vadd.f32 %v1037, %v1104
      %v1127 = vadd.f32 %v1038, %v1105
      %v1128 = vadd.f32 %v1039, %v1106
      %v1129 = vadd.f32 %v1040, %v1107
      %v1130 = vadd.f32 %v1041, %v1108
      %v1131 = vadd.f32 %v1042, %v1109
      %v1132 = vadd.f32 %v1043, %v1110
      %v1133 = vadd.f32 %v1044, %v1111
      %v1134 = vadd.f32 %v1045, %v1112
      %v1135 = vadd.f32 %v1046, %v1113
      %v1136 = vadd.f32 %v1047, %v1114
      %v1137 = vadd.f32 %v1048, %v1115
      %v1138 = vadd.f32 %v1049, %v1116
      %v1139 = vld [vmem:[#allocation2 + $0xe] sm:$0xff]
      %v1140 = vld [vmem:[#allocation2 + $0x16] sm:$0xff]
      %v1141 = vld [vmem:[#allocation2 + $0x1e] sm:$0xff]
      %v1142 = vld [vmem:[#allocation2 + $0x26] sm:$0xff]
      %v1143 = vld [vmem:[#allocation2 + $0x2e] sm:$0xff]
      %v1144 = vld [vmem:[#allocation2 + $0x36] sm:$0xff]
      %v1145 = vld [vmem:[#allocation2 + $0x3e] sm:$0xff]
      %v1146 = vld [vmem:[#allocation2 + $0x46] sm:$0xff]
      %v1147 = vld [vmem:[#allocation2 + $0x4e] sm:$0xff]
      %v1148 = vld [vmem:[#allocation2 + $0x56] sm:$0xff]
      %v1149 = vld [vmem:[#allocation2 + $0x5e] sm:$0xff]
      %v1150 = vld [vmem:[#allocation2 + $0x66] sm:$0xff]
      %v1151 = vld [vmem:[#allocation2 + $0x6e] sm:$0xff]
      %v1152 = vld [vmem:[#allocation2 + $0x76] sm:$0xff]
      %v1153 = vld [vmem:[#allocation2 + $0x7e] sm:$0xff]
      %v1154 = vld [vmem:[#allocation2 + $0x86] sm:$0xff]
      %v1155 = vld [vmem:[#allocation2 + $0x8e] sm:$0xff]
      %v1156 = vld [vmem:[#allocation2 + $0x96] sm:$0xff]
      %v1157 = vld [vmem:[#allocation2 + $0x9e] sm:$0xff]
      %v1158 = vld [vmem:[#allocation2 + $0xa6] sm:$0xff]
      %v1159 = vld [vmem:[#allocation2 + $0xae] sm:$0xff]
      %v1160 = vld [vmem:[#allocation2 + $0xb6] sm:$0x1]
      %s1161 = scalar_lea.vmem %s11, 704
      %v1162 = vld [vmem:[%s1161] sm:$0xff]
      %v1163 = vld [vmem:[%s1161 + $0x8] sm:$0xff]
      %v1164 = vld [vmem:[%s1161 + $0x10] sm:$0xff]
      %v1165 = vld [vmem:[%s1161 + $0x18] sm:$0xff]
      %v1166 = vld [vmem:[%s1161 + $0x20] sm:$0xff]
      %v1167 = vld [vmem:[%s1161 + $0x28] sm:$0xff]
      %v1168 = vld [vmem:[%s1161 + $0x30] sm:$0xff]
      %v1169 = vld [vmem:[%s1161 + $0x38] sm:$0xff]
      %v1170 = vld [vmem:[%s1161 + $0x40] sm:$0xff]
      %v1171 = vld [vmem:[%s1161 + $0x48] sm:$0xff]
      %v1172 = vld [vmem:[%s1161 + $0x50] sm:$0xff]
      %v1173 = vld [vmem:[%s1161 + $0x58] sm:$0xff]
      %v1174 = vld [vmem:[%s1161 + $0x60] sm:$0xff]
      %v1175 = vld [vmem:[%s1161 + $0x68] sm:$0xff]
      %v1176 = vld [vmem:[%s1161 + $0x70] sm:$0xff]
      %v1177 = vld [vmem:[%s1161 + $0x78] sm:$0xff]
      %v1178 = vld [vmem:[%s1161 + $0x80] sm:$0xff]
      %v1179 = vld [vmem:[%s1161 + $0x88] sm:$0xff]
      %v1180 = vld [vmem:[%s1161 + $0x90] sm:$0xff]
      %v1181 = vld [vmem:[%s1161 + $0x98] sm:$0xff]
      %v1182 = vld [vmem:[%s1161 + $0xa0] sm:$0xff]
      %v1183 = vld [vmem:[%s1161 + $0xa8] sm:$0x1]
      %v1184 = vmul.f32 %v1162, %v1139
      %v1185 = vmul.f32 %v1163, %v1140
      %v1186 = vmul.f32 %v1164, %v1141
      %v1187 = vmul.f32 %v1165, %v1142
      %v1188 = vmul.f32 %v1166, %v1143
      %v1189 = vmul.f32 %v1167, %v1144
      %v1190 = vmul.f32 %v1168, %v1145
      %v1191 = vmul.f32 %v1169, %v1146
      %v1192 = vmul.f32 %v1170, %v1147
      %v1193 = vmul.f32 %v1171, %v1148
      %v1194 = vmul.f32 %v1172, %v1149
      %v1195 = vmul.f32 %v1173, %v1150
      %v1196 = vmul.f32 %v1174, %v1151
      %v1197 = vmul.f32 %v1175, %v1152
      %v1198 = vmul.f32 %v1176, %v1153
      %v1199 = vmul.f32 %v1177, %v1154
      %v1200 = vmul.f32 %v1178, %v1155
      %v1201 = vmul.f32 %v1179, %v1156
      %v1202 = vmul.f32 %v1180, %v1157
      %v1203 = vmul.f32 %v1181, %v1158
      %v1204 = vmul.f32 %v1182, %v1159
      %v1205 = vmul.f32 %v1183, %v1160
      %v1206 = vadd.f32 %v1117, %v1184
      %v1207 = vadd.f32 %v1118, %v1185
      %v1208 = vadd.f32 %v1119, %v1186
      %v1209 = vadd.f32 %v1120, %v1187
      %v1210 = vadd.f32 %v1121, %v1188
      %v1211 = vadd.f32 %v1122, %v1189
      %v1212 = vadd.f32 %v1123, %v1190
      %v1213 = vadd.f32 %v1124, %v1191
      %v1214 = vadd.f32 %v1125, %v1192
      %v1215 = vadd.f32 %v1126, %v1193
      %v1216 = vadd.f32 %v1127, %v1194
      %v1217 = vadd.f32 %v1128, %v1195
      %v1218 = vadd.f32 %v1129, %v1196
      %v1219 = vadd.f32 %v1130, %v1197
      %v1220 = vadd.f32 %v1131, %v1198
      %v1221 = vadd.f32 %v1132, %v1199
      %v1222 = vadd.f32 %v1133, %v1200
      %v1223 = vadd.f32 %v1134, %v1201
      %v1224 = vadd.f32 %v1135, %v1202
      %v1225 = vadd.f32 %v1136, %v1203
      %v1226 = vadd.f32 %v1137, %v1204
      %v1227 = vadd.f32 %v1138, %v1205
      %v1228 = vld [vmem:[#allocation2 + $0xf] sm:$0xff]
      %v1229 = vld [vmem:[#allocation2 + $0x17] sm:$0xff]
      %v1230 = vld [vmem:[#allocation2 + $0x1f] sm:$0xff]
      %v1231 = vld [vmem:[#allocation2 + $0x27] sm:$0xff]
      %v1232 = vld [vmem:[#allocation2 + $0x2f] sm:$0xff]
      %v1233 = vld [vmem:[#allocation2 + $0x37] sm:$0xff]
      %v1234 = vld [vmem:[#allocation2 + $0x3f] sm:$0xff]
      %v1235 = vld [vmem:[#allocation2 + $0x47] sm:$0xff]
      %v1236 = vld [vmem:[#allocation2 + $0x4f] sm:$0xff]
      %v1237 = vld [vmem:[#allocation2 + $0x57] sm:$0xff]
      %v1238 = vld [vmem:[#allocation2 + $0x5f] sm:$0xff]
      %v1239 = vld [vmem:[#allocation2 + $0x67] sm:$0xff]
      %v1240 = vld [vmem:[#allocation2 + $0x6f] sm:$0xff]
      %v1241 = vld [vmem:[#allocation2 + $0x77] sm:$0xff]
      %v1242 = vld [vmem:[#allocation2 + $0x7f] sm:$0xff]
      %v1243 = vld [vmem:[#allocation2 + $0x87] sm:$0xff]
      %v1244 = vld [vmem:[#allocation2 + $0x8f] sm:$0xff]
      %v1245 = vld [vmem:[#allocation2 + $0x97] sm:$0xff]
      %v1246 = vld [vmem:[#allocation2 + $0x9f] sm:$0xff]
      %v1247 = vld [vmem:[#allocation2 + $0xa7] sm:$0xff]
      %v1248 = vld [vmem:[#allocation2 + $0xaf] sm:$0xff]
      %v1249 = vld [vmem:[#allocation2 + $0xb7] sm:$0x1]
      %s1250 = scalar_lea.vmem %s11, 880
      %v1251 = vld [vmem:[%s1250] sm:$0xff]
      %v1252 = vld [vmem:[%s1250 + $0x8] sm:$0xff]
      %v1253 = vld [vmem:[%s1250 + $0x10] sm:$0xff]
      %v1254 = vld [vmem:[%s1250 + $0x18] sm:$0xff]
      %v1255 = vld [vmem:[%s1250 + $0x20] sm:$0xff]
      %v1256 = vld [vmem:[%s1250 + $0x28] sm:$0xff]
      %v1257 = vld [vmem:[%s1250 + $0x30] sm:$0xff]
      %v1258 = vld [vmem:[%s1250 + $0x38] sm:$0xff]
      %v1259 = vld [vmem:[%s1250 + $0x40] sm:$0xff]
      %v1260 = vld [vmem:[%s1250 + $0x48] sm:$0xff]
      %v1261 = vld [vmem:[%s1250 + $0x50] sm:$0xff]
      %v1262 = vld [vmem:[%s1250 + $0x58] sm:$0xff]
      %v1263 = vld [vmem:[%s1250 + $0x60] sm:$0xff]
      %v1264 = vld [vmem:[%s1250 + $0x68] sm:$0xff]
      %v1265 = vld [vmem:[%s1250 + $0x70] sm:$0xff]
      %v1266 = vld [vmem:[%s1250 + $0x78] sm:$0xff]
      %v1267 = vld [vmem:[%s1250 + $0x80] sm:$0xff]
      %v1268 = vld [vmem:[%s1250 + $0x88] sm:$0xff]
      %v1269 = vld [vmem:[%s1250 + $0x90] sm:$0xff]
      %v1270 = vld [vmem:[%s1250 + $0x98] sm:$0xff]
      %v1271 = vld [vmem:[%s1250 + $0xa0] sm:$0xff]
      %v1272 = vld [vmem:[%s1250 + $0xa8] sm:$0x1]
      %v1273 = vmul.f32 %v1251, %v1228
      %v1274 = vmul.f32 %v1252, %v1229
      %v1275 = vmul.f32 %v1253, %v1230
      %v1276 = vmul.f32 %v1254, %v1231
      %v1277 = vmul.f32 %v1255, %v1232
      %v1278 = vmul.f32 %v1256, %v1233
      %v1279 = vmul.f32 %v1257, %v1234
      %v1280 = vmul.f32 %v1258, %v1235
      %v1281 = vmul.f32 %v1259, %v1236
      %v1282 = vmul.f32 %v1260, %v1237
      %v1283 = vmul.f32 %v1261, %v1238
      %v1284 = vmul.f32 %v1262, %v1239
      %v1285 = vmul.f32 %v1263, %v1240
      %v1286 = vmul.f32 %v1264, %v1241
      %v1287 = vmul.f32 %v1265, %v1242
      %v1288 = vmul.f32 %v1266, %v1243
      %v1289 = vmul.f32 %v1267, %v1244
      %v1290 = vmul.f32 %v1268, %v1245
      %v1291 = vmul.f32 %v1269, %v1246
      %v1292 = vmul.f32 %v1270, %v1247
      %v1293 = vmul.f32 %v1271, %v1248
      %v1294 = vmul.f32 %v1272, %v1249
      %v1295 = vadd.f32 %v1206, %v1273
      %v1296 = vadd.f32 %v1207, %v1274
      %v1297 = vadd.f32 %v1208, %v1275
      %v1298 = vadd.f32 %v1209, %v1276
      %v1299 = vadd.f32 %v1210, %v1277
      %v1300 = vadd.f32 %v1211, %v1278
      %v1301 = vadd.f32 %v1212, %v1279
      %v1302 = vadd.f32 %v1213, %v1280
      %v1303 = vadd.f32 %v1214, %v1281
      %v1304 = vadd.f32 %v1215, %v1282
      %v1305 = vadd.f32 %v1216, %v1283
      %v1306 = vadd.f32 %v1217, %v1284
      %v1307 = vadd.f32 %v1218, %v1285
      %v1308 = vadd.f32 %v1219, %v1286
      %v1309 = vadd.f32 %v1220, %v1287
      %v1310 = vadd.f32 %v1221, %v1288
      %v1311 = vadd.f32 %v1222, %v1289
      %v1312 = vadd.f32 %v1223, %v1290
      %v1313 = vadd.f32 %v1224, %v1291
      %v1314 = vadd.f32 %v1225, %v1292
      %v1315 = vadd.f32 %v1226, %v1293
      %v1316 = vadd.f32 %v1227, %v1294
      %v1317 = vld [vmem:[#allocation2 + $0xaa] sm:$0xff]
      %v1318 = vld [vmem:[#allocation2 + $0xb2] sm:$0xff]
      %v1319 = vld [vmem:[#allocation2 + $0xba] sm:$0xff]
      %v1320 = vld [vmem:[#allocation2 + $0xc2] sm:$0x1]
      %s1321 = scalar_lea.vmem %s11, 1056
      %v1322 = vld [vmem:[%s1321] sm:$0xff]
      %v1323 = vld [vmem:[%s1321 + $0x8] sm:$0xff]
      %v1324 = vld [vmem:[%s1321 + $0x10] sm:$0xff]
      %v1325 = vld [vmem:[%s1321 + $0x18] sm:$0xff]
      %v1326 = vld [vmem:[%s1321 + $0x20] sm:$0xff]
      %v1327 = vld [vmem:[%s1321 + $0x28] sm:$0xff]
      %v1328 = vld [vmem:[%s1321 + $0x30] sm:$0xff]
      %v1329 = vld [vmem:[%s1321 + $0x38] sm:$0xff]
      %v1330 = vld [vmem:[%s1321 + $0x40] sm:$0xff]
      %v1331 = vld [vmem:[%s1321 + $0x48] sm:$0xff]
      %v1332 = vld [vmem:[%s1321 + $0x50] sm:$0xff]
      %v1333 = vld [vmem:[%s1321 + $0x58] sm:$0xff]
      %v1334 = vld [vmem:[%s1321 + $0x60] sm:$0xff]
      %v1335 = vld [vmem:[%s1321 + $0x68] sm:$0xff]
      %v1336 = vld [vmem:[%s1321 + $0x70] sm:$0xff]
      %v1337 = vld [vmem:[%s1321 + $0x78] sm:$0xff]
      %v1338 = vld [vmem:[%s1321 + $0x80] sm:$0xff]
      %v1339 = vld [vmem:[%s1321 + $0x88] sm:$0xff]
      %v1340 = vld [vmem:[%s1321 + $0x90] sm:$0xff]
      %v1341 = vld [vmem:[%s1321 + $0x98] sm:$0xff]
      %v1342 = vld [vmem:[%s1321 + $0xa0] sm:$0xff]
      %v1343 = vld [vmem:[%s1321 + $0xa8] sm:$0x1]
      %v1344 = vmul.f32 %v1322, %v964
      %v1345 = vmul.f32 %v1323, %v965
      %v1346 = vmul.f32 %v1324, %v966
      %v1347 = vmul.f32 %v1325, %v967
      %v1348 = vmul.f32 %v1326, %v968
      %v1349 = vmul.f32 %v1327, %v969
      %v1350 = vmul.f32 %v1328, %v970
      %v1351 = vmul.f32 %v1329, %v971
      %v1352 = vmul.f32 %v1330, %v972
      %v1353 = vmul.f32 %v1331, %v973
      %v1354 = vmul.f32 %v1332, %v974
      %v1355 = vmul.f32 %v1333, %v975
      %v1356 = vmul.f32 %v1334, %v976
      %v1357 = vmul.f32 %v1335, %v977
      %v1358 = vmul.f32 %v1336, %v978
      %v1359 = vmul.f32 %v1337, %v979
      %v1360 = vmul.f32 %v1338, %v980
      %v1361 = vmul.f32 %v1339, %v981
      %v1362 = vmul.f32 %v1340, %v1317
      %v1363 = vmul.f32 %v1341, %v1318
      %v1364 = vmul.f32 %v1342, %v1319
      %v1365 = vmul.f32 %v1343, %v1320
      %v1366 = vadd.f32 %v1295, %v1344
      %v1367 = vadd.f32 %v1296, %v1345
      %v1368 = vadd.f32 %v1297, %v1346
      %v1369 = vadd.f32 %v1298, %v1347
      %v1370 = vadd.f32 %v1299, %v1348
      %v1371 = vadd.f32 %v1300, %v1349
      %v1372 = vadd.f32 %v1301, %v1350
      %v1373 = vadd.f32 %v1302, %v1351
      %v1374 = vadd.f32 %v1303, %v1352
      %v1375 = vadd.f32 %v1304, %v1353
      %v1376 = vadd.f32 %v1305, %v1354
      %v1377 = vadd.f32 %v1306, %v1355
      %v1378 = vadd.f32 %v1307, %v1356
      %v1379 = vadd.f32 %v1308, %v1357
      %v1380 = vadd.f32 %v1309, %v1358
      %v1381 = vadd.f32 %v1310, %v1359
      %v1382 = vadd.f32 %v1311, %v1360
      %v1383 = vadd.f32 %v1312, %v1361
      %v1384 = vadd.f32 %v1313, %v1362
      %v1385 = vadd.f32 %v1314, %v1363
      %v1386 = vadd.f32 %v1315, %v1364
      %v1387 = vadd.f32 %v1316, %v1365
      %v1388 = vld [vmem:[#allocation2 + $0x1b] sm:$0xff]
      %v1389 = vld [vmem:[#allocation2 + $0x23] sm:$0xff]
      %v1390 = vld [vmem:[#allocation2 + $0x2b] sm:$0xff]
      %v1391 = vld [vmem:[#allocation2 + $0x33] sm:$0xff]
      %v1392 = vld [vmem:[#allocation2 + $0x3b] sm:$0xff]
      %v1393 = vld [vmem:[#allocation2 + $0x43] sm:$0xff]
      %v1394 = vld [vmem:[#allocation2 + $0x4b] sm:$0xff]
      %v1395 = vld [vmem:[#allocation2 + $0x53] sm:$0xff]
      %v1396 = vld [vmem:[#allocation2 + $0x5b] sm:$0xff]
      %v1397 = vld [vmem:[#allocation2 + $0x63] sm:$0xff]
      %v1398 = vld [vmem:[#allocation2 + $0x6b] sm:$0xff]
      %v1399 = vld [vmem:[#allocation2 + $0x73] sm:$0xff]
      %v1400 = vld [vmem:[#allocation2 + $0x7b] sm:$0xff]
      %v1401 = vld [vmem:[#allocation2 + $0x83] sm:$0xff]
      %v1402 = vld [vmem:[#allocation2 + $0x8b] sm:$0xff]
      %v1403 = vld [vmem:[#allocation2 + $0x93] sm:$0xff]
      %v1404 = vld [vmem:[#allocation2 + $0x9b] sm:$0xff]
      %v1405 = vld [vmem:[#allocation2 + $0xa3] sm:$0xff]
      %v1406 = vld [vmem:[#allocation2 + $0xab] sm:$0xff]
      %v1407 = vld [vmem:[#allocation2 + $0xb3] sm:$0xff]
      %v1408 = vld [vmem:[#allocation2 + $0xbb] sm:$0xff]
      %v1409 = vld [vmem:[#allocation2 + $0xc3] sm:$0x1]
      %s1410 = scalar_lea.vmem %s11, 1232
      %v1411 = vld [vmem:[%s1410] sm:$0xff]
      %v1412 = vld [vmem:[%s1410 + $0x8] sm:$0xff]
      %v1413 = vld [vmem:[%s1410 + $0x10] sm:$0xff]
      %v1414 = vld [vmem:[%s1410 + $0x18] sm:$0xff]
      %v1415 = vld [vmem:[%s1410 + $0x20] sm:$0xff]
      %v1416 = vld [vmem:[%s1410 + $0x28] sm:$0xff]
      %v1417 = vld [vmem:[%s1410 + $0x30] sm:$0xff]
      %v1418 = vld [vmem:[%s1410 + $0x38] sm:$0xff]
      %v1419 = vld [vmem:[%s1410 + $0x40] sm:$0xff]
      %v1420 = vld [vmem:[%s1410 + $0x48] sm:$0xff]
      %v1421 = vld [vmem:[%s1410 + $0x50] sm:$0xff]
      %v1422 = vld [vmem:[%s1410 + $0x58] sm:$0xff]
      %v1423 = vld [vmem:[%s1410 + $0x60] sm:$0xff]
      %v1424 = vld [vmem:[%s1410 + $0x68] sm:$0xff]
      %v1425 = vld [vmem:[%s1410 + $0x70] sm:$0xff]
      %v1426 = vld [vmem:[%s1410 + $0x78] sm:$0xff]
      %v1427 = vld [vmem:[%s1410 + $0x80] sm:$0xff]
      %v1428 = vld [vmem:[%s1410 + $0x88] sm:$0xff]
      %v1429 = vld [vmem:[%s1410 + $0x90] sm:$0xff]
      %v1430 = vld [vmem:[%s1410 + $0x98] sm:$0xff]
      %v1431 = vld [vmem:[%s1410 + $0xa0] sm:$0xff]
      %v1432 = vld [vmem:[%s1410 + $0xa8] sm:$0x1]
      %v1433 = vmul.f32 %v1411, %v1388
      %v1434 = vmul.f32 %v1412, %v1389
      %v1435 = vmul.f32 %v1413, %v1390
      %v1436 = vmul.f32 %v1414, %v1391
      %v1437 = vmul.f32 %v1415, %v1392
      %v1438 = vmul.f32 %v1416, %v1393
      %v1439 = vmul.f32 %v1417, %v1394
      %v1440 = vmul.f32 %v1418, %v1395
      %v1441 = vmul.f32 %v1419, %v1396
      %v1442 = vmul.f32 %v1420, %v1397
      %v1443 = vmul.f32 %v1421, %v1398
      %v1444 = vmul.f32 %v1422, %v1399
      %v1445 = vmul.f32 %v1423, %v1400
      %v1446 = vmul.f32 %v1424, %v1401
      %v1447 = vmul.f32 %v1425, %v1402
      %v1448 = vmul.f32 %v1426, %v1403
      %v1449 = vmul.f32 %v1427, %v1404
      %v1450 = vmul.f32 %v1428, %v1405
      %v1451 = vmul.f32 %v1429, %v1406
      %v1452 = vmul.f32 %v1430, %v1407
      %v1453 = vmul.f32 %v1431, %v1408
      %v1454 = vmul.f32 %v1432, %v1409
      %v1455 = vadd.f32 %v1366, %v1433
      %v1456 = vadd.f32 %v1367, %v1434
      %v1457 = vadd.f32 %v1368, %v1435
      %v1458 = vadd.f32 %v1369, %v1436
      %v1459 = vadd.f32 %v1370, %v1437
      %v1460 = vadd.f32 %v1371, %v1438
      %v1461 = vadd.f32 %v1372, %v1439
      %v1462 = vadd.f32 %v1373, %v1440
      %v1463 = vadd.f32 %v1374, %v1441
      %v1464 = vadd.f32 %v1375, %v1442
      %v1465 = vadd.f32 %v1376, %v1443
      %v1466 = vadd.f32 %v1377, %v1444
      %v1467 = vadd.f32 %v1378, %v1445
      %v1468 = vadd.f32 %v1379, %v1446
      %v1469 = vadd.f32 %v1380, %v1447
      %v1470 = vadd.f32 %v1381, %v1448
      %v1471 = vadd.f32 %v1382, %v1449
      %v1472 = vadd.f32 %v1383, %v1450
      %v1473 = vadd.f32 %v1384, %v1451
      %v1474 = vadd.f32 %v1385, %v1452
      %v1475 = vadd.f32 %v1386, %v1453
      %v1476 = vadd.f32 %v1387, %v1454
      %v1477 = vld [vmem:[#allocation2 + $0x1c] sm:$0xff]
      %v1478 = vld [vmem:[#allocation2 + $0x24] sm:$0xff]
      %v1479 = vld [vmem:[#allocation2 + $0x2c] sm:$0xff]
      %v1480 = vld [vmem:[#allocation2 + $0x34] sm:$0xff]
      %v1481 = vld [vmem:[#allocation2 + $0x3c] sm:$0xff]
      %v1482 = vld [vmem:[#allocation2 + $0x44] sm:$0xff]
      %v1483 = vld [vmem:[#allocation2 + $0x4c] sm:$0xff]
      %v1484 = vld [vmem:[#allocation2 + $0x54] sm:$0xff]
      %v1485 = vld [vmem:[#allocation2 + $0x5c] sm:$0xff]
      %v1486 = vld [vmem:[#allocation2 + $0x64] sm:$0xff]
      %v1487 = vld [vmem:[#allocation2 + $0x6c] sm:$0xff]
      %v1488 = vld [vmem:[#allocation2 + $0x74] sm:$0xff]
      %v1489 = vld [vmem:[#allocation2 + $0x7c] sm:$0xff]
      %v1490 = vld [vmem:[#allocation2 + $0x84] sm:$0xff]
      %v1491 = vld [vmem:[#allocation2 + $0x8c] sm:$0xff]
      %v1492 = vld [vmem:[#allocation2 + $0x94] sm:$0xff]
      %v1493 = vld [vmem:[#allocation2 + $0x9c] sm:$0xff]
      %v1494 = vld [vmem:[#allocation2 + $0xa4] sm:$0xff]
      %v1495 = vld [vmem:[#allocation2 + $0xac] sm:$0xff]
      %v1496 = vld [vmem:[#allocation2 + $0xb4] sm:$0xff]
      %v1497 = vld [vmem:[#allocation2 + $0xbc] sm:$0xff]
      %v1498 = vld [vmem:[#allocation2 + $0xc4] sm:$0x1]
      %s1499 = scalar_lea.vmem %s11, 1408
      %v1500 = vld [vmem:[%s1499] sm:$0xff]
      %v1501 = vld [vmem:[%s1499 + $0x8] sm:$0xff]
      %v1502 = vld [vmem:[%s1499 + $0x10] sm:$0xff]
      %v1503 = vld [vmem:[%s1499 + $0x18] sm:$0xff]
      %v1504 = vld [vmem:[%s1499 + $0x20] sm:$0xff]
      %v1505 = vld [vmem:[%s1499 + $0x28] sm:$0xff]
      %v1506 = vld [vmem:[%s1499 + $0x30] sm:$0xff]
      %v1507 = vld [vmem:[%s1499 + $0x38] sm:$0xff]
      %v1508 = vld [vmem:[%s1499 + $0x40] sm:$0xff]
      %v1509 = vld [vmem:[%s1499 + $0x48] sm:$0xff]
      %v1510 = vld [vmem:[%s1499 + $0x50] sm:$0xff]
      %v1511 = vld [vmem:[%s1499 + $0x58] sm:$0xff]
      %v1512 = vld [vmem:[%s1499 + $0x60] sm:$0xff]
      %v1513 = vld [vmem:[%s1499 + $0x68] sm:$0xff]
      %v1514 = vld [vmem:[%s1499 + $0x70] sm:$0xff]
      %v1515 = vld [vmem:[%s1499 + $0x78] sm:$0xff]
      %v1516 = vld [vmem:[%s1499 + $0x80] sm:$0xff]
      %v1517 = vld [vmem:[%s1499 + $0x88] sm:$0xff]
      %v1518 = vld [vmem:[%s1499 + $0x90] sm:$0xff]
      %v1519 = vld [vmem:[%s1499 + $0x98] sm:$0xff]
      %v1520 = vld [vmem:[%s1499 + $0xa0] sm:$0xff]
      %v1521 = vld [vmem:[%s1499 + $0xa8] sm:$0x1]
      %v1522 = vmul.f32 %v1500, %v1477
      %v1523 = vmul.f32 %v1501, %v1478
      %v1524 = vmul.f32 %v1502, %v1479
      %v1525 = vmul.f32 %v1503, %v1480
      %v1526 = vmul.f32 %v1504, %v1481
      %v1527 = vmul.f32 %v1505, %v1482
      %v1528 = vmul.f32 %v1506, %v1483
      %v1529 = vmul.f32 %v1507, %v1484
      %v1530 = vmul.f32 %v1508, %v1485
      %v1531 = vmul.f32 %v1509, %v1486
      %v1532 = vmul.f32 %v1510, %v1487
      %v1533 = vmul.f32 %v1511, %v1488
      %v1534 = vmul.f32 %v1512, %v1489
      %v1535 = vmul.f32 %v1513, %v1490
      %v1536 = vmul.f32 %v1514, %v1491
      %v1537 = vmul.f32 %v1515, %v1492
      %v1538 = vmul.f32 %v1516, %v1493
      %v1539 = vmul.f32 %v1517, %v1494
      %v1540 = vmul.f32 %v1518, %v1495
      %v1541 = vmul.f32 %v1519, %v1496
      %v1542 = vmul.f32 %v1520, %v1497
      %v1543 = vmul.f32 %v1521, %v1498
      %v1544 = vadd.f32 %v1455, %v1522
      %v1545 = vadd.f32 %v1456, %v1523
      %v1546 = vadd.f32 %v1457, %v1524
      %v1547 = vadd.f32 %v1458, %v1525
      %v1548 = vadd.f32 %v1459, %v1526
      %v1549 = vadd.f32 %v1460, %v1527
      %v1550 = vadd.f32 %v1461, %v1528
      %v1551 = vadd.f32 %v1462, %v1529
      %v1552 = vadd.f32 %v1463, %v1530
      %v1553 = vadd.f32 %v1464, %v1531
      %v1554 = vadd.f32 %v1465, %v1532
      %v1555 = vadd.f32 %v1466, %v1533
      %v1556 = vadd.f32 %v1467, %v1534
      %v1557 = vadd.f32 %v1468, %v1535
      %v1558 = vadd.f32 %v1469, %v1536
      %v1559 = vadd.f32 %v1470, %v1537
      %v1560 = vadd.f32 %v1471, %v1538
      %v1561 = vadd.f32 %v1472, %v1539
      %v1562 = vadd.f32 %v1473, %v1540
      %v1563 = vadd.f32 %v1474, %v1541
      %v1564 = vadd.f32 %v1475, %v1542
      %v1565 = vadd.f32 %v1476, %v1543
      %v1567 = vlaneseq
      %v1568 = vshrl.u32 %v1567, 7
      %v1569 = vsub.s32 0, %v1568
      %v1570 = vrot.slane %v491, %v1569
      %v1572 = vadd.f32 %v1544, %v1570
      %v1573 = vadd.f32 %v1545, %v1570
      %v1574 = vadd.f32 %v1546, %v1570
      %v1575 = vadd.f32 %v1547, %v1570
      %v1576 = vadd.f32 %v1548, %v1570
      %v1577 = vadd.f32 %v1549, %v1570
      %v1578 = vadd.f32 %v1550, %v1570
      %v1579 = vadd.f32 %v1551, %v1570
      %v1580 = vadd.f32 %v1552, %v1570
      %v1581 = vadd.f32 %v1553, %v1570
      %v1582 = vadd.f32 %v1554, %v1570
      %v1583 = vadd.f32 %v1555, %v1570
      %v1584 = vadd.f32 %v1556, %v1570
      %v1585 = vadd.f32 %v1557, %v1570
      %v1586 = vadd.f32 %v1558, %v1570
      %v1587 = vadd.f32 %v1559, %v1570
      %v1588 = vadd.f32 %v1560, %v1570
      %v1589 = vadd.f32 %v1561, %v1570
      %v1590 = vadd.f32 %v1562, %v1570
      %v1591 = vadd.f32 %v1563, %v1570
      %v1592 = vadd.f32 %v1564, %v1570
      %v1593 = vadd.f32 %v1565, %v1570
      %v1594 = vpack.c.bf16 %v1573, %v1572
      %v1595 = vpack.c.bf16 %v1575, %v1574
      %v1596 = vpack.c.bf16 %v1577, %v1576
      %v1597 = vpack.c.bf16 %v1579, %v1578
      %v1598 = vpack.c.bf16 %v1581, %v1580
      %v1599 = vpack.c.bf16 %v1583, %v1582
      %v1600 = vpack.c.bf16 %v1585, %v1584
      %v1601 = vpack.c.bf16 %v1587, %v1586
      %v1602 = vpack.c.bf16 %v1589, %v1588
      %v1603 = vpack.c.bf16 %v1591, %v1590
      %v1604 = vpack.c.bf16 %v1593, %v1592
      %v1605 = vld [vmem:[%s2] sm:$0xf]
      %v1606 = vld [vmem:[%s2 + $0x4] sm:$0xf]
      %v1609 = vunpack.c.l.b16 %v1605
      %v1610 = vunpack.c.l.b16 %v1606
      %v1611 = vpack.c.b16 %v1610, %v1609
      %1613 = vmatprep.subr.bf16.mxu0 0
      %1614 = vmatpush1.bf16.msra.mxu0 %v1611
      %1615 = vmatprep.subr.bf16.mxu0 0
      %1616 = vmatpush1.bf16.msra.mxu0 0
      %1617 = vmatprep.subr.bf16.mxu0 0
      %1618 = vmatpush1.bf16.msra.mxu0 0
      %1619 = vmatprep.subr.bf16.mxu0 0
      %1620 = vmatpush1.bf16.msra.mxu0 0
      %1621 = vmatprep.subr.bf16.mxu0 0
      %1622 = vmatpush1.bf16.msra.mxu0 0
      %1623 = vmatprep.subr.bf16.mxu0 0
      %1624 = vmatpush1.bf16.msra.mxu0 0
      %1625 = vmatprep.subr.bf16.mxu0 0
      %1626 = vmatpush1.bf16.msra.mxu0 0
      %1627 = vmatprep.subr.bf16.mxu0 0
      %1628 = vmatpush1.bf16.msra.mxu0 0
      %1629 = vmatprep.subr.bf16.mxu0 0
      %1630 = vmatpush1.bf16.msra.mxu0 0
      %1631 = vmatprep.subr.bf16.mxu0 0
      %1632 = vmatpush1.bf16.msra.mxu0 0
      %1633 = vmatprep.subr.bf16.mxu0 0
      %1634 = vmatpush1.bf16.msra.mxu0 0
      %1635 = vmatprep.subr.bf16.mxu0 0
      %1636 = vmatpush1.bf16.msra.mxu0 0
      %1637 = vmatprep.subr.bf16.mxu0 0
      %1638 = vmatpush1.bf16.msra.mxu0 0
      %1639 = vmatprep.subr.bf16.mxu0 0
      %1640 = vmatpush1.bf16.msra.mxu0 0
      %1641 = vmatprep.subr.bf16.mxu0 0
      %1642 = vmatpush1.bf16.msra.mxu0 0
      %1643 = vmatprep.subr.bf16.mxu0 0
      %1644 = vmatpush1.bf16.msra.mxu0 0
      %1645 = vmatprep.mubr.bf16.mxu0 0
      %1646 = vmatmul.mubr.bf16.gmra.mrb[0].mxu0 %v608
      %v1647 = vpop.f32.mrb[0].mxu0
      %v1648 = vadd.f32 0.0, %v1647
      %v1649 = vpop.f32.mrb[0].mxu0
      %v1650 = vpop.f32.mrb[0].mxu0
      %v1651 = vadd.f32 0.0, %v1650
      %v1652 = vpop.f32.mrb[0].mxu0
      %1653 = vmatprep.mubr.bf16.mxu0 0
      %1654 = vmatmul.mubr.bf16.gmra.mrb[0].mxu0 %v611
      %v1655 = vpop.f32.mrb[0].mxu0
      %v1656 = vadd.f32 0.0, %v1655
      %v1657 = vpop.f32.mrb[0].mxu0
      %v1658 = vpop.f32.mrb[0].mxu0
      %v1659 = vadd.f32 0.0, %v1658
      %v1660 = vpop.f32.mrb[0].mxu0
      %1661 = vmatprep.mubr.bf16.mxu0 0
      %1662 = vmatmul.mubr.bf16.gmra.mrb[0].mxu0 %v614
      %v1663 = vpop.f32.mrb[0].mxu0
      %v1664 = vadd.f32 0.0, %v1663
      %v1665 = vpop.f32.mrb[0].mxu0
      %v1666 = vpop.f32.mrb[0].mxu0
      %v1667 = vadd.f32 0.0, %v1666
      %v1668 = vpop.f32.mrb[0].mxu0
      %1669 = vmatprep.mubr.bf16.mxu0 0
      %1670 = vmatmul.mubr.bf16.gmra.mrb[0].mxu0 %v617
      %v1671 = vpop.f32.mrb[0].mxu0
      %v1672 = vadd.f32 0.0, %v1671
      %v1673 = vpop.f32.mrb[0].mxu0
      %v1674 = vpop.f32.mrb[0].mxu0
      %v1675 = vadd.f32 0.0, %v1674
      %v1676 = vpop.f32.mrb[0].mxu0
      %1677 = vmatprep.mubr.bf16.mxu0 0
      %1678 = vmatmul.mubr.bf16.gmra.mrb[0].mxu0 %v620
      %v1679 = vpop.f32.mrb[0].mxu0
      %v1680 = vadd.f32 0.0, %v1679
      %v1681 = vpop.f32.mrb[0].mxu0
      %v1682 = vpop.f32.mrb[0].mxu0
      %v1683 = vadd.f32 0.0, %v1682
      %v1684 = vpop.f32.mrb[0].mxu0
      %1685 = vmatprep.mubr.bf16.mxu0 0
      %1686 = vmatmul.mubr.bf16.gmra.mrb[0].mxu0 %v623
      %v1687 = vpop.f32.mrb[0].mxu0
      %v1688 = vadd.f32 0.0, %v1687
      %v1689 = vpop.f32.mrb[0].mxu0
      %v1690 = vpop.f32.mrb[0].mxu0
      %v1691 = vadd.f32 0.0, %v1690
      %v1692 = vpop.f32.mrb[0].mxu0
      %1693 = vmatprep.mubr.bf16.mxu0 0
      %1694 = vmatmul.mubr.bf16.gmra.mrb[0].mxu0 %v626
      %v1695 = vpop.f32.mrb[0].mxu0
      %v1696 = vadd.f32 0.0, %v1695
      %v1697 = vpop.f32.mrb[0].mxu0
      %v1698 = vpop.f32.mrb[0].mxu0
      %v1699 = vadd.f32 0.0, %v1698
      %v1700 = vpop.f32.mrb[0].mxu0
      %1701 = vmatprep.mubr.bf16.mxu0 0
      %1702 = vmatmul.mubr.bf16.gmra.mrb[0].mxu0 %v629
      %v1703 = vpop.f32.mrb[0].mxu0
      %v1704 = vadd.f32 0.0, %v1703
      %v1705 = vpop.f32.mrb[0].mxu0
      %v1706 = vpop.f32.mrb[0].mxu0
      %v1707 = vadd.f32 0.0, %v1706
      %v1708 = vpop.f32.mrb[0].mxu0
      %1709 = vmatprep.mubr.bf16.mxu0 0
      %1710 = vmatmul.mubr.bf16.gmra.mrb[0].mxu0 %v632
      %v1711 = vpop.f32.mrb[0].mxu0
      %v1712 = vadd.f32 0.0, %v1711
      %v1713 = vpop.f32.mrb[0].mxu0
      %v1714 = vpop.f32.mrb[0].mxu0
      %v1715 = vadd.f32 0.0, %v1714
      %v1716 = vpop.f32.mrb[0].mxu0
      %1717 = vmatprep.mubr.bf16.mxu0 0
      %1718 = vmatmul.mubr.bf16.gmra.mrb[0].mxu0 %v635
      %v1719 = vpop.f32.mrb[0].mxu0
      %v1720 = vadd.f32 0.0, %v1719
      %v1721 = vpop.f32.mrb[0].mxu0
      %v1722 = vpop.f32.mrb[0].mxu0
      %v1723 = vadd.f32 0.0, %v1722
      %v1724 = vpop.f32.mrb[0].mxu0
      %1725 = vmatprep.mubr.bf16.mxu0 0
      %1726 = vmatmul.mubr.bf16.gmra.mrb[0].mxu0 %v638
      %v1727 = vpop.f32.mrb[0].mxu0
      %v1728 = vadd.f32 0.0, %v1727
      %v1729 = vpop.f32.mrb[0].mxu0
      %v1730 = vpop.f32.mrb[0].mxu0
      %v1731 = vadd.f32 0.0, %v1730
      %v1732 = vpop.f32.mrb[0].mxu0
      %1733 = vdwg.mxu0
      %v1734 = vmul.f32 %v1648, 0.5
      %v1735 = vmul.f32 %v1651, 0.5
      %v1736 = vmul.f32 %v1656, 0.5
      %v1737 = vmul.f32 %v1659, 0.5
      %v1738 = vmul.f32 %v1664, 0.5
      %v1739 = vmul.f32 %v1667, 0.5
      %v1740 = vmul.f32 %v1672, 0.5
      %v1741 = vmul.f32 %v1675, 0.5
      %v1742 = vmul.f32 %v1680, 0.5
      %v1743 = vmul.f32 %v1683, 0.5
      %v1744 = vmul.f32 %v1688, 0.5
      %v1745 = vmul.f32 %v1691, 0.5
      %v1746 = vmul.f32 %v1696, 0.5
      %v1747 = vmul.f32 %v1699, 0.5
      %v1748 = vmul.f32 %v1704, 0.5
      %v1749 = vmul.f32 %v1707, 0.5
      %v1750 = vmul.f32 %v1712, 0.5
      %v1751 = vmul.f32 %v1715, 0.5
      %v1752 = vmul.f32 %v1720, 0.5
      %v1753 = vmul.f32 %v1723, 0.5
      %v1754 = vmul.f32 %v1728, 0.5
      %v1755 = vmul.f32 %v1731, 0.5
      %v1756 = vpack.c.bf16 %v1735, %v1734
      %v1757 = vpack.c.bf16 %v1737, %v1736
      %v1758 = vpack.c.bf16 %v1739, %v1738
      %v1759 = vpack.c.bf16 %v1741, %v1740
      %v1760 = vpack.c.bf16 %v1743, %v1742
      %v1761 = vpack.c.bf16 %v1745, %v1744
      %v1762 = vpack.c.bf16 %v1747, %v1746
      %v1763 = vpack.c.bf16 %v1749, %v1748
      %v1764 = vpack.c.bf16 %v1751, %v1750
      %v1765 = vpack.c.bf16 %v1753, %v1752
      %v1766 = vpack.c.bf16 %v1755, %v1754
      %v1767 = vld [vmem:[%s3] sm:$0x3]
      %v1770 = vunpack.c.l.b16 %v542
      %v1771 = vunpack.c.h.b16 %v542
      %v1772 = vunpack.c.l.b16 %v543
      %v1773 = vunpack.c.h.b16 %v543
      %v1774 = vpack.c.b16 %v1772, %v1770
      %v1775 = vpack.c.b16 %v1773, %v1771
      %v1779 = vsel %vm493, %v1767, 0
      %1781 = vmatprep.subr.bf16.mxu0 %v1775
      %1782 = vmatpush1.bf16.msra.mxu0 %v1774
      %1783 = vmatprep.subr.bf16.mxu0 0
      %1784 = vmatpush1.bf16.msra.mxu0 0
      %1785 = vmatprep.subr.bf16.mxu0 0
      %1786 = vmatpush1.bf16.msra.mxu0 0
      %1787 = vmatprep.subr.bf16.mxu0 0
      %1788 = vmatpush1.bf16.msra.mxu0 0
      %1789 = vmatprep.subr.bf16.mxu0 0
      %1790 = vmatpush1.bf16.msra.mxu0 0
      %1791 = vmatprep.subr.bf16.mxu0 0
      %1792 = vmatpush1.bf16.msra.mxu0 0
      %1793 = vmatprep.subr.bf16.mxu0 0
      %1794 = vmatpush1.bf16.msra.mxu0 0
      %1795 = vmatprep.subr.bf16.mxu0 0
      %1796 = vmatpush1.bf16.msra.mxu0 0
      %1797 = vmatprep.subr.bf16.mxu0 0
      %1798 = vmatpush1.bf16.msra.mxu0 0
      %1799 = vmatprep.subr.bf16.mxu0 0
      %1800 = vmatpush1.bf16.msra.mxu0 0
      %1801 = vmatprep.subr.bf16.mxu0 0
      %1802 = vmatpush1.bf16.msra.mxu0 0
      %1803 = vmatprep.subr.bf16.mxu0 0
      %1804 = vmatpush1.bf16.msra.mxu0 0
      %1805 = vmatprep.subr.bf16.mxu0 0
      %1806 = vmatpush1.bf16.msra.mxu0 0
      %1807 = vmatprep.subr.bf16.mxu0 0
      %1808 = vmatpush1.bf16.msra.mxu0 0
      %1809 = vmatprep.subr.bf16.mxu0 0
      %1810 = vmatpush1.bf16.msra.mxu0 0
      %1811 = vmatprep.subr.bf16.mxu0 0
      %1812 = vmatpush1.bf16.msra.mxu0 0
      %1813 = vmatprep.mubr.bf16.mxu0 0
      %1814 = vmatmul.mubr.bf16.gmra.mrb[0].mxu0 %v1779
      %v1815 = vpop.f32.mrb[0].mxu0
      %v1816 = vadd.f32 0.0, %v1815
      %v1817 = vpop.f32.mrb[0].mxu0
      %v1818 = vadd.f32 0.0, %v1817
      %v1819 = vpop.f32.mrb[0].mxu0
      %v1820 = vpop.f32.mrb[0].mxu0
      %1821 = vdwg.mxu0
      %v1822 = vpack.c.bf16 %v1816, %v1816
      %v1823 = vpack.c.bf16 %v1818, %v1818
      %v1824 = vld [vmem:[%s4] sm:$0x3]
      %v1826 = vsel %vm493, %v1824, 0
      %1828 = vmatprep.subr.bf16.mxu0 %v1775
      %1829 = vmatpush1.bf16.msra.mxu0 %v1774
      %1830 = vmatprep.subr.bf16.mxu0 0
      %1831 = vmatpush1.bf16.msra.mxu0 0
      %1832 = vmatprep.subr.bf16.mxu0 0
      %1833 = vmatpush1.bf16.msra.mxu0 0
      %1834 = vmatprep.subr.bf16.mxu0 0
      %1835 = vmatpush1.bf16.msra.mxu0 0
      %1836 = vmatprep.subr.bf16.mxu0 0
      %1837 = vmatpush1.bf16.msra.mxu0 0
      %1838 = vmatprep.subr.bf16.mxu0 0
      %1839 = vmatpush1.bf16.msra.mxu0 0
      %1840 = vmatprep.subr.bf16.mxu0 0
      %1841 = vmatpush1.bf16.msra.mxu0 0
      %1842 = vmatprep.subr.bf16.mxu0 0
      %1843 = vmatpush1.bf16.msra.mxu0 0
      %1844 = vmatprep.subr.bf16.mxu0 0
      %1845 = vmatpush1.bf16.msra.mxu0 0
      %1846 = vmatprep.subr.bf16.mxu0 0
      %1847 = vmatpush1.bf16.msra.mxu0 0
      %1848 = vmatprep.subr.bf16.mxu0 0
      %1849 = vmatpush1.bf16.msra.mxu0 0
      %1850 = vmatprep.subr.bf16.mxu0 0
      %1851 = vmatpush1.bf16.msra.mxu0 0
      %1852 = vmatprep.subr.bf16.mxu0 0
      %1853 = vmatpush1.bf16.msra.mxu0 0
      %1854 = vmatprep.subr.bf16.mxu0 0
      %1855 = vmatpush1.bf16.msra.mxu0 0
      %1856 = vmatprep.subr.bf16.mxu0 0
      %1857 = vmatpush1.bf16.msra.mxu0 0
      %1858 = vmatprep.subr.bf16.mxu0 0
      %1859 = vmatpush1.bf16.msra.mxu0 0
      %1860 = vmatprep.mubr.bf16.mxu0 0
      %1861 = vmatmul.mubr.bf16.gmra.mrb[0].mxu0 %v1826
      %v1862 = vpop.f32.mrb[0].mxu0
      %v1863 = vadd.f32 0.0, %v1862
      %v1864 = vpop.f32.mrb[0].mxu0
      %v1865 = vadd.f32 0.0, %v1864
      %v1866 = vpop.f32.mrb[0].mxu0
      %v1867 = vpop.f32.mrb[0].mxu0
      %1868 = vdwg.mxu0
      %v1869 = vpack.c.bf16 %v1863, %v1863
      %v1870 = vpack.c.bf16 %v1865, %v1865
      %v1871 = vld [vmem:[%s5] sm:$0xf]
      %v1872 = vld [vmem:[%s5 + $0x4] sm:$0xf]
      %v1875 = vunpack.c.l.b16 %v1871
      %v1876 = vunpack.c.l.b16 %v1872
      %v1877 = vpack.c.b16 %v1876, %v1875
      %1879 = vmatprep.subr.bf16.mxu0 0
      %1880 = vmatpush1.bf16.msra.mxu0 %v1877
      %1881 = vmatprep.subr.bf16.mxu0 0
      %1882 = vmatpush1.bf16.msra.mxu0 0
      %1883 = vmatprep.subr.bf16.mxu0 0
      %1884 = vmatpush1.bf16.msra.mxu0 0
      %1885 = vmatprep.subr.bf16.mxu0 0
      %1886 = vmatpush1.bf16.msra.mxu0 0
      %1887 = vmatprep.subr.bf16.mxu0 0
      %1888 = vmatpush1.bf16.msra.mxu0 0
      %1889 = vmatprep.subr.bf16.mxu0 0
      %1890 = vmatpush1.bf16.msra.mxu0 0
      %1891 = vmatprep.subr.bf16.mxu0 0
      %1892 = vmatpush1.bf16.msra.mxu0 0
      %1893 = vmatprep.subr.bf16.mxu0 0
      %1894 = vmatpush1.bf16.msra.mxu0 0
      %1895 = vmatprep.subr.bf16.mxu0 0
      %1896 = vmatpush1.bf16.msra.mxu0 0
      %1897 = vmatprep.subr.bf16.mxu0 0
      %1898 = vmatpush1.bf16.msra.mxu0 0
      %1899 = vmatprep.subr.bf16.mxu0 0
      %1900 = vmatpush1.bf16.msra.mxu0 0
      %1901 = vmatprep.subr.bf16.mxu0 0
      %1902 = vmatpush1.bf16.msra.mxu0 0
      %1903 = vmatprep.subr.bf16.mxu0 0
      %1904 = vmatpush1.bf16.msra.mxu0 0
      %1905 = vmatprep.subr.bf16.mxu0 0
      %1906 = vmatpush1.bf16.msra.mxu0 0
      %1907 = vmatprep.subr.bf16.mxu0 0
      %1908 = vmatpush1.bf16.msra.mxu0 0
      %1909 = vmatprep.subr.bf16.mxu0 0
      %1910 = vmatpush1.bf16.msra.mxu0 0
      %1911 = vmatprep.mubr.bf16.mxu0 0
      %1912 = vmatmul.mubr.bf16.gmra.mrb[0].mxu0 %v608
      %v1913 = vpop.f32.mrb[0].mxu0
      %v1914 = vadd.f32 0.0, %v1913
      %v1915 = vpop.f32.mrb[0].mxu0
      %v1916 = vpop.f32.mrb[0].mxu0
      %v1917 = vadd.f32 0.0, %v1916
      %v1918 = vpop.f32.mrb[0].mxu0
      %1919 = vmatprep.mubr.bf16.mxu0 0
      %1920 = vmatmul.mubr.bf16.gmra.mrb[0].mxu0 %v611
      %v1921 = vpop.f32.mrb[0].mxu0
      %v1922 = vadd.f32 0.0, %v1921
      %v1923 = vpop.f32.mrb[0].mxu0
      %v1924 = vpop.f32.mrb[0].mxu0
      %v1925 = vadd.f32 0.0, %v1924
      %v1926 = vpop.f32.mrb[0].mxu0
      %1927 = vmatprep.mubr.bf16.mxu0 0
      %1928 = vmatmul.mubr.bf16.gmra.mrb[0].mxu0 %v614
      %v1929 = vpop.f32.mrb[0].mxu0
      %v1930 = vadd.f32 0.0, %v1929
      %v1931 = vpop.f32.mrb[0].mxu0
      %v1932 = vpop.f32.mrb[0].mxu0
      %v1933 = vadd.f32 0.0, %v1932
      %v1934 = vpop.f32.mrb[0].mxu0
      %1935 = vmatprep.mubr.bf16.mxu0 0
      %1936 = vmatmul.mubr.bf16.gmra.mrb[0].mxu0 %v617
      %v1937 = vpop.f32.mrb[0].mxu0
      %v1938 = vadd.f32 0.0, %v1937
      %v1939 = vpop.f32.mrb[0].mxu0
      %v1940 = vpop.f32.mrb[0].mxu0
      %v1941 = vadd.f32 0.0, %v1940
      %v1942 = vpop.f32.mrb[0].mxu0
      %1943 = vmatprep.mubr.bf16.mxu0 0
      %1944 = vmatmul.mubr.bf16.gmra.mrb[0].mxu0 %v620
      %v1945 = vpop.f32.mrb[0].mxu0
      %v1946 = vadd.f32 0.0, %v1945
      %v1947 = vpop.f32.mrb[0].mxu0
      %v1948 = vpop.f32.mrb[0].mxu0
      %v1949 = vadd.f32 0.0, %v1948
      %v1950 = vpop.f32.mrb[0].mxu0
      %1951 = vmatprep.mubr.bf16.mxu0 0
      %1952 = vmatmul.mubr.bf16.gmra.mrb[0].mxu0 %v623
      %v1953 = vpop.f32.mrb[0].mxu0
      %v1954 = vadd.f32 0.0, %v1953
      %v1955 = vpop.f32.mrb[0].mxu0
      %v1956 = vpop.f32.mrb[0].mxu0
      %v1957 = vadd.f32 0.0, %v1956
      %v1958 = vpop.f32.mrb[0].mxu0
      %1959 = vmatprep.mubr.bf16.mxu0 0
      %1960 = vmatmul.mubr.bf16.gmra.mrb[0].mxu0 %v626
      %v1961 = vpop.f32.mrb[0].mxu0
      %v1962 = vadd.f32 0.0, %v1961
      %v1963 = vpop.f32.mrb[0].mxu0
      %v1964 = vpop.f32.mrb[0].mxu0
      %v1965 = vadd.f32 0.0, %v1964
      %v1966 = vpop.f32.mrb[0].mxu0
      %1967 = vmatprep.mubr.bf16.mxu0 0
      %1968 = vmatmul.mubr.bf16.gmra.mrb[0].mxu0 %v629
      %v1969 = vpop.f32.mrb[0].mxu0
      %v1970 = vadd.f32 0.0, %v1969
      %v1971 = vpop.f32.mrb[0].mxu0
      %v1972 = vpop.f32.mrb[0].mxu0
      %v1973 = vadd.f32 0.0, %v1972
      %v1974 = vpop.f32.mrb[0].mxu0
      %1975 = vmatprep.mubr.bf16.mxu0 0
      %1976 = vmatmul.mubr.bf16.gmra.mrb[0].mxu0 %v632
      %v1977 = vpop.f32.mrb[0].mxu0
      %v1978 = vadd.f32 0.0, %v1977
      %v1979 = vpop.f32.mrb[0].mxu0
      %v1980 = vpop.f32.mrb[0].mxu0
      %v1981 = vadd.f32 0.0, %v1980
      %v1982 = vpop.f32.mrb[0].mxu0
      %1983 = vmatprep.mubr.bf16.mxu0 0
      %1984 = vmatmul.mubr.bf16.gmra.mrb[0].mxu0 %v635
      %v1985 = vpop.f32.mrb[0].mxu0
      %v1986 = vadd.f32 0.0, %v1985
      %v1987 = vpop.f32.mrb[0].mxu0
      %v1988 = vpop.f32.mrb[0].mxu0
      %v1989 = vadd.f32 0.0, %v1988
      %v1990 = vpop.f32.mrb[0].mxu0
      %1991 = vmatprep.mubr.bf16.mxu0 0
      %1992 = vmatmul.mubr.bf16.gmra.mrb[0].mxu0 %v638
      %v1993 = vpop.f32.mrb[0].mxu0
      %v1994 = vadd.f32 0.0, %v1993
      %v1995 = vpop.f32.mrb[0].mxu0
      %v1996 = vpop.f32.mrb[0].mxu0
      %v1997 = vadd.f32 0.0, %v1996
      %v1998 = vpop.f32.mrb[0].mxu0
      %1999 = vdwg.mxu0
      %v2000 = vpack.c.bf16 %v1917, %v1914
      %v2001 = vpack.c.bf16 %v1925, %v1922
      %v2002 = vpack.c.bf16 %v1933, %v1930
      %v2003 = vpack.c.bf16 %v1941, %v1938
      %v2004 = vpack.c.bf16 %v1949, %v1946
      %v2005 = vpack.c.bf16 %v1957, %v1954
      %v2006 = vpack.c.bf16 %v1965, %v1962
      %v2007 = vpack.c.bf16 %v1973, %v1970
      %v2008 = vpack.c.bf16 %v1981, %v1978
      %v2009 = vpack.c.bf16 %v1989, %v1986
      %v2010 = vpack.c.bf16 %v1997, %v1994
      %v2011 = vld [vmem:[%s9] sm:$0xff]
      %v2012 = vld [vmem:[%s9 + $0x8] sm:$0xff]
      %v2013 = vld [vmem:[%s9 + $0x10] sm:$0xff]
      %v2014 = vld [vmem:[%s9 + $0x18] sm:$0xff]
      %v2015 = vld [vmem:[%s9 + $0x20] sm:$0xff]
      %v2016 = vld [vmem:[%s9 + $0x28] sm:$0xff]
      %v2017 = vld [vmem:[%s9 + $0x30] sm:$0xff]
      %v2018 = vld [vmem:[%s9 + $0x38] sm:$0xff]
      %v2019 = vld [vmem:[%s9 + $0x40] sm:$0xff]
      %v2020 = vld [vmem:[%s9 + $0x48] sm:$0xff]
      %v2021 = vld [vmem:[%s9 + $0x50] sm:$0xff]
      %v2022 = vld [vmem:[%s9 + $0x58] sm:$0xff]
      %v2023 = vld [vmem:[%s9 + $0x60] sm:$0xff]
      %v2024 = vld [vmem:[%s9 + $0x68] sm:$0xff]
      %v2025 = vld [vmem:[%s9 + $0x70] sm:$0xff]
      %v2026 = vld [vmem:[%s9 + $0x78] sm:$0xff]
      %v2027 = vld [vmem:[%s9 + $0x80] sm:$0xff]
      %v2028 = vld [vmem:[%s9 + $0x88] sm:$0xff]
      %v2029 = vld [vmem:[%s9 + $0x90] sm:$0xff]
      %v2030 = vld [vmem:[%s9 + $0x98] sm:$0xff]
      %v2031 = vld [vmem:[%s9 + $0xa0] sm:$0xff]
      %v2032 = vld [vmem:[%s9 + $0xa8] sm:$0x11]
      %v2033 = vunpack.c.l.bf16 %v2011
      %v2034 = vunpack.c.h.bf16 %v2011
      %v2035 = vunpack.c.l.bf16 %v2012
      %v2036 = vunpack.c.h.bf16 %v2012
      %v2037 = vunpack.c.l.bf16 %v2013
      %v2038 = vunpack.c.h.bf16 %v2013
      %v2039 = vunpack.c.l.bf16 %v2014
      %v2040 = vunpack.c.h.bf16 %v2014
      %v2041 = vunpack.c.l.bf16 %v2015
      %v2042 = vunpack.c.h.bf16 %v2015
      %v2043 = vunpack.c.l.bf16 %v2016
      %v2044 = vunpack.c.h.bf16 %v2016
      %v2045 = vunpack.c.l.bf16 %v2017
      %v2046 = vunpack.c.h.bf16 %v2017
      %v2047 = vunpack.c.l.bf16 %v2018
      %v2048 = vunpack.c.h.bf16 %v2018
      %v2049 = vunpack.c.l.bf16 %v2019
      %v2050 = vunpack.c.h.bf16 %v2019
      %v2051 = vunpack.c.l.bf16 %v2020
      %v2052 = vunpack.c.h.bf16 %v2020
      %v2053 = vunpack.c.l.bf16 %v2021
      %v2054 = vunpack.c.h.bf16 %v2021
      %v2055 = vunpack.c.l.bf16 %v2022
      %v2056 = vunpack.c.h.bf16 %v2022
      %v2057 = vunpack.c.l.bf16 %v2023
      %v2058 = vunpack.c.h.bf16 %v2023
      %v2059 = vunpack.c.l.bf16 %v2024
      %v2060 = vunpack.c.h.bf16 %v2024
      %v2061 = vunpack.c.l.bf16 %v2025
      %v2062 = vunpack.c.h.bf16 %v2025
      %v2063 = vunpack.c.l.bf16 %v2026
      %v2064 = vunpack.c.h.bf16 %v2026
      %v2065 = vunpack.c.l.bf16 %v2027
      %v2066 = vunpack.c.h.bf16 %v2027
      %v2067 = vunpack.c.l.bf16 %v2028
      %v2068 = vunpack.c.h.bf16 %v2028
      %v2069 = vunpack.c.l.bf16 %v2029
      %v2070 = vunpack.c.h.bf16 %v2029
      %v2071 = vunpack.c.l.bf16 %v2030
      %v2072 = vunpack.c.h.bf16 %v2030
      %v2073 = vunpack.c.l.bf16 %v2031
      %v2074 = vunpack.c.h.bf16 %v2031
      %v2075 = vunpack.c.l.bf16 %v2032
      %v2076 = vunpack.c.h.bf16 %v2032
      %vm2077 = vcmask 31744
      %v2079 = vsel %vm2077, %v1756, 0
      %v2082 = vsel %vm2077, %v1757, 0
      %v2085 = vsel %vm2077, %v1758, 0
      %v2088 = vsel %vm2077, %v1759, 0
      %v2091 = vsel %vm2077, %v1760, 0
      %v2094 = vsel %vm2077, %v1761, 0
      %v2097 = vsel %vm2077, %v1762, 0
      %v2100 = vsel %vm2077, %v1763, 0
      %v2103 = vsel %vm2077, %v1764, 0
      %v2106 = vsel %vm2077, %v1765, 0
      %v2109 = vsel %vm2077, %v1766, 0
      %vm2111 = vcmask 1041408
      %v2113 = vsel %vm2111, %v1822, 0
      %v2116 = vsel %vm2111, %v1823, 0
      %2118 = vmatprep.subr.bf16.mxu0 %v2116
      %2119 = vmatpush1.bf16.msra.mxu0 %v2113
      %2120 = vmatprep.subr.bf16.mxu0 0
      %2121 = vmatpush1.bf16.msra.mxu0 0
      %2122 = vmatprep.subr.bf16.mxu0 0
      %2123 = vmatpush1.bf16.msra.mxu0 0
      %2124 = vmatprep.subr.bf16.mxu0 0
      %2125 = vmatpush1.bf16.msra.mxu0 0
      %2126 = vmatprep.subr.bf16.mxu0 0
      %2127 = vmatpush1.bf16.msra.mxu0 0
      %2128 = vmatprep.subr.bf16.mxu0 0
      %2129 = vmatpush1.bf16.msra.mxu0 0
      %2130 = vmatprep.subr.bf16.mxu0 0
      %2131 = vmatpush1.bf16.msra.mxu0 0
      %2132 = vmatprep.subr.bf16.mxu0 0
      %2133 = vmatpush1.bf16.msra.mxu0 0
      %2134 = vmatprep.subr.bf16.mxu0 0
      %2135 = vmatpush1.bf16.msra.mxu0 0
      %2136 = vmatprep.subr.bf16.mxu0 0
      %2137 = vmatpush1.bf16.msra.mxu0 0
      %2138 = vmatprep.subr.bf16.mxu0 0
      %2139 = vmatpush1.bf16.msra.mxu0 0
      %2140 = vmatprep.subr.bf16.mxu0 0
      %2141 = vmatpush1.bf16.msra.mxu0 0
      %2142 = vmatprep.subr.bf16.mxu0 0
      %2143 = vmatpush1.bf16.msra.mxu0 0
      %2144 = vmatprep.subr.bf16.mxu0 0
      %2145 = vmatpush1.bf16.msra.mxu0 0
      %2146 = vmatprep.subr.bf16.mxu0 0
      %2147 = vmatpush1.bf16.msra.mxu0 0
      %2148 = vmatprep.subr.bf16.mxu0 0
      %2149 = vmatpush1.bf16.msra.mxu0 0
      %2150 = vmatprep.mubr.bf16.mxu0 0
      %2151 = vmatmul.mubr.bf16.gmra.mrb[0].mxu0 %v2079
      %v2152 = vpop.f32.mrb[0].mxu0
      %v2153 = vadd.f32 %v2033, %v2152
      %v2154 = vpop.f32.mrb[0].mxu0
      %v2155 = vadd.f32 %v2034, %v2154
      %v2156 = vpop.f32.mrb[0].mxu0
      %v2157 = vadd.f32 %v2035, %v2156
      %v2158 = vpop.f32.mrb[0].mxu0
      %v2159 = vadd.f32 %v2036, %v2158
      %2160 = vmatprep.mubr.bf16.mxu0 0
      %2161 = vmatmul.mubr.bf16.gmra.mrb[0].mxu0 %v2082
      %v2162 = vpop.f32.mrb[0].mxu0
      %v2163 = vadd.f32 %v2037, %v2162
      %v2164 = vpop.f32.mrb[0].mxu0
      %v2165 = vadd.f32 %v2038, %v2164
      %v2166 = vpop.f32.mrb[0].mxu0
      %v2167 = vadd.f32 %v2039, %v2166
      %v2168 = vpop.f32.mrb[0].mxu0
      %v2169 = vadd.f32 %v2040, %v2168
      %2170 = vmatprep.mubr.bf16.mxu0 0
      %2171 = vmatmul.mubr.bf16.gmra.mrb[0].mxu0 %v2085
      %v2172 = vpop.f32.mrb[0].mxu0
      %v2173 = vadd.f32 %v2041, %v2172
      %v2174 = vpop.f32.mrb[0].mxu0
      %v2175 = vadd.f32 %v2042, %v2174
      %v2176 = vpop.f32.mrb[0].mxu0
      %v2177 = vadd.f32 %v2043, %v2176
      %v2178 = vpop.f32.mrb[0].mxu0
      %v2179 = vadd.f32 %v2044, %v2178
      %2180 = vmatprep.mubr.bf16.mxu0 0
      %2181 = vmatmul.mubr.bf16.gmra.mrb[0].mxu0 %v2088
      %v2182 = vpop.f32.mrb[0].mxu0
      %v2183 = vadd.f32 %v2045, %v2182
      %v2184 = vpop.f32.mrb[0].mxu0
      %v2185 = vadd.f32 %v2046, %v2184
      %v2186 = vpop.f32.mrb[0].mxu0
      %v2187 = vadd.f32 %v2047, %v2186
      %v2188 = vpop.f32.mrb[0].mxu0
      %v2189 = vadd.f32 %v2048, %v2188
      %2190 = vmatprep.mubr.bf16.mxu0 0
      %2191 = vmatmul.mubr.bf16.gmra.mrb[0].mxu0 %v2091
      %v2192 = vpop.f32.mrb[0].mxu0
      %v2193 = vadd.f32 %v2049, %v2192
      %v2194 = vpop.f32.mrb[0].mxu0
      %v2195 = vadd.f32 %v2050, %v2194
      %v2196 = vpop.f32.mrb[0].mxu0
      %v2197 = vadd.f32 %v2051, %v2196
      %v2198 = vpop.f32.mrb[0].mxu0
      %v2199 = vadd.f32 %v2052, %v2198
      %2200 = vmatprep.mubr.bf16.mxu0 0
      %2201 = vmatmul.mubr.bf16.gmra.mrb[0].mxu0 %v2094
      %v2202 = vpop.f32.mrb[0].mxu0
      %v2203 = vadd.f32 %v2053, %v2202
      %v2204 = vpop.f32.mrb[0].mxu0
      %v2205 = vadd.f32 %v2054, %v2204
      %v2206 = vpop.f32.mrb[0].mxu0
      %v2207 = vadd.f32 %v2055, %v2206
      %v2208 = vpop.f32.mrb[0].mxu0
      %v2209 = vadd.f32 %v2056, %v2208
      %2210 = vmatprep.mubr.bf16.mxu0 0
      %2211 = vmatmul.mubr.bf16.gmra.mrb[0].mxu0 %v2097
      %v2212 = vpop.f32.mrb[0].mxu0
      %v2213 = vadd.f32 %v2057, %v2212
      %v2214 = vpop.f32.mrb[0].mxu0
      %v2215 = vadd.f32 %v2058, %v2214
      %v2216 = vpop.f32.mrb[0].mxu0
      %v2217 = vadd.f32 %v2059, %v2216
      %v2218 = vpop.f32.mrb[0].mxu0
      %v2219 = vadd.f32 %v2060, %v2218
      %2220 = vmatprep.mubr.bf16.mxu0 0
      %2221 = vmatmul.mubr.bf16.gmra.mrb[0].mxu0 %v2100
      %v2222 = vpop.f32.mrb[0].mxu0
      %v2223 = vadd.f32 %v2061, %v2222
      %v2224 = vpop.f32.mrb[0].mxu0
      %v2225 = vadd.f32 %v2062, %v2224
      %v2226 = vpop.f32.mrb[0].mxu0
      %v2227 = vadd.f32 %v2063, %v2226
      %v2228 = vpop.f32.mrb[0].mxu0
      %v2229 = vadd.f32 %v2064, %v2228
      %2230 = vmatprep.mubr.bf16.mxu0 0
      %2231 = vmatmul.mubr.bf16.gmra.mrb[0].mxu0 %v2103
      %v2232 = vpop.f32.mrb[0].mxu0
      %v2233 = vadd.f32 %v2065, %v2232
      %v2234 = vpop.f32.mrb[0].mxu0
      %v2235 = vadd.f32 %v2066, %v2234
      %v2236 = vpop.f32.mrb[0].mxu0
      %v2237 = vadd.f32 %v2067, %v2236
      %v2238 = vpop.f32.mrb[0].mxu0
      %v2239 = vadd.f32 %v2068, %v2238
      %2240 = vmatprep.mubr.bf16.mxu0 0
      %2241 = vmatmul.mubr.bf16.gmra.mrb[0].mxu0 %v2106
      %v2242 = vpop.f32.mrb[0].mxu0
      %v2243 = vadd.f32 %v2069, %v2242
      %v2244 = vpop.f32.mrb[0].mxu0
      %v2245 = vadd.f32 %v2070, %v2244
      %v2246 = vpop.f32.mrb[0].mxu0
      %v2247 = vadd.f32 %v2071, %v2246
      %v2248 = vpop.f32.mrb[0].mxu0
      %v2249 = vadd.f32 %v2072, %v2248
      %2250 = vmatprep.mubr.bf16.mxu0 0
      %2251 = vmatmul.mubr.bf16.gmra.mrb[0].mxu0 %v2109
      %v2252 = vpop.f32.mrb[0].mxu0
      %v2253 = vadd.f32 %v2073, %v2252
      %v2254 = vpop.f32.mrb[0].mxu0
      %v2255 = vadd.f32 %v2074, %v2254
      %v2256 = vpop.f32.mrb[0].mxu0
      %v2257 = vadd.f32 %v2075, %v2256
      %v2258 = vpop.f32.mrb[0].mxu0
      %v2259 = vadd.f32 %v2076, %v2258
      %2260 = vdwg.mxu0
      %vm2261 = vcmask 334848
      %v2262 = vsel %vm2261, %v2155, -inf
      %v2263 = vmax.f32 %v2153, %v2262
      %2264 = vmax.xlane.f32.xlu0 %v2263
      %v2265 = vpop.xlane.xlu0 %2264
      %v2266 = vsel %vm2261, %v2159, -inf
      %v2267 = vmax.f32 %v2157, %v2266
      %2268 = vmax.xlane.f32.xlu0 %v2267
      %v2269 = vpop.xlane.xlu0 %2268
      %v2270 = vsel %vm2261, %v2165, -inf
      %v2271 = vmax.f32 %v2163, %v2270
      %2272 = vmax.xlane.f32.xlu0 %v2271
      %v2273 = vpop.xlane.xlu0 %2272
      %v2274 = vsel %vm2261, %v2169, -inf
      %v2275 = vmax.f32 %v2167, %v2274
      %2276 = vmax.xlane.f32.xlu0 %v2275
      %v2277 = vpop.xlane.xlu0 %2276
      %v2278 = vsel %vm2261, %v2175, -inf
      %v2279 = vmax.f32 %v2173, %v2278
      %2280 = vmax.xlane.f32.xlu0 %v2279
      %v2281 = vpop.xlane.xlu0 %2280
      %v2282 = vsel %vm2261, %v2179, -inf
      %v2283 = vmax.f32 %v2177, %v2282
      %2284 = vmax.xlane.f32.xlu0 %v2283
      %v2285 = vpop.xlane.xlu0 %2284
      %v2286 = vsel %vm2261, %v2185, -inf
      %v2287 = vmax.f32 %v2183, %v2286
      %2288 = vmax.xlane.f32.xlu0 %v2287
      %v2289 = vpop.xlane.xlu0 %2288
      %v2290 = vsel %vm2261, %v2189, -inf
      %v2291 = vmax.f32 %v2187, %v2290
      %2292 = vmax.xlane.f32.xlu0 %v2291
      %v2293 = vpop.xlane.xlu0 %2292
      %v2294 = vsel %vm2261, %v2195, -inf
      %v2295 = vmax.f32 %v2193, %v2294
      %2296 = vmax.xlane.f32.xlu0 %v2295
      %v2297 = vpop.xlane.xlu0 %2296
      %v2298 = vsel %vm2261, %v2199, -inf
      %v2299 = vmax.f32 %v2197, %v2298
      %2300 = vmax.xlane.f32.xlu0 %v2299
      %v2301 = vpop.xlane.xlu0 %2300
      %v2302 = vsel %vm2261, %v2205, -inf
      %v2303 = vmax.f32 %v2203, %v2302
      %2304 = vmax.xlane.f32.xlu0 %v2303
      %v2305 = vpop.xlane.xlu0 %2304
      %v2306 = vsel %vm2261, %v2209, -inf
      %v2307 = vmax.f32 %v2207, %v2306
      %2308 = vmax.xlane.f32.xlu0 %v2307
      %v2309 = vpop.xlane.xlu0 %2308
      %v2310 = vsel %vm2261, %v2215, -inf
      %v2311 = vmax.f32 %v2213, %v2310
      %2312 = vmax.xlane.f32.xlu0 %v2311
      %v2313 = vpop.xlane.xlu0 %2312
      %v2314 = vsel %vm2261, %v2219, -inf
      %v2315 = vmax.f32 %v2217, %v2314
      %2316 = vmax.xlane.f32.xlu0 %v2315
      %v2317 = vpop.xlane.xlu0 %2316
      %v2318 = vsel %vm2261, %v2225, -inf
      %v2319 = vmax.f32 %v2223, %v2318
      %2320 = vmax.xlane.f32.xlu0 %v2319
      %v2321 = vpop.xlane.xlu0 %2320
      %v2322 = vsel %vm2261, %v2229, -inf
      %v2323 = vmax.f32 %v2227, %v2322
      %2324 = vmax.xlane.f32.xlu0 %v2323
      %v2325 = vpop.xlane.xlu0 %2324
      %v2326 = vsel %vm2261, %v2235, -inf
      %v2327 = vmax.f32 %v2233, %v2326
      %2328 = vmax.xlane.f32.xlu0 %v2327
      %v2329 = vpop.xlane.xlu0 %2328
      %v2330 = vsel %vm2261, %v2239, -inf
      %v2331 = vmax.f32 %v2237, %v2330
      %2332 = vmax.xlane.f32.xlu0 %v2331
      %v2333 = vpop.xlane.xlu0 %2332
      %v2334 = vsel %vm2261, %v2245, -inf
      %v2335 = vmax.f32 %v2243, %v2334
      %2336 = vmax.xlane.f32.xlu0 %v2335
      %v2337 = vpop.xlane.xlu0 %2336
      %v2338 = vsel %vm2261, %v2249, -inf
      %v2339 = vmax.f32 %v2247, %v2338
      %2340 = vmax.xlane.f32.xlu0 %v2339
      %v2341 = vpop.xlane.xlu0 %2340
      %v2342 = vsel %vm2261, %v2255, -inf
      %v2343 = vmax.f32 %v2253, %v2342
      %2344 = vmax.xlane.f32.xlu0 %v2343
      %v2345 = vpop.xlane.xlu0 %2344
      %vm2346 = vcmask 1040384
      %v2347 = vsel %vm2346, %v2257, -inf
      %vm2348 = vcmask 327680
      %v2349 = vsel %vm2348, %v2259, -inf
      %v2350 = vmax.f32 %v2347, %v2349
      %2351 = vmax.xlane.f32.xlu0 %v2350
      %v2352 = vpop.xlane.xlu0 %2351
      %v2353 = vsub.f32 %v2153, %v2265
      %v2354 = vsub.f32 %v2155, %v2265
      %v2355 = vsub.f32 %v2157, %v2269
      %v2356 = vsub.f32 %v2159, %v2269
      %v2357 = vsub.f32 %v2163, %v2273
      %v2358 = vsub.f32 %v2165, %v2273
      %v2359 = vsub.f32 %v2167, %v2277
      %v2360 = vsub.f32 %v2169, %v2277
      %v2361 = vsub.f32 %v2173, %v2281
      %v2362 = vsub.f32 %v2175, %v2281
      %v2363 = vsub.f32 %v2177, %v2285
      %v2364 = vsub.f32 %v2179, %v2285
      %v2365 = vsub.f32 %v2183, %v2289
      %v2366 = vsub.f32 %v2185, %v2289
      %v2367 = vsub.f32 %v2187, %v2293
      %v2368 = vsub.f32 %v2189, %v2293
      %v2369 = vsub.f32 %v2193, %v2297
      %v2370 = vsub.f32 %v2195, %v2297
      %v2371 = vsub.f32 %v2197, %v2301
      %v2372 = vsub.f32 %v2199, %v2301
      %v2373 = vsub.f32 %v2203, %v2305
      %v2374 = vsub.f32 %v2205, %v2305
      %v2375 = vsub.f32 %v2207, %v2309
      %v2376 = vsub.f32 %v2209, %v2309
      %v2377 = vsub.f32 %v2213, %v2313
      %v2378 = vsub.f32 %v2215, %v2313
      %v2379 = vsub.f32 %v2217, %v2317
      %v2380 = vsub.f32 %v2219, %v2317
      %v2381 = vsub.f32 %v2223, %v2321
      %v2382 = vsub.f32 %v2225, %v2321
      %v2383 = vsub.f32 %v2227, %v2325
      %v2384 = vsub.f32 %v2229, %v2325
      %v2385 = vsub.f32 %v2233, %v2329
      %v2386 = vsub.f32 %v2235, %v2329
      %v2387 = vsub.f32 %v2237, %v2333
      %v2388 = vsub.f32 %v2239, %v2333
      %v2389 = vsub.f32 %v2243, %v2337
      %v2390 = vsub.f32 %v2245, %v2337
      %v2391 = vsub.f32 %v2247, %v2341
      %v2392 = vsub.f32 %v2249, %v2341
      %v2393 = vsub.f32 %v2253, %v2345
      %v2394 = vsub.f32 %v2255, %v2345
      %v2395 = vsub.f32 %v2257, %v2352
      %v2396 = vsub.f32 %v2259, %v2352
      %v2397 = vmul.f32 %v2353, 1.442695
      %v2398 = vpow.pop %v2397
      %v2399 = vmul.f32 %v2354, 1.442695
      %v2400 = vpow.pop %v2399
      %v2401 = vmul.f32 %v2355, 1.442695
      %v2402 = vpow.pop %v2401
      %v2403 = vmul.f32 %v2356, 1.442695
      %v2404 = vpow.pop %v2403
      %v2405 = vmul.f32 %v2357, 1.442695
      %v2406 = vpow.pop %v2405
      %v2407 = vmul.f32 %v2358, 1.442695
      %v2408 = vpow.pop %v2407
      %v2409 = vmul.f32 %v2359, 1.442695
      %v2410 = vpow.pop %v2409
      %v2411 = vmul.f32 %v2360, 1.442695
      %v2412 = vpow.pop %v2411
      %v2413 = vmul.f32 %v2361, 1.442695
      %v2414 = vpow.pop %v2413
      %v2415 = vmul.f32 %v2362, 1.442695
      %v2416 = vpow.pop %v2415
      %v2417 = vmul.f32 %v2363, 1.442695
      %v2418 = vpow.pop %v2417
      %v2419 = vmul.f32 %v2364, 1.442695
      %v2420 = vpow.pop %v2419
      %v2421 = vmul.f32 %v2365, 1.442695
      %v2422 = vpow.pop %v2421
      %v2423 = vmul.f32 %v2366, 1.442695
      %v2424 = vpow.pop %v2423
      %v2425 = vmul.f32 %v2367, 1.442695
      %v2426 = vpow.pop %v2425
      %v2427 = vmul.f32 %v2368, 1.442695
      %v2428 = vpow.pop %v2427
      %v2429 = vmul.f32 %v2369, 1.442695
      %v2430 = vpow.pop %v2429
      %v2431 = vmul.f32 %v2370, 1.442695
      %v2432 = vpow.pop %v2431
      %v2433 = vmul.f32 %v2371, 1.442695
      %v2434 = vpow.pop %v2433
      %v2435 = vmul.f32 %v2372, 1.442695
      %v2436 = vpow.pop %v2435
      %v2437 = vmul.f32 %v2373, 1.442695
      %v2438 = vpow.pop %v2437
      %v2439 = vmul.f32 %v2374, 1.442695
      %v2440 = vpow.pop %v2439
      %v2441 = vmul.f32 %v2375, 1.442695
      %v2442 = vpow.pop %v2441
      %v2443 = vmul.f32 %v2376, 1.442695
      %v2444 = vpow.pop %v2443
      %v2445 = vmul.f32 %v2377, 1.442695
      %v2446 = vpow.pop %v2445
      %v2447 = vmul.f32 %v2378, 1.442695
      %v2448 = vpow.pop %v2447
      %v2449 = vmul.f32 %v2379, 1.442695
      %v2450 = vpow.pop %v2449
      %v2451 = vmul.f32 %v2380, 1.442695
      %v2452 = vpow.pop %v2451
      %v2453 = vmul.f32 %v2381, 1.442695
      %v2454 = vpow.pop %v2453
      %v2455 = vmul.f32 %v2382, 1.442695
      %v2456 = vpow.pop %v2455
      %v2457 = vmul.f32 %v2383, 1.442695
      %v2458 = vpow.pop %v2457
      %v2459 = vmul.f32 %v2384, 1.442695
      %v2460 = vpow.pop %v2459
      %v2461 = vmul.f32 %v2385, 1.442695
      %v2462 = vpow.pop %v2461
      %v2463 = vmul.f32 %v2386, 1.442695
      %v2464 = vpow.pop %v2463
      %v2465 = vmul.f32 %v2387, 1.442695
      %v2466 = vpow.pop %v2465
      %v2467 = vmul.f32 %v2388, 1.442695
      %v2468 = vpow.pop %v2467
      %v2469 = vmul.f32 %v2389, 1.442695
      %v2470 = vpow.pop %v2469
      %v2471 = vmul.f32 %v2390, 1.442695
      %v2472 = vpow.pop %v2471
      %v2473 = vmul.f32 %v2391, 1.442695
      %v2474 = vpow.pop %v2473
      %v2475 = vmul.f32 %v2392, 1.442695
      %v2476 = vpow.pop %v2475
      %v2477 = vmul.f32 %v2393, 1.442695
      %v2478 = vpow.pop %v2477
      %v2479 = vmul.f32 %v2394, 1.442695
      %v2480 = vpow.pop %v2479
      %v2481 = vmul.f32 %v2395, 1.442695
      %v2482 = vpow.pop %v2481
      %v2483 = vmul.f32 %v2396, 1.442695
      %v2484 = vpow.pop %v2483
      %v2485 = vsel %vm2261, %v2400, 0.0
      %v2486 = vadd.f32 %v2398, %v2485
      %2487 = vadd.xlane.f32.xlu0 %v2486
      %v2488 = vpop.xlane.xlu0 %2487
      %v2489 = vsel %vm2261, %v2404, 0.0
      %v2490 = vadd.f32 %v2402, %v2489
      %2491 = vadd.xlane.f32.xlu0 %v2490
      %v2492 = vpop.xlane.xlu0 %2491
      %v2493 = vsel %vm2261, %v2408, 0.0
      %v2494 = vadd.f32 %v2406, %v2493
      %2495 = vadd.xlane.f32.xlu0 %v2494
      %v2496 = vpop.xlane.xlu0 %2495
      %v2497 = vsel %vm2261, %v2412, 0.0
      %v2498 = vadd.f32 %v2410, %v2497
      %2499 = vadd.xlane.f32.xlu0 %v2498
      %v2500 = vpop.xlane.xlu0 %2499
      %v2501 = vsel %vm2261, %v2416, 0.0
      %v2502 = vadd.f32 %v2414, %v2501
      %2503 = vadd.xlane.f32.xlu0 %v2502
      %v2504 = vpop.xlane.xlu0 %2503
      %v2505 = vsel %vm2261, %v2420, 0.0
      %v2506 = vadd.f32 %v2418, %v2505
      %2507 = vadd.xlane.f32.xlu0 %v2506
      %v2508 = vpop.xlane.xlu0 %2507
      %v2509 = vsel %vm2261, %v2424, 0.0
      %v2510 = vadd.f32 %v2422, %v2509
      %2511 = vadd.xlane.f32.xlu0 %v2510
      %v2512 = vpop.xlane.xlu0 %2511
      %v2513 = vsel %vm2261, %v2428, 0.0
      %v2514 = vadd.f32 %v2426, %v2513
      %2515 = vadd.xlane.f32.xlu0 %v2514
      %v2516 = vpop.xlane.xlu0 %2515
      %v2517 = vsel %vm2261, %v2432, 0.0
      %v2518 = vadd.f32 %v2430, %v2517
      %2519 = vadd.xlane.f32.xlu0 %v2518
      %v2520 = vpop.xlane.xlu0 %2519
      %v2521 = vsel %vm2261, %v2436, 0.0
      %v2522 = vadd.f32 %v2434, %v2521
      %2523 = vadd.xlane.f32.xlu0 %v2522
      %v2524 = vpop.xlane.xlu0 %2523
      %v2525 = vsel %vm2261, %v2440, 0.0
      %v2526 = vadd.f32 %v2438, %v2525
      %2527 = vadd.xlane.f32.xlu0 %v2526
      %v2528 = vpop.xlane.xlu0 %2527
      %v2529 = vsel %vm2261, %v2444, 0.0
      %v2530 = vadd.f32 %v2442, %v2529
      %2531 = vadd.xlane.f32.xlu0 %v2530
      %v2532 = vpop.xlane.xlu0 %2531
      %v2533 = vsel %vm2261, %v2448, 0.0
      %v2534 = vadd.f32 %v2446, %v2533
      %2535 = vadd.xlane.f32.xlu0 %v2534
      %v2536 = vpop.xlane.xlu0 %2535
      %v2537 = vsel %vm2261, %v2452, 0.0
      %v2538 = vadd.f32 %v2450, %v2537
      %2539 = vadd.xlane.f32.xlu0 %v2538
      %v2540 = vpop.xlane.xlu0 %2539
      %v2541 = vsel %vm2261, %v2456, 0.0
      %v2542 = vadd.f32 %v2454, %v2541
      %2543 = vadd.xlane.f32.xlu0 %v2542
      %v2544 = vpop.xlane.xlu0 %2543
      %v2545 = vsel %vm2261, %v2460, 0.0
      %v2546 = vadd.f32 %v2458, %v2545
      %2547 = vadd.xlane.f32.xlu0 %v2546
      %v2548 = vpop.xlane.xlu0 %2547
      %v2549 = vsel %vm2261, %v2464, 0.0
      %v2550 = vadd.f32 %v2462, %v2549
      %2551 = vadd.xlane.f32.xlu0 %v2550
      %v2552 = vpop.xlane.xlu0 %2551
      %v2553 = vsel %vm2261, %v2468, 0.0
      %v2554 = vadd.f32 %v2466, %v2553
      %2555 = vadd.xlane.f32.xlu0 %v2554
      %v2556 = vpop.xlane.xlu0 %2555
      %v2557 = vsel %vm2261, %v2472, 0.0
      %v2558 = vadd.f32 %v2470, %v2557
      %2559 = vadd.xlane.f32.xlu0 %v2558
      %v2560 = vpop.xlane.xlu0 %2559
      %v2561 = vsel %vm2261, %v2476, 0.0
      %v2562 = vadd.f32 %v2474, %v2561
      %2563 = vadd.xlane.f32.xlu0 %v2562
      %v2564 = vpop.xlane.xlu0 %2563
      %v2565 = vsel %vm2261, %v2480, 0.0
      %v2566 = vadd.f32 %v2478, %v2565
      %2567 = vadd.xlane.f32.xlu0 %v2566
      %v2568 = vpop.xlane.xlu0 %2567
      %v2569 = vsel %vm2346, %v2482, 0.0
      %v2570 = vsel %vm2348, %v2484, 0.0
      %v2571 = vadd.f32 %v2569, %v2570
      %2572 = vadd.xlane.f32.xlu0 %v2571
      %v2573 = vpop.xlane.xlu0 %2572
      %v2574 = vrcp.pop %v2488
      %v2575 = vrcp.pop %v2492
      %v2576 = vrcp.pop %v2496
      %v2577 = vrcp.pop %v2500
      %v2578 = vrcp.pop %v2504
      %v2579 = vrcp.pop %v2508
      %v2580 = vrcp.pop %v2512
      %v2581 = vrcp.pop %v2516
      %v2582 = vrcp.pop %v2520
      %v2583 = vrcp.pop %v2524
      %v2584 = vrcp.pop %v2528
      %v2585 = vrcp.pop %v2532
      %v2586 = vrcp.pop %v2536
      %v2587 = vrcp.pop %v2540
      %v2588 = vrcp.pop %v2544
      %v2589 = vrcp.pop %v2548
      %v2590 = vrcp.pop %v2552
      %v2591 = vrcp.pop %v2556
      %v2592 = vrcp.pop %v2560
      %v2593 = vrcp.pop %v2564
      %v2594 = vrcp.pop %v2568
      %v2595 = vrcp.pop %v2573
      %v2596 = vpack.c.bf16 %v2402, %v2398
      %v2597 = vpack.c.bf16 %v2404, %v2400
      %v2598 = vpack.c.bf16 %v2410, %v2406
      %v2599 = vpack.c.bf16 %v2412, %v2408
      %v2600 = vpack.c.bf16 %v2418, %v2414
      %v2601 = vpack.c.bf16 %v2420, %v2416
      %v2602 = vpack.c.bf16 %v2426, %v2422
      %v2603 = vpack.c.bf16 %v2428, %v2424
      %v2604 = vpack.c.bf16 %v2434, %v2430
      %v2605 = vpack.c.bf16 %v2436, %v2432
      %v2606 = vpack.c.bf16 %v2442, %v2438
      %v2607 = vpack.c.bf16 %v2444, %v2440
      %v2608 = vpack.c.bf16 %v2450, %v2446
      %v2609 = vpack.c.bf16 %v2452, %v2448
      %v2610 = vpack.c.bf16 %v2458, %v2454
      %v2611 = vpack.c.bf16 %v2460, %v2456
      %v2612 = vpack.c.bf16 %v2466, %v2462
      %v2613 = vpack.c.bf16 %v2468, %v2464
      %v2614 = vpack.c.bf16 %v2474, %v2470
      %v2615 = vpack.c.bf16 %v2476, %v2472
      %v2616 = vpack.c.bf16 %v2482, %v2478
      %v2617 = vpack.c.bf16 %v2484, %v2480
      %v2619 = vsel %vm2261, %v2597, 0
      %v2622 = vsel %vm2261, %v2599, 0
      %v2625 = vsel %vm2261, %v2601, 0
      %v2628 = vsel %vm2261, %v2603, 0
      %v2631 = vsel %vm2261, %v2605, 0
      %v2634 = vsel %vm2261, %v2607, 0
      %v2637 = vsel %vm2261, %v2609, 0
      %v2640 = vsel %vm2261, %v2611, 0
      %v2643 = vsel %vm2261, %v2613, 0
      %v2646 = vsel %vm2261, %v2615, 0
      %v2649 = vsel %vm2261, %v2617, 0
      %vm2651 = vcmask 1043456
      %vm2652 = vcmask 1044480
      %v2653 = vsel %vm2651, 4294967295, 65535
      %v2654 = vsel %vm2652, %v2653, 0
      %v2656 = vand.u32 %v2010, %v2654
      %2658 = vmatprep.subr.bf16.mxu0 0
      %2659 = vmatpush1.bf16.msra.mxu0 %v2000
      %2660 = vmatprep.subr.bf16.mxu0 0
      %2661 = vmatpush1.bf16.msra.mxu0 %v2001
      %2662 = vmatprep.subr.bf16.mxu0 0
      %2663 = vmatpush1.bf16.msra.mxu0 %v2002
      %2664 = vmatprep.subr.bf16.mxu0 0
      %2665 = vmatpush1.bf16.msra.mxu0 %v2003
      %2666 = vmatprep.subr.bf16.mxu0 0
      %2667 = vmatpush1.bf16.msra.mxu0 %v2004
      %2668 = vmatprep.subr.bf16.mxu0 0
      %2669 = vmatpush1.bf16.msra.mxu0 %v2005
      %2670 = vmatprep.subr.bf16.mxu0 0
      %2671 = vmatpush1.bf16.msra.mxu0 %v2006
      %2672 = vmatprep.subr.bf16.mxu0 0
      %2673 = vmatpush1.bf16.msra.mxu0 %v2007
      %2674 = vmatprep.subr.bf16.mxu0 0
      %2675 = vmatpush1.bf16.msra.mxu0 %v2008
      %2676 = vmatprep.subr.bf16.mxu0 0
      %2677 = vmatpush1.bf16.msra.mxu0 %v2009
      %2678 = vmatprep.subr.bf16.mxu0 0
      %2679 = vmatpush1.bf16.msra.mxu0 %v2656
      %2680 = vmatprep.subr.bf16.mxu0 0
      %2681 = vmatpush1.bf16.msra.mxu0 0
      %2682 = vmatprep.subr.bf16.mxu0 0
      %2683 = vmatpush1.bf16.msra.mxu0 0
      %2684 = vmatprep.subr.bf16.mxu0 0
      %2685 = vmatpush1.bf16.msra.mxu0 0
      %2686 = vmatprep.subr.bf16.mxu0 0
      %2687 = vmatpush1.bf16.msra.mxu0 0
      %2688 = vmatprep.subr.bf16.mxu0 0
      %2689 = vmatpush1.bf16.msra.mxu0 0
      %2690 = vmatprep.mubr.bf16.mxu0 %v2619
      %2691 = vmatmul.mubr.bf16.gmra.mrb[0].mxu0 %v2596
      %v2692 = vpop.f32.mrb[0].mxu0
      %v2693 = vadd.f32 0.0, %v2692
      %v2694 = vpop.f32.mrb[0].mxu0
      %v2695 = vpop.f32.mrb[0].mxu0
      %v2696 = vadd.f32 0.0, %v2695
      %v2697 = vpop.f32.mrb[0].mxu0
      %2698 = vmatprep.mubr.bf16.mxu0 %v2622
      %2699 = vmatmul.mubr.bf16.gmra.mrb[0].mxu0 %v2598
      %v2700 = vpop.f32.mrb[0].mxu0
      %v2701 = vadd.f32 0.0, %v2700
      %v2702 = vpop.f32.mrb[0].mxu0
      %v2703 = vpop.f32.mrb[0].mxu0
      %v2704 = vadd.f32 0.0, %v2703
      %v2705 = vpop.f32.mrb[0].mxu0
      %2706 = vmatprep.mubr.bf16.mxu0 %v2625
      %2707 = vmatmul.mubr.bf16.gmra.mrb[0].mxu0 %v2600
      %v2708 = vpop.f32.mrb[0].mxu0
      %v2709 = vadd.f32 0.0, %v2708
      %v2710 = vpop.f32.mrb[0].mxu0
      %v2711 = vpop.f32.mrb[0].mxu0
      %v2712 = vadd.f32 0.0, %v2711
      %v2713 = vpop.f32.mrb[0].mxu0
      %2714 = vmatprep.mubr.bf16.mxu0 %v2628
      %2715 = vmatmul.mubr.bf16.gmra.mrb[0].mxu0 %v2602
      %v2716 = vpop.f32.mrb[0].mxu0
      %v2717 = vadd.f32 0.0, %v2716
      %v2718 = vpop.f32.mrb[0].mxu0
      %v2719 = vpop.f32.mrb[0].mxu0
      %v2720 = vadd.f32 0.0, %v2719
      %v2721 = vpop.f32.mrb[0].mxu0
      %2722 = vmatprep.mubr.bf16.mxu0 %v2631
      %2723 = vmatmul.mubr.bf16.gmra.mrb[0].mxu0 %v2604
      %v2724 = vpop.f32.mrb[0].mxu0
      %v2725 = vadd.f32 0.0, %v2724
      %v2726 = vpop.f32.mrb[0].mxu0
      %v2727 = vpop.f32.mrb[0].mxu0
      %v2728 = vadd.f32 0.0, %v2727
      %v2729 = vpop.f32.mrb[0].mxu0
      %2730 = vmatprep.mubr.bf16.mxu0 %v2634
      %2731 = vmatmul.mubr.bf16.gmra.mrb[0].mxu0 %v2606
      %v2732 = vpop.f32.mrb[0].mxu0
      %v2733 = vadd.f32 0.0, %v2732
      %v2734 = vpop.f32.mrb[0].mxu0
      %v2735 = vpop.f32.mrb[0].mxu0
      %v2736 = vadd.f32 0.0, %v2735
      %v2737 = vpop.f32.mrb[0].mxu0
      %2738 = vmatprep.mubr.bf16.mxu0 %v2637
      %2739 = vmatmul.mubr.bf16.gmra.mrb[0].mxu0 %v2608
      %v2740 = vpop.f32.mrb[0].mxu0
      %v2741 = vadd.f32 0.0, %v2740
      %v2742 = vpop.f32.mrb[0].mxu0
      %v2743 = vpop.f32.mrb[0].mxu0
      %v2744 = vadd.f32 0.0, %v2743
      %v2745 = vpop.f32.mrb[0].mxu0
      %2746 = vmatprep.mubr.bf16.mxu0 %v2640
      %2747 = vmatmul.mubr.bf16.gmra.mrb[0].mxu0 %v2610
      %v2748 = vpop.f32.mrb[0].mxu0
      %v2749 = vadd.f32 0.0, %v2748
      %v2750 = vpop.f32.mrb[0].mxu0
      %v2751 = vpop.f32.mrb[0].mxu0
      %v2752 = vadd.f32 0.0, %v2751
      %v2753 = vpop.f32.mrb[0].mxu0
      %2754 = vmatprep.mubr.bf16.mxu0 %v2643
      %2755 = vmatmul.mubr.bf16.gmra.mrb[0].mxu0 %v2612
      %v2756 = vpop.f32.mrb[0].mxu0
      %v2757 = vadd.f32 0.0, %v2756
      %v2758 = vpop.f32.mrb[0].mxu0
      %v2759 = vpop.f32.mrb[0].mxu0
      %v2760 = vadd.f32 0.0, %v2759
      %v2761 = vpop.f32.mrb[0].mxu0
      %2762 = vmatprep.mubr.bf16.mxu0 %v2646
      %2763 = vmatmul.mubr.bf16.gmra.mrb[0].mxu0 %v2614
      %v2764 = vpop.f32.mrb[0].mxu0
      %v2765 = vadd.f32 0.0, %v2764
      %v2766 = vpop.f32.mrb[0].mxu0
      %v2767 = vpop.f32.mrb[0].mxu0
      %v2768 = vadd.f32 0.0, %v2767
      %v2769 = vpop.f32.mrb[0].mxu0
      %2770 = vmatprep.mubr.bf16.mxu0 %v2649
      %2771 = vmatmul.mubr.bf16.gmra.mrb[0].mxu0 %v2616
      %v2772 = vpop.f32.mrb[0].mxu0
      %v2773 = vadd.f32 0.0, %v2772
      %v2774 = vpop.f32.mrb[0].mxu0
      %v2775 = vpop.f32.mrb[0].mxu0
      %v2776 = vadd.f32 0.0, %v2775
      %v2777 = vpop.f32.mrb[0].mxu0
      %2778 = vdwg.mxu0
      %v2779 = vmul.f32 %v2693, %v2574
      %v2780 = vmul.f32 %v2696, %v2575
      %v2781 = vmul.f32 %v2701, %v2576
      %v2782 = vmul.f32 %v2704, %v2577
      %v2783 = vmul.f32 %v2709, %v2578
      %v2784 = vmul.f32 %v2712, %v2579
      %v2785 = vmul.f32 %v2717, %v2580
      %v2786 = vmul.f32 %v2720, %v2581
      %v2787 = vmul.f32 %v2725, %v2582
      %v2788 = vmul.f32 %v2728, %v2583
      %v2789 = vmul.f32 %v2733, %v2584
      %v2790 = vmul.f32 %v2736, %v2585
      %v2791 = vmul.f32 %v2741, %v2586
      %v2792 = vmul.f32 %v2744, %v2587
      %v2793 = vmul.f32 %v2749, %v2588
      %v2794 = vmul.f32 %v2752, %v2589
      %v2795 = vmul.f32 %v2757, %v2590
      %v2796 = vmul.f32 %v2760, %v2591
      %v2797 = vmul.f32 %v2765, %v2592
      %v2798 = vmul.f32 %v2768, %v2593
      %v2799 = vmul.f32 %v2773, %v2594
      %v2800 = vmul.f32 %v2776, %v2595
      %v2801 = vld [vmem:[%s10] sm:$0xff]
      %v2802 = vld [vmem:[%s10 + $0x8] sm:$0xff]
      %v2803 = vld [vmem:[%s10 + $0x10] sm:$0xff]
      %v2804 = vld [vmem:[%s10 + $0x18] sm:$0xff]
      %v2805 = vld [vmem:[%s10 + $0x20] sm:$0xff]
      %v2806 = vld [vmem:[%s10 + $0x28] sm:$0xff]
      %v2807 = vld [vmem:[%s10 + $0x30] sm:$0xff]
      %v2808 = vld [vmem:[%s10 + $0x38] sm:$0xff]
      %v2809 = vld [vmem:[%s10 + $0x40] sm:$0xff]
      %v2810 = vld [vmem:[%s10 + $0x48] sm:$0xff]
      %v2811 = vld [vmem:[%s10 + $0x50] sm:$0xff]
      %v2812 = vld [vmem:[%s10 + $0x58] sm:$0xff]
      %v2813 = vld [vmem:[%s10 + $0x60] sm:$0xff]
      %v2814 = vld [vmem:[%s10 + $0x68] sm:$0xff]
      %v2815 = vld [vmem:[%s10 + $0x70] sm:$0xff]
      %v2816 = vld [vmem:[%s10 + $0x78] sm:$0xff]
      %v2817 = vld [vmem:[%s10 + $0x80] sm:$0xff]
      %v2818 = vld [vmem:[%s10 + $0x88] sm:$0xff]
      %v2819 = vld [vmem:[%s10 + $0x90] sm:$0xff]
      %v2820 = vld [vmem:[%s10 + $0x98] sm:$0xff]
      %v2821 = vld [vmem:[%s10 + $0xa0] sm:$0xff]
      %v2822 = vld [vmem:[%s10 + $0xa8] sm:$0x11]
      %v2823 = vunpack.c.l.bf16 %v2801
      %v2824 = vunpack.c.h.bf16 %v2801
      %v2825 = vunpack.c.l.bf16 %v2802
      %v2826 = vunpack.c.h.bf16 %v2802
      %v2827 = vunpack.c.l.bf16 %v2803
      %v2828 = vunpack.c.h.bf16 %v2803
      %v2829 = vunpack.c.l.bf16 %v2804
      %v2830 = vunpack.c.h.bf16 %v2804
      %v2831 = vunpack.c.l.bf16 %v2805
      %v2832 = vunpack.c.h.bf16 %v2805
      %v2833 = vunpack.c.l.bf16 %v2806
      %v2834 = vunpack.c.h.bf16 %v2806
      %v2835 = vunpack.c.l.bf16 %v2807
      %v2836 = vunpack.c.h.bf16 %v2807
      %v2837 = vunpack.c.l.bf16 %v2808
      %v2838 = vunpack.c.h.bf16 %v2808
      %v2839 = vunpack.c.l.bf16 %v2809
      %v2840 = vunpack.c.h.bf16 %v2809
      %v2841 = vunpack.c.l.bf16 %v2810
      %v2842 = vunpack.c.h.bf16 %v2810
      %v2843 = vunpack.c.l.bf16 %v2811
      %v2844 = vunpack.c.h.bf16 %v2811
      %v2845 = vunpack.c.l.bf16 %v2812
      %v2846 = vunpack.c.h.bf16 %v2812
      %v2847 = vunpack.c.l.bf16 %v2813
      %v2848 = vunpack.c.h.bf16 %v2813
      %v2849 = vunpack.c.l.bf16 %v2814
      %v2850 = vunpack.c.h.bf16 %v2814
      %v2851 = vunpack.c.l.bf16 %v2815
      %v2852 = vunpack.c.h.bf16 %v2815
      %v2853 = vunpack.c.l.bf16 %v2816
      %v2854 = vunpack.c.h.bf16 %v2816
      %v2855 = vunpack.c.l.bf16 %v2817
      %v2856 = vunpack.c.h.bf16 %v2817
      %v2857 = vunpack.c.l.bf16 %v2818
      %v2858 = vunpack.c.h.bf16 %v2818
      %v2859 = vunpack.c.l.bf16 %v2819
      %v2860 = vunpack.c.h.bf16 %v2819
      %v2861 = vunpack.c.l.bf16 %v2820
      %v2862 = vunpack.c.h.bf16 %v2820
      %v2863 = vunpack.c.l.bf16 %v2821
      %v2864 = vunpack.c.h.bf16 %v2821
      %v2865 = vunpack.c.l.bf16 %v2822
      %v2866 = vunpack.c.h.bf16 %v2822
      %v2868 = vsel %vm2111, %v1869, 0
      %v2871 = vsel %vm2111, %v1870, 0
      %2873 = vmatprep.subr.bf16.mxu0 %v2871
      %2874 = vmatpush1.bf16.msra.mxu0 %v2868
      %2875 = vmatprep.subr.bf16.mxu0 0
      %2876 = vmatpush1.bf16.msra.mxu0 0
      %2877 = vmatprep.subr.bf16.mxu0 0
      %2878 = vmatpush1.bf16.msra.mxu0 0
      %2879 = vmatprep.subr.bf16.mxu0 0
      %2880 = vmatpush1.bf16.msra.mxu0 0
      %2881 = vmatprep.subr.bf16.mxu0 0
      %2882 = vmatpush1.bf16.msra.mxu0 0
      %2883 = vmatprep.subr.bf16.mxu0 0
      %2884 = vmatpush1.bf16.msra.mxu0 0
      %2885 = vmatprep.subr.bf16.mxu0 0
      %2886 = vmatpush1.bf16.msra.mxu0 0
      %2887 = vmatprep.subr.bf16.mxu0 0
      %2888 = vmatpush1.bf16.msra.mxu0 0
      %2889 = vmatprep.subr.bf16.mxu0 0
      %2890 = vmatpush1.bf16.msra.mxu0 0
      %2891 = vmatprep.subr.bf16.mxu0 0
      %2892 = vmatpush1.bf16.msra.mxu0 0
      %2893 = vmatprep.subr.bf16.mxu0 0
      %2894 = vmatpush1.bf16.msra.mxu0 0
      %2895 = vmatprep.subr.bf16.mxu0 0
      %2896 = vmatpush1.bf16.msra.mxu0 0
      %2897 = vmatprep.subr.bf16.mxu0 0
      %2898 = vmatpush1.bf16.msra.mxu0 0
      %2899 = vmatprep.subr.bf16.mxu0 0
      %2900 = vmatpush1.bf16.msra.mxu0 0
      %2901 = vmatprep.subr.bf16.mxu0 0
      %2902 = vmatpush1.bf16.msra.mxu0 0
      %2903 = vmatprep.subr.bf16.mxu0 0
      %2904 = vmatpush1.bf16.msra.mxu0 0
      %2905 = vmatprep.mubr.bf16.mxu0 0
      %2906 = vmatmul.mubr.bf16.gmra.mrb[0].mxu0 %v2079
      %v2907 = vpop.f32.mrb[0].mxu0
      %v2908 = vadd.f32 %v2823, %v2907
      %v2909 = vpop.f32.mrb[0].mxu0
      %v2910 = vadd.f32 %v2824, %v2909
      %v2911 = vpop.f32.mrb[0].mxu0
      %v2912 = vadd.f32 %v2825, %v2911
      %v2913 = vpop.f32.mrb[0].mxu0
      %v2914 = vadd.f32 %v2826, %v2913
      %2915 = vmatprep.mubr.bf16.mxu0 0
      %2916 = vmatmul.mubr.bf16.gmra.mrb[0].mxu0 %v2082
      %v2917 = vpop.f32.mrb[0].mxu0
      %v2918 = vadd.f32 %v2827, %v2917
      %v2919 = vpop.f32.mrb[0].mxu0
      %v2920 = vadd.f32 %v2828, %v2919
      %v2921 = vpop.f32.mrb[0].mxu0
      %v2922 = vadd.f32 %v2829, %v2921
      %v2923 = vpop.f32.mrb[0].mxu0
      %v2924 = vadd.f32 %v2830, %v2923
      %2925 = vmatprep.mubr.bf16.mxu0 0
      %2926 = vmatmul.mubr.bf16.gmra.mrb[0].mxu0 %v2085
      %v2927 = vpop.f32.mrb[0].mxu0
      %v2928 = vadd.f32 %v2831, %v2927
      %v2929 = vpop.f32.mrb[0].mxu0
      %v2930 = vadd.f32 %v2832, %v2929
      %v2931 = vpop.f32.mrb[0].mxu0
      %v2932 = vadd.f32 %v2833, %v2931
      %v2933 = vpop.f32.mrb[0].mxu0
      %v2934 = vadd.f32 %v2834, %v2933
      %2935 = vmatprep.mubr.bf16.mxu0 0
      %2936 = vmatmul.mubr.bf16.gmra.mrb[0].mxu0 %v2088
      %v2937 = vpop.f32.mrb[0].mxu0
      %v2938 = vadd.f32 %v2835, %v2937
      %v2939 = vpop.f32.mrb[0].mxu0
      %v2940 = vadd.f32 %v2836, %v2939
      %v2941 = vpop.f32.mrb[0].mxu0
      %v2942 = vadd.f32 %v2837, %v2941
      %v2943 = vpop.f32.mrb[0].mxu0
      %v2944 = vadd.f32 %v2838, %v2943
      %2945 = vmatprep.mubr.bf16.mxu0 0
      %2946 = vmatmul.mubr.bf16.gmra.mrb[0].mxu0 %v2091
      %v2947 = vpop.f32.mrb[0].mxu0
      %v2948 = vadd.f32 %v2839, %v2947
      %v2949 = vpop.f32.mrb[0].mxu0
      %v2950 = vadd.f32 %v2840, %v2949
      %v2951 = vpop.f32.mrb[0].mxu0
      %v2952 = vadd.f32 %v2841, %v2951
      %v2953 = vpop.f32.mrb[0].mxu0
      %v2954 = vadd.f32 %v2842, %v2953
      %2955 = vmatprep.mubr.bf16.mxu0 0
      %2956 = vmatmul.mubr.bf16.gmra.mrb[0].mxu0 %v2094
      %v2957 = vpop.f32.mrb[0].mxu0
      %v2958 = vadd.f32 %v2843, %v2957
      %v2959 = vpop.f32.mrb[0].mxu0
      %v2960 = vadd.f32 %v2844, %v2959
      %v2961 = vpop.f32.mrb[0].mxu0
      %v2962 = vadd.f32 %v2845, %v2961
      %v2963 = vpop.f32.mrb[0].mxu0
      %v2964 = vadd.f32 %v2846, %v2963
      %2965 = vmatprep.mubr.bf16.mxu0 0
      %2966 = vmatmul.mubr.bf16.gmra.mrb[0].mxu0 %v2097
      %v2967 = vpop.f32.mrb[0].mxu0
      %v2968 = vadd.f32 %v2847, %v2967
      %v2969 = vpop.f32.mrb[0].mxu0
      %v2970 = vadd.f32 %v2848, %v2969
      %v2971 = vpop.f32.mrb[0].mxu0
      %v2972 = vadd.f32 %v2849, %v2971
      %v2973 = vpop.f32.mrb[0].mxu0
      %v2974 = vadd.f32 %v2850, %v2973
      %2975 = vmatprep.mubr.bf16.mxu0 0
      %2976 = vmatmul.mubr.bf16.gmra.mrb[0].mxu0 %v2100
      %v2977 = vpop.f32.mrb[0].mxu0
      %v2978 = vadd.f32 %v2851, %v2977
      %v2979 = vpop.f32.mrb[0].mxu0
      %v2980 = vadd.f32 %v2852, %v2979
      %v2981 = vpop.f32.mrb[0].mxu0
      %v2982 = vadd.f32 %v2853, %v2981
      %v2983 = vpop.f32.mrb[0].mxu0
      %v2984 = vadd.f32 %v2854, %v2983
      %2985 = vmatprep.mubr.bf16.mxu0 0
      %2986 = vmatmul.mubr.bf16.gmra.mrb[0].mxu0 %v2103
      %v2987 = vpop.f32.mrb[0].mxu0
      %v2988 = vadd.f32 %v2855, %v2987
      %v2989 = vpop.f32.mrb[0].mxu0
      %v2990 = vadd.f32 %v2856, %v2989
      %v2991 = vpop.f32.mrb[0].mxu0
      %v2992 = vadd.f32 %v2857, %v2991
      %v2993 = vpop.f32.mrb[0].mxu0
      %v2994 = vadd.f32 %v2858, %v2993
      %2995 = vmatprep.mubr.bf16.mxu0 0
      %2996 = vmatmul.mubr.bf16.gmra.mrb[0].mxu0 %v2106
      %v2997 = vpop.f32.mrb[0].mxu0
      %v2998 = vadd.f32 %v2859, %v2997
      %v2999 = vpop.f32.mrb[0].mxu0
      %v3000 = vadd.f32 %v2860, %v2999
      %v3001 = vpop.f32.mrb[0].mxu0
      %v3002 = vadd.f32 %v2861, %v3001
      %v3003 = vpop.f32.mrb[0].mxu0
      %v3004 = vadd.f32 %v2862, %v3003
      %3005 = vmatprep.mubr.bf16.mxu0 0
      %3006 = vmatmul.mubr.bf16.gmra.mrb[0].mxu0 %v2109
      %v3007 = vpop.f32.mrb[0].mxu0
      %v3008 = vadd.f32 %v2863, %v3007
      %v3009 = vpop.f32.mrb[0].mxu0
      %v3010 = vadd.f32 %v2864, %v3009
      %v3011 = vpop.f32.mrb[0].mxu0
      %v3012 = vadd.f32 %v2865, %v3011
      %v3013 = vpop.f32.mrb[0].mxu0
      %v3014 = vadd.f32 %v2866, %v3013
      %3015 = vdwg.mxu0
      %v3016 = vsel %vm2261, %v2910, -inf
      %v3017 = vmax.f32 %v2908, %v3016
      %3018 = vmax.xlane.f32.xlu0 %v3017
      %v3019 = vpop.xlane.xlu0 %3018
      %v3020 = vsel %vm2261, %v2914, -inf
      %v3021 = vmax.f32 %v2912, %v3020
      %3022 = vmax.xlane.f32.xlu0 %v3021
      %v3023 = vpop.xlane.xlu0 %3022
      %v3024 = vsel %vm2261, %v2920, -inf
      %v3025 = vmax.f32 %v2918, %v3024
      %3026 = vmax.xlane.f32.xlu0 %v3025
      %v3027 = vpop.xlane.xlu0 %3026
      %v3028 = vsel %vm2261, %v2924, -inf
      %v3029 = vmax.f32 %v2922, %v3028
      %3030 = vmax.xlane.f32.xlu0 %v3029
      %v3031 = vpop.xlane.xlu0 %3030
      %v3032 = vsel %vm2261, %v2930, -inf
      %v3033 = vmax.f32 %v2928, %v3032
      %3034 = vmax.xlane.f32.xlu0 %v3033
      %v3035 = vpop.xlane.xlu0 %3034
      %v3036 = vsel %vm2261, %v2934, -inf
      %v3037 = vmax.f32 %v2932, %v3036
      %3038 = vmax.xlane.f32.xlu0 %v3037
      %v3039 = vpop.xlane.xlu0 %3038
      %v3040 = vsel %vm2261, %v2940, -inf
      %v3041 = vmax.f32 %v2938, %v3040
      %3042 = vmax.xlane.f32.xlu0 %v3041
      %v3043 = vpop.xlane.xlu0 %3042
      %v3044 = vsel %vm2261, %v2944, -inf
      %v3045 = vmax.f32 %v2942, %v3044
      %3046 = vmax.xlane.f32.xlu0 %v3045
      %v3047 = vpop.xlane.xlu0 %3046
      %v3048 = vsel %vm2261, %v2950, -inf
      %v3049 = vmax.f32 %v2948, %v3048
      %3050 = vmax.xlane.f32.xlu0 %v3049
      %v3051 = vpop.xlane.xlu0 %3050
      %v3052 = vsel %vm2261, %v2954, -inf
      %v3053 = vmax.f32 %v2952, %v3052
      %3054 = vmax.xlane.f32.xlu0 %v3053
      %v3055 = vpop.xlane.xlu0 %3054
      %v3056 = vsel %vm2261, %v2960, -inf
      %v3057 = vmax.f32 %v2958, %v3056
      %3058 = vmax.xlane.f32.xlu0 %v3057
      %v3059 = vpop.xlane.xlu0 %3058
      %v3060 = vsel %vm2261, %v2964, -inf
      %v3061 = vmax.f32 %v2962, %v3060
      %3062 = vmax.xlane.f32.xlu0 %v3061
      %v3063 = vpop.xlane.xlu0 %3062
      %v3064 = vsel %vm2261, %v2970, -inf
      %v3065 = vmax.f32 %v2968, %v3064
      %3066 = vmax.xlane.f32.xlu0 %v3065
      %v3067 = vpop.xlane.xlu0 %3066
      %v3068 = vsel %vm2261, %v2974, -inf
      %v3069 = vmax.f32 %v2972, %v3068
      %3070 = vmax.xlane.f32.xlu0 %v3069
      %v3071 = vpop.xlane.xlu0 %3070
      %v3072 = vsel %vm2261, %v2980, -inf
      %v3073 = vmax.f32 %v2978, %v3072
      %3074 = vmax.xlane.f32.xlu0 %v3073
      %v3075 = vpop.xlane.xlu0 %3074
      %v3076 = vsel %vm2261, %v2984, -inf
      %v3077 = vmax.f32 %v2982, %v3076
      %3078 = vmax.xlane.f32.xlu0 %v3077
      %v3079 = vpop.xlane.xlu0 %3078
      %v3080 = vsel %vm2261, %v2990, -inf
      %v3081 = vmax.f32 %v2988, %v3080
      %3082 = vmax.xlane.f32.xlu0 %v3081
      %v3083 = vpop.xlane.xlu0 %3082
      %v3084 = vsel %vm2261, %v2994, -inf
      %v3085 = vmax.f32 %v2992, %v3084
      %3086 = vmax.xlane.f32.xlu0 %v3085
      %v3087 = vpop.xlane.xlu0 %3086
      %v3088 = vsel %vm2261, %v3000, -inf
      %v3089 = vmax.f32 %v2998, %v3088
      %3090 = vmax.xlane.f32.xlu0 %v3089
      %v3091 = vpop.xlane.xlu0 %3090
      %v3092 = vsel %vm2261, %v3004, -inf
      %v3093 = vmax.f32 %v3002, %v3092
      %3094 = vmax.xlane.f32.xlu0 %v3093
      %v3095 = vpop.xlane.xlu0 %3094
      %v3096 = vsel %vm2261, %v3010, -inf
      %v3097 = vmax.f32 %v3008, %v3096
      %3098 = vmax.xlane.f32.xlu0 %v3097
      %v3099 = vpop.xlane.xlu0 %3098
      %v3100 = vsel %vm2346, %v3012, -inf
      %v3101 = vsel %vm2348, %v3014, -inf
      %v3102 = vmax.f32 %v3100, %v3101
      %3103 = vmax.xlane.f32.xlu0 %v3102
      %v3104 = vpop.xlane.xlu0 %3103
      %v3105 = vsub.f32 %v2908, %v3019
      %v3106 = vsub.f32 %v2910, %v3019
      %v3107 = vsub.f32 %v2912, %v3023
      %v3108 = vsub.f32 %v2914, %v3023
      %v3109 = vsub.f32 %v2918, %v3027
      %v3110 = vsub.f32 %v2920, %v3027
      %v3111 = vsub.f32 %v2922, %v3031
      %v3112 = vsub.f32 %v2924, %v3031
      %v3113 = vsub.f32 %v2928, %v3035
      %v3114 = vsub.f32 %v2930, %v3035
      %v3115 = vsub.f32 %v2932, %v3039
      %v3116 = vsub.f32 %v2934, %v3039
      %v3117 = vsub.f32 %v2938, %v3043
      %v3118 = vsub.f32 %v2940, %v3043
      %v3119 = vsub.f32 %v2942, %v3047
      %v3120 = vsub.f32 %v2944, %v3047
      %v3121 = vsub.f32 %v2948, %v3051
      %v3122 = vsub.f32 %v2950, %v3051
      %v3123 = vsub.f32 %v2952, %v3055
      %v3124 = vsub.f32 %v2954, %v3055
      %v3125 = vsub.f32 %v2958, %v3059
      %v3126 = vsub.f32 %v2960, %v3059
      %v3127 = vsub.f32 %v2962, %v3063
      %v3128 = vsub.f32 %v2964, %v3063
      %v3129 = vsub.f32 %v2968, %v3067
      %v3130 = vsub.f32 %v2970, %v3067
      %v3131 = vsub.f32 %v2972, %v3071
      %v3132 = vsub.f32 %v2974, %v3071
      %v3133 = vsub.f32 %v2978, %v3075
      %v3134 = vsub.f32 %v2980, %v3075
      %v3135 = vsub.f32 %v2982, %v3079
      %v3136 = vsub.f32 %v2984, %v3079
      %v3137 = vsub.f32 %v2988, %v3083
      %v3138 = vsub.f32 %v2990, %v3083
      %v3139 = vsub.f32 %v2992, %v3087
      %v3140 = vsub.f32 %v2994, %v3087
      %v3141 = vsub.f32 %v2998, %v3091
      %v3142 = vsub.f32 %v3000, %v3091
      %v3143 = vsub.f32 %v3002, %v3095
      %v3144 = vsub.f32 %v3004, %v3095
      %v3145 = vsub.f32 %v3008, %v3099
      %v3146 = vsub.f32 %v3010, %v3099
      %v3147 = vsub.f32 %v3012, %v3104
      %v3148 = vsub.f32 %v3014, %v3104
      %v3149 = vmul.f32 %v3105, 1.442695
      %v3150 = vpow.pop %v3149
      %v3151 = vmul.f32 %v3106, 1.442695
      %v3152 = vpow.pop %v3151
      %v3153 = vmul.f32 %v3107, 1.442695
      %v3154 = vpow.pop %v3153
      %v3155 = vmul.f32 %v3108, 1.442695
      %v3156 = vpow.pop %v3155
      %v3157 = vmul.f32 %v3109, 1.442695
      %v3158 = vpow.pop %v3157
      %v3159 = vmul.f32 %v3110, 1.442695
      %v3160 = vpow.pop %v3159
      %v3161 = vmul.f32 %v3111, 1.442695
      %v3162 = vpow.pop %v3161
      %v3163 = vmul.f32 %v3112, 1.442695
      %v3164 = vpow.pop %v3163
      %v3165 = vmul.f32 %v3113, 1.442695
      %v3166 = vpow.pop %v3165
      %v3167 = vmul.f32 %v3114, 1.442695
      %v3168 = vpow.pop %v3167
      %v3169 = vmul.f32 %v3115, 1.442695
      %v3170 = vpow.pop %v3169
      %v3171 = vmul.f32 %v3116, 1.442695
      %v3172 = vpow.pop %v3171
      %v3173 = vmul.f32 %v3117, 1.442695
      %v3174 = vpow.pop %v3173
      %v3175 = vmul.f32 %v3118, 1.442695
      %v3176 = vpow.pop %v3175
      %v3177 = vmul.f32 %v3119, 1.442695
      %v3178 = vpow.pop %v3177
      %v3179 = vmul.f32 %v3120, 1.442695
      %v3180 = vpow.pop %v3179
      %v3181 = vmul.f32 %v3121, 1.442695
      %v3182 = vpow.pop %v3181
      %v3183 = vmul.f32 %v3122, 1.442695
      %v3184 = vpow.pop %v3183
      %v3185 = vmul.f32 %v3123, 1.442695
      %v3186 = vpow.pop %v3185
      %v3187 = vmul.f32 %v3124, 1.442695
      %v3188 = vpow.pop %v3187
      %v3189 = vmul.f32 %v3125, 1.442695
      %v3190 = vpow.pop %v3189
      %v3191 = vmul.f32 %v3126, 1.442695
      %v3192 = vpow.pop %v3191
      %v3193 = vmul.f32 %v3127, 1.442695
      %v3194 = vpow.pop %v3193
      %v3195 = vmul.f32 %v3128, 1.442695
      %v3196 = vpow.pop %v3195
      %v3197 = vmul.f32 %v3129, 1.442695
      %v3198 = vpow.pop %v3197
      %v3199 = vmul.f32 %v3130, 1.442695
      %v3200 = vpow.pop %v3199
      %v3201 = vmul.f32 %v3131, 1.442695
      %v3202 = vpow.pop %v3201
      %v3203 = vmul.f32 %v3132, 1.442695
      %v3204 = vpow.pop %v3203
      %v3205 = vmul.f32 %v3133, 1.442695
      %v3206 = vpow.pop %v3205
      %v3207 = vmul.f32 %v3134, 1.442695
      %v3208 = vpow.pop %v3207
      %v3209 = vmul.f32 %v3135, 1.442695
      %v3210 = vpow.pop %v3209
      %v3211 = vmul.f32 %v3136, 1.442695
      %v3212 = vpow.pop %v3211
      %v3213 = vmul.f32 %v3137, 1.442695
      %v3214 = vpow.pop %v3213
      %v3215 = vmul.f32 %v3138, 1.442695
      %v3216 = vpow.pop %v3215
      %v3217 = vmul.f32 %v3139, 1.442695
      %v3218 = vpow.pop %v3217
      %v3219 = vmul.f32 %v3140, 1.442695
      %v3220 = vpow.pop %v3219
      %v3221 = vmul.f32 %v3141, 1.442695
      %v3222 = vpow.pop %v3221
      %v3223 = vmul.f32 %v3142, 1.442695
      %v3224 = vpow.pop %v3223
      %v3225 = vmul.f32 %v3143, 1.442695
      %v3226 = vpow.pop %v3225
      %v3227 = vmul.f32 %v3144, 1.442695
      %v3228 = vpow.pop %v3227
      %v3229 = vmul.f32 %v3145, 1.442695
      %v3230 = vpow.pop %v3229
      %v3231 = vmul.f32 %v3146, 1.442695
      %v3232 = vpow.pop %v3231
      %v3233 = vmul.f32 %v3147, 1.442695
      %v3234 = vpow.pop %v3233
      %v3235 = vmul.f32 %v3148, 1.442695
      %v3236 = vpow.pop %v3235
      %v3237 = vsel %vm2261, %v3152, 0.0
      %v3238 = vadd.f32 %v3150, %v3237
      %3239 = vadd.xlane.f32.xlu0 %v3238
      %v3240 = vpop.xlane.xlu0 %3239
      %v3241 = vsel %vm2261, %v3156, 0.0
      %v3242 = vadd.f32 %v3154, %v3241
      %3243 = vadd.xlane.f32.xlu0 %v3242
      %v3244 = vpop.xlane.xlu0 %3243
      %v3245 = vsel %vm2261, %v3160, 0.0
      %v3246 = vadd.f32 %v3158, %v3245
      %3247 = vadd.xlane.f32.xlu0 %v3246
      %v3248 = vpop.xlane.xlu0 %3247
      %v3249 = vsel %vm2261, %v3164, 0.0
      %v3250 = vadd.f32 %v3162, %v3249
      %3251 = vadd.xlane.f32.xlu0 %v3250
      %v3252 = vpop.xlane.xlu0 %3251
      %v3253 = vsel %vm2261, %v3168, 0.0
      %v3254 = vadd.f32 %v3166, %v3253
      %3255 = vadd.xlane.f32.xlu0 %v3254
      %v3256 = vpop.xlane.xlu0 %3255
      %v3257 = vsel %vm2261, %v3172, 0.0
      %v3258 = vadd.f32 %v3170, %v3257
      %3259 = vadd.xlane.f32.xlu0 %v3258
      %v3260 = vpop.xlane.xlu0 %3259
      %v3261 = vsel %vm2261, %v3176, 0.0
      %v3262 = vadd.f32 %v3174, %v3261
      %3263 = vadd.xlane.f32.xlu0 %v3262
      %v3264 = vpop.xlane.xlu0 %3263
      %v3265 = vsel %vm2261, %v3180, 0.0
      %v3266 = vadd.f32 %v3178, %v3265
      %3267 = vadd.xlane.f32.xlu0 %v3266
      %v3268 = vpop.xlane.xlu0 %3267
      %v3269 = vsel %vm2261, %v3184, 0.0
      %v3270 = vadd.f32 %v3182, %v3269
      %3271 = vadd.xlane.f32.xlu0 %v3270
      %v3272 = vpop.xlane.xlu0 %3271
      %v3273 = vsel %vm2261, %v3188, 0.0
      %v3274 = vadd.f32 %v3186, %v3273
      %3275 = vadd.xlane.f32.xlu0 %v3274
      %v3276 = vpop.xlane.xlu0 %3275
      %v3277 = vsel %vm2261, %v3192, 0.0
      %v3278 = vadd.f32 %v3190, %v3277
      %3279 = vadd.xlane.f32.xlu0 %v3278
      %v3280 = vpop.xlane.xlu0 %3279
      %v3281 = vsel %vm2261, %v3196, 0.0
      %v3282 = vadd.f32 %v3194, %v3281
      %3283 = vadd.xlane.f32.xlu0 %v3282
      %v3284 = vpop.xlane.xlu0 %3283
      %v3285 = vsel %vm2261, %v3200, 0.0
      %v3286 = vadd.f32 %v3198, %v3285
      %3287 = vadd.xlane.f32.xlu0 %v3286
      %v3288 = vpop.xlane.xlu0 %3287
      %v3289 = vsel %vm2261, %v3204, 0.0
      %v3290 = vadd.f32 %v3202, %v3289
      %3291 = vadd.xlane.f32.xlu0 %v3290
      %v3292 = vpop.xlane.xlu0 %3291
      %v3293 = vsel %vm2261, %v3208, 0.0
      %v3294 = vadd.f32 %v3206, %v3293
      %3295 = vadd.xlane.f32.xlu0 %v3294
      %v3296 = vpop.xlane.xlu0 %3295
      %v3297 = vsel %vm2261, %v3212, 0.0
      %v3298 = vadd.f32 %v3210, %v3297
      %3299 = vadd.xlane.f32.xlu0 %v3298
      %v3300 = vpop.xlane.xlu0 %3299
      %v3301 = vsel %vm2261, %v3216, 0.0
      %v3302 = vadd.f32 %v3214, %v3301
      %3303 = vadd.xlane.f32.xlu0 %v3302
      %v3304 = vpop.xlane.xlu0 %3303
      %v3305 = vsel %vm2261, %v3220, 0.0
      %v3306 = vadd.f32 %v3218, %v3305
      %3307 = vadd.xlane.f32.xlu0 %v3306
      %v3308 = vpop.xlane.xlu0 %3307
      %v3309 = vsel %vm2261, %v3224, 0.0
      %v3310 = vadd.f32 %v3222, %v3309
      %3311 = vadd.xlane.f32.xlu0 %v3310
      %v3312 = vpop.xlane.xlu0 %3311
      %v3313 = vsel %vm2261, %v3228, 0.0
      %v3314 = vadd.f32 %v3226, %v3313
      %3315 = vadd.xlane.f32.xlu0 %v3314
      %v3316 = vpop.xlane.xlu0 %3315
      %v3317 = vsel %vm2261, %v3232, 0.0
      %v3318 = vadd.f32 %v3230, %v3317
      %3319 = vadd.xlane.f32.xlu0 %v3318
      %v3320 = vpop.xlane.xlu0 %3319
      %v3321 = vsel %vm2346, %v3234, 0.0
      %v3322 = vsel %vm2348, %v3236, 0.0
      %v3323 = vadd.f32 %v3321, %v3322
      %3324 = vadd.xlane.f32.xlu0 %v3323
      %v3325 = vpop.xlane.xlu0 %3324
      %v3326 = vrcp.pop %v3240
      %v3327 = vrcp.pop %v3244
      %v3328 = vrcp.pop %v3248
      %v3329 = vrcp.pop %v3252
      %v3330 = vrcp.pop %v3256
      %v3331 = vrcp.pop %v3260
      %v3332 = vrcp.pop %v3264
      %v3333 = vrcp.pop %v3268
      %v3334 = vrcp.pop %v3272
      %v3335 = vrcp.pop %v3276
      %v3336 = vrcp.pop %v3280
      %v3337 = vrcp.pop %v3284
      %v3338 = vrcp.pop %v3288
      %v3339 = vrcp.pop %v3292
      %v3340 = vrcp.pop %v3296
      %v3341 = vrcp.pop %v3300
      %v3342 = vrcp.pop %v3304
      %v3343 = vrcp.pop %v3308
      %v3344 = vrcp.pop %v3312
      %v3345 = vrcp.pop %v3316
      %v3346 = vrcp.pop %v3320
      %v3347 = vrcp.pop %v3325
      %v3348 = vpack.c.bf16 %v3154, %v3150
      %v3349 = vpack.c.bf16 %v3156, %v3152
      %v3350 = vpack.c.bf16 %v3162, %v3158
      %v3351 = vpack.c.bf16 %v3164, %v3160
      %v3352 = vpack.c.bf16 %v3170, %v3166
      %v3353 = vpack.c.bf16 %v3172, %v3168
      %v3354 = vpack.c.bf16 %v3178, %v3174
      %v3355 = vpack.c.bf16 %v3180, %v3176
      %v3356 = vpack.c.bf16 %v3186, %v3182
      %v3357 = vpack.c.bf16 %v3188, %v3184
      %v3358 = vpack.c.bf16 %v3194, %v3190
      %v3359 = vpack.c.bf16 %v3196, %v3192
      %v3360 = vpack.c.bf16 %v3202, %v3198
      %v3361 = vpack.c.bf16 %v3204, %v3200
      %v3362 = vpack.c.bf16 %v3210, %v3206
      %v3363 = vpack.c.bf16 %v3212, %v3208
      %v3364 = vpack.c.bf16 %v3218, %v3214
      %v3365 = vpack.c.bf16 %v3220, %v3216
      %v3366 = vpack.c.bf16 %v3226, %v3222
      %v3367 = vpack.c.bf16 %v3228, %v3224
      %v3368 = vpack.c.bf16 %v3234, %v3230
      %v3369 = vpack.c.bf16 %v3236, %v3232
      %v3370 = vpack.c.bf16 %v2780, %v2779
      %v3371 = vpack.c.bf16 %v2782, %v2781
      %v3372 = vpack.c.bf16 %v2784, %v2783
      %v3373 = vpack.c.bf16 %v2786, %v2785
      %v3374 = vpack.c.bf16 %v2788, %v2787
      %v3375 = vpack.c.bf16 %v2790, %v2789
      %v3376 = vpack.c.bf16 %v2792, %v2791
      %v3377 = vpack.c.bf16 %v2794, %v2793
      %v3378 = vpack.c.bf16 %v2796, %v2795
      %v3379 = vpack.c.bf16 %v2798, %v2797
      %v3380 = vpack.c.bf16 %v2800, %v2799
      %v3382 = vsel %vm2261, %v3349, 0
      %v3385 = vsel %vm2261, %v3351, 0
      %v3388 = vsel %vm2261, %v3353, 0
      %v3391 = vsel %vm2261, %v3355, 0
      %v3394 = vsel %vm2261, %v3357, 0
      %v3397 = vsel %vm2261, %v3359, 0
      %v3400 = vsel %vm2261, %v3361, 0
      %v3403 = vsel %vm2261, %v3363, 0
      %v3406 = vsel %vm2261, %v3365, 0
      %v3409 = vsel %vm2261, %v3367, 0
      %v3412 = vsel %vm2261, %v3369, 0
      %v3415 = vand.u32 %v3380, %v2654
      %3417 = vmatprep.subr.bf16.mxu0 0
      %3418 = vmatpush1.bf16.msra.mxu0 %v3370
      %3419 = vmatprep.subr.bf16.mxu0 0
      %3420 = vmatpush1.bf16.msra.mxu0 %v3371
      %3421 = vmatprep.subr.bf16.mxu0 0
      %3422 = vmatpush1.bf16.msra.mxu0 %v3372
      %3423 = vmatprep.subr.bf16.mxu0 0
      %3424 = vmatpush1.bf16.msra.mxu0 %v3373
      %3425 = vmatprep.subr.bf16.mxu0 0
      %3426 = vmatpush1.bf16.msra.mxu0 %v3374
      %3427 = vmatprep.subr.bf16.mxu0 0
      %3428 = vmatpush1.bf16.msra.mxu0 %v3375
      %3429 = vmatprep.subr.bf16.mxu0 0
      %3430 = vmatpush1.bf16.msra.mxu0 %v3376
      %3431 = vmatprep.subr.bf16.mxu0 0
      %3432 = vmatpush1.bf16.msra.mxu0 %v3377
      %3433 = vmatprep.subr.bf16.mxu0 0
      %3434 = vmatpush1.bf16.msra.mxu0 %v3378
      %3435 = vmatprep.subr.bf16.mxu0 0
      %3436 = vmatpush1.bf16.msra.mxu0 %v3379
      %3437 = vmatprep.subr.bf16.mxu0 0
      %3438 = vmatpush1.bf16.msra.mxu0 %v3415
      %3439 = vmatprep.subr.bf16.mxu0 0
      %3440 = vmatpush1.bf16.msra.mxu0 0
      %3441 = vmatprep.subr.bf16.mxu0 0
      %3442 = vmatpush1.bf16.msra.mxu0 0
      %3443 = vmatprep.subr.bf16.mxu0 0
      %3444 = vmatpush1.bf16.msra.mxu0 0
      %3445 = vmatprep.subr.bf16.mxu0 0
      %3446 = vmatpush1.bf16.msra.mxu0 0
      %3447 = vmatprep.subr.bf16.mxu0 0
      %3448 = vmatpush1.bf16.msra.mxu0 0
      %3449 = vmatprep.mubr.bf16.mxu0 %v3382
      %3450 = vmatmul.mubr.bf16.gmra.mrb[0].mxu0 %v3348
      %v3451 = vpop.f32.mrb[0].mxu0
      %v3452 = vadd.f32 0.0, %v3451
      %v3453 = vpop.f32.mrb[0].mxu0
      %v3454 = vpop.f32.mrb[0].mxu0
      %v3455 = vadd.f32 0.0, %v3454
      %v3456 = vpop.f32.mrb[0].mxu0
      %3457 = vmatprep.mubr.bf16.mxu0 %v3385
      %3458 = vmatmul.mubr.bf16.gmra.mrb[0].mxu0 %v3350
      %v3459 = vpop.f32.mrb[0].mxu0
      %v3460 = vadd.f32 0.0, %v3459
      %v3461 = vpop.f32.mrb[0].mxu0
      %v3462 = vpop.f32.mrb[0].mxu0
      %v3463 = vadd.f32 0.0, %v3462
      %v3464 = vpop.f32.mrb[0].mxu0
      %3465 = vmatprep.mubr.bf16.mxu0 %v3388
      %3466 = vmatmul.mubr.bf16.gmra.mrb[0].mxu0 %v3352
      %v3467 = vpop.f32.mrb[0].mxu0
      %v3468 = vadd.f32 0.0, %v3467
      %v3469 = vpop.f32.mrb[0].mxu0
      %v3470 = vpop.f32.mrb[0].mxu0
      %v3471 = vadd.f32 0.0, %v3470
      %v3472 = vpop.f32.mrb[0].mxu0
      %3473 = vmatprep.mubr.bf16.mxu0 %v3391
      %3474 = vmatmul.mubr.bf16.gmra.mrb[0].mxu0 %v3354
      %v3475 = vpop.f32.mrb[0].mxu0
      %v3476 = vadd.f32 0.0, %v3475
      %v3477 = vpop.f32.mrb[0].mxu0
      %v3478 = vpop.f32.mrb[0].mxu0
      %v3479 = vadd.f32 0.0, %v3478
      %v3480 = vpop.f32.mrb[0].mxu0
      %3481 = vmatprep.mubr.bf16.mxu0 %v3394
      %3482 = vmatmul.mubr.bf16.gmra.mrb[0].mxu0 %v3356
      %v3483 = vpop.f32.mrb[0].mxu0
      %v3484 = vadd.f32 0.0, %v3483
      %v3485 = vpop.f32.mrb[0].mxu0
      %v3486 = vpop.f32.mrb[0].mxu0
      %v3487 = vadd.f32 0.0, %v3486
      %v3488 = vpop.f32.mrb[0].mxu0
      %3489 = vmatprep.mubr.bf16.mxu0 %v3397
      %3490 = vmatmul.mubr.bf16.gmra.mrb[0].mxu0 %v3358
      %v3491 = vpop.f32.mrb[0].mxu0
      %v3492 = vadd.f32 0.0, %v3491
      %v3493 = vpop.f32.mrb[0].mxu0
      %v3494 = vpop.f32.mrb[0].mxu0
      %v3495 = vadd.f32 0.0, %v3494
      %v3496 = vpop.f32.mrb[0].mxu0
      %3497 = vmatprep.mubr.bf16.mxu0 %v3400
      %3498 = vmatmul.mubr.bf16.gmra.mrb[0].mxu0 %v3360
      %v3499 = vpop.f32.mrb[0].mxu0
      %v3500 = vadd.f32 0.0, %v3499
      %v3501 = vpop.f32.mrb[0].mxu0
      %v3502 = vpop.f32.mrb[0].mxu0
      %v3503 = vadd.f32 0.0, %v3502
      %v3504 = vpop.f32.mrb[0].mxu0
      %3505 = vmatprep.mubr.bf16.mxu0 %v3403
      %3506 = vmatmul.mubr.bf16.gmra.mrb[0].mxu0 %v3362
      %v3507 = vpop.f32.mrb[0].mxu0
      %v3508 = vadd.f32 0.0, %v3507
      %v3509 = vpop.f32.mrb[0].mxu0
      %v3510 = vpop.f32.mrb[0].mxu0
      %v3511 = vadd.f32 0.0, %v3510
      %v3512 = vpop.f32.mrb[0].mxu0
      %3513 = vmatprep.mubr.bf16.mxu0 %v3406
      %3514 = vmatmul.mubr.bf16.gmra.mrb[0].mxu0 %v3364
      %v3515 = vpop.f32.mrb[0].mxu0
      %v3516 = vadd.f32 0.0, %v3515
      %v3517 = vpop.f32.mrb[0].mxu0
      %v3518 = vpop.f32.mrb[0].mxu0
      %v3519 = vadd.f32 0.0, %v3518
      %v3520 = vpop.f32.mrb[0].mxu0
      %3521 = vmatprep.mubr.bf16.mxu0 %v3409
      %3522 = vmatmul.mubr.bf16.gmra.mrb[0].mxu0 %v3366
      %v3523 = vpop.f32.mrb[0].mxu0
      %v3524 = vadd.f32 0.0, %v3523
      %v3525 = vpop.f32.mrb[0].mxu0
      %v3526 = vpop.f32.mrb[0].mxu0
      %v3527 = vadd.f32 0.0, %v3526
      %v3528 = vpop.f32.mrb[0].mxu0
      %3529 = vmatprep.mubr.bf16.mxu0 %v3412
      %3530 = vmatmul.mubr.bf16.gmra.mrb[0].mxu0 %v3368
      %v3531 = vpop.f32.mrb[0].mxu0
      %v3532 = vadd.f32 0.0, %v3531
      %v3533 = vpop.f32.mrb[0].mxu0
      %v3534 = vpop.f32.mrb[0].mxu0
      %v3535 = vadd.f32 0.0, %v3534
      %v3536 = vpop.f32.mrb[0].mxu0
      %3537 = vdwg.mxu0
      %v3538 = vmul.f32 %v3452, %v3326
      %v3539 = vmul.f32 %v3455, %v3327
      %v3540 = vmul.f32 %v3460, %v3328
      %v3541 = vmul.f32 %v3463, %v3329
      %v3542 = vmul.f32 %v3468, %v3330
      %v3543 = vmul.f32 %v3471, %v3331
      %v3544 = vmul.f32 %v3476, %v3332
      %v3545 = vmul.f32 %v3479, %v3333
      %v3546 = vmul.f32 %v3484, %v3334
      %v3547 = vmul.f32 %v3487, %v3335
      %v3548 = vmul.f32 %v3492, %v3336
      %v3549 = vmul.f32 %v3495, %v3337
      %v3550 = vmul.f32 %v3500, %v3338
      %v3551 = vmul.f32 %v3503, %v3339
      %v3552 = vmul.f32 %v3508, %v3340
      %v3553 = vmul.f32 %v3511, %v3341
      %v3554 = vmul.f32 %v3516, %v3342
      %v3555 = vmul.f32 %v3519, %v3343
      %v3556 = vmul.f32 %v3524, %v3344
      %v3557 = vmul.f32 %v3527, %v3345
      %v3558 = vmul.f32 %v3532, %v3346
      %v3559 = vmul.f32 %v3535, %v3347
      %v3560 = vpack.c.bf16 %v3539, %v3538
      %v3561 = vpack.c.bf16 %v3541, %v3540
      %v3562 = vpack.c.bf16 %v3543, %v3542
      %v3563 = vpack.c.bf16 %v3545, %v3544
      %v3564 = vpack.c.bf16 %v3547, %v3546
      %v3565 = vpack.c.bf16 %v3549, %v3548
      %v3566 = vpack.c.bf16 %v3551, %v3550
      %v3567 = vpack.c.bf16 %v3553, %v3552
      %v3568 = vpack.c.bf16 %v3555, %v3554
      %v3569 = vpack.c.bf16 %v3557, %v3556
      %v3570 = vpack.c.bf16 %v3559, %v3558
      %v3571 = vld [vmem:[%s8] sm:$0x3]
      %v3573 = vsel %vm2077, %v3560, 0
      %v3576 = vsel %vm2077, %v3561, 0
      %v3579 = vsel %vm2077, %v3562, 0
      %v3582 = vsel %vm2077, %v3563, 0
      %v3585 = vsel %vm2077, %v3564, 0
      %v3588 = vsel %vm2077, %v3565, 0
      %v3591 = vsel %vm2077, %v3566, 0
      %v3594 = vsel %vm2077, %v3567, 0
      %v3597 = vsel %vm2077, %v3568, 0
      %v3600 = vsel %vm2077, %v3569, 0
      %v3603 = vsel %vm2077, %v3570, 0
      %v3606 = vsel %vm2111, %v3571, 0
      %3608 = vmatprep.subr.bf16.mxu0 0
      %3609 = vmatpush1.bf16.msra.mxu0 %v3606
      %3610 = vmatprep.subr.bf16.mxu0 0
      %3611 = vmatpush1.bf16.msra.mxu0 0
      %3612 = vmatprep.subr.bf16.mxu0 0
      %3613 = vmatpush1.bf16.msra.mxu0 0
      %3614 = vmatprep.subr.bf16.mxu0 0
      %3615 = vmatpush1.bf16.msra.mxu0 0
      %3616 = vmatprep.subr.bf16.mxu0 0
      %3617 = vmatpush1.bf16.msra.mxu0 0
      %3618 = vmatprep.subr.bf16.mxu0 0
      %3619 = vmatpush1.bf16.msra.mxu0 0
      %3620 = vmatprep.subr.bf16.mxu0 0
      %3621 = vmatpush1.bf16.msra.mxu0 0
      %3622 = vmatprep.subr.bf16.mxu0 0
      %3623 = vmatpush1.bf16.msra.mxu0 0
      %3624 = vmatprep.subr.bf16.mxu0 0
      %3625 = vmatpush1.bf16.msra.mxu0 0
      %3626 = vmatprep.subr.bf16.mxu0 0
      %3627 = vmatpush1.bf16.msra.mxu0 0
      %3628 = vmatprep.subr.bf16.mxu0 0
      %3629 = vmatpush1.bf16.msra.mxu0 0
      %3630 = vmatprep.subr.bf16.mxu0 0
      %3631 = vmatpush1.bf16.msra.mxu0 0
      %3632 = vmatprep.subr.bf16.mxu0 0
      %3633 = vmatpush1.bf16.msra.mxu0 0
      %3634 = vmatprep.subr.bf16.mxu0 0
      %3635 = vmatpush1.bf16.msra.mxu0 0
      %3636 = vmatprep.subr.bf16.mxu0 0
      %3637 = vmatpush1.bf16.msra.mxu0 0
      %3638 = vmatprep.subr.bf16.mxu0 0
      %3639 = vmatpush1.bf16.msra.mxu0 0
      %3640 = vmatprep.mubr.bf16.mxu0 0
      %3641 = vmatmul.mubr.bf16.gmra.mrb[0].mxu0 %v3573
      %v3642 = vpop.f32.mrb[0].mxu0
      %v3643 = vadd.f32 0.0, %v3642
      %v3644 = vpop.f32.mrb[0].mxu0
      %v3645 = vpop.f32.mrb[0].mxu0
      %v3646 = vadd.f32 0.0, %v3645
      %v3647 = vpop.f32.mrb[0].mxu0
      %3648 = vmatprep.mubr.bf16.mxu0 0
      %3649 = vmatmul.mubr.bf16.gmra.mrb[0].mxu0 %v3576
      %v3650 = vpop.f32.mrb[0].mxu0
      %v3651 = vadd.f32 0.0, %v3650
      %v3652 = vpop.f32.mrb[0].mxu0
      %v3653 = vpop.f32.mrb[0].mxu0
      %v3654 = vadd.f32 0.0, %v3653
      %v3655 = vpop.f32.mrb[0].mxu0
      %3656 = vmatprep.mubr.bf16.mxu0 0
      %3657 = vmatmul.mubr.bf16.gmra.mrb[0].mxu0 %v3579
      %v3658 = vpop.f32.mrb[0].mxu0
      %v3659 = vadd.f32 0.0, %v3658
      %v3660 = vpop.f32.mrb[0].mxu0
      %v3661 = vpop.f32.mrb[0].mxu0
      %v3662 = vadd.f32 0.0, %v3661
      %v3663 = vpop.f32.mrb[0].mxu0
      %3664 = vmatprep.mubr.bf16.mxu0 0
      %3665 = vmatmul.mubr.bf16.gmra.mrb[0].mxu0 %v3582
      %v3666 = vpop.f32.mrb[0].mxu0
      %v3667 = vadd.f32 0.0, %v3666
      %v3668 = vpop.f32.mrb[0].mxu0
      %v3669 = vpop.f32.mrb[0].mxu0
      %v3670 = vadd.f32 0.0, %v3669
      %v3671 = vpop.f32.mrb[0].mxu0
      %3672 = vmatprep.mubr.bf16.mxu0 0
      %3673 = vmatmul.mubr.bf16.gmra.mrb[0].mxu0 %v3585
      %v3674 = vpop.f32.mrb[0].mxu0
      %v3675 = vadd.f32 0.0, %v3674
      %v3676 = vpop.f32.mrb[0].mxu0
      %v3677 = vpop.f32.mrb[0].mxu0
      %v3678 = vadd.f32 0.0, %v3677
      %v3679 = vpop.f32.mrb[0].mxu0
      %3680 = vmatprep.mubr.bf16.mxu0 0
      %3681 = vmatmul.mubr.bf16.gmra.mrb[0].mxu0 %v3588
      %v3682 = vpop.f32.mrb[0].mxu0
      %v3683 = vadd.f32 0.0, %v3682
      %v3684 = vpop.f32.mrb[0].mxu0
      %v3685 = vpop.f32.mrb[0].mxu0
      %v3686 = vadd.f32 0.0, %v3685
      %v3687 = vpop.f32.mrb[0].mxu0
      %3688 = vmatprep.mubr.bf16.mxu0 0
      %3689 = vmatmul.mubr.bf16.gmra.mrb[0].mxu0 %v3591
      %v3690 = vpop.f32.mrb[0].mxu0
      %v3691 = vadd.f32 0.0, %v3690
      %v3692 = vpop.f32.mrb[0].mxu0
      %v3693 = vpop.f32.mrb[0].mxu0
      %v3694 = vadd.f32 0.0, %v3693
      %v3695 = vpop.f32.mrb[0].mxu0
      %3696 = vmatprep.mubr.bf16.mxu0 0
      %3697 = vmatmul.mubr.bf16.gmra.mrb[0].mxu0 %v3594
      %v3698 = vpop.f32.mrb[0].mxu0
      %v3699 = vadd.f32 0.0, %v3698
      %v3700 = vpop.f32.mrb[0].mxu0
      %v3701 = vpop.f32.mrb[0].mxu0
      %v3702 = vadd.f32 0.0, %v3701
      %v3703 = vpop.f32.mrb[0].mxu0
      %3704 = vmatprep.mubr.bf16.mxu0 0
      %3705 = vmatmul.mubr.bf16.gmra.mrb[0].mxu0 %v3597
      %v3706 = vpop.f32.mrb[0].mxu0
      %v3707 = vadd.f32 0.0, %v3706
      %v3708 = vpop.f32.mrb[0].mxu0
      %v3709 = vpop.f32.mrb[0].mxu0
      %v3710 = vadd.f32 0.0, %v3709
      %v3711 = vpop.f32.mrb[0].mxu0
      %3712 = vmatprep.mubr.bf16.mxu0 0
      %3713 = vmatmul.mubr.bf16.gmra.mrb[0].mxu0 %v3600
      %v3714 = vpop.f32.mrb[0].mxu0
      %v3715 = vadd.f32 0.0, %v3714
      %v3716 = vpop.f32.mrb[0].mxu0
      %v3717 = vpop.f32.mrb[0].mxu0
      %v3718 = vadd.f32 0.0, %v3717
      %v3719 = vpop.f32.mrb[0].mxu0
      %3720 = vmatprep.mubr.bf16.mxu0 0
      %3721 = vmatmul.mubr.bf16.gmra.mrb[0].mxu0 %v3603
      %v3722 = vpop.f32.mrb[0].mxu0
      %v3723 = vadd.f32 0.0, %v3722
      %v3724 = vpop.f32.mrb[0].mxu0
      %v3725 = vpop.f32.mrb[0].mxu0
      %v3726 = vadd.f32 0.0, %v3725
      %v3727 = vpop.f32.mrb[0].mxu0
      %3728 = vdwg.mxu0
      %v3731 = vunpack.c.l.b16 %v489
      %v3732 = vunpack.c.l.b16 %v490
      %v3733 = vpack.c.b16 %v3732, %v3731
      %v3736 = vsel %vm493, %v1594, 0
      %v3739 = vsel %vm493, %v1595, 0
      %v3742 = vsel %vm493, %v1596, 0
      %v3745 = vsel %vm493, %v1597, 0
      %v3748 = vsel %vm493, %v1598, 0
      %v3751 = vsel %vm493, %v1599, 0
      %v3754 = vsel %vm493, %v1600, 0
      %v3757 = vsel %vm493, %v1601, 0
      %v3760 = vsel %vm493, %v1602, 0
      %v3763 = vsel %vm493, %v1603, 0
      %v3766 = vsel %vm493, %v1604, 0
      %3768 = vmatprep.subr.bf16.mxu0 0
      %3769 = vmatpush1.bf16.msra.mxu0 %v3733
      %3770 = vmatprep.subr.bf16.mxu0 0
      %3771 = vmatpush1.bf16.msra.mxu0 0
      %3772 = vmatprep.subr.bf16.mxu0 0
      %3773 = vmatpush1.bf16.msra.mxu0 0
      %3774 = vmatprep.subr.bf16.mxu0 0
      %3775 = vmatpush1.bf16.msra.mxu0 0
      %3776 = vmatprep.subr.bf16.mxu0 0
      %3777 = vmatpush1.bf16.msra.mxu0 0
      %3778 = vmatprep.subr.bf16.mxu0 0
      %3779 = vmatpush1.bf16.msra.mxu0 0
      %3780 = vmatprep.subr.bf16.mxu0 0
      %3781 = vmatpush1.bf16.msra.mxu0 0
      %3782 = vmatprep.subr.bf16.mxu0 0
      %3783 = vmatpush1.bf16.msra.mxu0 0
      %3784 = vmatprep.subr.bf16.mxu0 0
      %3785 = vmatpush1.bf16.msra.mxu0 0
      %3786 = vmatprep.subr.bf16.mxu0 0
      %3787 = vmatpush1.bf16.msra.mxu0 0
      %3788 = vmatprep.subr.bf16.mxu0 0
      %3789 = vmatpush1.bf16.msra.mxu0 0
      %3790 = vmatprep.subr.bf16.mxu0 0
      %3791 = vmatpush1.bf16.msra.mxu0 0
      %3792 = vmatprep.subr.bf16.mxu0 0
      %3793 = vmatpush1.bf16.msra.mxu0 0
      %3794 = vmatprep.subr.bf16.mxu0 0
      %3795 = vmatpush1.bf16.msra.mxu0 0
      %3796 = vmatprep.subr.bf16.mxu0 0
      %3797 = vmatpush1.bf16.msra.mxu0 0
      %3798 = vmatprep.subr.bf16.mxu0 0
      %3799 = vmatpush1.bf16.msra.mxu0 0
      %3800 = vmatprep.mubr.bf16.mxu0 0
      %3801 = vmatmul.mubr.bf16.gmra.mrb[0].mxu0 %v3736
      %v3802 = vpop.f32.mrb[0].mxu0
      %v3803 = vadd.f32 %v3643, %v3802
      %v3804 = vpop.f32.mrb[0].mxu0
      %v3805 = vpop.f32.mrb[0].mxu0
      %v3806 = vadd.f32 %v3646, %v3805
      %v3807 = vpop.f32.mrb[0].mxu0
      %3808 = vmatprep.mubr.bf16.mxu0 0
      %3809 = vmatmul.mubr.bf16.gmra.mrb[0].mxu0 %v3739
      %v3810 = vpop.f32.mrb[0].mxu0
      %v3811 = vadd.f32 %v3651, %v3810
      %v3812 = vpop.f32.mrb[0].mxu0
      %v3813 = vpop.f32.mrb[0].mxu0
      %v3814 = vadd.f32 %v3654, %v3813
      %v3815 = vpop.f32.mrb[0].mxu0
      %3816 = vmatprep.mubr.bf16.mxu0 0
      %3817 = vmatmul.mubr.bf16.gmra.mrb[0].mxu0 %v3742
      %v3818 = vpop.f32.mrb[0].mxu0
      %v3819 = vadd.f32 %v3659, %v3818
      %v3820 = vpop.f32.mrb[0].mxu0
      %v3821 = vpop.f32.mrb[0].mxu0
      %v3822 = vadd.f32 %v3662, %v3821
      %v3823 = vpop.f32.mrb[0].mxu0
      %3824 = vmatprep.mubr.bf16.mxu0 0
      %3825 = vmatmul.mubr.bf16.gmra.mrb[0].mxu0 %v3745
      %v3826 = vpop.f32.mrb[0].mxu0
      %v3827 = vadd.f32 %v3667, %v3826
      %v3828 = vpop.f32.mrb[0].mxu0
      %v3829 = vpop.f32.mrb[0].mxu0
      %v3830 = vadd.f32 %v3670, %v3829
      %v3831 = vpop.f32.mrb[0].mxu0
      %3832 = vmatprep.mubr.bf16.mxu0 0
      %3833 = vmatmul.mubr.bf16.gmra.mrb[0].mxu0 %v3748
      %v3834 = vpop.f32.mrb[0].mxu0
      %v3835 = vadd.f32 %v3675, %v3834
      %v3836 = vpop.f32.mrb[0].mxu0
      %v3837 = vpop.f32.mrb[0].mxu0
      %v3838 = vadd.f32 %v3678, %v3837
      %v3839 = vpop.f32.mrb[0].mxu0
      %3840 = vmatprep.mubr.bf16.mxu0 0
      %3841 = vmatmul.mubr.bf16.gmra.mrb[0].mxu0 %v3751
      %v3842 = vpop.f32.mrb[0].mxu0
      %v3843 = vadd.f32 %v3683, %v3842
      %v3844 = vpop.f32.mrb[0].mxu0
      %v3845 = vpop.f32.mrb[0].mxu0
      %v3846 = vadd.f32 %v3686, %v3845
      %v3847 = vpop.f32.mrb[0].mxu0
      %3848 = vmatprep.mubr.bf16.mxu0 0
      %3849 = vmatmul.mubr.bf16.gmra.mrb[0].mxu0 %v3754
      %v3850 = vpop.f32.mrb[0].mxu0
      %v3851 = vadd.f32 %v3691, %v3850
      %v3852 = vpop.f32.mrb[0].mxu0
      %v3853 = vpop.f32.mrb[0].mxu0
      %v3854 = vadd.f32 %v3694, %v3853
      %v3855 = vpop.f32.mrb[0].mxu0
      %3856 = vmatprep.mubr.bf16.mxu0 0
      %3857 = vmatmul.mubr.bf16.gmra.mrb[0].mxu0 %v3757
      %v3858 = vpop.f32.mrb[0].mxu0
      %v3859 = vadd.f32 %v3699, %v3858
      %v3860 = vpop.f32.mrb[0].mxu0
      %v3861 = vpop.f32.mrb[0].mxu0
      %v3862 = vadd.f32 %v3702, %v3861
      %v3863 = vpop.f32.mrb[0].mxu0
      %3864 = vmatprep.mubr.bf16.mxu0 0
      %3865 = vmatmul.mubr.bf16.gmra.mrb[0].mxu0 %v3760
      %v3866 = vpop.f32.mrb[0].mxu0
      %v3867 = vadd.f32 %v3707, %v3866
      %v3868 = vpop.f32.mrb[0].mxu0
      %v3869 = vpop.f32.mrb[0].mxu0
      %v3870 = vadd.f32 %v3710, %v3869
      %v3871 = vpop.f32.mrb[0].mxu0
      %3872 = vmatprep.mubr.bf16.mxu0 0
      %3873 = vmatmul.mubr.bf16.gmra.mrb[0].mxu0 %v3763
      %v3874 = vpop.f32.mrb[0].mxu0
      %v3875 = vadd.f32 %v3715, %v3874
      %v3876 = vpop.f32.mrb[0].mxu0
      %v3877 = vpop.f32.mrb[0].mxu0
      %v3878 = vadd.f32 %v3718, %v3877
      %v3879 = vpop.f32.mrb[0].mxu0
      %3880 = vmatprep.mubr.bf16.mxu0 0
      %3881 = vmatmul.mubr.bf16.gmra.mrb[0].mxu0 %v3766
      %v3882 = vpop.f32.mrb[0].mxu0
      %v3883 = vadd.f32 %v3723, %v3882
      %v3884 = vpop.f32.mrb[0].mxu0
      %v3885 = vpop.f32.mrb[0].mxu0
      %v3886 = vadd.f32 %v3726, %v3885
      %v3887 = vpop.f32.mrb[0].mxu0
      %3888 = vdwg.mxu0
      %s3889 = scalar_lea.vmem %s2, 8
      %v3890 = vld [vmem:[%s3889] sm:$0xf]
      %v3891 = vld [vmem:[%s3889 + $0x4] sm:$0xf]
      %v3894 = vunpack.c.l.b16 %v3890
      %v3895 = vunpack.c.l.b16 %v3891
      %v3896 = vpack.c.b16 %v3895, %v3894
      %3898 = vmatprep.subr.bf16.mxu0 0
      %3899 = vmatpush1.bf16.msra.mxu0 %v3896
      %3900 = vmatprep.subr.bf16.mxu0 0
      %3901 = vmatpush1.bf16.msra.mxu0 0
      %3902 = vmatprep.subr.bf16.mxu0 0
      %3903 = vmatpush1.bf16.msra.mxu0 0
      %3904 = vmatprep.subr.bf16.mxu0 0
      %3905 = vmatpush1.bf16.msra.mxu0 0
      %3906 = vmatprep.subr.bf16.mxu0 0
      %3907 = vmatpush1.bf16.msra.mxu0 0
      %3908 = vmatprep.subr.bf16.mxu0 0
      %3909 = vmatpush1.bf16.msra.mxu0 0
      %3910 = vmatprep.subr.bf16.mxu0 0
      %3911 = vmatpush1.bf16.msra.mxu0 0
      %3912 = vmatprep.subr.bf16.mxu0 0
      %3913 = vmatpush1.bf16.msra.mxu0 0
      %3914 = vmatprep.subr.bf16.mxu0 0
      %3915 = vmatpush1.bf16.msra.mxu0 0
      %3916 = vmatprep.subr.bf16.mxu0 0
      %3917 = vmatpush1.bf16.msra.mxu0 0
      %3918 = vmatprep.subr.bf16.mxu0 0
      %3919 = vmatpush1.bf16.msra.mxu0 0
      %3920 = vmatprep.subr.bf16.mxu0 0
      %3921 = vmatpush1.bf16.msra.mxu0 0
      %3922 = vmatprep.subr.bf16.mxu0 0
      %3923 = vmatpush1.bf16.msra.mxu0 0
      %3924 = vmatprep.subr.bf16.mxu0 0
      %3925 = vmatpush1.bf16.msra.mxu0 0
      %3926 = vmatprep.subr.bf16.mxu0 0
      %3927 = vmatpush1.bf16.msra.mxu0 0
      %3928 = vmatprep.subr.bf16.mxu0 0
      %3929 = vmatpush1.bf16.msra.mxu0 0
      %3930 = vmatprep.mubr.bf16.mxu0 0
      %3931 = vmatmul.mubr.bf16.gmra.mrb[0].mxu0 %v608
      %v3932 = vpop.f32.mrb[0].mxu0
      %v3933 = vadd.f32 0.0, %v3932
      %v3934 = vpop.f32.mrb[0].mxu0
      %v3935 = vpop.f32.mrb[0].mxu0
      %v3936 = vadd.f32 0.0, %v3935
      %v3937 = vpop.f32.mrb[0].mxu0
      %3938 = vmatprep.mubr.bf16.mxu0 0
      %3939 = vmatmul.mubr.bf16.gmra.mrb[0].mxu0 %v611
      %v3940 = vpop.f32.mrb[0].mxu0
      %v3941 = vadd.f32 0.0, %v3940
      %v3942 = vpop.f32.mrb[0].mxu0
      %v3943 = vpop.f32.mrb[0].mxu0
      %v3944 = vadd.f32 0.0, %v3943
      %v3945 = vpop.f32.mrb[0].mxu0
      %3946 = vmatprep.mubr.bf16.mxu0 0
      %3947 = vmatmul.mubr.bf16.gmra.mrb[0].mxu0 %v614
      %v3948 = vpop.f32.mrb[0].mxu0
      %v3949 = vadd.f32 0.0, %v3948
      %v3950 = vpop.f32.mrb[0].mxu0
      %v3951 = vpop.f32.mrb[0].mxu0
      %v3952 = vadd.f32 0.0, %v3951
      %v3953 = vpop.f32.mrb[0].mxu0
      %3954 = vmatprep.mubr.bf16.mxu0 0
      %3955 = vmatmul.mubr.bf16.gmra.mrb[0].mxu0 %v617
      %v3956 = vpop.f32.mrb[0].mxu0
      %v3957 = vadd.f32 0.0, %v3956
      %v3958 = vpop.f32.mrb[0].mxu0
      %v3959 = vpop.f32.mrb[0].mxu0
      %v3960 = vadd.f32 0.0, %v3959
      %v3961 = vpop.f32.mrb[0].mxu0
      %3962 = vmatprep.mubr.bf16.mxu0 0
      %3963 = vmatmul.mubr.bf16.gmra.mrb[0].mxu0 %v620
      %v3964 = vpop.f32.mrb[0].mxu0
      %v3965 = vadd.f32 0.0, %v3964
      %v3966 = vpop.f32.mrb[0].mxu0
      %v3967 = vpop.f32.mrb[0].mxu0
      %v3968 = vadd.f32 0.0, %v3967
      %v3969 = vpop.f32.mrb[0].mxu0
      %3970 = vmatprep.mubr.bf16.mxu0 0
      %3971 = vmatmul.mubr.bf16.gmra.mrb[0].mxu0 %v623
      %v3972 = vpop.f32.mrb[0].mxu0
      %v3973 = vadd.f32 0.0, %v3972
      %v3974 = vpop.f32.mrb[0].mxu0
      %v3975 = vpop.f32.mrb[0].mxu0
      %v3976 = vadd.f32 0.0, %v3975
      %v3977 = vpop.f32.mrb[0].mxu0
      %3978 = vmatprep.mubr.bf16.mxu0 0
      %3979 = vmatmul.mubr.bf16.gmra.mrb[0].mxu0 %v626
      %v3980 = vpop.f32.mrb[0].mxu0
      %v3981 = vadd.f32 0.0, %v3980
      %v3982 = vpop.f32.mrb[0].mxu0
      %v3983 = vpop.f32.mrb[0].mxu0
      %v3984 = vadd.f32 0.0, %v3983
      %v3985 = vpop.f32.mrb[0].mxu0
      %3986 = vmatprep.mubr.bf16.mxu0 0
      %3987 = vmatmul.mubr.bf16.gmra.mrb[0].mxu0 %v629
      %v3988 = vpop.f32.mrb[0].mxu0
      %v3989 = vadd.f32 0.0, %v3988
      %v3990 = vpop.f32.mrb[0].mxu0
      %v3991 = vpop.f32.mrb[0].mxu0
      %v3992 = vadd.f32 0.0, %v3991
      %v3993 = vpop.f32.mrb[0].mxu0
      %3994 = vmatprep.mubr.bf16.mxu0 0
      %3995 = vmatmul.mubr.bf16.gmra.mrb[0].mxu0 %v632
      %v3996 = vpop.f32.mrb[0].mxu0
      %v3997 = vadd.f32 0.0, %v3996
      %v3998 = vpop.f32.mrb[0].mxu0
      %v3999 = vpop.f32.mrb[0].mxu0
      %v4000 = vadd.f32 0.0, %v3999
      %v4001 = vpop.f32.mrb[0].mxu0
      %4002 = vmatprep.mubr.bf16.mxu0 0
      %4003 = vmatmul.mubr.bf16.gmra.mrb[0].mxu0 %v635
      %v4004 = vpop.f32.mrb[0].mxu0
      %v4005 = vadd.f32 0.0, %v4004
      %v4006 = vpop.f32.mrb[0].mxu0
      %v4007 = vpop.f32.mrb[0].mxu0
      %v4008 = vadd.f32 0.0, %v4007
      %v4009 = vpop.f32.mrb[0].mxu0
      %4010 = vmatprep.mubr.bf16.mxu0 0
      %4011 = vmatmul.mubr.bf16.gmra.mrb[0].mxu0 %v638
      %v4012 = vpop.f32.mrb[0].mxu0
      %v4013 = vadd.f32 0.0, %v4012
      %v4014 = vpop.f32.mrb[0].mxu0
      %v4015 = vpop.f32.mrb[0].mxu0
      %v4016 = vadd.f32 0.0, %v4015
      %v4017 = vpop.f32.mrb[0].mxu0
      %4018 = vdwg.mxu0
      %v4019 = vmul.f32 %v3933, 0.5
      %v4020 = vmul.f32 %v3936, 0.5
      %v4021 = vmul.f32 %v3941, 0.5
      %v4022 = vmul.f32 %v3944, 0.5
      %v4023 = vmul.f32 %v3949, 0.5
      %v4024 = vmul.f32 %v3952, 0.5
      %v4025 = vmul.f32 %v3957, 0.5
      %v4026 = vmul.f32 %v3960, 0.5
      %v4027 = vmul.f32 %v3965, 0.5
      %v4028 = vmul.f32 %v3968, 0.5
      %v4029 = vmul.f32 %v3973, 0.5
      %v4030 = vmul.f32 %v3976, 0.5
      %v4031 = vmul.f32 %v3981, 0.5
      %v4032 = vmul.f32 %v3984, 0.5
      %v4033 = vmul.f32 %v3989, 0.5
      %v4034 = vmul.f32 %v3992, 0.5
      %v4035 = vmul.f32 %v3997, 0.5
      %v4036 = vmul.f32 %v4000, 0.5
      %v4037 = vmul.f32 %v4005, 0.5
      %v4038 = vmul.f32 %v4008, 0.5
      %v4039 = vmul.f32 %v4013, 0.5
      %v4040 = vmul.f32 %v4016, 0.5
      %v4041 = vpack.c.bf16 %v4020, %v4019
      %v4042 = vpack.c.bf16 %v4022, %v4021
      %v4043 = vpack.c.bf16 %v4024, %v4023
      %v4044 = vpack.c.bf16 %v4026, %v4025
      %v4045 = vpack.c.bf16 %v4028, %v4027
      %v4046 = vpack.c.bf16 %v4030, %v4029
      %v4047 = vpack.c.bf16 %v4032, %v4031
      %v4048 = vpack.c.bf16 %v4034, %v4033
      %v4049 = vpack.c.bf16 %v4036, %v4035
      %v4050 = vpack.c.bf16 %v4038, %v4037
      %v4051 = vpack.c.bf16 %v4040, %v4039
      %s4052 = scalar_lea.vmem %s3, 2
      %v4053 = vld [vmem:[%s4052] sm:$0x3]
      %v4055 = vsel %vm493, %v4053, 0
      %4057 = vmatprep.subr.bf16.mxu0 %v1775
      %4058 = vmatpush1.bf16.msra.mxu0 %v1774
      %4059 = vmatprep.subr.bf16.mxu0 0
      %4060 = vmatpush1.bf16.msra.mxu0 0
      %4061 = vmatprep.subr.bf16.mxu0 0
      %4062 = vmatpush1.bf16.msra.mxu0 0
      %4063 = vmatprep.subr.bf16.mxu0 0
      %4064 = vmatpush1.bf16.msra.mxu0 0
      %4065 = vmatprep.subr.bf16.mxu0 0
      %4066 = vmatpush1.bf16.msra.mxu0 0
      %4067 = vmatprep.subr.bf16.mxu0 0
      %4068 = vmatpush1.bf16.msra.mxu0 0
      %4069 = vmatprep.subr.bf16.mxu0 0
      %4070 = vmatpush1.bf16.msra.mxu0 0
      %4071 = vmatprep.subr.bf16.mxu0 0
      %4072 = vmatpush1.bf16.msra.mxu0 0
      %4073 = vmatprep.subr.bf16.mxu0 0
      %4074 = vmatpush1.bf16.msra.mxu0 0
      %4075 = vmatprep.subr.bf16.mxu0 0
      %4076 = vmatpush1.bf16.msra.mxu0 0
      %4077 = vmatprep.subr.bf16.mxu0 0
      %4078 = vmatpush1.bf16.msra.mxu0 0
      %4079 = vmatprep.subr.bf16.mxu0 0
      %4080 = vmatpush1.bf16.msra.mxu0 0
      %4081 = vmatprep.subr.bf16.mxu0 0
      %4082 = vmatpush1.bf16.msra.mxu0 0
      %4083 = vmatprep.subr.bf16.mxu0 0
      %4084 = vmatpush1.bf16.msra.mxu0 0
      %4085 = vmatprep.subr.bf16.mxu0 0
      %4086 = vmatpush1.bf16.msra.mxu0 0
      %4087 = vmatprep.subr.bf16.mxu0 0
      %4088 = vmatpush1.bf16.msra.mxu0 0
      %4089 = vmatprep.mubr.bf16.mxu0 0
      %4090 = vmatmul.mubr.bf16.gmra.mrb[0].mxu0 %v4055
      %v4091 = vpop.f32.mrb[0].mxu0
      %v4092 = vadd.f32 0.0, %v4091
      %v4093 = vpop.f32.mrb[0].mxu0
      %v4094 = vadd.f32 0.0, %v4093
      %v4095 = vpop.f32.mrb[0].mxu0
      %v4096 = vpop.f32.mrb[0].mxu0
      %4097 = vdwg.mxu0
      %v4098 = vpack.c.bf16 %v4092, %v4092
      %v4099 = vpack.c.bf16 %v4094, %v4094
      %s4100 = scalar_lea.vmem %s4, 2
      %v4101 = vld [vmem:[%s4100] sm:$0x3]
      %v4103 = vsel %vm493, %v4101, 0
      %4105 = vmatprep.subr.bf16.mxu0 %v1775
      %4106 = vmatpush1.bf16.msra.mxu0 %v1774
      %4107 = vmatprep.subr.bf16.mxu0 0
      %4108 = vmatpush1.bf16.msra.mxu0 0
      %4109 = vmatprep.subr.bf16.mxu0 0
      %4110 = vmatpush1.bf16.msra.mxu0 0
      %4111 = vmatprep.subr.bf16.mxu0 0
      %4112 = vmatpush1.bf16.msra.mxu0 0
      %4113 = vmatprep.subr.bf16.mxu0 0
      %4114 = vmatpush1.bf16.msra.mxu0 0
      %4115 = vmatprep.subr.bf16.mxu0 0
      %4116 = vmatpush1.bf16.msra.mxu0 0
      %4117 = vmatprep.subr.bf16.mxu0 0
      %4118 = vmatpush1.bf16.msra.mxu0 0
      %4119 = vmatprep.subr.bf16.mxu0 0
      %4120 = vmatpush1.bf16.msra.mxu0 0
      %4121 = vmatprep.subr.bf16.mxu0 0
      %4122 = vmatpush1.bf16.msra.mxu0 0
      %4123 = vmatprep.subr.bf16.mxu0 0
      %4124 = vmatpush1.bf16.msra.mxu0 0
      %4125 = vmatprep.subr.bf16.mxu0 0
      %4126 = vmatpush1.bf16.msra.mxu0 0
      %4127 = vmatprep.subr.bf16.mxu0 0
      %4128 = vmatpush1.bf16.msra.mxu0 0
      %4129 = vmatprep.subr.bf16.mxu0 0
      %4130 = vmatpush1.bf16.msra.mxu0 0
      %4131 = vmatprep.subr.bf16.mxu0 0
      %4132 = vmatpush1.bf16.msra.mxu0 0
      %4133 = vmatprep.subr.bf16.mxu0 0
      %4134 = vmatpush1.bf16.msra.mxu0 0
      %4135 = vmatprep.subr.bf16.mxu0 0
      %4136 = vmatpush1.bf16.msra.mxu0 0
      %4137 = vmatprep.mubr.bf16.mxu0 0
      %4138 = vmatmul.mubr.bf16.gmra.mrb[0].mxu0 %v4103
      %v4139 = vpop.f32.mrb[0].mxu0
      %v4140 = vadd.f32 0.0, %v4139
      %v4141 = vpop.f32.mrb[0].mxu0
      %v4142 = vadd.f32 0.0, %v4141
      %v4143 = vpop.f32.mrb[0].mxu0
      %v4144 = vpop.f32.mrb[0].mxu0
      %4145 = vdwg.mxu0
      %v4146 = vpack.c.bf16 %v4140, %v4140
      %v4147 = vpack.c.bf16 %v4142, %v4142
      %s4148 = scalar_lea.vmem %s5, 8
      %v4149 = vld [vmem:[%s4148] sm:$0xf]
      %v4150 = vld [vmem:[%s4148 + $0x4] sm:$0xf]
      %v4153 = vunpack.c.l.b16 %v4149
      %v4154 = vunpack.c.l.b16 %v4150
      %v4155 = vpack.c.b16 %v4154, %v4153
      %4157 = vmatprep.subr.bf16.mxu0 0
      %4158 = vmatpush1.bf16.msra.mxu0 %v4155
      %4159 = vmatprep.subr.bf16.mxu0 0
      %4160 = vmatpush1.bf16.msra.mxu0 0
      %4161 = vmatprep.subr.bf16.mxu0 0
      %4162 = vmatpush1.bf16.msra.mxu0 0
      %4163 = vmatprep.subr.bf16.mxu0 0
      %4164 = vmatpush1.bf16.msra.mxu0 0
      %4165 = vmatprep.subr.bf16.mxu0 0
      %4166 = vmatpush1.bf16.msra.mxu0 0
      %4167 = vmatprep.subr.bf16.mxu0 0
      %4168 = vmatpush1.bf16.msra.mxu0 0
      %4169 = vmatprep.subr.bf16.mxu0 0
      %4170 = vmatpush1.bf16.msra.mxu0 0
      %4171 = vmatprep.subr.bf16.mxu0 0
      %4172 = vmatpush1.bf16.msra.mxu0 0
      %4173 = vmatprep.subr.bf16.mxu0 0
      %4174 = vmatpush1.bf16.msra.mxu0 0
      %4175 = vmatprep.subr.bf16.mxu0 0
      %4176 = vmatpush1.bf16.msra.mxu0 0
      %4177 = vmatprep.subr.bf16.mxu0 0
      %4178 = vmatpush1.bf16.msra.mxu0 0
      %4179 = vmatprep.subr.bf16.mxu0 0
      %4180 = vmatpush1.bf16.msra.mxu0 0
      %4181 = vmatprep.subr.bf16.mxu0 0
      %4182 = vmatpush1.bf16.msra.mxu0 0
      %4183 = vmatprep.subr.bf16.mxu0 0
      %4184 = vmatpush1.bf16.msra.mxu0 0
      %4185 = vmatprep.subr.bf16.mxu0 0
      %4186 = vmatpush1.bf16.msra.mxu0 0
      %4187 = vmatprep.subr.bf16.mxu0 0
      %4188 = vmatpush1.bf16.msra.mxu0 0
      %4189 = vmatprep.mubr.bf16.mxu0 0
      %4190 = vmatmul.mubr.bf16.gmra.mrb[0].mxu0 %v608
      %v4191 = vpop.f32.mrb[0].mxu0
      %v4192 = vadd.f32 0.0, %v4191
      %v4193 = vpop.f32.mrb[0].mxu0
      %v4194 = vpop.f32.mrb[0].mxu0
      %v4195 = vadd.f32 0.0, %v4194
      %v4196 = vpop.f32.mrb[0].mxu0
      %4197 = vmatprep.mubr.bf16.mxu0 0
      %4198 = vmatmul.mubr.bf16.gmra.mrb[0].mxu0 %v611
      %v4199 = vpop.f32.mrb[0].mxu0
      %v4200 = vadd.f32 0.0, %v4199
      %v4201 = vpop.f32.mrb[0].mxu0
      %v4202 = vpop.f32.mrb[0].mxu0
      %v4203 = vadd.f32 0.0, %v4202
      %v4204 = vpop.f32.mrb[0].mxu0
      %4205 = vmatprep.mubr.bf16.mxu0 0
      %4206 = vmatmul.mubr.bf16.gmra.mrb[0].mxu0 %v614
      %v4207 = vpop.f32.mrb[0].mxu0
      %v4208 = vadd.f32 0.0, %v4207
      %v4209 = vpop.f32.mrb[0].mxu0
      %v4210 = vpop.f32.mrb[0].mxu0
      %v4211 = vadd.f32 0.0, %v4210
      %v4212 = vpop.f32.mrb[0].mxu0
      %4213 = vmatprep.mubr.bf16.mxu0 0
      %4214 = vmatmul.mubr.bf16.gmra.mrb[0].mxu0 %v617
      %v4215 = vpop.f32.mrb[0].mxu0
      %v4216 = vadd.f32 0.0, %v4215
      %v4217 = vpop.f32.mrb[0].mxu0
      %v4218 = vpop.f32.mrb[0].mxu0
      %v4219 = vadd.f32 0.0, %v4218
      %v4220 = vpop.f32.mrb[0].mxu0
      %4221 = vmatprep.mubr.bf16.mxu0 0
      %4222 = vmatmul.mubr.bf16.gmra.mrb[0].mxu0 %v620
      %v4223 = vpop.f32.mrb[0].mxu0
      %v4224 = vadd.f32 0.0, %v4223
      %v4225 = vpop.f32.mrb[0].mxu0
      %v4226 = vpop.f32.mrb[0].mxu0
      %v4227 = vadd.f32 0.0, %v4226
      %v4228 = vpop.f32.mrb[0].mxu0
      %4229 = vmatprep.mubr.bf16.mxu0 0
      %4230 = vmatmul.mubr.bf16.gmra.mrb[0].mxu0 %v623
      %v4231 = vpop.f32.mrb[0].mxu0
      %v4232 = vadd.f32 0.0, %v4231
      %v4233 = vpop.f32.mrb[0].mxu0
      %v4234 = vpop.f32.mrb[0].mxu0
      %v4235 = vadd.f32 0.0, %v4234
      %v4236 = vpop.f32.mrb[0].mxu0
      %4237 = vmatprep.mubr.bf16.mxu0 0
      %4238 = vmatmul.mubr.bf16.gmra.mrb[0].mxu0 %v626
      %v4239 = vpop.f32.mrb[0].mxu0
      %v4240 = vadd.f32 0.0, %v4239
      %v4241 = vpop.f32.mrb[0].mxu0
      %v4242 = vpop.f32.mrb[0].mxu0
      %v4243 = vadd.f32 0.0, %v4242
      %v4244 = vpop.f32.mrb[0].mxu0
      %4245 = vmatprep.mubr.bf16.mxu0 0
      %4246 = vmatmul.mubr.bf16.gmra.mrb[0].mxu0 %v629
      %v4247 = vpop.f32.mrb[0].mxu0
      %v4248 = vadd.f32 0.0, %v4247
      %v4249 = vpop.f32.mrb[0].mxu0
      %v4250 = vpop.f32.mrb[0].mxu0
      %v4251 = vadd.f32 0.0, %v4250
      %v4252 = vpop.f32.mrb[0].mxu0
      %4253 = vmatprep.mubr.bf16.mxu0 0
      %4254 = vmatmul.mubr.bf16.gmra.mrb[0].mxu0 %v632
      %v4255 = vpop.f32.mrb[0].mxu0
      %v4256 = vadd.f32 0.0, %v4255
      %v4257 = vpop.f32.mrb[0].mxu0
      %v4258 = vpop.f32.mrb[0].mxu0
      %v4259 = vadd.f32 0.0, %v4258
      %v4260 = vpop.f32.mrb[0].mxu0
      %4261 = vmatprep.mubr.bf16.mxu0 0
      %4262 = vmatmul.mubr.bf16.gmra.mrb[0].mxu0 %v635
      %v4263 = vpop.f32.mrb[0].mxu0
      %v4264 = vadd.f32 0.0, %v4263
      %v4265 = vpop.f32.mrb[0].mxu0
      %v4266 = vpop.f32.mrb[0].mxu0
      %v4267 = vadd.f32 0.0, %v4266
      %v4268 = vpop.f32.mrb[0].mxu0
      %4269 = vmatprep.mubr.bf16.mxu0 0
      %4270 = vmatmul.mubr.bf16.gmra.mrb[0].mxu0 %v638
      %v4271 = vpop.f32.mrb[0].mxu0
      %v4272 = vadd.f32 0.0, %v4271
      %v4273 = vpop.f32.mrb[0].mxu0
      %v4274 = vpop.f32.mrb[0].mxu0
      %v4275 = vadd.f32 0.0, %v4274
      %v4276 = vpop.f32.mrb[0].mxu0
      %4277 = vdwg.mxu0
      %v4278 = vpack.c.bf16 %v4195, %v4192
      %v4279 = vpack.c.bf16 %v4203, %v4200
      %v4280 = vpack.c.bf16 %v4211, %v4208
      %v4281 = vpack.c.bf16 %v4219, %v4216
      %v4282 = vpack.c.bf16 %v4227, %v4224
      %v4283 = vpack.c.bf16 %v4235, %v4232
      %v4284 = vpack.c.bf16 %v4243, %v4240
      %v4285 = vpack.c.bf16 %v4251, %v4248
      %v4286 = vpack.c.bf16 %v4259, %v4256
      %v4287 = vpack.c.bf16 %v4267, %v4264
      %v4288 = vpack.c.bf16 %v4275, %v4272
      %s4289 = scalar_lea.vmem %s9, 176
      %v4290 = vld [vmem:[%s4289] sm:$0xff]
      %v4291 = vld [vmem:[%s4289 + $0x8] sm:$0xff]
      %v4292 = vld [vmem:[%s4289 + $0x10] sm:$0xff]
      %v4293 = vld [vmem:[%s4289 + $0x18] sm:$0xff]
      %v4294 = vld [vmem:[%s4289 + $0x20] sm:$0xff]
      %v4295 = vld [vmem:[%s4289 + $0x28] sm:$0xff]
      %v4296 = vld [vmem:[%s4289 + $0x30] sm:$0xff]
      %v4297 = vld [vmem:[%s4289 + $0x38] sm:$0xff]
      %v4298 = vld [vmem:[%s4289 + $0x40] sm:$0xff]
      %v4299 = vld [vmem:[%s4289 + $0x48] sm:$0xff]
      %v4300 = vld [vmem:[%s4289 + $0x50] sm:$0xff]
      %v4301 = vld [vmem:[%s4289 + $0x58] sm:$0xff]
      %v4302 = vld [vmem:[%s4289 + $0x60] sm:$0xff]
      %v4303 = vld [vmem:[%s4289 + $0x68] sm:$0xff]
      %v4304 = vld [vmem:[%s4289 + $0x70] sm:$0xff]
      %v4305 = vld [vmem:[%s4289 + $0x78] sm:$0xff]
      %v4306 = vld [vmem:[%s4289 + $0x80] sm:$0xff]
      %v4307 = vld [vmem:[%s4289 + $0x88] sm:$0xff]
      %v4308 = vld [vmem:[%s4289 + $0x90] sm:$0xff]
      %v4309 = vld [vmem:[%s4289 + $0x98] sm:$0xff]
      %v4310 = vld [vmem:[%s4289 + $0xa0] sm:$0xff]
      %v4311 = vld [vmem:[%s4289 + $0xa8] sm:$0x11]
      %v4312 = vunpack.c.l.bf16 %v4290
      %v4313 = vunpack.c.h.bf16 %v4290
      %v4314 = vunpack.c.l.bf16 %v4291
      %v4315 = vunpack.c.h.bf16 %v4291
      %v4316 = vunpack.c.l.bf16 %v4292
      %v4317 = vunpack.c.h.bf16 %v4292
      %v4318 = vunpack.c.l.bf16 %v4293
      %v4319 = vunpack.c.h.bf16 %v4293
      %v4320 = vunpack.c.l.bf16 %v4294
      %v4321 = vunpack.c.h.bf16 %v4294
      %v4322 = vunpack.c.l.bf16 %v4295
      %v4323 = vunpack.c.h.bf16 %v4295
      %v4324 = vunpack.c.l.bf16 %v4296
      %v4325 = vunpack.c.h.bf16 %v4296
      %v4326 = vunpack.c.l.bf16 %v4297
      %v4327 = vunpack.c.h.bf16 %v4297
      %v4328 = vunpack.c.l.bf16 %v4298
      %v4329 = vunpack.c.h.bf16 %v4298
      %v4330 = vunpack.c.l.bf16 %v4299
      %v4331 = vunpack.c.h.bf16 %v4299
      %v4332 = vunpack.c.l.bf16 %v4300
      %v4333 = vunpack.c.h.bf16 %v4300
      %v4334 = vunpack.c.l.bf16 %v4301
      %v4335 = vunpack.c.h.bf16 %v4301
      %v4336 = vunpack.c.l.bf16 %v4302
      %v4337 = vunpack.c.h.bf16 %v4302
      %v4338 = vunpack.c.l.bf16 %v4303
      %v4339 = vunpack.c.h.bf16 %v4303
      %v4340 = vunpack.c.l.bf16 %v4304
      %v4341 = vunpack.c.h.bf16 %v4304
      %v4342 = vunpack.c.l.bf16 %v4305
      %v4343 = vunpack.c.h.bf16 %v4305
      %v4344 = vunpack.c.l.bf16 %v4306
      %v4345 = vunpack.c.h.bf16 %v4306
      %v4346 = vunpack.c.l.bf16 %v4307
      %v4347 = vunpack.c.h.bf16 %v4307
      %v4348 = vunpack.c.l.bf16 %v4308
      %v4349 = vunpack.c.h.bf16 %v4308
      %v4350 = vunpack.c.l.bf16 %v4309
      %v4351 = vunpack.c.h.bf16 %v4309
      %v4352 = vunpack.c.l.bf16 %v4310
      %v4353 = vunpack.c.h.bf16 %v4310
      %v4354 = vunpack.c.l.bf16 %v4311
      %v4355 = vunpack.c.h.bf16 %v4311
      %v4357 = vsel %vm2077, %v4041, 0
      %v4360 = vsel %vm2077, %v4042, 0
      %v4363 = vsel %vm2077, %v4043, 0
      %v4366 = vsel %vm2077, %v4044, 0
      %v4369 = vsel %vm2077, %v4045, 0
      %v4372 = vsel %vm2077, %v4046, 0
      %v4375 = vsel %vm2077, %v4047, 0
      %v4378 = vsel %vm2077, %v4048, 0
      %v4381 = vsel %vm2077, %v4049, 0
      %v4384 = vsel %vm2077, %v4050, 0
      %v4387 = vsel %vm2077, %v4051, 0
      %v4390 = vsel %vm2111, %v4098, 0
      %v4393 = vsel %vm2111, %v4099, 0
      %4395 = vmatprep.subr.bf16.mxu0 %v4393
      %4396 = vmatpush1.bf16.msra.mxu0 %v4390
      %4397 = vmatprep.subr.bf16.mxu0 0
      %4398 = vmatpush1.bf16.msra.mxu0 0
      %4399 = vmatprep.subr.bf16.mxu0 0
      %4400 = vmatpush1.bf16.msra.mxu0 0
      %4401 = vmatprep.subr.bf16.mxu0 0
      %4402 = vmatpush1.bf16.msra.mxu0 0
      %4403 = vmatprep.subr.bf16.mxu0 0
      %4404 = vmatpush1.bf16.msra.mxu0 0
      %4405 = vmatprep.subr.bf16.mxu0 0
      %4406 = vmatpush1.bf16.msra.mxu0 0
      %4407 = vmatprep.subr.bf16.mxu0 0
      %4408 = vmatpush1.bf16.msra.mxu0 0
      %4409 = vmatprep.subr.bf16.mxu0 0
      %4410 = vmatpush1.bf16.msra.mxu0 0
      %4411 = vmatprep.subr.bf16.mxu0 0
      %4412 = vmatpush1.bf16.msra.mxu0 0
      %4413 = vmatprep.subr.bf16.mxu0 0
      %4414 = vmatpush1.bf16.msra.mxu0 0
      %4415 = vmatprep.subr.bf16.mxu0 0
      %4416 = vmatpush1.bf16.msra.mxu0 0
      %4417 = vmatprep.subr.bf16.mxu0 0
      %4418 = vmatpush1.bf16.msra.mxu0 0
      %4419 = vmatprep.subr.bf16.mxu0 0
      %4420 = vmatpush1.bf16.msra.mxu0 0
      %4421 = vmatprep.subr.bf16.mxu0 0
      %4422 = vmatpush1.bf16.msra.mxu0 0
      %4423 = vmatprep.subr.bf16.mxu0 0
      %4424 = vmatpush1.bf16.msra.mxu0 0
      %4425 = vmatprep.subr.bf16.mxu0 0
      %4426 = vmatpush1.bf16.msra.mxu0 0
      %4427 = vmatprep.mubr.bf16.mxu0 0
      %4428 = vmatmul.mubr.bf16.gmra.mrb[0].mxu0 %v4357
      %v4429 = vpop.f32.mrb[0].mxu0
      %v4430 = vadd.f32 %v4312, %v4429
      %v4431 = vpop.f32.mrb[0].mxu0
      %v4432 = vadd.f32 %v4313, %v4431
      %v4433 = vpop.f32.mrb[0].mxu0
      %v4434 = vadd.f32 %v4314, %v4433
      %v4435 = vpop.f32.mrb[0].mxu0
      %v4436 = vadd.f32 %v4315, %v4435
      %4437 = vmatprep.mubr.bf16.mxu0 0
      %4438 = vmatmul.mubr.bf16.gmra.mrb[0].mxu0 %v4360
      %v4439 = vpop.f32.mrb[0].mxu0
      %v4440 = vadd.f32 %v4316, %v4439
      %v4441 = vpop.f32.mrb[0].mxu0
      %v4442 = vadd.f32 %v4317, %v4441
      %v4443 = vpop.f32.mrb[0].mxu0
      %v4444 = vadd.f32 %v4318, %v4443
      %v4445 = vpop.f32.mrb[0].mxu0
      %v4446 = vadd.f32 %v4319, %v4445
      %4447 = vmatprep.mubr.bf16.mxu0 0
      %4448 = vmatmul.mubr.bf16.gmra.mrb[0].mxu0 %v4363
      %v4449 = vpop.f32.mrb[0].mxu0
      %v4450 = vadd.f32 %v4320, %v4449
      %v4451 = vpop.f32.mrb[0].mxu0
      %v4452 = vadd.f32 %v4321, %v4451
      %v4453 = vpop.f32.mrb[0].mxu0
      %v4454 = vadd.f32 %v4322, %v4453
      %v4455 = vpop.f32.mrb[0].mxu0
      %v4456 = vadd.f32 %v4323, %v4455
      %4457 = vmatprep.mubr.bf16.mxu0 0
      %4458 = vmatmul.mubr.bf16.gmra.mrb[0].mxu0 %v4366
      %v4459 = vpop.f32.mrb[0].mxu0
      %v4460 = vadd.f32 %v4324, %v4459
      %v4461 = vpop.f32.mrb[0].mxu0
      %v4462 = vadd.f32 %v4325, %v4461
      %v4463 = vpop.f32.mrb[0].mxu0
      %v4464 = vadd.f32 %v4326, %v4463
      %v4465 = vpop.f32.mrb[0].mxu0
      %v4466 = vadd.f32 %v4327, %v4465
      %4467 = vmatprep.mubr.bf16.mxu0 0
      %4468 = vmatmul.mubr.bf16.gmra.mrb[0].mxu0 %v4369
      %v4469 = vpop.f32.mrb[0].mxu0
      %v4470 = vadd.f32 %v4328, %v4469
      %v4471 = vpop.f32.mrb[0].mxu0
      %v4472 = vadd.f32 %v4329, %v4471
      %v4473 = vpop.f32.mrb[0].mxu0
      %v4474 = vadd.f32 %v4330, %v4473
      %v4475 = vpop.f32.mrb[0].mxu0
      %v4476 = vadd.f32 %v4331, %v4475
      %4477 = vmatprep.mubr.bf16.mxu0 0
      %4478 = vmatmul.mubr.bf16.gmra.mrb[0].mxu0 %v4372
      %v4479 = vpop.f32.mrb[0].mxu0
      %v4480 = vadd.f32 %v4332, %v4479
      %v4481 = vpop.f32.mrb[0].mxu0
      %v4482 = vadd.f32 %v4333, %v4481
      %v4483 = vpop.f32.mrb[0].mxu0
      %v4484 = vadd.f32 %v4334, %v4483
      %v4485 = vpop.f32.mrb[0].mxu0
      %v4486 = vadd.f32 %v4335, %v4485
      %4487 = vmatprep.mubr.bf16.mxu0 0
      %4488 = vmatmul.mubr.bf16.gmra.mrb[0].mxu0 %v4375
      %v4489 = vpop.f32.mrb[0].mxu0
      %v4490 = vadd.f32 %v4336, %v4489
      %v4491 = vpop.f32.mrb[0].mxu0
      %v4492 = vadd.f32 %v4337, %v4491
      %v4493 = vpop.f32.mrb[0].mxu0
      %v4494 = vadd.f32 %v4338, %v4493
      %v4495 = vpop.f32.mrb[0].mxu0
      %v4496 = vadd.f32 %v4339, %v4495
      %4497 = vmatprep.mubr.bf16.mxu0 0
      %4498 = vmatmul.mubr.bf16.gmra.mrb[0].mxu0 %v4378
      %v4499 = vpop.f32.mrb[0].mxu0
      %v4500 = vadd.f32 %v4340, %v4499
      %v4501 = vpop.f32.mrb[0].mxu0
      %v4502 = vadd.f32 %v4341, %v4501
      %v4503 = vpop.f32.mrb[0].mxu0
      %v4504 = vadd.f32 %v4342, %v4503
      %v4505 = vpop.f32.mrb[0].mxu0
      %v4506 = vadd.f32 %v4343, %v4505
      %4507 = vmatprep.mubr.bf16.mxu0 0
      %4508 = vmatmul.mubr.bf16.gmra.mrb[0].mxu0 %v4381
      %v4509 = vpop.f32.mrb[0].mxu0
      %v4510 = vadd.f32 %v4344, %v4509
      %v4511 = vpop.f32.mrb[0].mxu0
      %v4512 = vadd.f32 %v4345, %v4511
      %v4513 = vpop.f32.mrb[0].mxu0
      %v4514 = vadd.f32 %v4346, %v4513
      %v4515 = vpop.f32.mrb[0].mxu0
      %v4516 = vadd.f32 %v4347, %v4515
      %4517 = vmatprep.mubr.bf16.mxu0 0
      %4518 = vmatmul.mubr.bf16.gmra.mrb[0].mxu0 %v4384
      %v4519 = vpop.f32.mrb[0].mxu0
      %v4520 = vadd.f32 %v4348, %v4519
      %v4521 = vpop.f32.mrb[0].mxu0
      %v4522 = vadd.f32 %v4349, %v4521
      %v4523 = vpop.f32.mrb[0].mxu0
      %v4524 = vadd.f32 %v4350, %v4523
      %v4525 = vpop.f32.mrb[0].mxu0
      %v4526 = vadd.f32 %v4351, %v4525
      %4527 = vmatprep.mubr.bf16.mxu0 0
      %4528 = vmatmul.mubr.bf16.gmra.mrb[0].mxu0 %v4387
      %v4529 = vpop.f32.mrb[0].mxu0
      %v4530 = vadd.f32 %v4352, %v4529
      %v4531 = vpop.f32.mrb[0].mxu0
      %v4532 = vadd.f32 %v4353, %v4531
      %v4533 = vpop.f32.mrb[0].mxu0
      %v4534 = vadd.f32 %v4354, %v4533
      %v4535 = vpop.f32.mrb[0].mxu0
      %v4536 = vadd.f32 %v4355, %v4535
      %4537 = vdwg.mxu0
      %v4538 = vsel %vm2261, %v4432, -inf
      %v4539 = vmax.f32 %v4430, %v4538
      %4540 = vmax.xlane.f32.xlu0 %v4539
      %v4541 = vpop.xlane.xlu0 %4540
      %v4542 = vsel %vm2261, %v4436, -inf
      %v4543 = vmax.f32 %v4434, %v4542
      %4544 = vmax.xlane.f32.xlu0 %v4543
      %v4545 = vpop.xlane.xlu0 %4544
      %v4546 = vsel %vm2261, %v4442, -inf
      %v4547 = vmax.f32 %v4440, %v4546
      %4548 = vmax.xlane.f32.xlu0 %v4547
      %v4549 = vpop.xlane.xlu0 %4548
      %v4550 = vsel %vm2261, %v4446, -inf
      %v4551 = vmax.f32 %v4444, %v4550
      %4552 = vmax.xlane.f32.xlu0 %v4551
      %v4553 = vpop.xlane.xlu0 %4552
      %v4554 = vsel %vm2261, %v4452, -inf
      %v4555 = vmax.f32 %v4450, %v4554
      %4556 = vmax.xlane.f32.xlu0 %v4555
      %v4557 = vpop.xlane.xlu0 %4556
      %v4558 = vsel %vm2261, %v4456, -inf
      %v4559 = vmax.f32 %v4454, %v4558
      %4560 = vmax.xlane.f32.xlu0 %v4559
      %v4561 = vpop.xlane.xlu0 %4560
      %v4562 = vsel %vm2261, %v4462, -inf
      %v4563 = vmax.f32 %v4460, %v4562
      %4564 = vmax.xlane.f32.xlu0 %v4563
      %v4565 = vpop.xlane.xlu0 %4564
      %v4566 = vsel %vm2261, %v4466, -inf
      %v4567 = vmax.f32 %v4464, %v4566
      %4568 = vmax.xlane.f32.xlu0 %v4567
      %v4569 = vpop.xlane.xlu0 %4568
      %v4570 = vsel %vm2261, %v4472, -inf
      %v4571 = vmax.f32 %v4470, %v4570
      %4572 = vmax.xlane.f32.xlu0 %v4571
      %v4573 = vpop.xlane.xlu0 %4572
      %v4574 = vsel %vm2261, %v4476, -inf
      %v4575 = vmax.f32 %v4474, %v4574
      %4576 = vmax.xlane.f32.xlu0 %v4575
      %v4577 = vpop.xlane.xlu0 %4576
      %v4578 = vsel %vm2261, %v4482, -inf
      %v4579 = vmax.f32 %v4480, %v4578
      %4580 = vmax.xlane.f32.xlu0 %v4579
      %v4581 = vpop.xlane.xlu0 %4580
      %v4582 = vsel %vm2261, %v4486, -inf
      %v4583 = vmax.f32 %v4484, %v4582
      %4584 = vmax.xlane.f32.xlu0 %v4583
      %v4585 = vpop.xlane.xlu0 %4584
      %v4586 = vsel %vm2261, %v4492, -inf
      %v4587 = vmax.f32 %v4490, %v4586
      %4588 = vmax.xlane.f32.xlu0 %v4587
      %v4589 = vpop.xlane.xlu0 %4588
      %v4590 = vsel %vm2261, %v4496, -inf
      %v4591 = vmax.f32 %v4494, %v4590
      %4592 = vmax.xlane.f32.xlu0 %v4591
      %v4593 = vpop.xlane.xlu0 %4592
      %v4594 = vsel %vm2261, %v4502, -inf
      %v4595 = vmax.f32 %v4500, %v4594
      %4596 = vmax.xlane.f32.xlu0 %v4595
      %v4597 = vpop.xlane.xlu0 %4596
      %v4598 = vsel %vm2261, %v4506, -inf
      %v4599 = vmax.f32 %v4504, %v4598
      %4600 = vmax.xlane.f32.xlu0 %v4599
      %v4601 = vpop.xlane.xlu0 %4600
      %v4602 = vsel %vm2261, %v4512, -inf
      %v4603 = vmax.f32 %v4510, %v4602
      %4604 = vmax.xlane.f32.xlu0 %v4603
      %v4605 = vpop.xlane.xlu0 %4604
      %v4606 = vsel %vm2261, %v4516, -inf
      %v4607 = vmax.f32 %v4514, %v4606
      %4608 = vmax.xlane.f32.xlu0 %v4607
      %v4609 = vpop.xlane.xlu0 %4608
      %v4610 = vsel %vm2261, %v4522, -inf
      %v4611 = vmax.f32 %v4520, %v4610
      %4612 = vmax.xlane.f32.xlu0 %v4611
      %v4613 = vpop.xlane.xlu0 %4612
      %v4614 = vsel %vm2261, %v4526, -inf
      %v4615 = vmax.f32 %v4524, %v4614
      %4616 = vmax.xlane.f32.xlu0 %v4615
      %v4617 = vpop.xlane.xlu0 %4616
      %v4618 = vsel %vm2261, %v4532, -inf
      %v4619 = vmax.f32 %v4530, %v4618
      %4620 = vmax.xlane.f32.xlu0 %v4619
      %v4621 = vpop.xlane.xlu0 %4620
      %v4622 = vsel %vm2346, %v4534, -inf
      %v4623 = vsel %vm2348, %v4536, -inf
      %v4624 = vmax.f32 %v4622, %v4623
      %4625 = vmax.xlane.f32.xlu0 %v4624
      %v4626 = vpop.xlane.xlu0 %4625
      %v4627 = vsub.f32 %v4430, %v4541
      %v4628 = vsub.f32 %v4432, %v4541
      %v4629 = vsub.f32 %v4434, %v4545
      %v4630 = vsub.f32 %v4436, %v4545
      %v4631 = vsub.f32 %v4440, %v4549
      %v4632 = vsub.f32 %v4442, %v4549
      %v4633 = vsub.f32 %v4444, %v4553
      %v4634 = vsub.f32 %v4446, %v4553
      %v4635 = vsub.f32 %v4450, %v4557
      %v4636 = vsub.f32 %v4452, %v4557
      %v4637 = vsub.f32 %v4454, %v4561
      %v4638 = vsub.f32 %v4456, %v4561
      %v4639 = vsub.f32 %v4460, %v4565
      %v4640 = vsub.f32 %v4462, %v4565
      %v4641 = vsub.f32 %v4464, %v4569
      %v4642 = vsub.f32 %v4466, %v4569
      %v4643 = vsub.f32 %v4470, %v4573
      %v4644 = vsub.f32 %v4472, %v4573
      %v4645 = vsub.f32 %v4474, %v4577
      %v4646 = vsub.f32 %v4476, %v4577
      %v4647 = vsub.f32 %v4480, %v4581
      %v4648 = vsub.f32 %v4482, %v4581
      %v4649 = vsub.f32 %v4484, %v4585
      %v4650 = vsub.f32 %v4486, %v4585
      %v4651 = vsub.f32 %v4490, %v4589
      %v4652 = vsub.f32 %v4492, %v4589
      %v4653 = vsub.f32 %v4494, %v4593
      %v4654 = vsub.f32 %v4496, %v4593
      %v4655 = vsub.f32 %v4500, %v4597
      %v4656 = vsub.f32 %v4502, %v4597
      %v4657 = vsub.f32 %v4504, %v4601
      %v4658 = vsub.f32 %v4506, %v4601
      %v4659 = vsub.f32 %v4510, %v4605
      %v4660 = vsub.f32 %v4512, %v4605
      %v4661 = vsub.f32 %v4514, %v4609
      %v4662 = vsub.f32 %v4516, %v4609
      %v4663 = vsub.f32 %v4520, %v4613
      %v4664 = vsub.f32 %v4522, %v4613
      %v4665 = vsub.f32 %v4524, %v4617
      %v4666 = vsub.f32 %v4526, %v4617
      %v4667 = vsub.f32 %v4530, %v4621
      %v4668 = vsub.f32 %v4532, %v4621
      %v4669 = vsub.f32 %v4534, %v4626
      %v4670 = vsub.f32 %v4536, %v4626
      %v4671 = vmul.f32 %v4627, 1.442695
      %v4672 = vpow.pop %v4671
      %v4673 = vmul.f32 %v4628, 1.442695
      %v4674 = vpow.pop %v4673
      %v4675 = vmul.f32 %v4629, 1.442695
      %v4676 = vpow.pop %v4675
      %v4677 = vmul.f32 %v4630, 1.442695
      %v4678 = vpow.pop %v4677
      %v4679 = vmul.f32 %v4631, 1.442695
      %v4680 = vpow.pop %v4679
      %v4681 = vmul.f32 %v4632, 1.442695
      %v4682 = vpow.pop %v4681
      %v4683 = vmul.f32 %v4633, 1.442695
      %v4684 = vpow.pop %v4683
      %v4685 = vmul.f32 %v4634, 1.442695
      %v4686 = vpow.pop %v4685
      %v4687 = vmul.f32 %v4635, 1.442695
      %v4688 = vpow.pop %v4687
      %v4689 = vmul.f32 %v4636, 1.442695
      %v4690 = vpow.pop %v4689
      %v4691 = vmul.f32 %v4637, 1.442695
      %v4692 = vpow.pop %v4691
      %v4693 = vmul.f32 %v4638, 1.442695
      %v4694 = vpow.pop %v4693
      %v4695 = vmul.f32 %v4639, 1.442695
      %v4696 = vpow.pop %v4695
      %v4697 = vmul.f32 %v4640, 1.442695
      %v4698 = vpow.pop %v4697
      %v4699 = vmul.f32 %v4641, 1.442695
      %v4700 = vpow.pop %v4699
      %v4701 = vmul.f32 %v4642, 1.442695
      %v4702 = vpow.pop %v4701
      %v4703 = vmul.f32 %v4643, 1.442695
      %v4704 = vpow.pop %v4703
      %v4705 = vmul.f32 %v4644, 1.442695
      %v4706 = vpow.pop %v4705
      %v4707 = vmul.f32 %v4645, 1.442695
      %v4708 = vpow.pop %v4707
      %v4709 = vmul.f32 %v4646, 1.442695
      %v4710 = vpow.pop %v4709
      %v4711 = vmul.f32 %v4647, 1.442695
      %v4712 = vpow.pop %v4711
      %v4713 = vmul.f32 %v4648, 1.442695
      %v4714 = vpow.pop %v4713
      %v4715 = vmul.f32 %v4649, 1.442695
      %v4716 = vpow.pop %v4715
      %v4717 = vmul.f32 %v4650, 1.442695
      %v4718 = vpow.pop %v4717
      %v4719 = vmul.f32 %v4651, 1.442695
      %v4720 = vpow.pop %v4719
      %v4721 = vmul.f32 %v4652, 1.442695
      %v4722 = vpow.pop %v4721
      %v4723 = vmul.f32 %v4653, 1.442695
      %v4724 = vpow.pop %v4723
      %v4725 = vmul.f32 %v4654, 1.442695
      %v4726 = vpow.pop %v4725
      %v4727 = vmul.f32 %v4655, 1.442695
      %v4728 = vpow.pop %v4727
      %v4729 = vmul.f32 %v4656, 1.442695
      %v4730 = vpow.pop %v4729
      %v4731 = vmul.f32 %v4657, 1.442695
      %v4732 = vpow.pop %v4731
      %v4733 = vmul.f32 %v4658, 1.442695
      %v4734 = vpow.pop %v4733
      %v4735 = vmul.f32 %v4659, 1.442695
      %v4736 = vpow.pop %v4735
      %v4737 = vmul.f32 %v4660, 1.442695
      %v4738 = vpow.pop %v4737
      %v4739 = vmul.f32 %v4661, 1.442695
      %v4740 = vpow.pop %v4739
      %v4741 = vmul.f32 %v4662, 1.442695
      %v4742 = vpow.pop %v4741
      %v4743 = vmul.f32 %v4663, 1.442695
      %v4744 = vpow.pop %v4743
      %v4745 = vmul.f32 %v4664, 1.442695
      %v4746 = vpow.pop %v4745
      %v4747 = vmul.f32 %v4665, 1.442695
      %v4748 = vpow.pop %v4747
      %v4749 = vmul.f32 %v4666, 1.442695
      %v4750 = vpow.pop %v4749
      %v4751 = vmul.f32 %v4667, 1.442695
      %v4752 = vpow.pop %v4751
      %v4753 = vmul.f32 %v4668, 1.442695
      %v4754 = vpow.pop %v4753
      %v4755 = vmul.f32 %v4669, 1.442695
      %v4756 = vpow.pop %v4755
      %v4757 = vmul.f32 %v4670, 1.442695
      %v4758 = vpow.pop %v4757
      %v4759 = vsel %vm2261, %v4674, 0.0
      %v4760 = vadd.f32 %v4672, %v4759
      %4761 = vadd.xlane.f32.xlu0 %v4760
      %v4762 = vpop.xlane.xlu0 %4761
      %v4763 = vsel %vm2261, %v4678, 0.0
      %v4764 = vadd.f32 %v4676, %v4763
      %4765 = vadd.xlane.f32.xlu0 %v4764
      %v4766 = vpop.xlane.xlu0 %4765
      %v4767 = vsel %vm2261, %v4682, 0.0
      %v4768 = vadd.f32 %v4680, %v4767
      %4769 = vadd.xlane.f32.xlu0 %v4768
      %v4770 = vpop.xlane.xlu0 %4769
      %v4771 = vsel %vm2261, %v4686, 0.0
      %v4772 = vadd.f32 %v4684, %v4771
      %4773 = vadd.xlane.f32.xlu0 %v4772
      %v4774 = vpop.xlane.xlu0 %4773
      %v4775 = vsel %vm2261, %v4690, 0.0
      %v4776 = vadd.f32 %v4688, %v4775
      %4777 = vadd.xlane.f32.xlu0 %v4776
      %v4778 = vpop.xlane.xlu0 %4777
      %v4779 = vsel %vm2261, %v4694, 0.0
      %v4780 = vadd.f32 %v4692, %v4779
      %4781 = vadd.xlane.f32.xlu0 %v4780
      %v4782 = vpop.xlane.xlu0 %4781
      %v4783 = vsel %vm2261, %v4698, 0.0
      %v4784 = vadd.f32 %v4696, %v4783
      %4785 = vadd.xlane.f32.xlu0 %v4784
      %v4786 = vpop.xlane.xlu0 %4785
      %v4787 = vsel %vm2261, %v4702, 0.0
      %v4788 = vadd.f32 %v4700, %v4787
      %4789 = vadd.xlane.f32.xlu0 %v4788
      %v4790 = vpop.xlane.xlu0 %4789
      %v4791 = vsel %vm2261, %v4706, 0.0
      %v4792 = vadd.f32 %v4704, %v4791
      %4793 = vadd.xlane.f32.xlu0 %v4792
      %v4794 = vpop.xlane.xlu0 %4793
      %v4795 = vsel %vm2261, %v4710, 0.0
      %v4796 = vadd.f32 %v4708, %v4795
      %4797 = vadd.xlane.f32.xlu0 %v4796
      %v4798 = vpop.xlane.xlu0 %4797
      %v4799 = vsel %vm2261, %v4714, 0.0
      %v4800 = vadd.f32 %v4712, %v4799
      %4801 = vadd.xlane.f32.xlu0 %v4800
      %v4802 = vpop.xlane.xlu0 %4801
      %v4803 = vsel %vm2261, %v4718, 0.0
      %v4804 = vadd.f32 %v4716, %v4803
      %4805 = vadd.xlane.f32.xlu0 %v4804
      %v4806 = vpop.xlane.xlu0 %4805
      %v4807 = vsel %vm2261, %v4722, 0.0
      %v4808 = vadd.f32 %v4720, %v4807
      %4809 = vadd.xlane.f32.xlu0 %v4808
      %v4810 = vpop.xlane.xlu0 %4809
      %v4811 = vsel %vm2261, %v4726, 0.0
      %v4812 = vadd.f32 %v4724, %v4811
      %4813 = vadd.xlane.f32.xlu0 %v4812
      %v4814 = vpop.xlane.xlu0 %4813
      %v4815 = vsel %vm2261, %v4730, 0.0
      %v4816 = vadd.f32 %v4728, %v4815
      %4817 = vadd.xlane.f32.xlu0 %v4816
      %v4818 = vpop.xlane.xlu0 %4817
      %v4819 = vsel %vm2261, %v4734, 0.0
      %v4820 = vadd.f32 %v4732, %v4819
      %4821 = vadd.xlane.f32.xlu0 %v4820
      %v4822 = vpop.xlane.xlu0 %4821
      %v4823 = vsel %vm2261, %v4738, 0.0
      %v4824 = vadd.f32 %v4736, %v4823
      %4825 = vadd.xlane.f32.xlu0 %v4824
      %v4826 = vpop.xlane.xlu0 %4825
      %v4827 = vsel %vm2261, %v4742, 0.0
      %v4828 = vadd.f32 %v4740, %v4827
      %4829 = vadd.xlane.f32.xlu0 %v4828
      %v4830 = vpop.xlane.xlu0 %4829
      %v4831 = vsel %vm2261, %v4746, 0.0
      %v4832 = vadd.f32 %v4744, %v4831
      %4833 = vadd.xlane.f32.xlu0 %v4832
      %v4834 = vpop.xlane.xlu0 %4833
      %v4835 = vsel %vm2261, %v4750, 0.0
      %v4836 = vadd.f32 %v4748, %v4835
      %4837 = vadd.xlane.f32.xlu0 %v4836
      %v4838 = vpop.xlane.xlu0 %4837
      %v4839 = vsel %vm2261, %v4754, 0.0
      %v4840 = vadd.f32 %v4752, %v4839
      %4841 = vadd.xlane.f32.xlu0 %v4840
      %v4842 = vpop.xlane.xlu0 %4841
      %v4843 = vsel %vm2346, %v4756, 0.0
      %v4844 = vsel %vm2348, %v4758, 0.0
      %v4845 = vadd.f32 %v4843, %v4844
      %4846 = vadd.xlane.f32.xlu0 %v4845
      %v4847 = vpop.xlane.xlu0 %4846
      %v4848 = vrcp.pop %v4762
      %v4849 = vrcp.pop %v4766
      %v4850 = vrcp.pop %v4770
      %v4851 = vrcp.pop %v4774
      %v4852 = vrcp.pop %v4778
      %v4853 = vrcp.pop %v4782
      %v4854 = vrcp.pop %v4786
      %v4855 = vrcp.pop %v4790
      %v4856 = vrcp.pop %v4794
      %v4857 = vrcp.pop %v4798
      %v4858 = vrcp.pop %v4802
      %v4859 = vrcp.pop %v4806
      %v4860 = vrcp.pop %v4810
      %v4861 = vrcp.pop %v4814
      %v4862 = vrcp.pop %v4818
      %v4863 = vrcp.pop %v4822
      %v4864 = vrcp.pop %v4826
      %v4865 = vrcp.pop %v4830
      %v4866 = vrcp.pop %v4834
      %v4867 = vrcp.pop %v4838
      %v4868 = vrcp.pop %v4842
      %v4869 = vrcp.pop %v4847
      %v4870 = vpack.c.bf16 %v4676, %v4672
      %v4871 = vpack.c.bf16 %v4678, %v4674
      %v4872 = vpack.c.bf16 %v4684, %v4680
      %v4873 = vpack.c.bf16 %v4686, %v4682
      %v4874 = vpack.c.bf16 %v4692, %v4688
      %v4875 = vpack.c.bf16 %v4694, %v4690
      %v4876 = vpack.c.bf16 %v4700, %v4696
      %v4877 = vpack.c.bf16 %v4702, %v4698
      %v4878 = vpack.c.bf16 %v4708, %v4704
      %v4879 = vpack.c.bf16 %v4710, %v4706
      %v4880 = vpack.c.bf16 %v4716, %v4712
      %v4881 = vpack.c.bf16 %v4718, %v4714
      %v4882 = vpack.c.bf16 %v4724, %v4720
      %v4883 = vpack.c.bf16 %v4726, %v4722
      %v4884 = vpack.c.bf16 %v4732, %v4728
      %v4885 = vpack.c.bf16 %v4734, %v4730
      %v4886 = vpack.c.bf16 %v4740, %v4736
      %v4887 = vpack.c.bf16 %v4742, %v4738
      %v4888 = vpack.c.bf16 %v4748, %v4744
      %v4889 = vpack.c.bf16 %v4750, %v4746
      %v4890 = vpack.c.bf16 %v4756, %v4752
      %v4891 = vpack.c.bf16 %v4758, %v4754
      %v4893 = vsel %vm2261, %v4871, 0
      %v4896 = vsel %vm2261, %v4873, 0
      %v4899 = vsel %vm2261, %v4875, 0
      %v4902 = vsel %vm2261, %v4877, 0
      %v4905 = vsel %vm2261, %v4879, 0
      %v4908 = vsel %vm2261, %v4881, 0
      %v4911 = vsel %vm2261, %v4883, 0
      %v4914 = vsel %vm2261, %v4885, 0
      %v4917 = vsel %vm2261, %v4887, 0
      %v4920 = vsel %vm2261, %v4889, 0
      %v4923 = vsel %vm2261, %v4891, 0
      %v4926 = vand.u32 %v4288, %v2654
      %4928 = vmatprep.subr.bf16.mxu0 0
      %4929 = vmatpush1.bf16.msra.mxu0 %v4278
      %4930 = vmatprep.subr.bf16.mxu0 0
      %4931 = vmatpush1.bf16.msra.mxu0 %v4279
      %4932 = vmatprep.subr.bf16.mxu0 0
      %4933 = vmatpush1.bf16.msra.mxu0 %v4280
      %4934 = vmatprep.subr.bf16.mxu0 0
      %4935 = vmatpush1.bf16.msra.mxu0 %v4281
      %4936 = vmatprep.subr.bf16.mxu0 0
      %4937 = vmatpush1.bf16.msra.mxu0 %v4282
      %4938 = vmatprep.subr.bf16.mxu0 0
      %4939 = vmatpush1.bf16.msra.mxu0 %v4283
      %4940 = vmatprep.subr.bf16.mxu0 0
      %4941 = vmatpush1.bf16.msra.mxu0 %v4284
      %4942 = vmatprep.subr.bf16.mxu0 0
      %4943 = vmatpush1.bf16.msra.mxu0 %v4285
      %4944 = vmatprep.subr.bf16.mxu0 0
      %4945 = vmatpush1.bf16.msra.mxu0 %v4286
      %4946 = vmatprep.subr.bf16.mxu0 0
      %4947 = vmatpush1.bf16.msra.mxu0 %v4287
      %4948 = vmatprep.subr.bf16.mxu0 0
      %4949 = vmatpush1.bf16.msra.mxu0 %v4926
      %4950 = vmatprep.subr.bf16.mxu0 0
      %4951 = vmatpush1.bf16.msra.mxu0 0
      %4952 = vmatprep.subr.bf16.mxu0 0
      %4953 = vmatpush1.bf16.msra.mxu0 0
      %4954 = vmatprep.subr.bf16.mxu0 0
      %4955 = vmatpush1.bf16.msra.mxu0 0
      %4956 = vmatprep.subr.bf16.mxu0 0
      %4957 = vmatpush1.bf16.msra.mxu0 0
      %4958 = vmatprep.subr.bf16.mxu0 0
      %4959 = vmatpush1.bf16.msra.mxu0 0
      %4960 = vmatprep.mubr.bf16.mxu0 %v4893
      %4961 = vmatmul.mubr.bf16.gmra.mrb[0].mxu0 %v4870
      %v4962 = vpop.f32.mrb[0].mxu0
      %v4963 = vadd.f32 0.0, %v4962
      %v4964 = vpop.f32.mrb[0].mxu0
      %v4965 = vpop.f32.mrb[0].mxu0
      %v4966 = vadd.f32 0.0, %v4965
      %v4967 = vpop.f32.mrb[0].mxu0
      %4968 = vmatprep.mubr.bf16.mxu0 %v4896
      %4969 = vmatmul.mubr.bf16.gmra.mrb[0].mxu0 %v4872
      %v4970 = vpop.f32.mrb[0].mxu0
      %v4971 = vadd.f32 0.0, %v4970
      %v4972 = vpop.f32.mrb[0].mxu0
      %v4973 = vpop.f32.mrb[0].mxu0
      %v4974 = vadd.f32 0.0, %v4973
      %v4975 = vpop.f32.mrb[0].mxu0
      %4976 = vmatprep.mubr.bf16.mxu0 %v4899
      %4977 = vmatmul.mubr.bf16.gmra.mrb[0].mxu0 %v4874
      %v4978 = vpop.f32.mrb[0].mxu0
      %v4979 = vadd.f32 0.0, %v4978
      %v4980 = vpop.f32.mrb[0].mxu0
      %v4981 = vpop.f32.mrb[0].mxu0
      %v4982 = vadd.f32 0.0, %v4981
      %v4983 = vpop.f32.mrb[0].mxu0
      %4984 = vmatprep.mubr.bf16.mxu0 %v4902
      %4985 = vmatmul.mubr.bf16.gmra.mrb[0].mxu0 %v4876
      %v4986 = vpop.f32.mrb[0].mxu0
      %v4987 = vadd.f32 0.0, %v4986
      %v4988 = vpop.f32.mrb[0].mxu0
      %v4989 = vpop.f32.mrb[0].mxu0
      %v4990 = vadd.f32 0.0, %v4989
      %v4991 = vpop.f32.mrb[0].mxu0
      %4992 = vmatprep.mubr.bf16.mxu0 %v4905
      %4993 = vmatmul.mubr.bf16.gmra.mrb[0].mxu0 %v4878
      %v4994 = vpop.f32.mrb[0].mxu0
      %v4995 = vadd.f32 0.0, %v4994
      %v4996 = vpop.f32.mrb[0].mxu0
      %v4997 = vpop.f32.mrb[0].mxu0
      %v4998 = vadd.f32 0.0, %v4997
      %v4999 = vpop.f32.mrb[0].mxu0
      %5000 = vmatprep.mubr.bf16.mxu0 %v4908
      %5001 = vmatmul.mubr.bf16.gmra.mrb[0].mxu0 %v4880
      %v5002 = vpop.f32.mrb[0].mxu0
      %v5003 = vadd.f32 0.0, %v5002
      %v5004 = vpop.f32.mrb[0].mxu0
      %v5005 = vpop.f32.mrb[0].mxu0
      %v5006 = vadd.f32 0.0, %v5005
      %v5007 = vpop.f32.mrb[0].mxu0
      %5008 = vmatprep.mubr.bf16.mxu0 %v4911
      %5009 = vmatmul.mubr.bf16.gmra.mrb[0].mxu0 %v4882
      %v5010 = vpop.f32.mrb[0].mxu0
      %v5011 = vadd.f32 0.0, %v5010
      %v5012 = vpop.f32.mrb[0].mxu0
      %v5013 = vpop.f32.mrb[0].mxu0
      %v5014 = vadd.f32 0.0, %v5013
      %v5015 = vpop.f32.mrb[0].mxu0
      %5016 = vmatprep.mubr.bf16.mxu0 %v4914
      %5017 = vmatmul.mubr.bf16.gmra.mrb[0].mxu0 %v4884
      %v5018 = vpop.f32.mrb[0].mxu0
      %v5019 = vadd.f32 0.0, %v5018
      %v5020 = vpop.f32.mrb[0].mxu0
      %v5021 = vpop.f32.mrb[0].mxu0
      %v5022 = vadd.f32 0.0, %v5021
      %v5023 = vpop.f32.mrb[0].mxu0
      %5024 = vmatprep.mubr.bf16.mxu0 %v4917
      %5025 = vmatmul.mubr.bf16.gmra.mrb[0].mxu0 %v4886
      %v5026 = vpop.f32.mrb[0].mxu0
      %v5027 = vadd.f32 0.0, %v5026
      %v5028 = vpop.f32.mrb[0].mxu0
      %v5029 = vpop.f32.mrb[0].mxu0
      %v5030 = vadd.f32 0.0, %v5029
      %v5031 = vpop.f32.mrb[0].mxu0
      %5032 = vmatprep.mubr.bf16.mxu0 %v4920
      %5033 = vmatmul.mubr.bf16.gmra.mrb[0].mxu0 %v4888
      %v5034 = vpop.f32.mrb[0].mxu0
      %v5035 = vadd.f32 0.0, %v5034
      %v5036 = vpop.f32.mrb[0].mxu0
      %v5037 = vpop.f32.mrb[0].mxu0
      %v5038 = vadd.f32 0.0, %v5037
      %v5039 = vpop.f32.mrb[0].mxu0
      %5040 = vmatprep.mubr.bf16.mxu0 %v4923
      %5041 = vmatmul.mubr.bf16.gmra.mrb[0].mxu0 %v4890
      %v5042 = vpop.f32.mrb[0].mxu0
      %v5043 = vadd.f32 0.0, %v5042
      %v5044 = vpop.f32.mrb[0].mxu0
      %v5045 = vpop.f32.mrb[0].mxu0
      %v5046 = vadd.f32 0.0, %v5045
      %v5047 = vpop.f32.mrb[0].mxu0
      %5048 = vdwg.mxu0
      %v5049 = vmul.f32 %v4963, %v4848
      %v5050 = vmul.f32 %v4966, %v4849
      %v5051 = vmul.f32 %v4971, %v4850
      %v5052 = vmul.f32 %v4974, %v4851
      %v5053 = vmul.f32 %v4979, %v4852
      %v5054 = vmul.f32 %v4982, %v4853
      %v5055 = vmul.f32 %v4987, %v4854
      %v5056 = vmul.f32 %v4990, %v4855
      %v5057 = vmul.f32 %v4995, %v4856
      %v5058 = vmul.f32 %v4998, %v4857
      %v5059 = vmul.f32 %v5003, %v4858
      %v5060 = vmul.f32 %v5006, %v4859
      %v5061 = vmul.f32 %v5011, %v4860
      %v5062 = vmul.f32 %v5014, %v4861
      %v5063 = vmul.f32 %v5019, %v4862
      %v5064 = vmul.f32 %v5022, %v4863
      %v5065 = vmul.f32 %v5027, %v4864
      %v5066 = vmul.f32 %v5030, %v4865
      %v5067 = vmul.f32 %v5035, %v4866
      %v5068 = vmul.f32 %v5038, %v4867
      %v5069 = vmul.f32 %v5043, %v4868
      %v5070 = vmul.f32 %v5046, %v4869
      %s5071 = scalar_lea.vmem %s10, 176
      %v5072 = vld [vmem:[%s5071] sm:$0xff]
      %v5073 = vld [vmem:[%s5071 + $0x8] sm:$0xff]
      %v5074 = vld [vmem:[%s5071 + $0x10] sm:$0xff]
      %v5075 = vld [vmem:[%s5071 + $0x18] sm:$0xff]
      %v5076 = vld [vmem:[%s5071 + $0x20] sm:$0xff]
      %v5077 = vld [vmem:[%s5071 + $0x28] sm:$0xff]
      %v5078 = vld [vmem:[%s5071 + $0x30] sm:$0xff]
      %v5079 = vld [vmem:[%s5071 + $0x38] sm:$0xff]
      %v5080 = vld [vmem:[%s5071 + $0x40] sm:$0xff]
      %v5081 = vld [vmem:[%s5071 + $0x48] sm:$0xff]
      %v5082 = vld [vmem:[%s5071 + $0x50] sm:$0xff]
      %v5083 = vld [vmem:[%s5071 + $0x58] sm:$0xff]
      %v5084 = vld [vmem:[%s5071 + $0x60] sm:$0xff]
      %v5085 = vld [vmem:[%s5071 + $0x68] sm:$0xff]
      %v5086 = vld [vmem:[%s5071 + $0x70] sm:$0xff]
      %v5087 = vld [vmem:[%s5071 + $0x78] sm:$0xff]
      %v5088 = vld [vmem:[%s5071 + $0x80] sm:$0xff]
      %v5089 = vld [vmem:[%s5071 + $0x88] sm:$0xff]
      %v5090 = vld [vmem:[%s5071 + $0x90] sm:$0xff]
      %v5091 = vld [vmem:[%s5071 + $0x98] sm:$0xff]
      %v5092 = vld [vmem:[%s5071 + $0xa0] sm:$0xff]
      %v5093 = vld [vmem:[%s5071 + $0xa8] sm:$0x11]
      %v5094 = vunpack.c.l.bf16 %v5072
      %v5095 = vunpack.c.h.bf16 %v5072
      %v5096 = vunpack.c.l.bf16 %v5073
      %v5097 = vunpack.c.h.bf16 %v5073
      %v5098 = vunpack.c.l.bf16 %v5074
      %v5099 = vunpack.c.h.bf16 %v5074
      %v5100 = vunpack.c.l.bf16 %v5075
      %v5101 = vunpack.c.h.bf16 %v5075
      %v5102 = vunpack.c.l.bf16 %v5076
      %v5103 = vunpack.c.h.bf16 %v5076
      %v5104 = vunpack.c.l.bf16 %v5077
      %v5105 = vunpack.c.h.bf16 %v5077
      %v5106 = vunpack.c.l.bf16 %v5078
      %v5107 = vunpack.c.h.bf16 %v5078
      %v5108 = vunpack.c.l.bf16 %v5079
      %v5109 = vunpack.c.h.bf16 %v5079
      %v5110 = vunpack.c.l.bf16 %v5080
      %v5111 = vunpack.c.h.bf16 %v5080
      %v5112 = vunpack.c.l.bf16 %v5081
      %v5113 = vunpack.c.h.bf16 %v5081
      %v5114 = vunpack.c.l.bf16 %v5082
      %v5115 = vunpack.c.h.bf16 %v5082
      %v5116 = vunpack.c.l.bf16 %v5083
      %v5117 = vunpack.c.h.bf16 %v5083
      %v5118 = vunpack.c.l.bf16 %v5084
      %v5119 = vunpack.c.h.bf16 %v5084
      %v5120 = vunpack.c.l.bf16 %v5085
      %v5121 = vunpack.c.h.bf16 %v5085
      %v5122 = vunpack.c.l.bf16 %v5086
      %v5123 = vunpack.c.h.bf16 %v5086
      %v5124 = vunpack.c.l.bf16 %v5087
      %v5125 = vunpack.c.h.bf16 %v5087
      %v5126 = vunpack.c.l.bf16 %v5088
      %v5127 = vunpack.c.h.bf16 %v5088
      %v5128 = vunpack.c.l.bf16 %v5089
      %v5129 = vunpack.c.h.bf16 %v5089
      %v5130 = vunpack.c.l.bf16 %v5090
      %v5131 = vunpack.c.h.bf16 %v5090
      %v5132 = vunpack.c.l.bf16 %v5091
      %v5133 = vunpack.c.h.bf16 %v5091
      %v5134 = vunpack.c.l.bf16 %v5092
      %v5135 = vunpack.c.h.bf16 %v5092
      %v5136 = vunpack.c.l.bf16 %v5093
      %v5137 = vunpack.c.h.bf16 %v5093
      %v5139 = vsel %vm2111, %v4146, 0
      %v5142 = vsel %vm2111, %v4147, 0
      %5144 = vmatprep.subr.bf16.mxu0 %v5142
      %5145 = vmatpush1.bf16.msra.mxu0 %v5139
      %5146 = vmatprep.subr.bf16.mxu0 0
      %5147 = vmatpush1.bf16.msra.mxu0 0
      %5148 = vmatprep.subr.bf16.mxu0 0
      %5149 = vmatpush1.bf16.msra.mxu0 0
      %5150 = vmatprep.subr.bf16.mxu0 0
      %5151 = vmatpush1.bf16.msra.mxu0 0
      %5152 = vmatprep.subr.bf16.mxu0 0
      %5153 = vmatpush1.bf16.msra.mxu0 0
      %5154 = vmatprep.subr.bf16.mxu0 0
      %5155 = vmatpush1.bf16.msra.mxu0 0
      %5156 = vmatprep.subr.bf16.mxu0 0
      %5157 = vmatpush1.bf16.msra.mxu0 0
      %5158 = vmatprep.subr.bf16.mxu0 0
      %5159 = vmatpush1.bf16.msra.mxu0 0
      %5160 = vmatprep.subr.bf16.mxu0 0
      %5161 = vmatpush1.bf16.msra.mxu0 0
      %5162 = vmatprep.subr.bf16.mxu0 0
      %5163 = vmatpush1.bf16.msra.mxu0 0
      %5164 = vmatprep.subr.bf16.mxu0 0
      %5165 = vmatpush1.bf16.msra.mxu0 0
      %5166 = vmatprep.subr.bf16.mxu0 0
      %5167 = vmatpush1.bf16.msra.mxu0 0
      %5168 = vmatprep.subr.bf16.mxu0 0
      %5169 = vmatpush1.bf16.msra.mxu0 0
      %5170 = vmatprep.subr.bf16.mxu0 0
      %5171 = vmatpush1.bf16.msra.mxu0 0
      %5172 = vmatprep.subr.bf16.mxu0 0
      %5173 = vmatpush1.bf16.msra.mxu0 0
      %5174 = vmatprep.subr.bf16.mxu0 0
      %5175 = vmatpush1.bf16.msra.mxu0 0
      %5176 = vmatprep.mubr.bf16.mxu0 0
      %5177 = vmatmul.mubr.bf16.gmra.mrb[0].mxu0 %v4357
      %v5178 = vpop.f32.mrb[0].mxu0
      %v5179 = vadd.f32 %v5094, %v5178
      %v5180 = vpop.f32.mrb[0].mxu0
      %v5181 = vadd.f32 %v5095, %v5180
      %v5182 = vpop.f32.mrb[0].mxu0
      %v5183 = vadd.f32 %v5096, %v5182
      %v5184 = vpop.f32.mrb[0].mxu0
      %v5185 = vadd.f32 %v5097, %v5184
      %5186 = vmatprep.mubr.bf16.mxu0 0
      %5187 = vmatmul.mubr.bf16.gmra.mrb[0].mxu0 %v4360
      %v5188 = vpop.f32.mrb[0].mxu0
      %v5189 = vadd.f32 %v5098, %v5188
      %v5190 = vpop.f32.mrb[0].mxu0
      %v5191 = vadd.f32 %v5099, %v5190
      %v5192 = vpop.f32.mrb[0].mxu0
      %v5193 = vadd.f32 %v5100, %v5192
      %v5194 = vpop.f32.mrb[0].mxu0
      %v5195 = vadd.f32 %v5101, %v5194
      %5196 = vmatprep.mubr.bf16.mxu0 0
      %5197 = vmatmul.mubr.bf16.gmra.mrb[0].mxu0 %v4363
      %v5198 = vpop.f32.mrb[0].mxu0
      %v5199 = vadd.f32 %v5102, %v5198
      %v5200 = vpop.f32.mrb[0].mxu0
      %v5201 = vadd.f32 %v5103, %v5200
      %v5202 = vpop.f32.mrb[0].mxu0
      %v5203 = vadd.f32 %v5104, %v5202
      %v5204 = vpop.f32.mrb[0].mxu0
      %v5205 = vadd.f32 %v5105, %v5204
      %5206 = vmatprep.mubr.bf16.mxu0 0
      %5207 = vmatmul.mubr.bf16.gmra.mrb[0].mxu0 %v4366
      %v5208 = vpop.f32.mrb[0].mxu0
      %v5209 = vadd.f32 %v5106, %v5208
      %v5210 = vpop.f32.mrb[0].mxu0
      %v5211 = vadd.f32 %v5107, %v5210
      %v5212 = vpop.f32.mrb[0].mxu0
      %v5213 = vadd.f32 %v5108, %v5212
      %v5214 = vpop.f32.mrb[0].mxu0
      %v5215 = vadd.f32 %v5109, %v5214
      %5216 = vmatprep.mubr.bf16.mxu0 0
      %5217 = vmatmul.mubr.bf16.gmra.mrb[0].mxu0 %v4369
      %v5218 = vpop.f32.mrb[0].mxu0
      %v5219 = vadd.f32 %v5110, %v5218
      %v5220 = vpop.f32.mrb[0].mxu0
      %v5221 = vadd.f32 %v5111, %v5220
      %v5222 = vpop.f32.mrb[0].mxu0
      %v5223 = vadd.f32 %v5112, %v5222
      %v5224 = vpop.f32.mrb[0].mxu0
      %v5225 = vadd.f32 %v5113, %v5224
      %5226 = vmatprep.mubr.bf16.mxu0 0
      %5227 = vmatmul.mubr.bf16.gmra.mrb[0].mxu0 %v4372
      %v5228 = vpop.f32.mrb[0].mxu0
      %v5229 = vadd.f32 %v5114, %v5228
      %v5230 = vpop.f32.mrb[0].mxu0
      %v5231 = vadd.f32 %v5115, %v5230
      %v5232 = vpop.f32.mrb[0].mxu0
      %v5233 = vadd.f32 %v5116, %v5232
      %v5234 = vpop.f32.mrb[0].mxu0
      %v5235 = vadd.f32 %v5117, %v5234
      %5236 = vmatprep.mubr.bf16.mxu0 0
      %5237 = vmatmul.mubr.bf16.gmra.mrb[0].mxu0 %v4375
      %v5238 = vpop.f32.mrb[0].mxu0
      %v5239 = vadd.f32 %v5118, %v5238
      %v5240 = vpop.f32.mrb[0].mxu0
      %v5241 = vadd.f32 %v5119, %v5240
      %v5242 = vpop.f32.mrb[0].mxu0
      %v5243 = vadd.f32 %v5120, %v5242
      %v5244 = vpop.f32.mrb[0].mxu0
      %v5245 = vadd.f32 %v5121, %v5244
      %5246 = vmatprep.mubr.bf16.mxu0 0
      %5247 = vmatmul.mubr.bf16.gmra.mrb[0].mxu0 %v4378
      %v5248 = vpop.f32.mrb[0].mxu0
      %v5249 = vadd.f32 %v5122, %v5248
      %v5250 = vpop.f32.mrb[0].mxu0
      %v5251 = vadd.f32 %v5123, %v5250
      %v5252 = vpop.f32.mrb[0].mxu0
      %v5253 = vadd.f32 %v5124, %v5252
      %v5254 = vpop.f32.mrb[0].mxu0
      %v5255 = vadd.f32 %v5125, %v5254
      %5256 = vmatprep.mubr.bf16.mxu0 0
      %5257 = vmatmul.mubr.bf16.gmra.mrb[0].mxu0 %v4381
      %v5258 = vpop.f32.mrb[0].mxu0
      %v5259 = vadd.f32 %v5126, %v5258
      %v5260 = vpop.f32.mrb[0].mxu0
      %v5261 = vadd.f32 %v5127, %v5260
      %v5262 = vpop.f32.mrb[0].mxu0
      %v5263 = vadd.f32 %v5128, %v5262
      %v5264 = vpop.f32.mrb[0].mxu0
      %v5265 = vadd.f32 %v5129, %v5264
      %5266 = vmatprep.mubr.bf16.mxu0 0
      %5267 = vmatmul.mubr.bf16.gmra.mrb[0].mxu0 %v4384
      %v5268 = vpop.f32.mrb[0].mxu0
      %v5269 = vadd.f32 %v5130, %v5268
      %v5270 = vpop.f32.mrb[0].mxu0
      %v5271 = vadd.f32 %v5131, %v5270
      %v5272 = vpop.f32.mrb[0].mxu0
      %v5273 = vadd.f32 %v5132, %v5272
      %v5274 = vpop.f32.mrb[0].mxu0
      %v5275 = vadd.f32 %v5133, %v5274
      %5276 = vmatprep.mubr.bf16.mxu0 0
      %5277 = vmatmul.mubr.bf16.gmra.mrb[0].mxu0 %v4387
      %v5278 = vpop.f32.mrb[0].mxu0
      %v5279 = vadd.f32 %v5134, %v5278
      %v5280 = vpop.f32.mrb[0].mxu0
      %v5281 = vadd.f32 %v5135, %v5280
      %v5282 = vpop.f32.mrb[0].mxu0
      %v5283 = vadd.f32 %v5136, %v5282
      %v5284 = vpop.f32.mrb[0].mxu0
      %v5285 = vadd.f32 %v5137, %v5284
      %5286 = vdwg.mxu0
      %v5287 = vsel %vm2261, %v5181, -inf
      %v5288 = vmax.f32 %v5179, %v5287
      %5289 = vmax.xlane.f32.xlu0 %v5288
      %v5290 = vpop.xlane.xlu0 %5289
      %v5291 = vsel %vm2261, %v5185, -inf
      %v5292 = vmax.f32 %v5183, %v5291
      %5293 = vmax.xlane.f32.xlu0 %v5292
      %v5294 = vpop.xlane.xlu0 %5293
      %v5295 = vsel %vm2261, %v5191, -inf
      %v5296 = vmax.f32 %v5189, %v5295
      %5297 = vmax.xlane.f32.xlu0 %v5296
      %v5298 = vpop.xlane.xlu0 %5297
      %v5299 = vsel %vm2261, %v5195, -inf
      %v5300 = vmax.f32 %v5193, %v5299
      %5301 = vmax.xlane.f32.xlu0 %v5300
      %v5302 = vpop.xlane.xlu0 %5301
      %v5303 = vsel %vm2261, %v5201, -inf
      %v5304 = vmax.f32 %v5199, %v5303
      %5305 = vmax.xlane.f32.xlu0 %v5304
      %v5306 = vpop.xlane.xlu0 %5305
      %v5307 = vsel %vm2261, %v5205, -inf
      %v5308 = vmax.f32 %v5203, %v5307
      %5309 = vmax.xlane.f32.xlu0 %v5308
      %v5310 = vpop.xlane.xlu0 %5309
      %v5311 = vsel %vm2261, %v5211, -inf
      %v5312 = vmax.f32 %v5209, %v5311
      %5313 = vmax.xlane.f32.xlu0 %v5312
      %v5314 = vpop.xlane.xlu0 %5313
      %v5315 = vsel %vm2261, %v5215, -inf
      %v5316 = vmax.f32 %v5213, %v5315
      %5317 = vmax.xlane.f32.xlu0 %v5316
      %v5318 = vpop.xlane.xlu0 %5317
      %v5319 = vsel %vm2261, %v5221, -inf
      %v5320 = vmax.f32 %v5219, %v5319
      %5321 = vmax.xlane.f32.xlu0 %v5320
      %v5322 = vpop.xlane.xlu0 %5321
      %v5323 = vsel %vm2261, %v5225, -inf
      %v5324 = vmax.f32 %v5223, %v5323
      %5325 = vmax.xlane.f32.xlu0 %v5324
      %v5326 = vpop.xlane.xlu0 %5325
      %v5327 = vsel %vm2261, %v5231, -inf
      %v5328 = vmax.f32 %v5229, %v5327
      %5329 = vmax.xlane.f32.xlu0 %v5328
      %v5330 = vpop.xlane.xlu0 %5329
      %v5331 = vsel %vm2261, %v5235, -inf
      %v5332 = vmax.f32 %v5233, %v5331
      %5333 = vmax.xlane.f32.xlu0 %v5332
      %v5334 = vpop.xlane.xlu0 %5333
      %v5335 = vsel %vm2261, %v5241, -inf
      %v5336 = vmax.f32 %v5239, %v5335
      %5337 = vmax.xlane.f32.xlu0 %v5336
      %v5338 = vpop.xlane.xlu0 %5337
      %v5339 = vsel %vm2261, %v5245, -inf
      %v5340 = vmax.f32 %v5243, %v5339
      %5341 = vmax.xlane.f32.xlu0 %v5340
      %v5342 = vpop.xlane.xlu0 %5341
      %v5343 = vsel %vm2261, %v5251, -inf
      %v5344 = vmax.f32 %v5249, %v5343
      %5345 = vmax.xlane.f32.xlu0 %v5344
      %v5346 = vpop.xlane.xlu0 %5345
      %v5347 = vsel %vm2261, %v5255, -inf
      %v5348 = vmax.f32 %v5253, %v5347
      %5349 = vmax.xlane.f32.xlu0 %v5348
      %v5350 = vpop.xlane.xlu0 %5349
      %v5351 = vsel %vm2261, %v5261, -inf
      %v5352 = vmax.f32 %v5259, %v5351
      %5353 = vmax.xlane.f32.xlu0 %v5352
      %v5354 = vpop.xlane.xlu0 %5353
      %v5355 = vsel %vm2261, %v5265, -inf
      %v5356 = vmax.f32 %v5263, %v5355
      %5357 = vmax.xlane.f32.xlu0 %v5356
      %v5358 = vpop.xlane.xlu0 %5357
      %v5359 = vsel %vm2261, %v5271, -inf
      %v5360 = vmax.f32 %v5269, %v5359
      %5361 = vmax.xlane.f32.xlu0 %v5360
      %v5362 = vpop.xlane.xlu0 %5361
      %v5363 = vsel %vm2261, %v5275, -inf
      %v5364 = vmax.f32 %v5273, %v5363
      %5365 = vmax.xlane.f32.xlu0 %v5364
      %v5366 = vpop.xlane.xlu0 %5365
      %v5367 = vsel %vm2261, %v5281, -inf
      %v5368 = vmax.f32 %v5279, %v5367
      %5369 = vmax.xlane.f32.xlu0 %v5368
      %v5370 = vpop.xlane.xlu0 %5369
      %v5371 = vsel %vm2346, %v5283, -inf
      %v5372 = vsel %vm2348, %v5285, -inf
      %v5373 = vmax.f32 %v5371, %v5372
      %5374 = vmax.xlane.f32.xlu0 %v5373
      %v5375 = vpop.xlane.xlu0 %5374
      %v5376 = vsub.f32 %v5179, %v5290
      %v5377 = vsub.f32 %v5181, %v5290
      %v5378 = vsub.f32 %v5183, %v5294
      %v5379 = vsub.f32 %v5185, %v5294
      %v5380 = vsub.f32 %v5189, %v5298
      %v5381 = vsub.f32 %v5191, %v5298
      %v5382 = vsub.f32 %v5193, %v5302
      %v5383 = vsub.f32 %v5195, %v5302
      %v5384 = vsub.f32 %v5199, %v5306
      %v5385 = vsub.f32 %v5201, %v5306
      %v5386 = vsub.f32 %v5203, %v5310
      %v5387 = vsub.f32 %v5205, %v5310
      %v5388 = vsub.f32 %v5209, %v5314
      %v5389 = vsub.f32 %v5211, %v5314
      %v5390 = vsub.f32 %v5213, %v5318
      %v5391 = vsub.f32 %v5215, %v5318
      %v5392 = vsub.f32 %v5219, %v5322
      %v5393 = vsub.f32 %v5221, %v5322
      %v5394 = vsub.f32 %v5223, %v5326
      %v5395 = vsub.f32 %v5225, %v5326
      %v5396 = vsub.f32 %v5229, %v5330
      %v5397 = vsub.f32 %v5231, %v5330
      %v5398 = vsub.f32 %v5233, %v5334
      %v5399 = vsub.f32 %v5235, %v5334
      %v5400 = vsub.f32 %v5239, %v5338
      %v5401 = vsub.f32 %v5241, %v5338
      %v5402 = vsub.f32 %v5243, %v5342
      %v5403 = vsub.f32 %v5245, %v5342
      %v5404 = vsub.f32 %v5249, %v5346
      %v5405 = vsub.f32 %v5251, %v5346
      %v5406 = vsub.f32 %v5253, %v5350
      %v5407 = vsub.f32 %v5255, %v5350
      %v5408 = vsub.f32 %v5259, %v5354
      %v5409 = vsub.f32 %v5261, %v5354
      %v5410 = vsub.f32 %v5263, %v5358
      %v5411 = vsub.f32 %v5265, %v5358
      %v5412 = vsub.f32 %v5269, %v5362
      %v5413 = vsub.f32 %v5271, %v5362
      %v5414 = vsub.f32 %v5273, %v5366
      %v5415 = vsub.f32 %v5275, %v5366
      %v5416 = vsub.f32 %v5279, %v5370
      %v5417 = vsub.f32 %v5281, %v5370
      %v5418 = vsub.f32 %v5283, %v5375
      %v5419 = vsub.f32 %v5285, %v5375
      %v5420 = vmul.f32 %v5376, 1.442695
      %v5421 = vpow.pop %v5420
      %v5422 = vmul.f32 %v5377, 1.442695
      %v5423 = vpow.pop %v5422
      %v5424 = vmul.f32 %v5378, 1.442695
      %v5425 = vpow.pop %v5424
      %v5426 = vmul.f32 %v5379, 1.442695
      %v5427 = vpow.pop %v5426
      %v5428 = vmul.f32 %v5380, 1.442695
      %v5429 = vpow.pop %v5428
      %v5430 = vmul.f32 %v5381, 1.442695
      %v5431 = vpow.pop %v5430
      %v5432 = vmul.f32 %v5382, 1.442695
      %v5433 = vpow.pop %v5432
      %v5434 = vmul.f32 %v5383, 1.442695
      %v5435 = vpow.pop %v5434
      %v5436 = vmul.f32 %v5384, 1.442695
      %v5437 = vpow.pop %v5436
      %v5438 = vmul.f32 %v5385, 1.442695
      %v5439 = vpow.pop %v5438
      %v5440 = vmul.f32 %v5386, 1.442695
      %v5441 = vpow.pop %v5440
      %v5442 = vmul.f32 %v5387, 1.442695
      %v5443 = vpow.pop %v5442
      %v5444 = vmul.f32 %v5388, 1.442695
      %v5445 = vpow.pop %v5444
      %v5446 = vmul.f32 %v5389, 1.442695
      %v5447 = vpow.pop %v5446
      %v5448 = vmul.f32 %v5390, 1.442695
      %v5449 = vpow.pop %v5448
      %v5450 = vmul.f32 %v5391, 1.442695
      %v5451 = vpow.pop %v5450
      %v5452 = vmul.f32 %v5392, 1.442695
      %v5453 = vpow.pop %v5452
      %v5454 = vmul.f32 %v5393, 1.442695
      %v5455 = vpow.pop %v5454
      %v5456 = vmul.f32 %v5394, 1.442695
      %v5457 = vpow.pop %v5456
      %v5458 = vmul.f32 %v5395, 1.442695
      %v5459 = vpow.pop %v5458
      %v5460 = vmul.f32 %v5396, 1.442695
      %v5461 = vpow.pop %v5460
      %v5462 = vmul.f32 %v5397, 1.442695
      %v5463 = vpow.pop %v5462
      %v5464 = vmul.f32 %v5398, 1.442695
      %v5465 = vpow.pop %v5464
      %v5466 = vmul.f32 %v5399, 1.442695
      %v5467 = vpow.pop %v5466
      %v5468 = vmul.f32 %v5400, 1.442695
      %v5469 = vpow.pop %v5468
      %v5470 = vmul.f32 %v5401, 1.442695
      %v5471 = vpow.pop %v5470
      %v5472 = vmul.f32 %v5402, 1.442695
      %v5473 = vpow.pop %v5472
      %v5474 = vmul.f32 %v5403, 1.442695
      %v5475 = vpow.pop %v5474
      %v5476 = vmul.f32 %v5404, 1.442695
      %v5477 = vpow.pop %v5476
      %v5478 = vmul.f32 %v5405, 1.442695
      %v5479 = vpow.pop %v5478
      %v5480 = vmul.f32 %v5406, 1.442695
      %v5481 = vpow.pop %v5480
      %v5482 = vmul.f32 %v5407, 1.442695
      %v5483 = vpow.pop %v5482
      %v5484 = vmul.f32 %v5408, 1.442695
      %v5485 = vpow.pop %v5484
      %v5486 = vmul.f32 %v5409, 1.442695
      %v5487 = vpow.pop %v5486
      %v5488 = vmul.f32 %v5410, 1.442695
      %v5489 = vpow.pop %v5488
      %v5490 = vmul.f32 %v5411, 1.442695
      %v5491 = vpow.pop %v5490
      %v5492 = vmul.f32 %v5412, 1.442695
      %v5493 = vpow.pop %v5492
      %v5494 = vmul.f32 %v5413, 1.442695
      %v5495 = vpow.pop %v5494
      %v5496 = vmul.f32 %v5414, 1.442695
      %v5497 = vpow.pop %v5496
      %v5498 = vmul.f32 %v5415, 1.442695
      %v5499 = vpow.pop %v5498
      %v5500 = vmul.f32 %v5416, 1.442695
      %v5501 = vpow.pop %v5500
      %v5502 = vmul.f32 %v5417, 1.442695
      %v5503 = vpow.pop %v5502
      %v5504 = vmul.f32 %v5418, 1.442695
      %v5505 = vpow.pop %v5504
      %v5506 = vmul.f32 %v5419, 1.442695
      %v5507 = vpow.pop %v5506
      %v5508 = vsel %vm2261, %v5423, 0.0
      %v5509 = vadd.f32 %v5421, %v5508
      %5510 = vadd.xlane.f32.xlu0 %v5509
      %v5511 = vpop.xlane.xlu0 %5510
      %v5512 = vsel %vm2261, %v5427, 0.0
      %v5513 = vadd.f32 %v5425, %v5512
      %5514 = vadd.xlane.f32.xlu0 %v5513
      %v5515 = vpop.xlane.xlu0 %5514
      %v5516 = vsel %vm2261, %v5431, 0.0
      %v5517 = vadd.f32 %v5429, %v5516
      %5518 = vadd.xlane.f32.xlu0 %v5517
      %v5519 = vpop.xlane.xlu0 %5518
      %v5520 = vsel %vm2261, %v5435, 0.0
      %v5521 = vadd.f32 %v5433, %v5520
      %5522 = vadd.xlane.f32.xlu0 %v5521
      %v5523 = vpop.xlane.xlu0 %5522
      %v5524 = vsel %vm2261, %v5439, 0.0
      %v5525 = vadd.f32 %v5437, %v5524
      %5526 = vadd.xlane.f32.xlu0 %v5525
      %v5527 = vpop.xlane.xlu0 %5526
      %v5528 = vsel %vm2261, %v5443, 0.0
      %v5529 = vadd.f32 %v5441, %v5528
      %5530 = vadd.xlane.f32.xlu0 %v5529
      %v5531 = vpop.xlane.xlu0 %5530
      %v5532 = vsel %vm2261, %v5447, 0.0
      %v5533 = vadd.f32 %v5445, %v5532
      %5534 = vadd.xlane.f32.xlu0 %v5533
      %v5535 = vpop.xlane.xlu0 %5534
      %v5536 = vsel %vm2261, %v5451, 0.0
      %v5537 = vadd.f32 %v5449, %v5536
      %5538 = vadd.xlane.f32.xlu0 %v5537
      %v5539 = vpop.xlane.xlu0 %5538
      %v5540 = vsel %vm2261, %v5455, 0.0
      %v5541 = vadd.f32 %v5453, %v5540
      %5542 = vadd.xlane.f32.xlu0 %v5541
      %v5543 = vpop.xlane.xlu0 %5542
      %v5544 = vsel %vm2261, %v5459, 0.0
      %v5545 = vadd.f32 %v5457, %v5544
      %5546 = vadd.xlane.f32.xlu0 %v5545
      %v5547 = vpop.xlane.xlu0 %5546
      %v5548 = vsel %vm2261, %v5463, 0.0
      %v5549 = vadd.f32 %v5461, %v5548
      %5550 = vadd.xlane.f32.xlu0 %v5549
      %v5551 = vpop.xlane.xlu0 %5550
      %v5552 = vsel %vm2261, %v5467, 0.0
      %v5553 = vadd.f32 %v5465, %v5552
      %5554 = vadd.xlane.f32.xlu0 %v5553
      %v5555 = vpop.xlane.xlu0 %5554
      %v5556 = vsel %vm2261, %v5471, 0.0
      %v5557 = vadd.f32 %v5469, %v5556
      %5558 = vadd.xlane.f32.xlu0 %v5557
      %v5559 = vpop.xlane.xlu0 %5558
      %v5560 = vsel %vm2261, %v5475, 0.0
      %v5561 = vadd.f32 %v5473, %v5560
      %5562 = vadd.xlane.f32.xlu0 %v5561
      %v5563 = vpop.xlane.xlu0 %5562
      %v5564 = vsel %vm2261, %v5479, 0.0
      %v5565 = vadd.f32 %v5477, %v5564
      %5566 = vadd.xlane.f32.xlu0 %v5565
      %v5567 = vpop.xlane.xlu0 %5566
      %v5568 = vsel %vm2261, %v5483, 0.0
      %v5569 = vadd.f32 %v5481, %v5568
      %5570 = vadd.xlane.f32.xlu0 %v5569
      %v5571 = vpop.xlane.xlu0 %5570
      %v5572 = vsel %vm2261, %v5487, 0.0
      %v5573 = vadd.f32 %v5485, %v5572
      %5574 = vadd.xlane.f32.xlu0 %v5573
      %v5575 = vpop.xlane.xlu0 %5574
      %v5576 = vsel %vm2261, %v5491, 0.0
      %v5577 = vadd.f32 %v5489, %v5576
      %5578 = vadd.xlane.f32.xlu0 %v5577
      %v5579 = vpop.xlane.xlu0 %5578
      %v5580 = vsel %vm2261, %v5495, 0.0
      %v5581 = vadd.f32 %v5493, %v5580
      %5582 = vadd.xlane.f32.xlu0 %v5581
      %v5583 = vpop.xlane.xlu0 %5582
      %v5584 = vsel %vm2261, %v5499, 0.0
      %v5585 = vadd.f32 %v5497, %v5584
      %5586 = vadd.xlane.f32.xlu0 %v5585
      %v5587 = vpop.xlane.xlu0 %5586
      %v5588 = vsel %vm2261, %v5503, 0.0
      %v5589 = vadd.f32 %v5501, %v5588
      %5590 = vadd.xlane.f32.xlu0 %v5589
      %v5591 = vpop.xlane.xlu0 %5590
      %v5592 = vsel %vm2346, %v5505, 0.0
      %v5593 = vsel %vm2348, %v5507, 0.0
      %v5594 = vadd.f32 %v5592, %v5593
      %5595 = vadd.xlane.f32.xlu0 %v5594
      %v5596 = vpop.xlane.xlu0 %5595
      %v5597 = vrcp.pop %v5511
      %v5598 = vrcp.pop %v5515
      %v5599 = vrcp.pop %v5519
      %v5600 = vrcp.pop %v5523
      %v5601 = vrcp.pop %v5527
      %v5602 = vrcp.pop %v5531
      %v5603 = vrcp.pop %v5535
      %v5604 = vrcp.pop %v5539
      %v5605 = vrcp.pop %v5543
      %v5606 = vrcp.pop %v5547
      %v5607 = vrcp.pop %v5551
      %v5608 = vrcp.pop %v5555
      %v5609 = vrcp.pop %v5559
      %v5610 = vrcp.pop %v5563
      %v5611 = vrcp.pop %v5567
      %v5612 = vrcp.pop %v5571
      %v5613 = vrcp.pop %v5575
      %v5614 = vrcp.pop %v5579
      %v5615 = vrcp.pop %v5583
      %v5616 = vrcp.pop %v5587
      %v5617 = vrcp.pop %v5591
      %v5618 = vrcp.pop %v5596
      %v5619 = vpack.c.bf16 %v5425, %v5421
      %v5620 = vpack.c.bf16 %v5427, %v5423
      %v5621 = vpack.c.bf16 %v5433, %v5429
      %v5622 = vpack.c.bf16 %v5435, %v5431
      %v5623 = vpack.c.bf16 %v5441, %v5437
      %v5624 = vpack.c.bf16 %v5443, %v5439
      %v5625 = vpack.c.bf16 %v5449, %v5445
      %v5626 = vpack.c.bf16 %v5451, %v5447
      %v5627 = vpack.c.bf16 %v5457, %v5453
      %v5628 = vpack.c.bf16 %v5459, %v5455
      %v5629 = vpack.c.bf16 %v5465, %v5461
      %v5630 = vpack.c.bf16 %v5467, %v5463
      %v5631 = vpack.c.bf16 %v5473, %v5469
      %v5632 = vpack.c.bf16 %v5475, %v5471
      %v5633 = vpack.c.bf16 %v5481, %v5477
      %v5634 = vpack.c.bf16 %v5483, %v5479
      %v5635 = vpack.c.bf16 %v5489, %v5485
      %v5636 = vpack.c.bf16 %v5491, %v5487
      %v5637 = vpack.c.bf16 %v5497, %v5493
      %v5638 = vpack.c.bf16 %v5499, %v5495
      %v5639 = vpack.c.bf16 %v5505, %v5501
      %v5640 = vpack.c.bf16 %v5507, %v5503
      %v5641 = vpack.c.bf16 %v5050, %v5049
      %v5642 = vpack.c.bf16 %v5052, %v5051
      %v5643 = vpack.c.bf16 %v5054, %v5053
      %v5644 = vpack.c.bf16 %v5056, %v5055
      %v5645 = vpack.c.bf16 %v5058, %v5057
      %v5646 = vpack.c.bf16 %v5060, %v5059
      %v5647 = vpack.c.bf16 %v5062, %v5061
      %v5648 = vpack.c.bf16 %v5064, %v5063
      %v5649 = vpack.c.bf16 %v5066, %v5065
      %v5650 = vpack.c.bf16 %v5068, %v5067
      %v5651 = vpack.c.bf16 %v5070, %v5069
      %v5653 = vsel %vm2261, %v5620, 0
      %v5656 = vsel %vm2261, %v5622, 0
      %v5659 = vsel %vm2261, %v5624, 0
      %v5662 = vsel %vm2261, %v5626, 0
      %v5665 = vsel %vm2261, %v5628, 0
      %v5668 = vsel %vm2261, %v5630, 0
      %v5671 = vsel %vm2261, %v5632, 0
      %v5674 = vsel %vm2261, %v5634, 0
      %v5677 = vsel %vm2261, %v5636, 0
      %v5680 = vsel %vm2261, %v5638, 0
      %v5683 = vsel %vm2261, %v5640, 0
      %v5686 = vand.u32 %v5651, %v2654
      %5688 = vmatprep.subr.bf16.mxu0 0
      %5689 = vmatpush1.bf16.msra.mxu0 %v5641
      %5690 = vmatprep.subr.bf16.mxu0 0
      %5691 = vmatpush1.bf16.msra.mxu0 %v5642
      %5692 = vmatprep.subr.bf16.mxu0 0
      %5693 = vmatpush1.bf16.msra.mxu0 %v5643
      %5694 = vmatprep.subr.bf16.mxu0 0
      %5695 = vmatpush1.bf16.msra.mxu0 %v5644
      %5696 = vmatprep.subr.bf16.mxu0 0
      %5697 = vmatpush1.bf16.msra.mxu0 %v5645
      %5698 = vmatprep.subr.bf16.mxu0 0
      %5699 = vmatpush1.bf16.msra.mxu0 %v5646
      %5700 = vmatprep.subr.bf16.mxu0 0
      %5701 = vmatpush1.bf16.msra.mxu0 %v5647
      %5702 = vmatprep.subr.bf16.mxu0 0
      %5703 = vmatpush1.bf16.msra.mxu0 %v5648
      %5704 = vmatprep.subr.bf16.mxu0 0
      %5705 = vmatpush1.bf16.msra.mxu0 %v5649
      %5706 = vmatprep.subr.bf16.mxu0 0
      %5707 = vmatpush1.bf16.msra.mxu0 %v5650
      %5708 = vmatprep.subr.bf16.mxu0 0
      %5709 = vmatpush1.bf16.msra.mxu0 %v5686
      %5710 = vmatprep.subr.bf16.mxu0 0
      %5711 = vmatpush1.bf16.msra.mxu0 0
      %5712 = vmatprep.subr.bf16.mxu0 0
      %5713 = vmatpush1.bf16.msra.mxu0 0
      %5714 = vmatprep.subr.bf16.mxu0 0
      %5715 = vmatpush1.bf16.msra.mxu0 0
      %5716 = vmatprep.subr.bf16.mxu0 0
      %5717 = vmatpush1.bf16.msra.mxu0 0
      %5718 = vmatprep.subr.bf16.mxu0 0
      %5719 = vmatpush1.bf16.msra.mxu0 0
      %5720 = vmatprep.mubr.bf16.mxu0 %v5653
      %5721 = vmatmul.mubr.bf16.gmra.mrb[0].mxu0 %v5619
      %v5722 = vpop.f32.mrb[0].mxu0
      %v5723 = vadd.f32 0.0, %v5722
      %v5724 = vpop.f32.mrb[0].mxu0
      %v5725 = vpop.f32.mrb[0].mxu0
      %v5726 = vadd.f32 0.0, %v5725
      %v5727 = vpop.f32.mrb[0].mxu0
      %5728 = vmatprep.mubr.bf16.mxu0 %v5656
      %5729 = vmatmul.mubr.bf16.gmra.mrb[0].mxu0 %v5621
      %v5730 = vpop.f32.mrb[0].mxu0
      %v5731 = vadd.f32 0.0, %v5730
      %v5732 = vpop.f32.mrb[0].mxu0
      %v5733 = vpop.f32.mrb[0].mxu0
      %v5734 = vadd.f32 0.0, %v5733
      %v5735 = vpop.f32.mrb[0].mxu0
      %5736 = vmatprep.mubr.bf16.mxu0 %v5659
      %5737 = vmatmul.mubr.bf16.gmra.mrb[0].mxu0 %v5623
      %v5738 = vpop.f32.mrb[0].mxu0
      %v5739 = vadd.f32 0.0, %v5738
      %v5740 = vpop.f32.mrb[0].mxu0
      %v5741 = vpop.f32.mrb[0].mxu0
      %v5742 = vadd.f32 0.0, %v5741
      %v5743 = vpop.f32.mrb[0].mxu0
      %5744 = vmatprep.mubr.bf16.mxu0 %v5662
      %5745 = vmatmul.mubr.bf16.gmra.mrb[0].mxu0 %v5625
      %v5746 = vpop.f32.mrb[0].mxu0
      %v5747 = vadd.f32 0.0, %v5746
      %v5748 = vpop.f32.mrb[0].mxu0
      %v5749 = vpop.f32.mrb[0].mxu0
      %v5750 = vadd.f32 0.0, %v5749
      %v5751 = vpop.f32.mrb[0].mxu0
      %5752 = vmatprep.mubr.bf16.mxu0 %v5665
      %5753 = vmatmul.mubr.bf16.gmra.mrb[0].mxu0 %v5627
      %v5754 = vpop.f32.mrb[0].mxu0
      %v5755 = vadd.f32 0.0, %v5754
      %v5756 = vpop.f32.mrb[0].mxu0
      %v5757 = vpop.f32.mrb[0].mxu0
      %v5758 = vadd.f32 0.0, %v5757
      %v5759 = vpop.f32.mrb[0].mxu0
      %5760 = vmatprep.mubr.bf16.mxu0 %v5668
      %5761 = vmatmul.mubr.bf16.gmra.mrb[0].mxu0 %v5629
      %v5762 = vpop.f32.mrb[0].mxu0
      %v5763 = vadd.f32 0.0, %v5762
      %v5764 = vpop.f32.mrb[0].mxu0
      %v5765 = vpop.f32.mrb[0].mxu0
      %v5766 = vadd.f32 0.0, %v5765
      %v5767 = vpop.f32.mrb[0].mxu0
      %5768 = vmatprep.mubr.bf16.mxu0 %v5671
      %5769 = vmatmul.mubr.bf16.gmra.mrb[0].mxu0 %v5631
      %v5770 = vpop.f32.mrb[0].mxu0
      %v5771 = vadd.f32 0.0, %v5770
      %v5772 = vpop.f32.mrb[0].mxu0
      %v5773 = vpop.f32.mrb[0].mxu0
      %v5774 = vadd.f32 0.0, %v5773
      %v5775 = vpop.f32.mrb[0].mxu0
      %5776 = vmatprep.mubr.bf16.mxu0 %v5674
      %5777 = vmatmul.mubr.bf16.gmra.mrb[0].mxu0 %v5633
      %v5778 = vpop.f32.mrb[0].mxu0
      %v5779 = vadd.f32 0.0, %v5778
      %v5780 = vpop.f32.mrb[0].mxu0
      %v5781 = vpop.f32.mrb[0].mxu0
      %v5782 = vadd.f32 0.0, %v5781
      %v5783 = vpop.f32.mrb[0].mxu0
      %5784 = vmatprep.mubr.bf16.mxu0 %v5677
      %5785 = vmatmul.mubr.bf16.gmra.mrb[0].mxu0 %v5635
      %v5786 = vpop.f32.mrb[0].mxu0
      %v5787 = vadd.f32 0.0, %v5786
      %v5788 = vpop.f32.mrb[0].mxu0
      %v5789 = vpop.f32.mrb[0].mxu0
      %v5790 = vadd.f32 0.0, %v5789
      %v5791 = vpop.f32.mrb[0].mxu0
      %5792 = vmatprep.mubr.bf16.mxu0 %v5680
      %5793 = vmatmul.mubr.bf16.gmra.mrb[0].mxu0 %v5637
      %v5794 = vpop.f32.mrb[0].mxu0
      %v5795 = vadd.f32 0.0, %v5794
      %v5796 = vpop.f32.mrb[0].mxu0
      %v5797 = vpop.f32.mrb[0].mxu0
      %v5798 = vadd.f32 0.0, %v5797
      %v5799 = vpop.f32.mrb[0].mxu0
      %5800 = vmatprep.mubr.bf16.mxu0 %v5683
      %5801 = vmatmul.mubr.bf16.gmra.mrb[0].mxu0 %v5639
      %v5802 = vpop.f32.mrb[0].mxu0
      %v5803 = vadd.f32 0.0, %v5802
      %v5804 = vpop.f32.mrb[0].mxu0
      %v5805 = vpop.f32.mrb[0].mxu0
      %v5806 = vadd.f32 0.0, %v5805
      %v5807 = vpop.f32.mrb[0].mxu0
      %5808 = vdwg.mxu0
      %v5809 = vmul.f32 %v5723, %v5597
      %v5810 = vmul.f32 %v5726, %v5598
      %v5811 = vmul.f32 %v5731, %v5599
      %v5812 = vmul.f32 %v5734, %v5600
      %v5813 = vmul.f32 %v5739, %v5601
      %v5814 = vmul.f32 %v5742, %v5602
      %v5815 = vmul.f32 %v5747, %v5603
      %v5816 = vmul.f32 %v5750, %v5604
      %v5817 = vmul.f32 %v5755, %v5605
      %v5818 = vmul.f32 %v5758, %v5606
      %v5819 = vmul.f32 %v5763, %v5607
      %v5820 = vmul.f32 %v5766, %v5608
      %v5821 = vmul.f32 %v5771, %v5609
      %v5822 = vmul.f32 %v5774, %v5610
      %v5823 = vmul.f32 %v5779, %v5611
      %v5824 = vmul.f32 %v5782, %v5612
      %v5825 = vmul.f32 %v5787, %v5613
      %v5826 = vmul.f32 %v5790, %v5614
      %v5827 = vmul.f32 %v5795, %v5615
      %v5828 = vmul.f32 %v5798, %v5616
      %v5829 = vmul.f32 %v5803, %v5617
      %v5830 = vmul.f32 %v5806, %v5618
      %v5831 = vpack.c.bf16 %v5810, %v5809
      %v5832 = vpack.c.bf16 %v5812, %v5811
      %v5833 = vpack.c.bf16 %v5814, %v5813
      %v5834 = vpack.c.bf16 %v5816, %v5815
      %v5835 = vpack.c.bf16 %v5818, %v5817
      %v5836 = vpack.c.bf16 %v5820, %v5819
      %v5837 = vpack.c.bf16 %v5822, %v5821
      %v5838 = vpack.c.bf16 %v5824, %v5823
      %v5839 = vpack.c.bf16 %v5826, %v5825
      %v5840 = vpack.c.bf16 %v5828, %v5827
      %v5841 = vpack.c.bf16 %v5830, %v5829
      %s5842 = scalar_lea.vmem %s8, 2
      %v5843 = vld [vmem:[%s5842] sm:$0x3]
      %s5844 = scalar_lea.vmem %s2, 16
      %v5845 = vld [vmem:[%s5844] sm:$0xf]
      %v5846 = vld [vmem:[%s5844 + $0x4] sm:$0xf]
      %v5849 = vunpack.c.l.b16 %v5845
      %v5850 = vunpack.c.l.b16 %v5846
      %v5851 = vpack.c.b16 %v5850, %v5849
      %5853 = vmatprep.subr.bf16.mxu0 0
      %5854 = vmatpush1.bf16.msra.mxu0 %v5851
      %5855 = vmatprep.subr.bf16.mxu0 0
      %5856 = vmatpush1.bf16.msra.mxu0 0
      %5857 = vmatprep.subr.bf16.mxu0 0
      %5858 = vmatpush1.bf16.msra.mxu0 0
      %5859 = vmatprep.subr.bf16.mxu0 0
      %5860 = vmatpush1.bf16.msra.mxu0 0
      %5861 = vmatprep.subr.bf16.mxu0 0
      %5862 = vmatpush1.bf16.msra.mxu0 0
      %5863 = vmatprep.subr.bf16.mxu0 0
      %5864 = vmatpush1.bf16.msra.mxu0 0
      %5865 = vmatprep.subr.bf16.mxu0 0
      %5866 = vmatpush1.bf16.msra.mxu0 0
      %5867 = vmatprep.subr.bf16.mxu0 0
      %5868 = vmatpush1.bf16.msra.mxu0 0
      %5869 = vmatprep.subr.bf16.mxu0 0
      %5870 = vmatpush1.bf16.msra.mxu0 0
      %5871 = vmatprep.subr.bf16.mxu0 0
      %5872 = vmatpush1.bf16.msra.mxu0 0
      %5873 = vmatprep.subr.bf16.mxu0 0
      %5874 = vmatpush1.bf16.msra.mxu0 0
      %5875 = vmatprep.subr.bf16.mxu0 0
      %5876 = vmatpush1.bf16.msra.mxu0 0
      %5877 = vmatprep.subr.bf16.mxu0 0
      %5878 = vmatpush1.bf16.msra.mxu0 0
      %5879 = vmatprep.subr.bf16.mxu0 0
      %5880 = vmatpush1.bf16.msra.mxu0 0
      %5881 = vmatprep.subr.bf16.mxu0 0
      %5882 = vmatpush1.bf16.msra.mxu0 0
      %5883 = vmatprep.subr.bf16.mxu0 0
      %5884 = vmatpush1.bf16.msra.mxu0 0
      %5885 = vmatprep.mubr.bf16.mxu0 0
      %5886 = vmatmul.mubr.bf16.gmra.mrb[0].mxu0 %v608
      %v5887 = vpop.f32.mrb[0].mxu0
      %v5888 = vadd.f32 0.0, %v5887
      %v5889 = vpop.f32.mrb[0].mxu0
      %v5890 = vpop.f32.mrb[0].mxu0
      %v5891 = vadd.f32 0.0, %v5890
      %v5892 = vpop.f32.mrb[0].mxu0
      %5893 = vmatprep.mubr.bf16.mxu0 0
      %5894 = vmatmul.mubr.bf16.gmra.mrb[0].mxu0 %v611
      %v5895 = vpop.f32.mrb[0].mxu0
      %v5896 = vadd.f32 0.0, %v5895
      %v5897 = vpop.f32.mrb[0].mxu0
      %v5898 = vpop.f32.mrb[0].mxu0
      %v5899 = vadd.f32 0.0, %v5898
      %v5900 = vpop.f32.mrb[0].mxu0
      %5901 = vmatprep.mubr.bf16.mxu0 0
      %5902 = vmatmul.mubr.bf16.gmra.mrb[0].mxu0 %v614
      %v5903 = vpop.f32.mrb[0].mxu0
      %v5904 = vadd.f32 0.0, %v5903
      %v5905 = vpop.f32.mrb[0].mxu0
      %v5906 = vpop.f32.mrb[0].mxu0
      %v5907 = vadd.f32 0.0, %v5906
      %v5908 = vpop.f32.mrb[0].mxu0
      %5909 = vmatprep.mubr.bf16.mxu0 0
      %5910 = vmatmul.mubr.bf16.gmra.mrb[0].mxu0 %v617
      %v5911 = vpop.f32.mrb[0].mxu0
      %v5912 = vadd.f32 0.0, %v5911
      %v5913 = vpop.f32.mrb[0].mxu0
      %v5914 = vpop.f32.mrb[0].mxu0
      %v5915 = vadd.f32 0.0, %v5914
      %v5916 = vpop.f32.mrb[0].mxu0
      %5917 = vmatprep.mubr.bf16.mxu0 0
      %5918 = vmatmul.mubr.bf16.gmra.mrb[0].mxu0 %v620
      %v5919 = vpop.f32.mrb[0].mxu0
      %v5920 = vadd.f32 0.0, %v5919
      %v5921 = vpop.f32.mrb[0].mxu0
      %v5922 = vpop.f32.mrb[0].mxu0
      %v5923 = vadd.f32 0.0, %v5922
      %v5924 = vpop.f32.mrb[0].mxu0
      %5925 = vmatprep.mubr.bf16.mxu0 0
      %5926 = vmatmul.mubr.bf16.gmra.mrb[0].mxu0 %v623
      %v5927 = vpop.f32.mrb[0].mxu0
      %v5928 = vadd.f32 0.0, %v5927
      %v5929 = vpop.f32.mrb[0].mxu0
      %v5930 = vpop.f32.mrb[0].mxu0
      %v5931 = vadd.f32 0.0, %v5930
      %v5932 = vpop.f32.mrb[0].mxu0
      %5933 = vmatprep.mubr.bf16.mxu0 0
      %5934 = vmatmul.mubr.bf16.gmra.mrb[0].mxu0 %v626
      %v5935 = vpop.f32.mrb[0].mxu0
      %v5936 = vadd.f32 0.0, %v5935
      %v5937 = vpop.f32.mrb[0].mxu0
      %v5938 = vpop.f32.mrb[0].mxu0
      %v5939 = vadd.f32 0.0, %v5938
      %v5940 = vpop.f32.mrb[0].mxu0
      %5941 = vmatprep.mubr.bf16.mxu0 0
      %5942 = vmatmul.mubr.bf16.gmra.mrb[0].mxu0 %v629
      %v5943 = vpop.f32.mrb[0].mxu0
      %v5944 = vadd.f32 0.0, %v5943
      %v5945 = vpop.f32.mrb[0].mxu0
      %v5946 = vpop.f32.mrb[0].mxu0
      %v5947 = vadd.f32 0.0, %v5946
      %v5948 = vpop.f32.mrb[0].mxu0
      %5949 = vmatprep.mubr.bf16.mxu0 0
      %5950 = vmatmul.mubr.bf16.gmra.mrb[0].mxu0 %v632
      %v5951 = vpop.f32.mrb[0].mxu0
      %v5952 = vadd.f32 0.0, %v5951
      %v5953 = vpop.f32.mrb[0].mxu0
      %v5954 = vpop.f32.mrb[0].mxu0
      %v5955 = vadd.f32 0.0, %v5954
      %v5956 = vpop.f32.mrb[0].mxu0
      %5957 = vmatprep.mubr.bf16.mxu0 0
      %5958 = vmatmul.mubr.bf16.gmra.mrb[0].mxu0 %v635
      %v5959 = vpop.f32.mrb[0].mxu0
      %v5960 = vadd.f32 0.0, %v5959
      %v5961 = vpop.f32.mrb[0].mxu0
      %v5962 = vpop.f32.mrb[0].mxu0
      %v5963 = vadd.f32 0.0, %v5962
      %v5964 = vpop.f32.mrb[0].mxu0
      %5965 = vmatprep.mubr.bf16.mxu0 0
      %5966 = vmatmul.mubr.bf16.gmra.mrb[0].mxu0 %v638
      %v5967 = vpop.f32.mrb[0].mxu0
      %v5968 = vadd.f32 0.0, %v5967
      %v5969 = vpop.f32.mrb[0].mxu0
      %v5970 = vpop.f32.mrb[0].mxu0
      %v5971 = vadd.f32 0.0, %v5970
      %v5972 = vpop.f32.mrb[0].mxu0
      %5973 = vdwg.mxu0
      %v5974 = vmul.f32 %v5888, 0.5
      %v5975 = vmul.f32 %v5891, 0.5
      %v5976 = vmul.f32 %v5896, 0.5
      %v5977 = vmul.f32 %v5899, 0.5
      %v5978 = vmul.f32 %v5904, 0.5
      %v5979 = vmul.f32 %v5907, 0.5
      %v5980 = vmul.f32 %v5912, 0.5
      %v5981 = vmul.f32 %v5915, 0.5
      %v5982 = vmul.f32 %v5920, 0.5
      %v5983 = vmul.f32 %v5923, 0.5
      %v5984 = vmul.f32 %v5928, 0.5
      %v5985 = vmul.f32 %v5931, 0.5
      %v5986 = vmul.f32 %v5936, 0.5
      %v5987 = vmul.f32 %v5939, 0.5
      %v5988 = vmul.f32 %v5944, 0.5
      %v5989 = vmul.f32 %v5947, 0.5
      %v5990 = vmul.f32 %v5952, 0.5
      %v5991 = vmul.f32 %v5955, 0.5
      %v5992 = vmul.f32 %v5960, 0.5
      %v5993 = vmul.f32 %v5963, 0.5
      %v5994 = vmul.f32 %v5968, 0.5
      %v5995 = vmul.f32 %v5971, 0.5
      %v5996 = vpack.c.bf16 %v5975, %v5974
      %v5997 = vpack.c.bf16 %v5977, %v5976
      %v5998 = vpack.c.bf16 %v5979, %v5978
      %v5999 = vpack.c.bf16 %v5981, %v5980
      %v6000 = vpack.c.bf16 %v5983, %v5982
      %v6001 = vpack.c.bf16 %v5985, %v5984
      %v6002 = vpack.c.bf16 %v5987, %v5986
      %v6003 = vpack.c.bf16 %v5989, %v5988
      %v6004 = vpack.c.bf16 %v5991, %v5990
      %v6005 = vpack.c.bf16 %v5993, %v5992
      %v6006 = vpack.c.bf16 %v5995, %v5994
      %s6007 = scalar_lea.vmem %s3, 4
      %v6008 = vld [vmem:[%s6007] sm:$0x3]
      %v6010 = vsel %vm493, %v6008, 0
      %6012 = vmatprep.subr.bf16.mxu0 %v1775
      %6013 = vmatpush1.bf16.msra.mxu0 %v1774
      %6014 = vmatprep.subr.bf16.mxu0 0
      %6015 = vmatpush1.bf16.msra.mxu0 0
      %6016 = vmatprep.subr.bf16.mxu0 0
      %6017 = vmatpush1.bf16.msra.mxu0 0
      %6018 = vmatprep.subr.bf16.mxu0 0
      %6019 = vmatpush1.bf16.msra.mxu0 0
      %6020 = vmatprep.subr.bf16.mxu0 0
      %6021 = vmatpush1.bf16.msra.mxu0 0
      %6022 = vmatprep.subr.bf16.mxu0 0
      %6023 = vmatpush1.bf16.msra.mxu0 0
      %6024 = vmatprep.subr.bf16.mxu0 0
      %6025 = vmatpush1.bf16.msra.mxu0 0
      %6026 = vmatprep.subr.bf16.mxu0 0
      %6027 = vmatpush1.bf16.msra.mxu0 0
      %6028 = vmatprep.subr.bf16.mxu0 0
      %6029 = vmatpush1.bf16.msra.mxu0 0
      %6030 = vmatprep.subr.bf16.mxu0 0
      %6031 = vmatpush1.bf16.msra.mxu0 0
      %6032 = vmatprep.subr.bf16.mxu0 0
      %6033 = vmatpush1.bf16.msra.mxu0 0
      %6034 = vmatprep.subr.bf16.mxu0 0
      %6035 = vmatpush1.bf16.msra.mxu0 0
      %6036 = vmatprep.subr.bf16.mxu0 0
      %6037 = vmatpush1.bf16.msra.mxu0 0
      %6038 = vmatprep.subr.bf16.mxu0 0
      %6039 = vmatpush1.bf16.msra.mxu0 0
      %6040 = vmatprep.subr.bf16.mxu0 0
      %6041 = vmatpush1.bf16.msra.mxu0 0
      %6042 = vmatprep.subr.bf16.mxu0 0
      %6043 = vmatpush1.bf16.msra.mxu0 0
      %6044 = vmatprep.mubr.bf16.mxu0 0
      %6045 = vmatmul.mubr.bf16.gmra.mrb[0].mxu0 %v6010
      %v6046 = vpop.f32.mrb[0].mxu0
      %v6047 = vadd.f32 0.0, %v6046
      %v6048 = vpop.f32.mrb[0].mxu0
      %v6049 = vadd.f32 0.0, %v6048
      %v6050 = vpop.f32.mrb[0].mxu0
      %v6051 = vpop.f32.mrb[0].mxu0
      %6052 = vdwg.mxu0
      %v6053 = vpack.c.bf16 %v6047, %v6047
      %v6054 = vpack.c.bf16 %v6049, %v6049
      %s6055 = scalar_lea.vmem %s4, 4
      %v6056 = vld [vmem:[%s6055] sm:$0x3]
      %v6058 = vsel %vm493, %v6056, 0
      %6060 = vmatprep.subr.bf16.mxu0 %v1775
      %6061 = vmatpush1.bf16.msra.mxu0 %v1774
      %6062 = vmatprep.subr.bf16.mxu0 0
      %6063 = vmatpush1.bf16.msra.mxu0 0
      %6064 = vmatprep.subr.bf16.mxu0 0
      %6065 = vmatpush1.bf16.msra.mxu0 0
      %6066 = vmatprep.subr.bf16.mxu0 0
      %6067 = vmatpush1.bf16.msra.mxu0 0
      %6068 = vmatprep.subr.bf16.mxu0 0
      %6069 = vmatpush1.bf16.msra.mxu0 0
      %6070 = vmatprep.subr.bf16.mxu0 0
      %6071 = vmatpush1.bf16.msra.mxu0 0
      %6072 = vmatprep.subr.bf16.mxu0 0
      %6073 = vmatpush1.bf16.msra.mxu0 0
      %6074 = vmatprep.subr.bf16.mxu0 0
      %6075 = vmatpush1.bf16.msra.mxu0 0
      %6076 = vmatprep.subr.bf16.mxu0 0
      %6077 = vmatpush1.bf16.msra.mxu0 0
      %6078 = vmatprep.subr.bf16.mxu0 0
      %6079 = vmatpush1.bf16.msra.mxu0 0
      %6080 = vmatprep.subr.bf16.mxu0 0
      %6081 = vmatpush1.bf16.msra.mxu0 0
      %6082 = vmatprep.subr.bf16.mxu0 0
      %6083 = vmatpush1.bf16.msra.mxu0 0
      %6084 = vmatprep.subr.bf16.mxu0 0
      %6085 = vmatpush1.bf16.msra.mxu0 0
      %6086 = vmatprep.subr.bf16.mxu0 0
      %6087 = vmatpush1.bf16.msra.mxu0 0
      %6088 = vmatprep.subr.bf16.mxu0 0
      %6089 = vmatpush1.bf16.msra.mxu0 0
      %6090 = vmatprep.subr.bf16.mxu0 0
      %6091 = vmatpush1.bf16.msra.mxu0 0
      %6092 = vmatprep.mubr.bf16.mxu0 0
      %6093 = vmatmul.mubr.bf16.gmra.mrb[0].mxu0 %v6058
      %v6094 = vpop.f32.mrb[0].mxu0
      %v6095 = vadd.f32 0.0, %v6094
      %v6096 = vpop.f32.mrb[0].mxu0
      %v6097 = vadd.f32 0.0, %v6096
      %v6098 = vpop.f32.mrb[0].mxu0
      %v6099 = vpop.f32.mrb[0].mxu0
      %6100 = vdwg.mxu0
      %v6101 = vpack.c.bf16 %v6095, %v6095
      %v6102 = vpack.c.bf16 %v6097, %v6097
      %s6103 = scalar_lea.vmem %s5, 16
      %v6104 = vld [vmem:[%s6103] sm:$0xf]
      %v6105 = vld [vmem:[%s6103 + $0x4] sm:$0xf]
      %v6108 = vunpack.c.l.b16 %v6104
      %v6109 = vunpack.c.l.b16 %v6105
      %v6110 = vpack.c.b16 %v6109, %v6108
      %6112 = vmatprep.subr.bf16.mxu0 0
      %6113 = vmatpush1.bf16.msra.mxu0 %v6110
      %6114 = vmatprep.subr.bf16.mxu0 0
      %6115 = vmatpush1.bf16.msra.mxu0 0
      %6116 = vmatprep.subr.bf16.mxu0 0
      %6117 = vmatpush1.bf16.msra.mxu0 0
      %6118 = vmatprep.subr.bf16.mxu0 0
      %6119 = vmatpush1.bf16.msra.mxu0 0
      %6120 = vmatprep.subr.bf16.mxu0 0
      %6121 = vmatpush1.bf16.msra.mxu0 0
      %6122 = vmatprep.subr.bf16.mxu0 0
      %6123 = vmatpush1.bf16.msra.mxu0 0
      %6124 = vmatprep.subr.bf16.mxu0 0
      %6125 = vmatpush1.bf16.msra.mxu0 0
      %6126 = vmatprep.subr.bf16.mxu0 0
      %6127 = vmatpush1.bf16.msra.mxu0 0
      %6128 = vmatprep.subr.bf16.mxu0 0
      %6129 = vmatpush1.bf16.msra.mxu0 0
      %6130 = vmatprep.subr.bf16.mxu0 0
      %6131 = vmatpush1.bf16.msra.mxu0 0
      %6132 = vmatprep.subr.bf16.mxu0 0
      %6133 = vmatpush1.bf16.msra.mxu0 0
      %6134 = vmatprep.subr.bf16.mxu0 0
      %6135 = vmatpush1.bf16.msra.mxu0 0
      %6136 = vmatprep.subr.bf16.mxu0 0
      %6137 = vmatpush1.bf16.msra.mxu0 0
      %6138 = vmatprep.subr.bf16.mxu0 0
      %6139 = vmatpush1.bf16.msra.mxu0 0
      %6140 = vmatprep.subr.bf16.mxu0 0
      %6141 = vmatpush1.bf16.msra.mxu0 0
      %6142 = vmatprep.subr.bf16.mxu0 0
      %6143 = vmatpush1.bf16.msra.mxu0 0
      %6144 = vmatprep.mubr.bf16.mxu0 0
      %6145 = vmatmul.mubr.bf16.gmra.mrb[0].mxu0 %v608
      %v6146 = vpop.f32.mrb[0].mxu0
      %v6147 = vadd.f32 0.0, %v6146
      %v6148 = vpop.f32.mrb[0].mxu0
      %v6149 = vpop.f32.mrb[0].mxu0
      %v6150 = vadd.f32 0.0, %v6149
      %v6151 = vpop.f32.mrb[0].mxu0
      %6152 = vmatprep.mubr.bf16.mxu0 0
      %6153 = vmatmul.mubr.bf16.gmra.mrb[0].mxu0 %v611
      %v6154 = vpop.f32.mrb[0].mxu0
      %v6155 = vadd.f32 0.0, %v6154
      %v6156 = vpop.f32.mrb[0].mxu0
      %v6157 = vpop.f32.mrb[0].mxu0
      %v6158 = vadd.f32 0.0, %v6157
      %v6159 = vpop.f32.mrb[0].mxu0
      %6160 = vmatprep.mubr.bf16.mxu0 0
      %6161 = vmatmul.mubr.bf16.gmra.mrb[0].mxu0 %v614
      %v6162 = vpop.f32.mrb[0].mxu0
      %v6163 = vadd.f32 0.0, %v6162
      %v6164 = vpop.f32.mrb[0].mxu0
      %v6165 = vpop.f32.mrb[0].mxu0
      %v6166 = vadd.f32 0.0, %v6165
      %v6167 = vpop.f32.mrb[0].mxu0
      %6168 = vmatprep.mubr.bf16.mxu0 0
      %6169 = vmatmul.mubr.bf16.gmra.mrb[0].mxu0 %v617
      %v6170 = vpop.f32.mrb[0].mxu0
      %v6171 = vadd.f32 0.0, %v6170
      %v6172 = vpop.f32.mrb[0].mxu0
      %v6173 = vpop.f32.mrb[0].mxu0
      %v6174 = vadd.f32 0.0, %v6173
      %v6175 = vpop.f32.mrb[0].mxu0
      %6176 = vmatprep.mubr.bf16.mxu0 0
      %6177 = vmatmul.mubr.bf16.gmra.mrb[0].mxu0 %v620
      %v6178 = vpop.f32.mrb[0].mxu0
      %v6179 = vadd.f32 0.0, %v6178
      %v6180 = vpop.f32.mrb[0].mxu0
      %v6181 = vpop.f32.mrb[0].mxu0
      %v6182 = vadd.f32 0.0, %v6181
      %v6183 = vpop.f32.mrb[0].mxu0
      %6184 = vmatprep.mubr.bf16.mxu0 0
      %6185 = vmatmul.mubr.bf16.gmra.mrb[0].mxu0 %v623
      %v6186 = vpop.f32.mrb[0].mxu0
      %v6187 = vadd.f32 0.0, %v6186
      %v6188 = vpop.f32.mrb[0].mxu0
      %v6189 = vpop.f32.mrb[0].mxu0
      %v6190 = vadd.f32 0.0, %v6189
      %v6191 = vpop.f32.mrb[0].mxu0
      %6192 = vmatprep.mubr.bf16.mxu0 0
      %6193 = vmatmul.mubr.bf16.gmra.mrb[0].mxu0 %v626
      %v6194 = vpop.f32.mrb[0].mxu0
      %v6195 = vadd.f32 0.0, %v6194
      %v6196 = vpop.f32.mrb[0].mxu0
      %v6197 = vpop.f32.mrb[0].mxu0
      %v6198 = vadd.f32 0.0, %v6197
      %v6199 = vpop.f32.mrb[0].mxu0
      %6200 = vmatprep.mubr.bf16.mxu0 0
      %6201 = vmatmul.mubr.bf16.gmra.mrb[0].mxu0 %v629
      %v6202 = vpop.f32.mrb[0].mxu0
      %v6203 = vadd.f32 0.0, %v6202
      %v6204 = vpop.f32.mrb[0].mxu0
      %v6205 = vpop.f32.mrb[0].mxu0
      %v6206 = vadd.f32 0.0, %v6205
      %v6207 = vpop.f32.mrb[0].mxu0
      %6208 = vmatprep.mubr.bf16.mxu0 0
      %6209 = vmatmul.mubr.bf16.gmra.mrb[0].mxu0 %v632
      %v6210 = vpop.f32.mrb[0].mxu0
      %v6211 = vadd.f32 0.0, %v6210
      %v6212 = vpop.f32.mrb[0].mxu0
      %v6213 = vpop.f32.mrb[0].mxu0
      %v6214 = vadd.f32 0.0, %v6213
      %v6215 = vpop.f32.mrb[0].mxu0
      %6216 = vmatprep.mubr.bf16.mxu0 0
      %6217 = vmatmul.mubr.bf16.gmra.mrb[0].mxu0 %v635
      %v6218 = vpop.f32.mrb[0].mxu0
      %v6219 = vadd.f32 0.0, %v6218
      %v6220 = vpop.f32.mrb[0].mxu0
      %v6221 = vpop.f32.mrb[0].mxu0
      %v6222 = vadd.f32 0.0, %v6221
      %v6223 = vpop.f32.mrb[0].mxu0
      %6224 = vmatprep.mubr.bf16.mxu0 0
      %6225 = vmatmul.mubr.bf16.gmra.mrb[0].mxu0 %v638
      %v6226 = vpop.f32.mrb[0].mxu0
      %v6227 = vadd.f32 0.0, %v6226
      %v6228 = vpop.f32.mrb[0].mxu0
      %v6229 = vpop.f32.mrb[0].mxu0
      %v6230 = vadd.f32 0.0, %v6229
      %v6231 = vpop.f32.mrb[0].mxu0
      %6232 = vdwg.mxu0
      %v6233 = vpack.c.bf16 %v6150, %v6147
      %v6234 = vpack.c.bf16 %v6158, %v6155
      %v6235 = vpack.c.bf16 %v6166, %v6163
      %v6236 = vpack.c.bf16 %v6174, %v6171
      %v6237 = vpack.c.bf16 %v6182, %v6179
      %v6238 = vpack.c.bf16 %v6190, %v6187
      %v6239 = vpack.c.bf16 %v6198, %v6195
      %v6240 = vpack.c.bf16 %v6206, %v6203
      %v6241 = vpack.c.bf16 %v6214, %v6211
      %v6242 = vpack.c.bf16 %v6222, %v6219
      %v6243 = vpack.c.bf16 %v6230, %v6227
      %s6244 = scalar_lea.vmem %s9, 352
      %v6245 = vld [vmem:[%s6244] sm:$0xff]
      %v6246 = vld [vmem:[%s6244 + $0x8] sm:$0xff]
      %v6247 = vld [vmem:[%s6244 + $0x10] sm:$0xff]
      %v6248 = vld [vmem:[%s6244 + $0x18] sm:$0xff]
      %v6249 = vld [vmem:[%s6244 + $0x20] sm:$0xff]
      %v6250 = vld [vmem:[%s6244 + $0x28] sm:$0xff]
      %v6251 = vld [vmem:[%s6244 + $0x30] sm:$0xff]
      %v6252 = vld [vmem:[%s6244 + $0x38] sm:$0xff]
      %v6253 = vld [vmem:[%s6244 + $0x40] sm:$0xff]
      %v6254 = vld [vmem:[%s6244 + $0x48] sm:$0xff]
      %v6255 = vld [vmem:[%s6244 + $0x50] sm:$0xff]
      %v6256 = vld [vmem:[%s6244 + $0x58] sm:$0xff]
      %v6257 = vld [vmem:[%s6244 + $0x60] sm:$0xff]
      %v6258 = vld [vmem:[%s6244 + $0x68] sm:$0xff]
      %v6259 = vld [vmem:[%s6244 + $0x70] sm:$0xff]
      %v6260 = vld [vmem:[%s6244 + $0x78] sm:$0xff]
      %v6261 = vld [vmem:[%s6244 + $0x80] sm:$0xff]
      %v6262 = vld [vmem:[%s6244 + $0x88] sm:$0xff]
      %v6263 = vld [vmem:[%s6244 + $0x90] sm:$0xff]
      %v6264 = vld [vmem:[%s6244 + $0x98] sm:$0xff]
      %v6265 = vld [vmem:[%s6244 + $0xa0] sm:$0xff]
      %v6266 = vld [vmem:[%s6244 + $0xa8] sm:$0x11]
      %v6267 = vunpack.c.l.bf16 %v6245
      %v6268 = vunpack.c.h.bf16 %v6245
      %v6269 = vunpack.c.l.bf16 %v6246
      %v6270 = vunpack.c.h.bf16 %v6246
      %v6271 = vunpack.c.l.bf16 %v6247
      %v6272 = vunpack.c.h.bf16 %v6247
      %v6273 = vunpack.c.l.bf16 %v6248
      %v6274 = vunpack.c.h.bf16 %v6248
      %v6275 = vunpack.c.l.bf16 %v6249
      %v6276 = vunpack.c.h.bf16 %v6249
      %v6277 = vunpack.c.l.bf16 %v6250
      %v6278 = vunpack.c.h.bf16 %v6250
      %v6279 = vunpack.c.l.bf16 %v6251
      %v6280 = vunpack.c.h.bf16 %v6251
      %v6281 = vunpack.c.l.bf16 %v6252
      %v6282 = vunpack.c.h.bf16 %v6252
      %v6283 = vunpack.c.l.bf16 %v6253
      %v6284 = vunpack.c.h.bf16 %v6253
      %v6285 = vunpack.c.l.bf16 %v6254
      %v6286 = vunpack.c.h.bf16 %v6254
      %v6287 = vunpack.c.l.bf16 %v6255
      %v6288 = vunpack.c.h.bf16 %v6255
      %v6289 = vunpack.c.l.bf16 %v6256
      %v6290 = vunpack.c.h.bf16 %v6256
      %v6291 = vunpack.c.l.bf16 %v6257
      %v6292 = vunpack.c.h.bf16 %v6257
      %v6293 = vunpack.c.l.bf16 %v6258
      %v6294 = vunpack.c.h.bf16 %v6258
      %v6295 = vunpack.c.l.bf16 %v6259
      %v6296 = vunpack.c.h.bf16 %v6259
      %v6297 = vunpack.c.l.bf16 %v6260
      %v6298 = vunpack.c.h.bf16 %v6260
      %v6299 = vunpack.c.l.bf16 %v6261
      %v6300 = vunpack.c.h.bf16 %v6261
      %v6301 = vunpack.c.l.bf16 %v6262
      %v6302 = vunpack.c.h.bf16 %v6262
      %v6303 = vunpack.c.l.bf16 %v6263
      %v6304 = vunpack.c.h.bf16 %v6263
      %v6305 = vunpack.c.l.bf16 %v6264
      %v6306 = vunpack.c.h.bf16 %v6264
      %v6307 = vunpack.c.l.bf16 %v6265
      %v6308 = vunpack.c.h.bf16 %v6265
      %v6309 = vunpack.c.l.bf16 %v6266
      %v6310 = vunpack.c.h.bf16 %v6266
      %v6312 = vsel %vm2077, %v5996, 0
      %v6315 = vsel %vm2077, %v5997, 0
      %v6318 = vsel %vm2077, %v5998, 0
      %v6321 = vsel %vm2077, %v5999, 0
      %v6324 = vsel %vm2077, %v6000, 0
      %v6327 = vsel %vm2077, %v6001, 0
      %v6330 = vsel %vm2077, %v6002, 0
      %v6333 = vsel %vm2077, %v6003, 0
      %v6336 = vsel %vm2077, %v6004, 0
      %v6339 = vsel %vm2077, %v6005, 0
      %v6342 = vsel %vm2077, %v6006, 0
      %v6345 = vsel %vm2111, %v6053, 0
      %v6348 = vsel %vm2111, %v6054, 0
      %6350 = vmatprep.subr.bf16.mxu0 %v6348
      %6351 = vmatpush1.bf16.msra.mxu0 %v6345
      %6352 = vmatprep.subr.bf16.mxu0 0
      %6353 = vmatpush1.bf16.msra.mxu0 0
      %6354 = vmatprep.subr.bf16.mxu0 0
      %6355 = vmatpush1.bf16.msra.mxu0 0
      %6356 = vmatprep.subr.bf16.mxu0 0
      %6357 = vmatpush1.bf16.msra.mxu0 0
      %6358 = vmatprep.subr.bf16.mxu0 0
      %6359 = vmatpush1.bf16.msra.mxu0 0
      %6360 = vmatprep.subr.bf16.mxu0 0
      %6361 = vmatpush1.bf16.msra.mxu0 0
      %6362 = vmatprep.subr.bf16.mxu0 0
      %6363 = vmatpush1.bf16.msra.mxu0 0
      %6364 = vmatprep.subr.bf16.mxu0 0
      %6365 = vmatpush1.bf16.msra.mxu0 0
      %6366 = vmatprep.subr.bf16.mxu0 0
      %6367 = vmatpush1.bf16.msra.mxu0 0
      %6368 = vmatprep.subr.bf16.mxu0 0
      %6369 = vmatpush1.bf16.msra.mxu0 0
      %6370 = vmatprep.subr.bf16.mxu0 0
      %6371 = vmatpush1.bf16.msra.mxu0 0
      %6372 = vmatprep.subr.bf16.mxu0 0
      %6373 = vmatpush1.bf16.msra.mxu0 0
      %6374 = vmatprep.subr.bf16.mxu0 0
      %6375 = vmatpush1.bf16.msra.mxu0 0
      %6376 = vmatprep.subr.bf16.mxu0 0
      %6377 = vmatpush1.bf16.msra.mxu0 0
      %6378 = vmatprep.subr.bf16.mxu0 0
      %6379 = vmatpush1.bf16.msra.mxu0 0
      %6380 = vmatprep.subr.bf16.mxu0 0
      %6381 = vmatpush1.bf16.msra.mxu0 0
      %6382 = vmatprep.mubr.bf16.mxu0 0
      %6383 = vmatmul.mubr.bf16.gmra.mrb[0].mxu0 %v6312
      %v6384 = vpop.f32.mrb[0].mxu0
      %v6385 = vadd.f32 %v6267, %v6384
      %v6386 = vpop.f32.mrb[0].mxu0
      %v6387 = vadd.f32 %v6268, %v6386
      %v6388 = vpop.f32.mrb[0].mxu0
      %v6389 = vadd.f32 %v6269, %v6388
      %v6390 = vpop.f32.mrb[0].mxu0
      %v6391 = vadd.f32 %v6270, %v6390
      %6392 = vmatprep.mubr.bf16.mxu0 0
      %6393 = vmatmul.mubr.bf16.gmra.mrb[0].mxu0 %v6315
      %v6394 = vpop.f32.mrb[0].mxu0
      %v6395 = vadd.f32 %v6271, %v6394
      %v6396 = vpop.f32.mrb[0].mxu0
      %v6397 = vadd.f32 %v6272, %v6396
      %v6398 = vpop.f32.mrb[0].mxu0
      %v6399 = vadd.f32 %v6273, %v6398
      %v6400 = vpop.f32.mrb[0].mxu0
      %v6401 = vadd.f32 %v6274, %v6400
      %6402 = vmatprep.mubr.bf16.mxu0 0
      %6403 = vmatmul.mubr.bf16.gmra.mrb[0].mxu0 %v6318
      %v6404 = vpop.f32.mrb[0].mxu0
      %v6405 = vadd.f32 %v6275, %v6404
      %v6406 = vpop.f32.mrb[0].mxu0
      %v6407 = vadd.f32 %v6276, %v6406
      %v6408 = vpop.f32.mrb[0].mxu0
      %v6409 = vadd.f32 %v6277, %v6408
      %v6410 = vpop.f32.mrb[0].mxu0
      %v6411 = vadd.f32 %v6278, %v6410
      %6412 = vmatprep.mubr.bf16.mxu0 0
      %6413 = vmatmul.mubr.bf16.gmra.mrb[0].mxu0 %v6321
      %v6414 = vpop.f32.mrb[0].mxu0
      %v6415 = vadd.f32 %v6279, %v6414
      %v6416 = vpop.f32.mrb[0].mxu0
      %v6417 = vadd.f32 %v6280, %v6416
      %v6418 = vpop.f32.mrb[0].mxu0
      %v6419 = vadd.f32 %v6281, %v6418
      %v6420 = vpop.f32.mrb[0].mxu0
      %v6421 = vadd.f32 %v6282, %v6420
      %6422 = vmatprep.mubr.bf16.mxu0 0
      %6423 = vmatmul.mubr.bf16.gmra.mrb[0].mxu0 %v6324
      %v6424 = vpop.f32.mrb[0].mxu0
      %v6425 = vadd.f32 %v6283, %v6424
      %v6426 = vpop.f32.mrb[0].mxu0
      %v6427 = vadd.f32 %v6284, %v6426
      %v6428 = vpop.f32.mrb[0].mxu0
      %v6429 = vadd.f32 %v6285, %v6428
      %v6430 = vpop.f32.mrb[0].mxu0
      %v6431 = vadd.f32 %v6286, %v6430
      %6432 = vmatprep.mubr.bf16.mxu0 0
      %6433 = vmatmul.mubr.bf16.gmra.mrb[0].mxu0 %v6327
      %v6434 = vpop.f32.mrb[0].mxu0
      %v6435 = vadd.f32 %v6287, %v6434
      %v6436 = vpop.f32.mrb[0].mxu0
      %v6437 = vadd.f32 %v6288, %v6436
      %v6438 = vpop.f32.mrb[0].mxu0
      %v6439 = vadd.f32 %v6289, %v6438
      %v6440 = vpop.f32.mrb[0].mxu0
      %v6441 = vadd.f32 %v6290, %v6440
      %6442 = vmatprep.mubr.bf16.mxu0 0
      %6443 = vmatmul.mubr.bf16.gmra.mrb[0].mxu0 %v6330
      %v6444 = vpop.f32.mrb[0].mxu0
      %v6445 = vadd.f32 %v6291, %v6444
      %v6446 = vpop.f32.mrb[0].mxu0
      %v6447 = vadd.f32 %v6292, %v6446
      %v6448 = vpop.f32.mrb[0].mxu0
      %v6449 = vadd.f32 %v6293, %v6448
      %v6450 = vpop.f32.mrb[0].mxu0
      %v6451 = vadd.f32 %v6294, %v6450
      %6452 = vmatprep.mubr.bf16.mxu0 0
      %6453 = vmatmul.mubr.bf16.gmra.mrb[0].mxu0 %v6333
      %v6454 = vpop.f32.mrb[0].mxu0
      %v6455 = vadd.f32 %v6295, %v6454
      %v6456 = vpop.f32.mrb[0].mxu0
      %v6457 = vadd.f32 %v6296, %v6456
      %v6458 = vpop.f32.mrb[0].mxu0
      %v6459 = vadd.f32 %v6297, %v6458
      %v6460 = vpop.f32.mrb[0].mxu0
      %v6461 = vadd.f32 %v6298, %v6460
      %6462 = vmatprep.mubr.bf16.mxu0 0
      %6463 = vmatmul.mubr.bf16.gmra.mrb[0].mxu0 %v6336
      %v6464 = vpop.f32.mrb[0].mxu0
      %v6465 = vadd.f32 %v6299, %v6464
      %v6466 = vpop.f32.mrb[0].mxu0
      %v6467 = vadd.f32 %v6300, %v6466
      %v6468 = vpop.f32.mrb[0].mxu0
      %v6469 = vadd.f32 %v6301, %v6468
      %v6470 = vpop.f32.mrb[0].mxu0
      %v6471 = vadd.f32 %v6302, %v6470
      %6472 = vmatprep.mubr.bf16.mxu0 0
      %6473 = vmatmul.mubr.bf16.gmra.mrb[0].mxu0 %v6339
      %v6474 = vpop.f32.mrb[0].mxu0
      %v6475 = vadd.f32 %v6303, %v6474
      %v6476 = vpop.f32.mrb[0].mxu0
      %v6477 = vadd.f32 %v6304, %v6476
      %v6478 = vpop.f32.mrb[0].mxu0
      %v6479 = vadd.f32 %v6305, %v6478
      %v6480 = vpop.f32.mrb[0].mxu0
      %v6481 = vadd.f32 %v6306, %v6480
      %6482 = vmatprep.mubr.bf16.mxu0 0
      %6483 = vmatmul.mubr.bf16.gmra.mrb[0].mxu0 %v6342
      %v6484 = vpop.f32.mrb[0].mxu0
      %v6485 = vadd.f32 %v6307, %v6484
      %v6486 = vpop.f32.mrb[0].mxu0
      %v6487 = vadd.f32 %v6308, %v6486
      %v6488 = vpop.f32.mrb[0].mxu0
      %v6489 = vadd.f32 %v6309, %v6488
      %v6490 = vpop.f32.mrb[0].mxu0
      %v6491 = vadd.f32 %v6310, %v6490
      %6492 = vdwg.mxu0
      %v6493 = vsel %vm2261, %v6387, -inf
      %v6494 = vmax.f32 %v6385, %v6493
      %6495 = vmax.xlane.f32.xlu0 %v6494
      %v6496 = vpop.xlane.xlu0 %6495
      %v6497 = vsel %vm2261, %v6391, -inf
      %v6498 = vmax.f32 %v6389, %v6497
      %6499 = vmax.xlane.f32.xlu0 %v6498
      %v6500 = vpop.xlane.xlu0 %6499
      %v6501 = vsel %vm2261, %v6397, -inf
      %v6502 = vmax.f32 %v6395, %v6501
      %6503 = vmax.xlane.f32.xlu0 %v6502
      %v6504 = vpop.xlane.xlu0 %6503
      %v6505 = vsel %vm2261, %v6401, -inf
      %v6506 = vmax.f32 %v6399, %v6505
      %6507 = vmax.xlane.f32.xlu0 %v6506
      %v6508 = vpop.xlane.xlu0 %6507
      %v6509 = vsel %vm2261, %v6407, -inf
      %v6510 = vmax.f32 %v6405, %v6509
      %6511 = vmax.xlane.f32.xlu0 %v6510
      %v6512 = vpop.xlane.xlu0 %6511
      %v6513 = vsel %vm2261, %v6411, -inf
      %v6514 = vmax.f32 %v6409, %v6513
      %6515 = vmax.xlane.f32.xlu0 %v6514
      %v6516 = vpop.xlane.xlu0 %6515
      %v6517 = vsel %vm2261, %v6417, -inf
      %v6518 = vmax.f32 %v6415, %v6517
      %6519 = vmax.xlane.f32.xlu0 %v6518
      %v6520 = vpop.xlane.xlu0 %6519
      %v6521 = vsel %vm2261, %v6421, -inf
      %v6522 = vmax.f32 %v6419, %v6521
      %6523 = vmax.xlane.f32.xlu0 %v6522
      %v6524 = vpop.xlane.xlu0 %6523
      %v6525 = vsel %vm2261, %v6427, -inf
      %v6526 = vmax.f32 %v6425, %v6525
      %6527 = vmax.xlane.f32.xlu0 %v6526
      %v6528 = vpop.xlane.xlu0 %6527
      %v6529 = vsel %vm2261, %v6431, -inf
      %v6530 = vmax.f32 %v6429, %v6529
      %6531 = vmax.xlane.f32.xlu0 %v6530
      %v6532 = vpop.xlane.xlu0 %6531
      %v6533 = vsel %vm2261, %v6437, -inf
      %v6534 = vmax.f32 %v6435, %v6533
      %6535 = vmax.xlane.f32.xlu0 %v6534
      %v6536 = vpop.xlane.xlu0 %6535
      %v6537 = vsel %vm2261, %v6441, -inf
      %v6538 = vmax.f32 %v6439, %v6537
      %6539 = vmax.xlane.f32.xlu0 %v6538
      %v6540 = vpop.xlane.xlu0 %6539
      %v6541 = vsel %vm2261, %v6447, -inf
      %v6542 = vmax.f32 %v6445, %v6541
      %6543 = vmax.xlane.f32.xlu0 %v6542
      %v6544 = vpop.xlane.xlu0 %6543
      %v6545 = vsel %vm2261, %v6451, -inf
      %v6546 = vmax.f32 %v6449, %v6545
      %6547 = vmax.xlane.f32.xlu0 %v6546
      %v6548 = vpop.xlane.xlu0 %6547
      %v6549 = vsel %vm2261, %v6457, -inf
      %v6550 = vmax.f32 %v6455, %v6549
      %6551 = vmax.xlane.f32.xlu0 %v6550
      %v6552 = vpop.xlane.xlu0 %6551
      %v6553 = vsel %vm2261, %v6461, -inf
      %v6554 = vmax.f32 %v6459, %v6553
      %6555 = vmax.xlane.f32.xlu0 %v6554
      %v6556 = vpop.xlane.xlu0 %6555
      %v6557 = vsel %vm2261, %v6467, -inf
      %v6558 = vmax.f32 %v6465, %v6557
      %6559 = vmax.xlane.f32.xlu0 %v6558
      %v6560 = vpop.xlane.xlu0 %6559
      %v6561 = vsel %vm2261, %v6471, -inf
      %v6562 = vmax.f32 %v6469, %v6561
      %6563 = vmax.xlane.f32.xlu0 %v6562
      %v6564 = vpop.xlane.xlu0 %6563
      %v6565 = vsel %vm2261, %v6477, -inf
      %v6566 = vmax.f32 %v6475, %v6565
      %6567 = vmax.xlane.f32.xlu0 %v6566
      %v6568 = vpop.xlane.xlu0 %6567
      %v6569 = vsel %vm2261, %v6481, -inf
      %v6570 = vmax.f32 %v6479, %v6569
      %6571 = vmax.xlane.f32.xlu0 %v6570
      %v6572 = vpop.xlane.xlu0 %6571
      %v6573 = vsel %vm2261, %v6487, -inf
      %v6574 = vmax.f32 %v6485, %v6573
      %6575 = vmax.xlane.f32.xlu0 %v6574
      %v6576 = vpop.xlane.xlu0 %6575
      %v6577 = vsel %vm2346, %v6489, -inf
      %v6578 = vsel %vm2348, %v6491, -inf
      %v6579 = vmax.f32 %v6577, %v6578
      %6580 = vmax.xlane.f32.xlu0 %v6579
      %v6581 = vpop.xlane.xlu0 %6580
      %v6582 = vsub.f32 %v6385, %v6496
      %v6583 = vsub.f32 %v6387, %v6496
      %v6584 = vsub.f32 %v6389, %v6500
      %v6585 = vsub.f32 %v6391, %v6500
      %v6586 = vsub.f32 %v6395, %v6504
      %v6587 = vsub.f32 %v6397, %v6504
      %v6588 = vsub.f32 %v6399, %v6508
      %v6589 = vsub.f32 %v6401, %v6508
      %v6590 = vsub.f32 %v6405, %v6512
      %v6591 = vsub.f32 %v6407, %v6512
      %v6592 = vsub.f32 %v6409, %v6516
      %v6593 = vsub.f32 %v6411, %v6516
      %v6594 = vsub.f32 %v6415, %v6520
      %v6595 = vsub.f32 %v6417, %v6520
      %v6596 = vsub.f32 %v6419, %v6524
      %v6597 = vsub.f32 %v6421, %v6524
      %v6598 = vsub.f32 %v6425, %v6528
      %v6599 = vsub.f32 %v6427, %v6528
      %v6600 = vsub.f32 %v6429, %v6532
      %v6601 = vsub.f32 %v6431, %v6532
      %v6602 = vsub.f32 %v6435, %v6536
      %v6603 = vsub.f32 %v6437, %v6536
      %v6604 = vsub.f32 %v6439, %v6540
      %v6605 = vsub.f32 %v6441, %v6540
      %v6606 = vsub.f32 %v6445, %v6544
      %v6607 = vsub.f32 %v6447, %v6544
      %v6608 = vsub.f32 %v6449, %v6548
      %v6609 = vsub.f32 %v6451, %v6548
      %v6610 = vsub.f32 %v6455, %v6552
      %v6611 = vsub.f32 %v6457, %v6552
      %v6612 = vsub.f32 %v6459, %v6556
      %v6613 = vsub.f32 %v6461, %v6556
      %v6614 = vsub.f32 %v6465, %v6560
      %v6615 = vsub.f32 %v6467, %v6560
      %v6616 = vsub.f32 %v6469, %v6564
      %v6617 = vsub.f32 %v6471, %v6564
      %v6618 = vsub.f32 %v6475, %v6568
      %v6619 = vsub.f32 %v6477, %v6568
      %v6620 = vsub.f32 %v6479, %v6572
      %v6621 = vsub.f32 %v6481, %v6572
      %v6622 = vsub.f32 %v6485, %v6576
      %v6623 = vsub.f32 %v6487, %v6576
      %v6624 = vsub.f32 %v6489, %v6581
      %v6625 = vsub.f32 %v6491, %v6581
      %v6626 = vmul.f32 %v6582, 1.442695
      %v6627 = vpow.pop %v6626
      %v6628 = vmul.f32 %v6583, 1.442695
      %v6629 = vpow.pop %v6628
      %v6630 = vmul.f32 %v6584, 1.442695
      %v6631 = vpow.pop %v6630
      %v6632 = vmul.f32 %v6585, 1.442695
      %v6633 = vpow.pop %v6632
      %v6634 = vmul.f32 %v6586, 1.442695
      %v6635 = vpow.pop %v6634
      %v6636 = vmul.f32 %v6587, 1.442695
      %v6637 = vpow.pop %v6636
      %v6638 = vmul.f32 %v6588, 1.442695
      %v6639 = vpow.pop %v6638
      %v6640 = vmul.f32 %v6589, 1.442695
      %v6641 = vpow.pop %v6640
      %v6642 = vmul.f32 %v6590, 1.442695
      %v6643 = vpow.pop %v6642
      %v6644 = vmul.f32 %v6591, 1.442695
      %v6645 = vpow.pop %v6644
      %v6646 = vmul.f32 %v6592, 1.442695
      %v6647 = vpow.pop %v6646
      %v6648 = vmul.f32 %v6593, 1.442695
      %v6649 = vpow.pop %v6648
      %v6650 = vmul.f32 %v6594, 1.442695
      %v6651 = vpow.pop %v6650
      %v6652 = vmul.f32 %v6595, 1.442695
      %v6653 = vpow.pop %v6652
      %v6654 = vmul.f32 %v6596, 1.442695
      %v6655 = vpow.pop %v6654
      %v6656 = vmul.f32 %v6597, 1.442695
      %v6657 = vpow.pop %v6656
      %v6658 = vmul.f32 %v6598, 1.442695
      %v6659 = vpow.pop %v6658
      %v6660 = vmul.f32 %v6599, 1.442695
      %v6661 = vpow.pop %v6660
      %v6662 = vmul.f32 %v6600, 1.442695
      %v6663 = vpow.pop %v6662
      %v6664 = vmul.f32 %v6601, 1.442695
      %v6665 = vpow.pop %v6664
      %v6666 = vmul.f32 %v6602, 1.442695
      %v6667 = vpow.pop %v6666
      %v6668 = vmul.f32 %v6603, 1.442695
      %v6669 = vpow.pop %v6668
      %v6670 = vmul.f32 %v6604, 1.442695
      %v6671 = vpow.pop %v6670
      %v6672 = vmul.f32 %v6605, 1.442695
      %v6673 = vpow.pop %v6672
      %v6674 = vmul.f32 %v6606, 1.442695
      %v6675 = vpow.pop %v6674
      %v6676 = vmul.f32 %v6607, 1.442695
      %v6677 = vpow.pop %v6676
      %v6678 = vmul.f32 %v6608, 1.442695
      %v6679 = vpow.pop %v6678
      %v6680 = vmul.f32 %v6609, 1.442695
      %v6681 = vpow.pop %v6680
      %v6682 = vmul.f32 %v6610, 1.442695
      %v6683 = vpow.pop %v6682
      %v6684 = vmul.f32 %v6611, 1.442695
      %v6685 = vpow.pop %v6684
      %v6686 = vmul.f32 %v6612, 1.442695
      %v6687 = vpow.pop %v6686
      %v6688 = vmul.f32 %v6613, 1.442695
      %v6689 = vpow.pop %v6688
      %v6690 = vmul.f32 %v6614, 1.442695
      %v6691 = vpow.pop %v6690
      %v6692 = vmul.f32 %v6615, 1.442695
      %v6693 = vpow.pop %v6692
      %v6694 = vmul.f32 %v6616, 1.442695
      %v6695 = vpow.pop %v6694
      %v6696 = vmul.f32 %v6617, 1.442695
      %v6697 = vpow.pop %v6696
      %v6698 = vmul.f32 %v6618, 1.442695
      %v6699 = vpow.pop %v6698
      %v6700 = vmul.f32 %v6619, 1.442695
      %v6701 = vpow.pop %v6700
      %v6702 = vmul.f32 %v6620, 1.442695
      %v6703 = vpow.pop %v6702
      %v6704 = vmul.f32 %v6621, 1.442695
      %v6705 = vpow.pop %v6704
      %v6706 = vmul.f32 %v6622, 1.442695
      %v6707 = vpow.pop %v6706
      %v6708 = vmul.f32 %v6623, 1.442695
      %v6709 = vpow.pop %v6708
      %v6710 = vmul.f32 %v6624, 1.442695
      %v6711 = vpow.pop %v6710
      %v6712 = vmul.f32 %v6625, 1.442695
      %v6713 = vpow.pop %v6712
      %v6714 = vsel %vm2261, %v6629, 0.0
      %v6715 = vadd.f32 %v6627, %v6714
      %6716 = vadd.xlane.f32.xlu0 %v6715
      %v6717 = vpop.xlane.xlu0 %6716
      %v6718 = vsel %vm2261, %v6633, 0.0
      %v6719 = vadd.f32 %v6631, %v6718
      %6720 = vadd.xlane.f32.xlu0 %v6719
      %v6721 = vpop.xlane.xlu0 %6720
      %v6722 = vsel %vm2261, %v6637, 0.0
      %v6723 = vadd.f32 %v6635, %v6722
      %6724 = vadd.xlane.f32.xlu0 %v6723
      %v6725 = vpop.xlane.xlu0 %6724
      %v6726 = vsel %vm2261, %v6641, 0.0
      %v6727 = vadd.f32 %v6639, %v6726
      %6728 = vadd.xlane.f32.xlu0 %v6727
      %v6729 = vpop.xlane.xlu0 %6728
      %v6730 = vsel %vm2261, %v6645, 0.0
      %v6731 = vadd.f32 %v6643, %v6730
      %6732 = vadd.xlane.f32.xlu0 %v6731
      %v6733 = vpop.xlane.xlu0 %6732
      %v6734 = vsel %vm2261, %v6649, 0.0
      %v6735 = vadd.f32 %v6647, %v6734
      %6736 = vadd.xlane.f32.xlu0 %v6735
      %v6737 = vpop.xlane.xlu0 %6736
      %v6738 = vsel %vm2261, %v6653, 0.0
      %v6739 = vadd.f32 %v6651, %v6738
      %6740 = vadd.xlane.f32.xlu0 %v6739
      %v6741 = vpop.xlane.xlu0 %6740
      %v6742 = vsel %vm2261, %v6657, 0.0
      %v6743 = vadd.f32 %v6655, %v6742
      %6744 = vadd.xlane.f32.xlu0 %v6743
      %v6745 = vpop.xlane.xlu0 %6744
      %v6746 = vsel %vm2261, %v6661, 0.0
      %v6747 = vadd.f32 %v6659, %v6746
      %6748 = vadd.xlane.f32.xlu0 %v6747
      %v6749 = vpop.xlane.xlu0 %6748
      %v6750 = vsel %vm2261, %v6665, 0.0
      %v6751 = vadd.f32 %v6663, %v6750
      %6752 = vadd.xlane.f32.xlu0 %v6751
      %v6753 = vpop.xlane.xlu0 %6752
      %v6754 = vsel %vm2261, %v6669, 0.0
      %v6755 = vadd.f32 %v6667, %v6754
      %6756 = vadd.xlane.f32.xlu0 %v6755
      %v6757 = vpop.xlane.xlu0 %6756
      %v6758 = vsel %vm2261, %v6673, 0.0
      %v6759 = vadd.f32 %v6671, %v6758
      %6760 = vadd.xlane.f32.xlu0 %v6759
      %v6761 = vpop.xlane.xlu0 %6760
      %v6762 = vsel %vm2261, %v6677, 0.0
      %v6763 = vadd.f32 %v6675, %v6762
      %6764 = vadd.xlane.f32.xlu0 %v6763
      %v6765 = vpop.xlane.xlu0 %6764
      %v6766 = vsel %vm2261, %v6681, 0.0
      %v6767 = vadd.f32 %v6679, %v6766
      %6768 = vadd.xlane.f32.xlu0 %v6767
      %v6769 = vpop.xlane.xlu0 %6768
      %v6770 = vsel %vm2261, %v6685, 0.0
      %v6771 = vadd.f32 %v6683, %v6770
      %6772 = vadd.xlane.f32.xlu0 %v6771
      %v6773 = vpop.xlane.xlu0 %6772
      %v6774 = vsel %vm2261, %v6689, 0.0
      %v6775 = vadd.f32 %v6687, %v6774
      %6776 = vadd.xlane.f32.xlu0 %v6775
      %v6777 = vpop.xlane.xlu0 %6776
      %v6778 = vsel %vm2261, %v6693, 0.0
      %v6779 = vadd.f32 %v6691, %v6778
      %6780 = vadd.xlane.f32.xlu0 %v6779
      %v6781 = vpop.xlane.xlu0 %6780
      %v6782 = vsel %vm2261, %v6697, 0.0
      %v6783 = vadd.f32 %v6695, %v6782
      %6784 = vadd.xlane.f32.xlu0 %v6783
      %v6785 = vpop.xlane.xlu0 %6784
      %v6786 = vsel %vm2261, %v6701, 0.0
      %v6787 = vadd.f32 %v6699, %v6786
      %6788 = vadd.xlane.f32.xlu0 %v6787
      %v6789 = vpop.xlane.xlu0 %6788
      %v6790 = vsel %vm2261, %v6705, 0.0
      %v6791 = vadd.f32 %v6703, %v6790
      %6792 = vadd.xlane.f32.xlu0 %v6791
      %v6793 = vpop.xlane.xlu0 %6792
      %v6794 = vsel %vm2261, %v6709, 0.0
      %v6795 = vadd.f32 %v6707, %v6794
      %6796 = vadd.xlane.f32.xlu0 %v6795
      %v6797 = vpop.xlane.xlu0 %6796
      %v6798 = vsel %vm2346, %v6711, 0.0
      %v6799 = vsel %vm2348, %v6713, 0.0
      %v6800 = vadd.f32 %v6798, %v6799
      %6801 = vadd.xlane.f32.xlu0 %v6800
      %v6802 = vpop.xlane.xlu0 %6801
      %v6803 = vrcp.pop %v6717
      %v6804 = vrcp.pop %v6721
      %v6805 = vrcp.pop %v6725
      %v6806 = vrcp.pop %v6729
      %v6807 = vrcp.pop %v6733
      %v6808 = vrcp.pop %v6737
      %v6809 = vrcp.pop %v6741
      %v6810 = vrcp.pop %v6745
      %v6811 = vrcp.pop %v6749
      %v6812 = vrcp.pop %v6753
      %v6813 = vrcp.pop %v6757
      %v6814 = vrcp.pop %v6761
      %v6815 = vrcp.pop %v6765
      %v6816 = vrcp.pop %v6769
      %v6817 = vrcp.pop %v6773
      %v6818 = vrcp.pop %v6777
      %v6819 = vrcp.pop %v6781
      %v6820 = vrcp.pop %v6785
      %v6821 = vrcp.pop %v6789
      %v6822 = vrcp.pop %v6793
      %v6823 = vrcp.pop %v6797
      %v6824 = vrcp.pop %v6802
      %v6825 = vpack.c.bf16 %v6631, %v6627
      %v6826 = vpack.c.bf16 %v6633, %v6629
      %v6827 = vpack.c.bf16 %v6639, %v6635
      %v6828 = vpack.c.bf16 %v6641, %v6637
      %v6829 = vpack.c.bf16 %v6647, %v6643
      %v6830 = vpack.c.bf16 %v6649, %v6645
      %v6831 = vpack.c.bf16 %v6655, %v6651
      %v6832 = vpack.c.bf16 %v6657, %v6653
      %v6833 = vpack.c.bf16 %v6663, %v6659
      %v6834 = vpack.c.bf16 %v6665, %v6661
      %v6835 = vpack.c.bf16 %v6671, %v6667
      %v6836 = vpack.c.bf16 %v6673, %v6669
      %v6837 = vpack.c.bf16 %v6679, %v6675
      %v6838 = vpack.c.bf16 %v6681, %v6677
      %v6839 = vpack.c.bf16 %v6687, %v6683
      %v6840 = vpack.c.bf16 %v6689, %v6685
      %v6841 = vpack.c.bf16 %v6695, %v6691
      %v6842 = vpack.c.bf16 %v6697, %v6693
      %v6843 = vpack.c.bf16 %v6703, %v6699
      %v6844 = vpack.c.bf16 %v6705, %v6701
      %v6845 = vpack.c.bf16 %v6711, %v6707
      %v6846 = vpack.c.bf16 %v6713, %v6709
      %v6848 = vsel %vm2261, %v6826, 0
      %v6851 = vsel %vm2261, %v6828, 0
      %v6854 = vsel %vm2261, %v6830, 0
      %v6857 = vsel %vm2261, %v6832, 0
      %v6860 = vsel %vm2261, %v6834, 0
      %v6863 = vsel %vm2261, %v6836, 0
      %v6866 = vsel %vm2261, %v6838, 0
      %v6869 = vsel %vm2261, %v6840, 0
      %v6872 = vsel %vm2261, %v6842, 0
      %v6875 = vsel %vm2261, %v6844, 0
      %v6878 = vsel %vm2261, %v6846, 0
      %v6881 = vand.u32 %v6243, %v2654
      %6883 = vmatprep.subr.bf16.mxu0 0
      %6884 = vmatpush1.bf16.msra.mxu0 %v6233
      %6885 = vmatprep.subr.bf16.mxu0 0
      %6886 = vmatpush1.bf16.msra.mxu0 %v6234
      %6887 = vmatprep.subr.bf16.mxu0 0
      %6888 = vmatpush1.bf16.msra.mxu0 %v6235
      %6889 = vmatprep.subr.bf16.mxu0 0
      %6890 = vmatpush1.bf16.msra.mxu0 %v6236
      %6891 = vmatprep.subr.bf16.mxu0 0
      %6892 = vmatpush1.bf16.msra.mxu0 %v6237
      %6893 = vmatprep.subr.bf16.mxu0 0
      %6894 = vmatpush1.bf16.msra.mxu0 %v6238
      %6895 = vmatprep.subr.bf16.mxu0 0
      %6896 = vmatpush1.bf16.msra.mxu0 %v6239
      %6897 = vmatprep.subr.bf16.mxu0 0
      %6898 = vmatpush1.bf16.msra.mxu0 %v6240
      %6899 = vmatprep.subr.bf16.mxu0 0
      %6900 = vmatpush1.bf16.msra.mxu0 %v6241
      %6901 = vmatprep.subr.bf16.mxu0 0
      %6902 = vmatpush1.bf16.msra.mxu0 %v6242
      %6903 = vmatprep.subr.bf16.mxu0 0
      %6904 = vmatpush1.bf16.msra.mxu0 %v6881
      %6905 = vmatprep.subr.bf16.mxu0 0
      %6906 = vmatpush1.bf16.msra.mxu0 0
      %6907 = vmatprep.subr.bf16.mxu0 0
      %6908 = vmatpush1.bf16.msra.mxu0 0
      %6909 = vmatprep.subr.bf16.mxu0 0
      %6910 = vmatpush1.bf16.msra.mxu0 0
      %6911 = vmatprep.subr.bf16.mxu0 0
      %6912 = vmatpush1.bf16.msra.mxu0 0
      %6913 = vmatprep.subr.bf16.mxu0 0
      %6914 = vmatpush1.bf16.msra.mxu0 0
      %6915 = vmatprep.mubr.bf16.mxu0 %v6848
      %6916 = vmatmul.mubr.bf16.gmra.mrb[0].mxu0 %v6825
      %v6917 = vpop.f32.mrb[0].mxu0
      %v6918 = vadd.f32 0.0, %v6917
      %v6919 = vpop.f32.mrb[0].mxu0
      %v6920 = vpop.f32.mrb[0].mxu0
      %v6921 = vadd.f32 0.0, %v6920
      %v6922 = vpop.f32.mrb[0].mxu0
      %6923 = vmatprep.mubr.bf16.mxu0 %v6851
      %6924 = vmatmul.mubr.bf16.gmra.mrb[0].mxu0 %v6827
      %v6925 = vpop.f32.mrb[0].mxu0
      %v6926 = vadd.f32 0.0, %v6925
      %v6927 = vpop.f32.mrb[0].mxu0
      %v6928 = vpop.f32.mrb[0].mxu0
      %v6929 = vadd.f32 0.0, %v6928
      %v6930 = vpop.f32.mrb[0].mxu0
      %6931 = vmatprep.mubr.bf16.mxu0 %v6854
      %6932 = vmatmul.mubr.bf16.gmra.mrb[0].mxu0 %v6829
      %v6933 = vpop.f32.mrb[0].mxu0
      %v6934 = vadd.f32 0.0, %v6933
      %v6935 = vpop.f32.mrb[0].mxu0
      %v6936 = vpop.f32.mrb[0].mxu0
      %v6937 = vadd.f32 0.0, %v6936
      %v6938 = vpop.f32.mrb[0].mxu0
      %6939 = vmatprep.mubr.bf16.mxu0 %v6857
      %6940 = vmatmul.mubr.bf16.gmra.mrb[0].mxu0 %v6831
      %v6941 = vpop.f32.mrb[0].mxu0
      %v6942 = vadd.f32 0.0, %v6941
      %v6943 = vpop.f32.mrb[0].mxu0
      %v6944 = vpop.f32.mrb[0].mxu0
      %v6945 = vadd.f32 0.0, %v6944
      %v6946 = vpop.f32.mrb[0].mxu0
      %6947 = vmatprep.mubr.bf16.mxu0 %v6860
      %6948 = vmatmul.mubr.bf16.gmra.mrb[0].mxu0 %v6833
      %v6949 = vpop.f32.mrb[0].mxu0
      %v6950 = vadd.f32 0.0, %v6949
      %v6951 = vpop.f32.mrb[0].mxu0
      %v6952 = vpop.f32.mrb[0].mxu0
      %v6953 = vadd.f32 0.0, %v6952
      %v6954 = vpop.f32.mrb[0].mxu0
      %6955 = vmatprep.mubr.bf16.mxu0 %v6863
      %6956 = vmatmul.mubr.bf16.gmra.mrb[0].mxu0 %v6835
      %v6957 = vpop.f32.mrb[0].mxu0
      %v6958 = vadd.f32 0.0, %v6957
      %v6959 = vpop.f32.mrb[0].mxu0
      %v6960 = vpop.f32.mrb[0].mxu0
      %v6961 = vadd.f32 0.0, %v6960
      %v6962 = vpop.f32.mrb[0].mxu0
      %6963 = vmatprep.mubr.bf16.mxu0 %v6866
      %6964 = vmatmul.mubr.bf16.gmra.mrb[0].mxu0 %v6837
      %v6965 = vpop.f32.mrb[0].mxu0
      %v6966 = vadd.f32 0.0, %v6965
      %v6967 = vpop.f32.mrb[0].mxu0
      %v6968 = vpop.f32.mrb[0].mxu0
      %v6969 = vadd.f32 0.0, %v6968
      %v6970 = vpop.f32.mrb[0].mxu0
      %6971 = vmatprep.mubr.bf16.mxu0 %v6869
      %6972 = vmatmul.mubr.bf16.gmra.mrb[0].mxu0 %v6839
      %v6973 = vpop.f32.mrb[0].mxu0
      %v6974 = vadd.f32 0.0, %v6973
      %v6975 = vpop.f32.mrb[0].mxu0
      %v6976 = vpop.f32.mrb[0].mxu0
      %v6977 = vadd.f32 0.0, %v6976
      %v6978 = vpop.f32.mrb[0].mxu0
      %6979 = vmatprep.mubr.bf16.mxu0 %v6872
      %6980 = vmatmul.mubr.bf16.gmra.mrb[0].mxu0 %v6841
      %v6981 = vpop.f32.mrb[0].mxu0
      %v6982 = vadd.f32 0.0, %v6981
      %v6983 = vpop.f32.mrb[0].mxu0
      %v6984 = vpop.f32.mrb[0].mxu0
      %v6985 = vadd.f32 0.0, %v6984
      %v6986 = vpop.f32.mrb[0].mxu0
      %6987 = vmatprep.mubr.bf16.mxu0 %v6875
      %6988 = vmatmul.mubr.bf16.gmra.mrb[0].mxu0 %v6843
      %v6989 = vpop.f32.mrb[0].mxu0
      %v6990 = vadd.f32 0.0, %v6989
      %v6991 = vpop.f32.mrb[0].mxu0
      %v6992 = vpop.f32.mrb[0].mxu0
      %v6993 = vadd.f32 0.0, %v6992
      %v6994 = vpop.f32.mrb[0].mxu0
      %6995 = vmatprep.mubr.bf16.mxu0 %v6878
      %6996 = vmatmul.mubr.bf16.gmra.mrb[0].mxu0 %v6845
      %v6997 = vpop.f32.mrb[0].mxu0
      %v6998 = vadd.f32 0.0, %v6997
      %v6999 = vpop.f32.mrb[0].mxu0
      %v7000 = vpop.f32.mrb[0].mxu0
      %v7001 = vadd.f32 0.0, %v7000
      %v7002 = vpop.f32.mrb[0].mxu0
      %7003 = vdwg.mxu0
      %v7004 = vmul.f32 %v6918, %v6803
      %v7005 = vmul.f32 %v6921, %v6804
      %v7006 = vmul.f32 %v6926, %v6805
      %v7007 = vmul.f32 %v6929, %v6806
      %v7008 = vmul.f32 %v6934, %v6807
      %v7009 = vmul.f32 %v6937, %v6808
      %v7010 = vmul.f32 %v6942, %v6809
      %v7011 = vmul.f32 %v6945, %v6810
      %v7012 = vmul.f32 %v6950, %v6811
      %v7013 = vmul.f32 %v6953, %v6812
      %v7014 = vmul.f32 %v6958, %v6813
      %v7015 = vmul.f32 %v6961, %v6814
      %v7016 = vmul.f32 %v6966, %v6815
      %v7017 = vmul.f32 %v6969, %v6816
      %v7018 = vmul.f32 %v6974, %v6817
      %v7019 = vmul.f32 %v6977, %v6818
      %v7020 = vmul.f32 %v6982, %v6819
      %v7021 = vmul.f32 %v6985, %v6820
      %v7022 = vmul.f32 %v6990, %v6821
      %v7023 = vmul.f32 %v6993, %v6822
      %v7024 = vmul.f32 %v6998, %v6823
      %v7025 = vmul.f32 %v7001, %v6824
      %s7026 = scalar_lea.vmem %s10, 352
      %v7027 = vld [vmem:[%s7026] sm:$0xff]
      %v7028 = vld [vmem:[%s7026 + $0x8] sm:$0xff]
      %v7029 = vld [vmem:[%s7026 + $0x10] sm:$0xff]
      %v7030 = vld [vmem:[%s7026 + $0x18] sm:$0xff]
      %v7031 = vld [vmem:[%s7026 + $0x20] sm:$0xff]
      %v7032 = vld [vmem:[%s7026 + $0x28] sm:$0xff]
      %v7033 = vld [vmem:[%s7026 + $0x30] sm:$0xff]
      %v7034 = vld [vmem:[%s7026 + $0x38] sm:$0xff]
      %v7035 = vld [vmem:[%s7026 + $0x40] sm:$0xff]
      %v7036 = vld [vmem:[%s7026 + $0x48] sm:$0xff]
      %v7037 = vld [vmem:[%s7026 + $0x50] sm:$0xff]
      %v7038 = vld [vmem:[%s7026 + $0x58] sm:$0xff]
      %v7039 = vld [vmem:[%s7026 + $0x60] sm:$0xff]
      %v7040 = vld [vmem:[%s7026 + $0x68] sm:$0xff]
      %v7041 = vld [vmem:[%s7026 + $0x70] sm:$0xff]
      %v7042 = vld [vmem:[%s7026 + $0x78] sm:$0xff]
      %v7043 = vld [vmem:[%s7026 + $0x80] sm:$0xff]
      %v7044 = vld [vmem:[%s7026 + $0x88] sm:$0xff]
      %v7045 = vld [vmem:[%s7026 + $0x90] sm:$0xff]
      %v7046 = vld [vmem:[%s7026 + $0x98] sm:$0xff]
      %v7047 = vld [vmem:[%s7026 + $0xa0] sm:$0xff]
      %v7048 = vld [vmem:[%s7026 + $0xa8] sm:$0x11]
      %v7049 = vunpack.c.l.bf16 %v7027
      %v7050 = vunpack.c.h.bf16 %v7027
      %v7051 = vunpack.c.l.bf16 %v7028
      %v7052 = vunpack.c.h.bf16 %v7028
      %v7053 = vunpack.c.l.bf16 %v7029
      %v7054 = vunpack.c.h.bf16 %v7029
      %v7055 = vunpack.c.l.bf16 %v7030
      %v7056 = vunpack.c.h.bf16 %v7030
      %v7057 = vunpack.c.l.bf16 %v7031
      %v7058 = vunpack.c.h.bf16 %v7031
      %v7059 = vunpack.c.l.bf16 %v7032
      %v7060 = vunpack.c.h.bf16 %v7032
      %v7061 = vunpack.c.l.bf16 %v7033
      %v7062 = vunpack.c.h.bf16 %v7033
      %v7063 = vunpack.c.l.bf16 %v7034
      %v7064 = vunpack.c.h.bf16 %v7034
      %v7065 = vunpack.c.l.bf16 %v7035
      %v7066 = vunpack.c.h.bf16 %v7035
      %v7067 = vunpack.c.l.bf16 %v7036
      %v7068 = vunpack.c.h.bf16 %v7036
      %v7069 = vunpack.c.l.bf16 %v7037
      %v7070 = vunpack.c.h.bf16 %v7037
      %v7071 = vunpack.c.l.bf16 %v7038
      %v7072 = vunpack.c.h.bf16 %v7038
      %v7073 = vunpack.c.l.bf16 %v7039
      %v7074 = vunpack.c.h.bf16 %v7039
      %v7075 = vunpack.c.l.bf16 %v7040
      %v7076 = vunpack.c.h.bf16 %v7040
      %v7077 = vunpack.c.l.bf16 %v7041
      %v7078 = vunpack.c.h.bf16 %v7041
      %v7079 = vunpack.c.l.bf16 %v7042
      %v7080 = vunpack.c.h.bf16 %v7042
      %v7081 = vunpack.c.l.bf16 %v7043
      %v7082 = vunpack.c.h.bf16 %v7043
      %v7083 = vunpack.c.l.bf16 %v7044
      %v7084 = vunpack.c.h.bf16 %v7044
      %v7085 = vunpack.c.l.bf16 %v7045
      %v7086 = vunpack.c.h.bf16 %v7045
      %v7087 = vunpack.c.l.bf16 %v7046
      %v7088 = vunpack.c.h.bf16 %v7046
      %v7089 = vunpack.c.l.bf16 %v7047
      %v7090 = vunpack.c.h.bf16 %v7047
      %v7091 = vunpack.c.l.bf16 %v7048
      %v7092 = vunpack.c.h.bf16 %v7048
      %v7094 = vsel %vm2111, %v6101, 0
      %v7097 = vsel %vm2111, %v6102, 0
      %7099 = vmatprep.subr.bf16.mxu0 %v7097
      %7100 = vmatpush1.bf16.msra.mxu0 %v7094
      %7101 = vmatprep.subr.bf16.mxu0 0
      %7102 = vmatpush1.bf16.msra.mxu0 0
      %7103 = vmatprep.subr.bf16.mxu0 0
      %7104 = vmatpush1.bf16.msra.mxu0 0
      %7105 = vmatprep.subr.bf16.mxu0 0
      %7106 = vmatpush1.bf16.msra.mxu0 0
      %7107 = vmatprep.subr.bf16.mxu0 0
      %7108 = vmatpush1.bf16.msra.mxu0 0
      %7109 = vmatprep.subr.bf16.mxu0 0
      %7110 = vmatpush1.bf16.msra.mxu0 0
      %7111 = vmatprep.subr.bf16.mxu0 0
      %7112 = vmatpush1.bf16.msra.mxu0 0
      %7113 = vmatprep.subr.bf16.mxu0 0
      %7114 = vmatpush1.bf16.msra.mxu0 0
      %7115 = vmatprep.subr.bf16.mxu0 0
      %7116 = vmatpush1.bf16.msra.mxu0 0
      %7117 = vmatprep.subr.bf16.mxu0 0
      %7118 = vmatpush1.bf16.msra.mxu0 0
      %7119 = vmatprep.subr.bf16.mxu0 0
      %7120 = vmatpush1.bf16.msra.mxu0 0
      %7121 = vmatprep.subr.bf16.mxu0 0
      %7122 = vmatpush1.bf16.msra.mxu0 0
      %7123 = vmatprep.subr.bf16.mxu0 0
      %7124 = vmatpush1.bf16.msra.mxu0 0
      %7125 = vmatprep.subr.bf16.mxu0 0
      %7126 = vmatpush1.bf16.msra.mxu0 0
      %7127 = vmatprep.subr.bf16.mxu0 0
      %7128 = vmatpush1.bf16.msra.mxu0 0
      %7129 = vmatprep.subr.bf16.mxu0 0
      %7130 = vmatpush1.bf16.msra.mxu0 0
      %7131 = vmatprep.mubr.bf16.mxu0 0
      %7132 = vmatmul.mubr.bf16.gmra.mrb[0].mxu0 %v6312
      %v7133 = vpop.f32.mrb[0].mxu0
      %v7134 = vadd.f32 %v7049, %v7133
      %v7135 = vpop.f32.mrb[0].mxu0
      %v7136 = vadd.f32 %v7050, %v7135
      %v7137 = vpop.f32.mrb[0].mxu0
      %v7138 = vadd.f32 %v7051, %v7137
      %v7139 = vpop.f32.mrb[0].mxu0
      %v7140 = vadd.f32 %v7052, %v7139
      %7141 = vmatprep.mubr.bf16.mxu0 0
      %7142 = vmatmul.mubr.bf16.gmra.mrb[0].mxu0 %v6315
      %v7143 = vpop.f32.mrb[0].mxu0
      %v7144 = vadd.f32 %v7053, %v7143
      %v7145 = vpop.f32.mrb[0].mxu0
      %v7146 = vadd.f32 %v7054, %v7145
      %v7147 = vpop.f32.mrb[0].mxu0
      %v7148 = vadd.f32 %v7055, %v7147
      %v7149 = vpop.f32.mrb[0].mxu0
      %v7150 = vadd.f32 %v7056, %v7149
      %7151 = vmatprep.mubr.bf16.mxu0 0
      %7152 = vmatmul.mubr.bf16.gmra.mrb[0].mxu0 %v6318
      %v7153 = vpop.f32.mrb[0].mxu0
      %v7154 = vadd.f32 %v7057, %v7153
      %v7155 = vpop.f32.mrb[0].mxu0
      %v7156 = vadd.f32 %v7058, %v7155
      %v7157 = vpop.f32.mrb[0].mxu0
      %v7158 = vadd.f32 %v7059, %v7157
      %v7159 = vpop.f32.mrb[0].mxu0
      %v7160 = vadd.f32 %v7060, %v7159
      %7161 = vmatprep.mubr.bf16.mxu0 0
      %7162 = vmatmul.mubr.bf16.gmra.mrb[0].mxu0 %v6321
      %v7163 = vpop.f32.mrb[0].mxu0
      %v7164 = vadd.f32 %v7061, %v7163
      %v7165 = vpop.f32.mrb[0].mxu0
      %v7166 = vadd.f32 %v7062, %v7165
      %v7167 = vpop.f32.mrb[0].mxu0
      %v7168 = vadd.f32 %v7063, %v7167
      %v7169 = vpop.f32.mrb[0].mxu0
      %v7170 = vadd.f32 %v7064, %v7169
      %7171 = vmatprep.mubr.bf16.mxu0 0
      %7172 = vmatmul.mubr.bf16.gmra.mrb[0].mxu0 %v6324
      %v7173 = vpop.f32.mrb[0].mxu0
      %v7174 = vadd.f32 %v7065, %v7173
      %v7175 = vpop.f32.mrb[0].mxu0
      %v7176 = vadd.f32 %v7066, %v7175
      %v7177 = vpop.f32.mrb[0].mxu0
      %v7178 = vadd.f32 %v7067, %v7177
      %v7179 = vpop.f32.mrb[0].mxu0
      %v7180 = vadd.f32 %v7068, %v7179
      %7181 = vmatprep.mubr.bf16.mxu0 0
      %7182 = vmatmul.mubr.bf16.gmra.mrb[0].mxu0 %v6327
      %v7183 = vpop.f32.mrb[0].mxu0
      %v7184 = vadd.f32 %v7069, %v7183
      %v7185 = vpop.f32.mrb[0].mxu0
      %v7186 = vadd.f32 %v7070, %v7185
      %v7187 = vpop.f32.mrb[0].mxu0
      %v7188 = vadd.f32 %v7071, %v7187
      %v7189 = vpop.f32.mrb[0].mxu0
      %v7190 = vadd.f32 %v7072, %v7189
      %7191 = vmatprep.mubr.bf16.mxu0 0
      %7192 = vmatmul.mubr.bf16.gmra.mrb[0].mxu0 %v6330
      %v7193 = vpop.f32.mrb[0].mxu0
      %v7194 = vadd.f32 %v7073, %v7193
      %v7195 = vpop.f32.mrb[0].mxu0
      %v7196 = vadd.f32 %v7074, %v7195
      %v7197 = vpop.f32.mrb[0].mxu0
      %v7198 = vadd.f32 %v7075, %v7197
      %v7199 = vpop.f32.mrb[0].mxu0
      %v7200 = vadd.f32 %v7076, %v7199
      %7201 = vmatprep.mubr.bf16.mxu0 0
      %7202 = vmatmul.mubr.bf16.gmra.mrb[0].mxu0 %v6333
      %v7203 = vpop.f32.mrb[0].mxu0
      %v7204 = vadd.f32 %v7077, %v7203
      %v7205 = vpop.f32.mrb[0].mxu0
      %v7206 = vadd.f32 %v7078, %v7205
      %v7207 = vpop.f32.mrb[0].mxu0
      %v7208 = vadd.f32 %v7079, %v7207
      %v7209 = vpop.f32.mrb[0].mxu0
      %v7210 = vadd.f32 %v7080, %v7209
      %7211 = vmatprep.mubr.bf16.mxu0 0
      %7212 = vmatmul.mubr.bf16.gmra.mrb[0].mxu0 %v6336
      %v7213 = vpop.f32.mrb[0].mxu0
      %v7214 = vadd.f32 %v7081, %v7213
      %v7215 = vpop.f32.mrb[0].mxu0
      %v7216 = vadd.f32 %v7082, %v7215
      %v7217 = vpop.f32.mrb[0].mxu0
      %v7218 = vadd.f32 %v7083, %v7217
      %v7219 = vpop.f32.mrb[0].mxu0
      %v7220 = vadd.f32 %v7084, %v7219
      %7221 = vmatprep.mubr.bf16.mxu0 0
      %7222 = vmatmul.mubr.bf16.gmra.mrb[0].mxu0 %v6339
      %v7223 = vpop.f32.mrb[0].mxu0
      %v7224 = vadd.f32 %v7085, %v7223
      %v7225 = vpop.f32.mrb[0].mxu0
      %v7226 = vadd.f32 %v7086, %v7225
      %v7227 = vpop.f32.mrb[0].mxu0
      %v7228 = vadd.f32 %v7087, %v7227
      %v7229 = vpop.f32.mrb[0].mxu0
      %v7230 = vadd.f32 %v7088, %v7229
      %7231 = vmatprep.mubr.bf16.mxu0 0
      %7232 = vmatmul.mubr.bf16.gmra.mrb[0].mxu0 %v6342
      %v7233 = vpop.f32.mrb[0].mxu0
      %v7234 = vadd.f32 %v7089, %v7233
      %v7235 = vpop.f32.mrb[0].mxu0
      %v7236 = vadd.f32 %v7090, %v7235
      %v7237 = vpop.f32.mrb[0].mxu0
      %v7238 = vadd.f32 %v7091, %v7237
      %v7239 = vpop.f32.mrb[0].mxu0
      %v7240 = vadd.f32 %v7092, %v7239
      %7241 = vdwg.mxu0
      %v7242 = vsel %vm2261, %v7136, -inf
      %v7243 = vmax.f32 %v7134, %v7242
      %7244 = vmax.xlane.f32.xlu0 %v7243
      %v7245 = vpop.xlane.xlu0 %7244
      %v7246 = vsel %vm2261, %v7140, -inf
      %v7247 = vmax.f32 %v7138, %v7246
      %7248 = vmax.xlane.f32.xlu0 %v7247
      %v7249 = vpop.xlane.xlu0 %7248
      %v7250 = vsel %vm2261, %v7146, -inf
      %v7251 = vmax.f32 %v7144, %v7250
      %7252 = vmax.xlane.f32.xlu0 %v7251
      %v7253 = vpop.xlane.xlu0 %7252
      %v7254 = vsel %vm2261, %v7150, -inf
      %v7255 = vmax.f32 %v7148, %v7254
      %7256 = vmax.xlane.f32.xlu0 %v7255
      %v7257 = vpop.xlane.xlu0 %7256
      %v7258 = vsel %vm2261, %v7156, -inf
      %v7259 = vmax.f32 %v7154, %v7258
      %7260 = vmax.xlane.f32.xlu0 %v7259
      %v7261 = vpop.xlane.xlu0 %7260
      %v7262 = vsel %vm2261, %v7160, -inf
      %v7263 = vmax.f32 %v7158, %v7262
      %7264 = vmax.xlane.f32.xlu0 %v7263
      %v7265 = vpop.xlane.xlu0 %7264
      %v7266 = vsel %vm2261, %v7166, -inf
      %v7267 = vmax.f32 %v7164, %v7266
      %7268 = vmax.xlane.f32.xlu0 %v7267
      %v7269 = vpop.xlane.xlu0 %7268
      %v7270 = vsel %vm2261, %v7170, -inf
      %v7271 = vmax.f32 %v7168, %v7270
      %7272 = vmax.xlane.f32.xlu0 %v7271
      %v7273 = vpop.xlane.xlu0 %7272
      %v7274 = vsel %vm2261, %v7176, -inf
      %v7275 = vmax.f32 %v7174, %v7274
      %7276 = vmax.xlane.f32.xlu0 %v7275
      %v7277 = vpop.xlane.xlu0 %7276
      %v7278 = vsel %vm2261, %v7180, -inf
      %v7279 = vmax.f32 %v7178, %v7278
      %7280 = vmax.xlane.f32.xlu0 %v7279
      %v7281 = vpop.xlane.xlu0 %7280
      %v7282 = vsel %vm2261, %v7186, -inf
      %v7283 = vmax.f32 %v7184, %v7282
      %7284 = vmax.xlane.f32.xlu0 %v7283
      %v7285 = vpop.xlane.xlu0 %7284
      %v7286 = vsel %vm2261, %v7190, -inf
      %v7287 = vmax.f32 %v7188, %v7286
      %7288 = vmax.xlane.f32.xlu0 %v7287
      %v7289 = vpop.xlane.xlu0 %7288
      %v7290 = vsel %vm2261, %v7196, -inf
      %v7291 = vmax.f32 %v7194, %v7290
      %7292 = vmax.xlane.f32.xlu0 %v7291
      %v7293 = vpop.xlane.xlu0 %7292
      %v7294 = vsel %vm2261, %v7200, -inf
      %v7295 = vmax.f32 %v7198, %v7294
      %7296 = vmax.xlane.f32.xlu0 %v7295
      %v7297 = vpop.xlane.xlu0 %7296
      %v7298 = vsel %vm2261, %v7206, -inf
      %v7299 = vmax.f32 %v7204, %v7298
      %7300 = vmax.xlane.f32.xlu0 %v7299
      %v7301 = vpop.xlane.xlu0 %7300
      %v7302 = vsel %vm2261, %v7210, -inf
      %v7303 = vmax.f32 %v7208, %v7302
      %7304 = vmax.xlane.f32.xlu0 %v7303
      %v7305 = vpop.xlane.xlu0 %7304
      %v7306 = vsel %vm2261, %v7216, -inf
      %v7307 = vmax.f32 %v7214, %v7306
      %7308 = vmax.xlane.f32.xlu0 %v7307
      %v7309 = vpop.xlane.xlu0 %7308
      %v7310 = vsel %vm2261, %v7220, -inf
      %v7311 = vmax.f32 %v7218, %v7310
      %7312 = vmax.xlane.f32.xlu0 %v7311
      %v7313 = vpop.xlane.xlu0 %7312
      %v7314 = vsel %vm2261, %v7226, -inf
      %v7315 = vmax.f32 %v7224, %v7314
      %7316 = vmax.xlane.f32.xlu0 %v7315
      %v7317 = vpop.xlane.xlu0 %7316
      %v7318 = vsel %vm2261, %v7230, -inf
      %v7319 = vmax.f32 %v7228, %v7318
      %7320 = vmax.xlane.f32.xlu0 %v7319
      %v7321 = vpop.xlane.xlu0 %7320
      %v7322 = vsel %vm2261, %v7236, -inf
      %v7323 = vmax.f32 %v7234, %v7322
      %7324 = vmax.xlane.f32.xlu0 %v7323
      %v7325 = vpop.xlane.xlu0 %7324
      %v7326 = vsel %vm2346, %v7238, -inf
      %v7327 = vsel %vm2348, %v7240, -inf
      %v7328 = vmax.f32 %v7326, %v7327
      %7329 = vmax.xlane.f32.xlu0 %v7328
      %v7330 = vpop.xlane.xlu0 %7329
      %v7331 = vsub.f32 %v7134, %v7245
      %v7332 = vsub.f32 %v7136, %v7245
      %v7333 = vsub.f32 %v7138, %v7249
      %v7334 = vsub.f32 %v7140, %v7249
      %v7335 = vsub.f32 %v7144, %v7253
      %v7336 = vsub.f32 %v7146, %v7253
      %v7337 = vsub.f32 %v7148, %v7257
      %v7338 = vsub.f32 %v7150, %v7257
      %v7339 = vsub.f32 %v7154, %v7261
      %v7340 = vsub.f32 %v7156, %v7261
      %v7341 = vsub.f32 %v7158, %v7265
      %v7342 = vsub.f32 %v7160, %v7265
      %v7343 = vsub.f32 %v7164, %v7269
      %v7344 = vsub.f32 %v7166, %v7269
      %v7345 = vsub.f32 %v7168, %v7273
      %v7346 = vsub.f32 %v7170, %v7273
      %v7347 = vsub.f32 %v7174, %v7277
      %v7348 = vsub.f32 %v7176, %v7277
      %v7349 = vsub.f32 %v7178, %v7281
      %v7350 = vsub.f32 %v7180, %v7281
      %v7351 = vsub.f32 %v7184, %v7285
      %v7352 = vsub.f32 %v7186, %v7285
      %v7353 = vsub.f32 %v7188, %v7289
      %v7354 = vsub.f32 %v7190, %v7289
      %v7355 = vsub.f32 %v7194, %v7293
      %v7356 = vsub.f32 %v7196, %v7293
      %v7357 = vsub.f32 %v7198, %v7297
      %v7358 = vsub.f32 %v7200, %v7297
      %v7359 = vsub.f32 %v7204, %v7301
      %v7360 = vsub.f32 %v7206, %v7301
      %v7361 = vsub.f32 %v7208, %v7305
      %v7362 = vsub.f32 %v7210, %v7305
      %v7363 = vsub.f32 %v7214, %v7309
      %v7364 = vsub.f32 %v7216, %v7309
      %v7365 = vsub.f32 %v7218, %v7313
      %v7366 = vsub.f32 %v7220, %v7313
      %v7367 = vsub.f32 %v7224, %v7317
      %v7368 = vsub.f32 %v7226, %v7317
      %v7369 = vsub.f32 %v7228, %v7321
      %v7370 = vsub.f32 %v7230, %v7321
      %v7371 = vsub.f32 %v7234, %v7325
      %v7372 = vsub.f32 %v7236, %v7325
      %v7373 = vsub.f32 %v7238, %v7330
      %v7374 = vsub.f32 %v7240, %v7330
      %v7375 = vmul.f32 %v7331, 1.442695
      %v7376 = vpow.pop %v7375
      %v7377 = vmul.f32 %v7332, 1.442695
      %v7378 = vpow.pop %v7377
      %v7379 = vmul.f32 %v7333, 1.442695
      %v7380 = vpow.pop %v7379
      %v7381 = vmul.f32 %v7334, 1.442695
      %v7382 = vpow.pop %v7381
      %v7383 = vmul.f32 %v7335, 1.442695
      %v7384 = vpow.pop %v7383
      %v7385 = vmul.f32 %v7336, 1.442695
      %v7386 = vpow.pop %v7385
      %v7387 = vmul.f32 %v7337, 1.442695
      %v7388 = vpow.pop %v7387
      %v7389 = vmul.f32 %v7338, 1.442695
      %v7390 = vpow.pop %v7389
      %v7391 = vmul.f32 %v7339, 1.442695
      %v7392 = vpow.pop %v7391
      %v7393 = vmul.f32 %v7340, 1.442695
      %v7394 = vpow.pop %v7393
      %v7395 = vmul.f32 %v7341, 1.442695
      %v7396 = vpow.pop %v7395
      %v7397 = vmul.f32 %v7342, 1.442695
      %v7398 = vpow.pop %v7397
      %v7399 = vmul.f32 %v7343, 1.442695
      %v7400 = vpow.pop %v7399
      %v7401 = vmul.f32 %v7344, 1.442695
      %v7402 = vpow.pop %v7401
      %v7403 = vmul.f32 %v7345, 1.442695
      %v7404 = vpow.pop %v7403
      %v7405 = vmul.f32 %v7346, 1.442695
      %v7406 = vpow.pop %v7405
      %v7407 = vmul.f32 %v7347, 1.442695
      %v7408 = vpow.pop %v7407
      %v7409 = vmul.f32 %v7348, 1.442695
      %v7410 = vpow.pop %v7409
      %v7411 = vmul.f32 %v7349, 1.442695
      %v7412 = vpow.pop %v7411
      %v7413 = vmul.f32 %v7350, 1.442695
      %v7414 = vpow.pop %v7413
      %v7415 = vmul.f32 %v7351, 1.442695
      %v7416 = vpow.pop %v7415
      %v7417 = vmul.f32 %v7352, 1.442695
      %v7418 = vpow.pop %v7417
      %v7419 = vmul.f32 %v7353, 1.442695
      %v7420 = vpow.pop %v7419
      %v7421 = vmul.f32 %v7354, 1.442695
      %v7422 = vpow.pop %v7421
      %v7423 = vmul.f32 %v7355, 1.442695
      %v7424 = vpow.pop %v7423
      %v7425 = vmul.f32 %v7356, 1.442695
      %v7426 = vpow.pop %v7425
      %v7427 = vmul.f32 %v7357, 1.442695
      %v7428 = vpow.pop %v7427
      %v7429 = vmul.f32 %v7358, 1.442695
      %v7430 = vpow.pop %v7429
      %v7431 = vmul.f32 %v7359, 1.442695
      %v7432 = vpow.pop %v7431
      %v7433 = vmul.f32 %v7360, 1.442695
      %v7434 = vpow.pop %v7433
      %v7435 = vmul.f32 %v7361, 1.442695
      %v7436 = vpow.pop %v7435
      %v7437 = vmul.f32 %v7362, 1.442695
      %v7438 = vpow.pop %v7437
      %v7439 = vmul.f32 %v7363, 1.442695
      %v7440 = vpow.pop %v7439
      %v7441 = vmul.f32 %v7364, 1.442695
      %v7442 = vpow.pop %v7441
      %v7443 = vmul.f32 %v7365, 1.442695
      %v7444 = vpow.pop %v7443
      %v7445 = vmul.f32 %v7366, 1.442695
      %v7446 = vpow.pop %v7445
      %v7447 = vmul.f32 %v7367, 1.442695
      %v7448 = vpow.pop %v7447
      %v7449 = vmul.f32 %v7368, 1.442695
      %v7450 = vpow.pop %v7449
      %v7451 = vmul.f32 %v7369, 1.442695
      %v7452 = vpow.pop %v7451
      %v7453 = vmul.f32 %v7370, 1.442695
      %v7454 = vpow.pop %v7453
      %v7455 = vmul.f32 %v7371, 1.442695
      %v7456 = vpow.pop %v7455
      %v7457 = vmul.f32 %v7372, 1.442695
      %v7458 = vpow.pop %v7457
      %v7459 = vmul.f32 %v7373, 1.442695
      %v7460 = vpow.pop %v7459
      %v7461 = vmul.f32 %v7374, 1.442695
      %v7462 = vpow.pop %v7461
      %v7463 = vsel %vm2261, %v7378, 0.0
      %v7464 = vadd.f32 %v7376, %v7463
      %7465 = vadd.xlane.f32.xlu0 %v7464
      %v7466 = vpop.xlane.xlu0 %7465
      %v7467 = vsel %vm2261, %v7382, 0.0
      %v7468 = vadd.f32 %v7380, %v7467
      %7469 = vadd.xlane.f32.xlu0 %v7468
      %v7470 = vpop.xlane.xlu0 %7469
      %v7471 = vsel %vm2261, %v7386, 0.0
      %v7472 = vadd.f32 %v7384, %v7471
      %7473 = vadd.xlane.f32.xlu0 %v7472
      %v7474 = vpop.xlane.xlu0 %7473
      %v7475 = vsel %vm2261, %v7390, 0.0
      %v7476 = vadd.f32 %v7388, %v7475
      %7477 = vadd.xlane.f32.xlu0 %v7476
      %v7478 = vpop.xlane.xlu0 %7477
      %v7479 = vsel %vm2261, %v7394, 0.0
      %v7480 = vadd.f32 %v7392, %v7479
      %7481 = vadd.xlane.f32.xlu0 %v7480
      %v7482 = vpop.xlane.xlu0 %7481
      %v7483 = vsel %vm2261, %v7398, 0.0
      %v7484 = vadd.f32 %v7396, %v7483
      %7485 = vadd.xlane.f32.xlu0 %v7484
      %v7486 = vpop.xlane.xlu0 %7485
      %v7487 = vsel %vm2261, %v7402, 0.0
      %v7488 = vadd.f32 %v7400, %v7487
      %7489 = vadd.xlane.f32.xlu0 %v7488
      %v7490 = vpop.xlane.xlu0 %7489
      %v7491 = vsel %vm2261, %v7406, 0.0
      %v7492 = vadd.f32 %v7404, %v7491
      %7493 = vadd.xlane.f32.xlu0 %v7492
      %v7494 = vpop.xlane.xlu0 %7493
      %v7495 = vsel %vm2261, %v7410, 0.0
      %v7496 = vadd.f32 %v7408, %v7495
      %7497 = vadd.xlane.f32.xlu0 %v7496
      %v7498 = vpop.xlane.xlu0 %7497
      %v7499 = vsel %vm2261, %v7414, 0.0
      %v7500 = vadd.f32 %v7412, %v7499
      %7501 = vadd.xlane.f32.xlu0 %v7500
      %v7502 = vpop.xlane.xlu0 %7501
      %v7503 = vsel %vm2261, %v7418, 0.0
      %v7504 = vadd.f32 %v7416, %v7503
      %7505 = vadd.xlane.f32.xlu0 %v7504
      %v7506 = vpop.xlane.xlu0 %7505
      %v7507 = vsel %vm2261, %v7422, 0.0
      %v7508 = vadd.f32 %v7420, %v7507
      %7509 = vadd.xlane.f32.xlu0 %v7508
      %v7510 = vpop.xlane.xlu0 %7509
      %v7511 = vsel %vm2261, %v7426, 0.0
      %v7512 = vadd.f32 %v7424, %v7511
      %7513 = vadd.xlane.f32.xlu0 %v7512
      %v7514 = vpop.xlane.xlu0 %7513
      %v7515 = vsel %vm2261, %v7430, 0.0
      %v7516 = vadd.f32 %v7428, %v7515
      %7517 = vadd.xlane.f32.xlu0 %v7516
      %v7518 = vpop.xlane.xlu0 %7517
      %v7519 = vsel %vm2261, %v7434, 0.0
      %v7520 = vadd.f32 %v7432, %v7519
      %7521 = vadd.xlane.f32.xlu0 %v7520
      %v7522 = vpop.xlane.xlu0 %7521
      %v7523 = vsel %vm2261, %v7438, 0.0
      %v7524 = vadd.f32 %v7436, %v7523
      %7525 = vadd.xlane.f32.xlu0 %v7524
      %v7526 = vpop.xlane.xlu0 %7525
      %v7527 = vsel %vm2261, %v7442, 0.0
      %v7528 = vadd.f32 %v7440, %v7527
      %7529 = vadd.xlane.f32.xlu0 %v7528
      %v7530 = vpop.xlane.xlu0 %7529
      %v7531 = vsel %vm2261, %v7446, 0.0
      %v7532 = vadd.f32 %v7444, %v7531
      %7533 = vadd.xlane.f32.xlu0 %v7532
      %v7534 = vpop.xlane.xlu0 %7533
      %v7535 = vsel %vm2261, %v7450, 0.0
      %v7536 = vadd.f32 %v7448, %v7535
      %7537 = vadd.xlane.f32.xlu0 %v7536
      %v7538 = vpop.xlane.xlu0 %7537
      %v7539 = vsel %vm2261, %v7454, 0.0
      %v7540 = vadd.f32 %v7452, %v7539
      %7541 = vadd.xlane.f32.xlu0 %v7540
      %v7542 = vpop.xlane.xlu0 %7541
      %v7543 = vsel %vm2261, %v7458, 0.0
      %v7544 = vadd.f32 %v7456, %v7543
      %7545 = vadd.xlane.f32.xlu0 %v7544
      %v7546 = vpop.xlane.xlu0 %7545
      %v7547 = vsel %vm2346, %v7460, 0.0
      %v7548 = vsel %vm2348, %v7462, 0.0
      %v7549 = vadd.f32 %v7547, %v7548
      %7550 = vadd.xlane.f32.xlu0 %v7549
      %v7551 = vpop.xlane.xlu0 %7550
      %v7552 = vrcp.pop %v7466
      %v7553 = vrcp.pop %v7470
      %v7554 = vrcp.pop %v7474
      %v7555 = vrcp.pop %v7478
      %v7556 = vrcp.pop %v7482
      %v7557 = vrcp.pop %v7486
      %v7558 = vrcp.pop %v7490
      %v7559 = vrcp.pop %v7494
      %v7560 = vrcp.pop %v7498
      %v7561 = vrcp.pop %v7502
      %v7562 = vrcp.pop %v7506
      %v7563 = vrcp.pop %v7510
      %v7564 = vrcp.pop %v7514
      %v7565 = vrcp.pop %v7518
      %v7566 = vrcp.pop %v7522
      %v7567 = vrcp.pop %v7526
      %v7568 = vrcp.pop %v7530
      %v7569 = vrcp.pop %v7534
      %v7570 = vrcp.pop %v7538
      %v7571 = vrcp.pop %v7542
      %v7572 = vrcp.pop %v7546
      %v7573 = vrcp.pop %v7551
      %v7574 = vpack.c.bf16 %v7380, %v7376
      %v7575 = vpack.c.bf16 %v7382, %v7378
      %v7576 = vpack.c.bf16 %v7388, %v7384
      %v7577 = vpack.c.bf16 %v7390, %v7386
      %v7578 = vpack.c.bf16 %v7396, %v7392
      %v7579 = vpack.c.bf16 %v7398, %v7394
      %v7580 = vpack.c.bf16 %v7404, %v7400
      %v7581 = vpack.c.bf16 %v7406, %v7402
      %v7582 = vpack.c.bf16 %v7412, %v7408
      %v7583 = vpack.c.bf16 %v7414, %v7410
      %v7584 = vpack.c.bf16 %v7420, %v7416
      %v7585 = vpack.c.bf16 %v7422, %v7418
      %v7586 = vpack.c.bf16 %v7428, %v7424
      %v7587 = vpack.c.bf16 %v7430, %v7426
      %v7588 = vpack.c.bf16 %v7436, %v7432
      %v7589 = vpack.c.bf16 %v7438, %v7434
      %v7590 = vpack.c.bf16 %v7444, %v7440
      %v7591 = vpack.c.bf16 %v7446, %v7442
      %v7592 = vpack.c.bf16 %v7452, %v7448
      %v7593 = vpack.c.bf16 %v7454, %v7450
      %v7594 = vpack.c.bf16 %v7460, %v7456
      %v7595 = vpack.c.bf16 %v7462, %v7458
      %v7596 = vpack.c.bf16 %v7005, %v7004
      %v7597 = vpack.c.bf16 %v7007, %v7006
      %v7598 = vpack.c.bf16 %v7009, %v7008
      %v7599 = vpack.c.bf16 %v7011, %v7010
      %v7600 = vpack.c.bf16 %v7013, %v7012
      %v7601 = vpack.c.bf16 %v7015, %v7014
      %v7602 = vpack.c.bf16 %v7017, %v7016
      %v7603 = vpack.c.bf16 %v7019, %v7018
      %v7604 = vpack.c.bf16 %v7021, %v7020
      %v7605 = vpack.c.bf16 %v7023, %v7022
      %v7606 = vpack.c.bf16 %v7025, %v7024
      %v7608 = vsel %vm2261, %v7575, 0
      %v7611 = vsel %vm2261, %v7577, 0
      %v7614 = vsel %vm2261, %v7579, 0
      %v7617 = vsel %vm2261, %v7581, 0
      %v7620 = vsel %vm2261, %v7583, 0
      %v7623 = vsel %vm2261, %v7585, 0
      %v7626 = vsel %vm2261, %v7587, 0
      %v7629 = vsel %vm2261, %v7589, 0
      %v7632 = vsel %vm2261, %v7591, 0
      %v7635 = vsel %vm2261, %v7593, 0
      %v7638 = vsel %vm2261, %v7595, 0
      %v7641 = vand.u32 %v7606, %v2654
      %7643 = vmatprep.subr.bf16.mxu0 0
      %7644 = vmatpush1.bf16.msra.mxu0 %v7596
      %7645 = vmatprep.subr.bf16.mxu0 0
      %7646 = vmatpush1.bf16.msra.mxu0 %v7597
      %7647 = vmatprep.subr.bf16.mxu0 0
      %7648 = vmatpush1.bf16.msra.mxu0 %v7598
      %7649 = vmatprep.subr.bf16.mxu0 0
      %7650 = vmatpush1.bf16.msra.mxu0 %v7599
      %7651 = vmatprep.subr.bf16.mxu0 0
      %7652 = vmatpush1.bf16.msra.mxu0 %v7600
      %7653 = vmatprep.subr.bf16.mxu0 0
      %7654 = vmatpush1.bf16.msra.mxu0 %v7601
      %7655 = vmatprep.subr.bf16.mxu0 0
      %7656 = vmatpush1.bf16.msra.mxu0 %v7602
      %7657 = vmatprep.subr.bf16.mxu0 0
      %7658 = vmatpush1.bf16.msra.mxu0 %v7603
      %7659 = vmatprep.subr.bf16.mxu0 0
      %7660 = vmatpush1.bf16.msra.mxu0 %v7604
      %7661 = vmatprep.subr.bf16.mxu0 0
      %7662 = vmatpush1.bf16.msra.mxu0 %v7605
      %7663 = vmatprep.subr.bf16.mxu0 0
      %7664 = vmatpush1.bf16.msra.mxu0 %v7641
      %7665 = vmatprep.subr.bf16.mxu0 0
      %7666 = vmatpush1.bf16.msra.mxu0 0
      %7667 = vmatprep.subr.bf16.mxu0 0
      %7668 = vmatpush1.bf16.msra.mxu0 0
      %7669 = vmatprep.subr.bf16.mxu0 0
      %7670 = vmatpush1.bf16.msra.mxu0 0
      %7671 = vmatprep.subr.bf16.mxu0 0
      %7672 = vmatpush1.bf16.msra.mxu0 0
      %7673 = vmatprep.subr.bf16.mxu0 0
      %7674 = vmatpush1.bf16.msra.mxu0 0
      %7675 = vmatprep.mubr.bf16.mxu0 %v7608
      %7676 = vmatmul.mubr.bf16.gmra.mrb[0].mxu0 %v7574
      %v7677 = vpop.f32.mrb[0].mxu0
      %v7678 = vadd.f32 0.0, %v7677
      %v7679 = vpop.f32.mrb[0].mxu0
      %v7680 = vpop.f32.mrb[0].mxu0
      %v7681 = vadd.f32 0.0, %v7680
      %v7682 = vpop.f32.mrb[0].mxu0
      %7683 = vmatprep.mubr.bf16.mxu0 %v7611
      %7684 = vmatmul.mubr.bf16.gmra.mrb[0].mxu0 %v7576
      %v7685 = vpop.f32.mrb[0].mxu0
      %v7686 = vadd.f32 0.0, %v7685
      %v7687 = vpop.f32.mrb[0].mxu0
      %v7688 = vpop.f32.mrb[0].mxu0
      %v7689 = vadd.f32 0.0, %v7688
      %v7690 = vpop.f32.mrb[0].mxu0
      %7691 = vmatprep.mubr.bf16.mxu0 %v7614
      %7692 = vmatmul.mubr.bf16.gmra.mrb[0].mxu0 %v7578
      %v7693 = vpop.f32.mrb[0].mxu0
      %v7694 = vadd.f32 0.0, %v7693
      %v7695 = vpop.f32.mrb[0].mxu0
      %v7696 = vpop.f32.mrb[0].mxu0
      %v7697 = vadd.f32 0.0, %v7696
      %v7698 = vpop.f32.mrb[0].mxu0
      %7699 = vmatprep.mubr.bf16.mxu0 %v7617
      %7700 = vmatmul.mubr.bf16.gmra.mrb[0].mxu0 %v7580
      %v7701 = vpop.f32.mrb[0].mxu0
      %v7702 = vadd.f32 0.0, %v7701
      %v7703 = vpop.f32.mrb[0].mxu0
      %v7704 = vpop.f32.mrb[0].mxu0
      %v7705 = vadd.f32 0.0, %v7704
      %v7706 = vpop.f32.mrb[0].mxu0
      %7707 = vmatprep.mubr.bf16.mxu0 %v7620
      %7708 = vmatmul.mubr.bf16.gmra.mrb[0].mxu0 %v7582
      %v7709 = vpop.f32.mrb[0].mxu0
      %v7710 = vadd.f32 0.0, %v7709
      %v7711 = vpop.f32.mrb[0].mxu0
      %v7712 = vpop.f32.mrb[0].mxu0
      %v7713 = vadd.f32 0.0, %v7712
      %v7714 = vpop.f32.mrb[0].mxu0
      %7715 = vmatprep.mubr.bf16.mxu0 %v7623
      %7716 = vmatmul.mubr.bf16.gmra.mrb[0].mxu0 %v7584
      %v7717 = vpop.f32.mrb[0].mxu0
      %v7718 = vadd.f32 0.0, %v7717
      %v7719 = vpop.f32.mrb[0].mxu0
      %v7720 = vpop.f32.mrb[0].mxu0
      %v7721 = vadd.f32 0.0, %v7720
      %v7722 = vpop.f32.mrb[0].mxu0
      %7723 = vmatprep.mubr.bf16.mxu0 %v7626
      %7724 = vmatmul.mubr.bf16.gmra.mrb[0].mxu0 %v7586
      %v7725 = vpop.f32.mrb[0].mxu0
      %v7726 = vadd.f32 0.0, %v7725
      %v7727 = vpop.f32.mrb[0].mxu0
      %v7728 = vpop.f32.mrb[0].mxu0
      %v7729 = vadd.f32 0.0, %v7728
      %v7730 = vpop.f32.mrb[0].mxu0
      %7731 = vmatprep.mubr.bf16.mxu0 %v7629
      %7732 = vmatmul.mubr.bf16.gmra.mrb[0].mxu0 %v7588
      %v7733 = vpop.f32.mrb[0].mxu0
      %v7734 = vadd.f32 0.0, %v7733
      %v7735 = vpop.f32.mrb[0].mxu0
      %v7736 = vpop.f32.mrb[0].mxu0
      %v7737 = vadd.f32 0.0, %v7736
      %v7738 = vpop.f32.mrb[0].mxu0
      %7739 = vmatprep.mubr.bf16.mxu0 %v7632
      %7740 = vmatmul.mubr.bf16.gmra.mrb[0].mxu0 %v7590
      %v7741 = vpop.f32.mrb[0].mxu0
      %v7742 = vadd.f32 0.0, %v7741
      %v7743 = vpop.f32.mrb[0].mxu0
      %v7744 = vpop.f32.mrb[0].mxu0
      %v7745 = vadd.f32 0.0, %v7744
      %v7746 = vpop.f32.mrb[0].mxu0
      %7747 = vmatprep.mubr.bf16.mxu0 %v7635
      %7748 = vmatmul.mubr.bf16.gmra.mrb[0].mxu0 %v7592
      %v7749 = vpop.f32.mrb[0].mxu0
      %v7750 = vadd.f32 0.0, %v7749
      %v7751 = vpop.f32.mrb[0].mxu0
      %v7752 = vpop.f32.mrb[0].mxu0
      %v7753 = vadd.f32 0.0, %v7752
      %v7754 = vpop.f32.mrb[0].mxu0
      %7755 = vmatprep.mubr.bf16.mxu0 %v7638
      %7756 = vmatmul.mubr.bf16.gmra.mrb[0].mxu0 %v7594
      %v7757 = vpop.f32.mrb[0].mxu0
      %v7758 = vadd.f32 0.0, %v7757
      %v7759 = vpop.f32.mrb[0].mxu0
      %v7760 = vpop.f32.mrb[0].mxu0
      %v7761 = vadd.f32 0.0, %v7760
      %v7762 = vpop.f32.mrb[0].mxu0
      %7763 = vdwg.mxu0
      %v7764 = vmul.f32 %v7678, %v7552
      %v7765 = vmul.f32 %v7681, %v7553
      %v7766 = vmul.f32 %v7686, %v7554
      %v7767 = vmul.f32 %v7689, %v7555
      %v7768 = vmul.f32 %v7694, %v7556
      %v7769 = vmul.f32 %v7697, %v7557
      %v7770 = vmul.f32 %v7702, %v7558
      %v7771 = vmul.f32 %v7705, %v7559
      %v7772 = vmul.f32 %v7710, %v7560
      %v7773 = vmul.f32 %v7713, %v7561
      %v7774 = vmul.f32 %v7718, %v7562
      %v7775 = vmul.f32 %v7721, %v7563
      %v7776 = vmul.f32 %v7726, %v7564
      %v7777 = vmul.f32 %v7729, %v7565
      %v7778 = vmul.f32 %v7734, %v7566
      %v7779 = vmul.f32 %v7737, %v7567
      %v7780 = vmul.f32 %v7742, %v7568
      %v7781 = vmul.f32 %v7745, %v7569
      %v7782 = vmul.f32 %v7750, %v7570
      %v7783 = vmul.f32 %v7753, %v7571
      %v7784 = vmul.f32 %v7758, %v7572
      %v7785 = vmul.f32 %v7761, %v7573
      %v7786 = vpack.c.bf16 %v7765, %v7764
      %v7787 = vpack.c.bf16 %v7767, %v7766
      %v7788 = vpack.c.bf16 %v7769, %v7768
      %v7789 = vpack.c.bf16 %v7771, %v7770
      %v7790 = vpack.c.bf16 %v7773, %v7772
      %v7791 = vpack.c.bf16 %v7775, %v7774
      %v7792 = vpack.c.bf16 %v7777, %v7776
      %v7793 = vpack.c.bf16 %v7779, %v7778
      %v7794 = vpack.c.bf16 %v7781, %v7780
      %v7795 = vpack.c.bf16 %v7783, %v7782
      %v7796 = vpack.c.bf16 %v7785, %v7784
      %s7797 = scalar_lea.vmem %s8, 4
      %v7798 = vld [vmem:[%s7797] sm:$0x3]
      %v7800 = vsel %vm2077, %v7786, 0
      %v7803 = vsel %vm2077, %v7787, 0
      %v7806 = vsel %vm2077, %v7788, 0
      %v7809 = vsel %vm2077, %v7789, 0
      %v7812 = vsel %vm2077, %v7790, 0
      %v7815 = vsel %vm2077, %v7791, 0
      %v7818 = vsel %vm2077, %v7792, 0
      %v7821 = vsel %vm2077, %v7793, 0
      %v7824 = vsel %vm2077, %v7794, 0
      %v7827 = vsel %vm2077, %v7795, 0
      %v7830 = vsel %vm2077, %v7796, 0
      %v7833 = vsel %vm2111, %v7798, 0
      %7835 = vmatprep.subr.bf16.mxu0 0
      %7836 = vmatpush1.bf16.msra.mxu0 %v7833
      %7837 = vmatprep.subr.bf16.mxu0 0
      %7838 = vmatpush1.bf16.msra.mxu0 0
      %7839 = vmatprep.subr.bf16.mxu0 0
      %7840 = vmatpush1.bf16.msra.mxu0 0
      %7841 = vmatprep.subr.bf16.mxu0 0
      %7842 = vmatpush1.bf16.msra.mxu0 0
      %7843 = vmatprep.subr.bf16.mxu0 0
      %7844 = vmatpush1.bf16.msra.mxu0 0
      %7845 = vmatprep.subr.bf16.mxu0 0
      %7846 = vmatpush1.bf16.msra.mxu0 0
      %7847 = vmatprep.subr.bf16.mxu0 0
      %7848 = vmatpush1.bf16.msra.mxu0 0
      %7849 = vmatprep.subr.bf16.mxu0 0
      %7850 = vmatpush1.bf16.msra.mxu0 0
      %7851 = vmatprep.subr.bf16.mxu0 0
      %7852 = vmatpush1.bf16.msra.mxu0 0
      %7853 = vmatprep.subr.bf16.mxu0 0
      %7854 = vmatpush1.bf16.msra.mxu0 0
      %7855 = vmatprep.subr.bf16.mxu0 0
      %7856 = vmatpush1.bf16.msra.mxu0 0
      %7857 = vmatprep.subr.bf16.mxu0 0
      %7858 = vmatpush1.bf16.msra.mxu0 0
      %7859 = vmatprep.subr.bf16.mxu0 0
      %7860 = vmatpush1.bf16.msra.mxu0 0
      %7861 = vmatprep.subr.bf16.mxu0 0
      %7862 = vmatpush1.bf16.msra.mxu0 0
      %7863 = vmatprep.subr.bf16.mxu0 0
      %7864 = vmatpush1.bf16.msra.mxu0 0
      %7865 = vmatprep.subr.bf16.mxu0 0
      %7866 = vmatpush1.bf16.msra.mxu0 0
      %7867 = vmatprep.mubr.bf16.mxu0 0
      %7868 = vmatmul.mubr.bf16.gmra.mrb[0].mxu0 %v7800
      %v7869 = vpop.f32.mrb[0].mxu0
      %v7870 = vadd.f32 0.0, %v7869
      %v7871 = vpop.f32.mrb[0].mxu0
      %v7872 = vpop.f32.mrb[0].mxu0
      %v7873 = vadd.f32 0.0, %v7872
      %v7874 = vpop.f32.mrb[0].mxu0
      %7875 = vmatprep.mubr.bf16.mxu0 0
      %7876 = vmatmul.mubr.bf16.gmra.mrb[0].mxu0 %v7803
      %v7877 = vpop.f32.mrb[0].mxu0
      %v7878 = vadd.f32 0.0, %v7877
      %v7879 = vpop.f32.mrb[0].mxu0
      %v7880 = vpop.f32.mrb[0].mxu0
      %v7881 = vadd.f32 0.0, %v7880
      %v7882 = vpop.f32.mrb[0].mxu0
      %7883 = vmatprep.mubr.bf16.mxu0 0
      %7884 = vmatmul.mubr.bf16.gmra.mrb[0].mxu0 %v7806
      %v7885 = vpop.f32.mrb[0].mxu0
      %v7886 = vadd.f32 0.0, %v7885
      %v7887 = vpop.f32.mrb[0].mxu0
      %v7888 = vpop.f32.mrb[0].mxu0
      %v7889 = vadd.f32 0.0, %v7888
      %v7890 = vpop.f32.mrb[0].mxu0
      %7891 = vmatprep.mubr.bf16.mxu0 0
      %7892 = vmatmul.mubr.bf16.gmra.mrb[0].mxu0 %v7809
      %v7893 = vpop.f32.mrb[0].mxu0
      %v7894 = vadd.f32 0.0, %v7893
      %v7895 = vpop.f32.mrb[0].mxu0
      %v7896 = vpop.f32.mrb[0].mxu0
      %v7897 = vadd.f32 0.0, %v7896
      %v7898 = vpop.f32.mrb[0].mxu0
      %7899 = vmatprep.mubr.bf16.mxu0 0
      %7900 = vmatmul.mubr.bf16.gmra.mrb[0].mxu0 %v7812
      %v7901 = vpop.f32.mrb[0].mxu0
      %v7902 = vadd.f32 0.0, %v7901
      %v7903 = vpop.f32.mrb[0].mxu0
      %v7904 = vpop.f32.mrb[0].mxu0
      %v7905 = vadd.f32 0.0, %v7904
      %v7906 = vpop.f32.mrb[0].mxu0
      %7907 = vmatprep.mubr.bf16.mxu0 0
      %7908 = vmatmul.mubr.bf16.gmra.mrb[0].mxu0 %v7815
      %v7909 = vpop.f32.mrb[0].mxu0
      %v7910 = vadd.f32 0.0, %v7909
      %v7911 = vpop.f32.mrb[0].mxu0
      %v7912 = vpop.f32.mrb[0].mxu0
      %v7913 = vadd.f32 0.0, %v7912
      %v7914 = vpop.f32.mrb[0].mxu0
      %7915 = vmatprep.mubr.bf16.mxu0 0
      %7916 = vmatmul.mubr.bf16.gmra.mrb[0].mxu0 %v7818
      %v7917 = vpop.f32.mrb[0].mxu0
      %v7918 = vadd.f32 0.0, %v7917
      %v7919 = vpop.f32.mrb[0].mxu0
      %v7920 = vpop.f32.mrb[0].mxu0
      %v7921 = vadd.f32 0.0, %v7920
      %v7922 = vpop.f32.mrb[0].mxu0
      %7923 = vmatprep.mubr.bf16.mxu0 0
      %7924 = vmatmul.mubr.bf16.gmra.mrb[0].mxu0 %v7821
      %v7925 = vpop.f32.mrb[0].mxu0
      %v7926 = vadd.f32 0.0, %v7925
      %v7927 = vpop.f32.mrb[0].mxu0
      %v7928 = vpop.f32.mrb[0].mxu0
      %v7929 = vadd.f32 0.0, %v7928
      %v7930 = vpop.f32.mrb[0].mxu0
      %7931 = vmatprep.mubr.bf16.mxu0 0
      %7932 = vmatmul.mubr.bf16.gmra.mrb[0].mxu0 %v7824
      %v7933 = vpop.f32.mrb[0].mxu0
      %v7934 = vadd.f32 0.0, %v7933
      %v7935 = vpop.f32.mrb[0].mxu0
      %v7936 = vpop.f32.mrb[0].mxu0
      %v7937 = vadd.f32 0.0, %v7936
      %v7938 = vpop.f32.mrb[0].mxu0
      %7939 = vmatprep.mubr.bf16.mxu0 0
      %7940 = vmatmul.mubr.bf16.gmra.mrb[0].mxu0 %v7827
      %v7941 = vpop.f32.mrb[0].mxu0
      %v7942 = vadd.f32 0.0, %v7941
      %v7943 = vpop.f32.mrb[0].mxu0
      %v7944 = vpop.f32.mrb[0].mxu0
      %v7945 = vadd.f32 0.0, %v7944
      %v7946 = vpop.f32.mrb[0].mxu0
      %7947 = vmatprep.mubr.bf16.mxu0 0
      %7948 = vmatmul.mubr.bf16.gmra.mrb[0].mxu0 %v7830
      %v7949 = vpop.f32.mrb[0].mxu0
      %v7950 = vadd.f32 0.0, %v7949
      %v7951 = vpop.f32.mrb[0].mxu0
      %v7952 = vpop.f32.mrb[0].mxu0
      %v7953 = vadd.f32 0.0, %v7952
      %v7954 = vpop.f32.mrb[0].mxu0
      %7955 = vdwg.mxu0
      %v7956 = vadd.f32 %v3803, %v7870
      %v7957 = vadd.f32 %v3806, %v7873
      %v7958 = vadd.f32 %v3811, %v7878
      %v7959 = vadd.f32 %v3814, %v7881
      %v7960 = vadd.f32 %v3819, %v7886
      %v7961 = vadd.f32 %v3822, %v7889
      %v7962 = vadd.f32 %v3827, %v7894
      %v7963 = vadd.f32 %v3830, %v7897
      %v7964 = vadd.f32 %v3835, %v7902
      %v7965 = vadd.f32 %v3838, %v7905
      %v7966 = vadd.f32 %v3843, %v7910
      %v7967 = vadd.f32 %v3846, %v7913
      %v7968 = vadd.f32 %v3851, %v7918
      %v7969 = vadd.f32 %v3854, %v7921
      %v7970 = vadd.f32 %v3859, %v7926
      %v7971 = vadd.f32 %v3862, %v7929
      %v7972 = vadd.f32 %v3867, %v7934
      %v7973 = vadd.f32 %v3870, %v7937
      %v7974 = vadd.f32 %v3875, %v7942
      %v7975 = vadd.f32 %v3878, %v7945
      %v7976 = vadd.f32 %v3883, %v7950
      %v7977 = vadd.f32 %v3886, %v7953
      %s7978 = scalar_lea.vmem %s2, 24
      %v7979 = vld [vmem:[%s7978] sm:$0xf]
      %v7980 = vld [vmem:[%s7978 + $0x4] sm:$0xf]
      %v7983 = vunpack.c.l.b16 %v7979
      %v7984 = vunpack.c.l.b16 %v7980
      %v7985 = vpack.c.b16 %v7984, %v7983
      %7987 = vmatprep.subr.bf16.mxu0 0
      %7988 = vmatpush1.bf16.msra.mxu0 %v7985
      %7989 = vmatprep.subr.bf16.mxu0 0
      %7990 = vmatpush1.bf16.msra.mxu0 0
      %7991 = vmatprep.subr.bf16.mxu0 0
      %7992 = vmatpush1.bf16.msra.mxu0 0
      %7993 = vmatprep.subr.bf16.mxu0 0
      %7994 = vmatpush1.bf16.msra.mxu0 0
      %7995 = vmatprep.subr.bf16.mxu0 0
      %7996 = vmatpush1.bf16.msra.mxu0 0
      %7997 = vmatprep.subr.bf16.mxu0 0
      %7998 = vmatpush1.bf16.msra.mxu0 0
      %7999 = vmatprep.subr.bf16.mxu0 0
      %8000 = vmatpush1.bf16.msra.mxu0 0
      %8001 = vmatprep.subr.bf16.mxu0 0
      %8002 = vmatpush1.bf16.msra.mxu0 0
      %8003 = vmatprep.subr.bf16.mxu0 0
      %8004 = vmatpush1.bf16.msra.mxu0 0
      %8005 = vmatprep.subr.bf16.mxu0 0
      %8006 = vmatpush1.bf16.msra.mxu0 0
      %8007 = vmatprep.subr.bf16.mxu0 0
      %8008 = vmatpush1.bf16.msra.mxu0 0
      %8009 = vmatprep.subr.bf16.mxu0 0
      %8010 = vmatpush1.bf16.msra.mxu0 0
      %8011 = vmatprep.subr.bf16.mxu0 0
      %8012 = vmatpush1.bf16.msra.mxu0 0
      %8013 = vmatprep.subr.bf16.mxu0 0
      %8014 = vmatpush1.bf16.msra.mxu0 0
      %8015 = vmatprep.subr.bf16.mxu0 0
      %8016 = vmatpush1.bf16.msra.mxu0 0
      %8017 = vmatprep.subr.bf16.mxu0 0
      %8018 = vmatpush1.bf16.msra.mxu0 0
      %8019 = vmatprep.mubr.bf16.mxu0 0
      %8020 = vmatmul.mubr.bf16.gmra.mrb[0].mxu0 %v608
      %v8021 = vpop.f32.mrb[0].mxu0
      %v8022 = vadd.f32 0.0, %v8021
      %v8023 = vpop.f32.mrb[0].mxu0
      %v8024 = vpop.f32.mrb[0].mxu0
      %v8025 = vadd.f32 0.0, %v8024
      %v8026 = vpop.f32.mrb[0].mxu0
      %8027 = vmatprep.mubr.bf16.mxu0 0
      %8028 = vmatmul.mubr.bf16.gmra.mrb[0].mxu0 %v611
      %v8029 = vpop.f32.mrb[0].mxu0
      %v8030 = vadd.f32 0.0, %v8029
      %v8031 = vpop.f32.mrb[0].mxu0
      %v8032 = vpop.f32.mrb[0].mxu0
      %v8033 = vadd.f32 0.0, %v8032
      %v8034 = vpop.f32.mrb[0].mxu0
      %8035 = vmatprep.mubr.bf16.mxu0 0
      %8036 = vmatmul.mubr.bf16.gmra.mrb[0].mxu0 %v614
      %v8037 = vpop.f32.mrb[0].mxu0
      %v8038 = vadd.f32 0.0, %v8037
      %v8039 = vpop.f32.mrb[0].mxu0
      %v8040 = vpop.f32.mrb[0].mxu0
      %v8041 = vadd.f32 0.0, %v8040
      %v8042 = vpop.f32.mrb[0].mxu0
      %8043 = vmatprep.mubr.bf16.mxu0 0
      %8044 = vmatmul.mubr.bf16.gmra.mrb[0].mxu0 %v617
      %v8045 = vpop.f32.mrb[0].mxu0
      %v8046 = vadd.f32 0.0, %v8045
      %v8047 = vpop.f32.mrb[0].mxu0
      %v8048 = vpop.f32.mrb[0].mxu0
      %v8049 = vadd.f32 0.0, %v8048
      %v8050 = vpop.f32.mrb[0].mxu0
      %8051 = vmatprep.mubr.bf16.mxu0 0
      %8052 = vmatmul.mubr.bf16.gmra.mrb[0].mxu0 %v620
      %v8053 = vpop.f32.mrb[0].mxu0
      %v8054 = vadd.f32 0.0, %v8053
      %v8055 = vpop.f32.mrb[0].mxu0
      %v8056 = vpop.f32.mrb[0].mxu0
      %v8057 = vadd.f32 0.0, %v8056
      %v8058 = vpop.f32.mrb[0].mxu0
      %8059 = vmatprep.mubr.bf16.mxu0 0
      %8060 = vmatmul.mubr.bf16.gmra.mrb[0].mxu0 %v623
      %v8061 = vpop.f32.mrb[0].mxu0
      %v8062 = vadd.f32 0.0, %v8061
      %v8063 = vpop.f32.mrb[0].mxu0
      %v8064 = vpop.f32.mrb[0].mxu0
      %v8065 = vadd.f32 0.0, %v8064
      %v8066 = vpop.f32.mrb[0].mxu0
      %8067 = vmatprep.mubr.bf16.mxu0 0
      %8068 = vmatmul.mubr.bf16.gmra.mrb[0].mxu0 %v626
      %v8069 = vpop.f32.mrb[0].mxu0
      %v8070 = vadd.f32 0.0, %v8069
      %v8071 = vpop.f32.mrb[0].mxu0
      %v8072 = vpop.f32.mrb[0].mxu0
      %v8073 = vadd.f32 0.0, %v8072
      %v8074 = vpop.f32.mrb[0].mxu0
      %8075 = vmatprep.mubr.bf16.mxu0 0
      %8076 = vmatmul.mubr.bf16.gmra.mrb[0].mxu0 %v629
      %v8077 = vpop.f32.mrb[0].mxu0
      %v8078 = vadd.f32 0.0, %v8077
      %v8079 = vpop.f32.mrb[0].mxu0
      %v8080 = vpop.f32.mrb[0].mxu0
      %v8081 = vadd.f32 0.0, %v8080
      %v8082 = vpop.f32.mrb[0].mxu0
      %8083 = vmatprep.mubr.bf16.mxu0 0
      %8084 = vmatmul.mubr.bf16.gmra.mrb[0].mxu0 %v632
      %v8085 = vpop.f32.mrb[0].mxu0
      %v8086 = vadd.f32 0.0, %v8085
      %v8087 = vpop.f32.mrb[0].mxu0
      %v8088 = vpop.f32.mrb[0].mxu0
      %v8089 = vadd.f32 0.0, %v8088
      %v8090 = vpop.f32.mrb[0].mxu0
      %8091 = vmatprep.mubr.bf16.mxu0 0
      %8092 = vmatmul.mubr.bf16.gmra.mrb[0].mxu0 %v635
      %v8093 = vpop.f32.mrb[0].mxu0
      %v8094 = vadd.f32 0.0, %v8093
      %v8095 = vpop.f32.mrb[0].mxu0
      %v8096 = vpop.f32.mrb[0].mxu0
      %v8097 = vadd.f32 0.0, %v8096
      %v8098 = vpop.f32.mrb[0].mxu0
      %8099 = vmatprep.mubr.bf16.mxu0 0
      %8100 = vmatmul.mubr.bf16.gmra.mrb[0].mxu0 %v638
      %v8101 = vpop.f32.mrb[0].mxu0
      %v8102 = vadd.f32 0.0, %v8101
      %v8103 = vpop.f32.mrb[0].mxu0
      %v8104 = vpop.f32.mrb[0].mxu0
      %v8105 = vadd.f32 0.0, %v8104
      %v8106 = vpop.f32.mrb[0].mxu0
      %8107 = vdwg.mxu0
      %v8108 = vmul.f32 %v8022, 0.5
      %v8109 = vmul.f32 %v8025, 0.5
      %v8110 = vmul.f32 %v8030, 0.5
      %v8111 = vmul.f32 %v8033, 0.5
      %v8112 = vmul.f32 %v8038, 0.5
      %v8113 = vmul.f32 %v8041, 0.5
      %v8114 = vmul.f32 %v8046, 0.5
      %v8115 = vmul.f32 %v8049, 0.5
      %v8116 = vmul.f32 %v8054, 0.5
      %v8117 = vmul.f32 %v8057, 0.5
      %v8118 = vmul.f32 %v8062, 0.5
      %v8119 = vmul.f32 %v8065, 0.5
      %v8120 = vmul.f32 %v8070, 0.5
      %v8121 = vmul.f32 %v8073, 0.5
      %v8122 = vmul.f32 %v8078, 0.5
      %v8123 = vmul.f32 %v8081, 0.5
      %v8124 = vmul.f32 %v8086, 0.5
      %v8125 = vmul.f32 %v8089, 0.5
      %v8126 = vmul.f32 %v8094, 0.5
      %v8127 = vmul.f32 %v8097, 0.5
      %v8128 = vmul.f32 %v8102, 0.5
      %v8129 = vmul.f32 %v8105, 0.5
      %v8130 = vpack.c.bf16 %v8109, %v8108
      %v8131 = vpack.c.bf16 %v8111, %v8110
      %v8132 = vpack.c.bf16 %v8113, %v8112
      %v8133 = vpack.c.bf16 %v8115, %v8114
      %v8134 = vpack.c.bf16 %v8117, %v8116
      %v8135 = vpack.c.bf16 %v8119, %v8118
      %v8136 = vpack.c.bf16 %v8121, %v8120
      %v8137 = vpack.c.bf16 %v8123, %v8122
      %v8138 = vpack.c.bf16 %v8125, %v8124
      %v8139 = vpack.c.bf16 %v8127, %v8126
      %v8140 = vpack.c.bf16 %v8129, %v8128
      %s8141 = scalar_lea.vmem %s3, 6
      %v8142 = vld [vmem:[%s8141] sm:$0x3]
      %v8144 = vsel %vm493, %v8142, 0
      %8146 = vmatprep.subr.bf16.mxu0 %v1775
      %8147 = vmatpush1.bf16.msra.mxu0 %v1774
      %8148 = vmatprep.subr.bf16.mxu0 0
      %8149 = vmatpush1.bf16.msra.mxu0 0
      %8150 = vmatprep.subr.bf16.mxu0 0
      %8151 = vmatpush1.bf16.msra.mxu0 0
      %8152 = vmatprep.subr.bf16.mxu0 0
      %8153 = vmatpush1.bf16.msra.mxu0 0
      %8154 = vmatprep.subr.bf16.mxu0 0
      %8155 = vmatpush1.bf16.msra.mxu0 0
      %8156 = vmatprep.subr.bf16.mxu0 0
      %8157 = vmatpush1.bf16.msra.mxu0 0
      %8158 = vmatprep.subr.bf16.mxu0 0
      %8159 = vmatpush1.bf16.msra.mxu0 0
      %8160 = vmatprep.subr.bf16.mxu0 0
      %8161 = vmatpush1.bf16.msra.mxu0 0
      %8162 = vmatprep.subr.bf16.mxu0 0
      %8163 = vmatpush1.bf16.msra.mxu0 0
      %8164 = vmatprep.subr.bf16.mxu0 0
      %8165 = vmatpush1.bf16.msra.mxu0 0
      %8166 = vmatprep.subr.bf16.mxu0 0
      %8167 = vmatpush1.bf16.msra.mxu0 0
      %8168 = vmatprep.subr.bf16.mxu0 0
      %8169 = vmatpush1.bf16.msra.mxu0 0
      %8170 = vmatprep.subr.bf16.mxu0 0
      %8171 = vmatpush1.bf16.msra.mxu0 0
      %8172 = vmatprep.subr.bf16.mxu0 0
      %8173 = vmatpush1.bf16.msra.mxu0 0
      %8174 = vmatprep.subr.bf16.mxu0 0
      %8175 = vmatpush1.bf16.msra.mxu0 0
      %8176 = vmatprep.subr.bf16.mxu0 0
      %8177 = vmatpush1.bf16.msra.mxu0 0
      %8178 = vmatprep.mubr.bf16.mxu0 0
      %8179 = vmatmul.mubr.bf16.gmra.mrb[0].mxu0 %v8144
      %v8180 = vpop.f32.mrb[0].mxu0
      %v8181 = vadd.f32 0.0, %v8180
      %v8182 = vpop.f32.mrb[0].mxu0
      %v8183 = vadd.f32 0.0, %v8182
      %v8184 = vpop.f32.mrb[0].mxu0
      %v8185 = vpop.f32.mrb[0].mxu0
      %8186 = vdwg.mxu0
      %v8187 = vpack.c.bf16 %v8181, %v8181
      %v8188 = vpack.c.bf16 %v8183, %v8183
      %s8189 = scalar_lea.vmem %s4, 6
      %v8190 = vld [vmem:[%s8189] sm:$0x3]
      %v8192 = vsel %vm493, %v8190, 0
      %8194 = vmatprep.subr.bf16.mxu0 %v1775
      %8195 = vmatpush1.bf16.msra.mxu0 %v1774
      %8196 = vmatprep.subr.bf16.mxu0 0
      %8197 = vmatpush1.bf16.msra.mxu0 0
      %8198 = vmatprep.subr.bf16.mxu0 0
      %8199 = vmatpush1.bf16.msra.mxu0 0
      %8200 = vmatprep.subr.bf16.mxu0 0
      %8201 = vmatpush1.bf16.msra.mxu0 0
      %8202 = vmatprep.subr.bf16.mxu0 0
      %8203 = vmatpush1.bf16.msra.mxu0 0
      %8204 = vmatprep.subr.bf16.mxu0 0
      %8205 = vmatpush1.bf16.msra.mxu0 0
      %8206 = vmatprep.subr.bf16.mxu0 0
      %8207 = vmatpush1.bf16.msra.mxu0 0
      %8208 = vmatprep.subr.bf16.mxu0 0
      %8209 = vmatpush1.bf16.msra.mxu0 0
      %8210 = vmatprep.subr.bf16.mxu0 0
      %8211 = vmatpush1.bf16.msra.mxu0 0
      %8212 = vmatprep.subr.bf16.mxu0 0
      %8213 = vmatpush1.bf16.msra.mxu0 0
      %8214 = vmatprep.subr.bf16.mxu0 0
      %8215 = vmatpush1.bf16.msra.mxu0 0
      %8216 = vmatprep.subr.bf16.mxu0 0
      %8217 = vmatpush1.bf16.msra.mxu0 0
      %8218 = vmatprep.subr.bf16.mxu0 0
      %8219 = vmatpush1.bf16.msra.mxu0 0
      %8220 = vmatprep.subr.bf16.mxu0 0
      %8221 = vmatpush1.bf16.msra.mxu0 0
      %8222 = vmatprep.subr.bf16.mxu0 0
      %8223 = vmatpush1.bf16.msra.mxu0 0
      %8224 = vmatprep.subr.bf16.mxu0 0
      %8225 = vmatpush1.bf16.msra.mxu0 0
      %8226 = vmatprep.mubr.bf16.mxu0 0
      %8227 = vmatmul.mubr.bf16.gmra.mrb[0].mxu0 %v8192
      %v8228 = vpop.f32.mrb[0].mxu0
      %v8229 = vadd.f32 0.0, %v8228
      %v8230 = vpop.f32.mrb[0].mxu0
      %v8231 = vadd.f32 0.0, %v8230
      %v8232 = vpop.f32.mrb[0].mxu0
      %v8233 = vpop.f32.mrb[0].mxu0
      %8234 = vdwg.mxu0
      %v8235 = vpack.c.bf16 %v8229, %v8229
      %v8236 = vpack.c.bf16 %v8231, %v8231
      %s8237 = scalar_lea.vmem %s5, 24
      %v8238 = vld [vmem:[%s8237] sm:$0xf]
      %v8239 = vld [vmem:[%s8237 + $0x4] sm:$0xf]
      %v8242 = vunpack.c.l.b16 %v8238
      %v8243 = vunpack.c.l.b16 %v8239
      %v8244 = vpack.c.b16 %v8243, %v8242
      %8246 = vmatprep.subr.bf16.mxu0 0
      %8247 = vmatpush1.bf16.msra.mxu0 %v8244
      %8248 = vmatprep.subr.bf16.mxu0 0
      %8249 = vmatpush1.bf16.msra.mxu0 0
      %8250 = vmatprep.subr.bf16.mxu0 0
      %8251 = vmatpush1.bf16.msra.mxu0 0
      %8252 = vmatprep.subr.bf16.mxu0 0
      %8253 = vmatpush1.bf16.msra.mxu0 0
      %8254 = vmatprep.subr.bf16.mxu0 0
      %8255 = vmatpush1.bf16.msra.mxu0 0
      %8256 = vmatprep.subr.bf16.mxu0 0
      %8257 = vmatpush1.bf16.msra.mxu0 0
      %8258 = vmatprep.subr.bf16.mxu0 0
      %8259 = vmatpush1.bf16.msra.mxu0 0
      %8260 = vmatprep.subr.bf16.mxu0 0
      %8261 = vmatpush1.bf16.msra.mxu0 0
      %8262 = vmatprep.subr.bf16.mxu0 0
      %8263 = vmatpush1.bf16.msra.mxu0 0
      %8264 = vmatprep.subr.bf16.mxu0 0
      %8265 = vmatpush1.bf16.msra.mxu0 0
      %8266 = vmatprep.subr.bf16.mxu0 0
      %8267 = vmatpush1.bf16.msra.mxu0 0
      %8268 = vmatprep.subr.bf16.mxu0 0
      %8269 = vmatpush1.bf16.msra.mxu0 0
      %8270 = vmatprep.subr.bf16.mxu0 0
      %8271 = vmatpush1.bf16.msra.mxu0 0
      %8272 = vmatprep.subr.bf16.mxu0 0
      %8273 = vmatpush1.bf16.msra.mxu0 0
      %8274 = vmatprep.subr.bf16.mxu0 0
      %8275 = vmatpush1.bf16.msra.mxu0 0
      %8276 = vmatprep.subr.bf16.mxu0 0
      %8277 = vmatpush1.bf16.msra.mxu0 0
      %8278 = vmatprep.mubr.bf16.mxu0 0
      %8279 = vmatmul.mubr.bf16.gmra.mrb[0].mxu0 %v608
      %v8280 = vpop.f32.mrb[0].mxu0
      %v8281 = vadd.f32 0.0, %v8280
      %v8282 = vpop.f32.mrb[0].mxu0
      %v8283 = vpop.f32.mrb[0].mxu0
      %v8284 = vadd.f32 0.0, %v8283
      %v8285 = vpop.f32.mrb[0].mxu0
      %8286 = vmatprep.mubr.bf16.mxu0 0
      %8287 = vmatmul.mubr.bf16.gmra.mrb[0].mxu0 %v611
      %v8288 = vpop.f32.mrb[0].mxu0
      %v8289 = vadd.f32 0.0, %v8288
      %v8290 = vpop.f32.mrb[0].mxu0
      %v8291 = vpop.f32.mrb[0].mxu0
      %v8292 = vadd.f32 0.0, %v8291
      %v8293 = vpop.f32.mrb[0].mxu0
      %8294 = vmatprep.mubr.bf16.mxu0 0
      %8295 = vmatmul.mubr.bf16.gmra.mrb[0].mxu0 %v614
      %v8296 = vpop.f32.mrb[0].mxu0
      %v8297 = vadd.f32 0.0, %v8296
      %v8298 = vpop.f32.mrb[0].mxu0
      %v8299 = vpop.f32.mrb[0].mxu0
      %v8300 = vadd.f32 0.0, %v8299
      %v8301 = vpop.f32.mrb[0].mxu0
      %8302 = vmatprep.mubr.bf16.mxu0 0
      %8303 = vmatmul.mubr.bf16.gmra.mrb[0].mxu0 %v617
      %v8304 = vpop.f32.mrb[0].mxu0
      %v8305 = vadd.f32 0.0, %v8304
      %v8306 = vpop.f32.mrb[0].mxu0
      %v8307 = vpop.f32.mrb[0].mxu0
      %v8308 = vadd.f32 0.0, %v8307
      %v8309 = vpop.f32.mrb[0].mxu0
      %8310 = vmatprep.mubr.bf16.mxu0 0
      %8311 = vmatmul.mubr.bf16.gmra.mrb[0].mxu0 %v620
      %v8312 = vpop.f32.mrb[0].mxu0
      %v8313 = vadd.f32 0.0, %v8312
      %v8314 = vpop.f32.mrb[0].mxu0
      %v8315 = vpop.f32.mrb[0].mxu0
      %v8316 = vadd.f32 0.0, %v8315
      %v8317 = vpop.f32.mrb[0].mxu0
      %8318 = vmatprep.mubr.bf16.mxu0 0
      %8319 = vmatmul.mubr.bf16.gmra.mrb[0].mxu0 %v623
      %v8320 = vpop.f32.mrb[0].mxu0
      %v8321 = vadd.f32 0.0, %v8320
      %v8322 = vpop.f32.mrb[0].mxu0
      %v8323 = vpop.f32.mrb[0].mxu0
      %v8324 = vadd.f32 0.0, %v8323
      %v8325 = vpop.f32.mrb[0].mxu0
      %8326 = vmatprep.mubr.bf16.mxu0 0
      %8327 = vmatmul.mubr.bf16.gmra.mrb[0].mxu0 %v626
      %v8328 = vpop.f32.mrb[0].mxu0
      %v8329 = vadd.f32 0.0, %v8328
      %v8330 = vpop.f32.mrb[0].mxu0
      %v8331 = vpop.f32.mrb[0].mxu0
      %v8332 = vadd.f32 0.0, %v8331
      %v8333 = vpop.f32.mrb[0].mxu0
      %8334 = vmatprep.mubr.bf16.mxu0 0
      %8335 = vmatmul.mubr.bf16.gmra.mrb[0].mxu0 %v629
      %v8336 = vpop.f32.mrb[0].mxu0
      %v8337 = vadd.f32 0.0, %v8336
      %v8338 = vpop.f32.mrb[0].mxu0
      %v8339 = vpop.f32.mrb[0].mxu0
      %v8340 = vadd.f32 0.0, %v8339
      %v8341 = vpop.f32.mrb[0].mxu0
      %8342 = vmatprep.mubr.bf16.mxu0 0
      %8343 = vmatmul.mubr.bf16.gmra.mrb[0].mxu0 %v632
      %v8344 = vpop.f32.mrb[0].mxu0
      %v8345 = vadd.f32 0.0, %v8344
      %v8346 = vpop.f32.mrb[0].mxu0
      %v8347 = vpop.f32.mrb[0].mxu0
      %v8348 = vadd.f32 0.0, %v8347
      %v8349 = vpop.f32.mrb[0].mxu0
      %8350 = vmatprep.mubr.bf16.mxu0 0
      %8351 = vmatmul.mubr.bf16.gmra.mrb[0].mxu0 %v635
      %v8352 = vpop.f32.mrb[0].mxu0
      %v8353 = vadd.f32 0.0, %v8352
      %v8354 = vpop.f32.mrb[0].mxu0
      %v8355 = vpop.f32.mrb[0].mxu0
      %v8356 = vadd.f32 0.0, %v8355
      %v8357 = vpop.f32.mrb[0].mxu0
      %8358 = vmatprep.mubr.bf16.mxu0 0
      %8359 = vmatmul.mubr.bf16.gmra.mrb[0].mxu0 %v638
      %v8360 = vpop.f32.mrb[0].mxu0
      %v8361 = vadd.f32 0.0, %v8360
      %v8362 = vpop.f32.mrb[0].mxu0
      %v8363 = vpop.f32.mrb[0].mxu0
      %v8364 = vadd.f32 0.0, %v8363
      %v8365 = vpop.f32.mrb[0].mxu0
      %8366 = vdwg.mxu0
      %v8367 = vpack.c.bf16 %v8284, %v8281
      %v8368 = vpack.c.bf16 %v8292, %v8289
      %v8369 = vpack.c.bf16 %v8300, %v8297
      %v8370 = vpack.c.bf16 %v8308, %v8305
      %v8371 = vpack.c.bf16 %v8316, %v8313
      %v8372 = vpack.c.bf16 %v8324, %v8321
      %v8373 = vpack.c.bf16 %v8332, %v8329
      %v8374 = vpack.c.bf16 %v8340, %v8337
      %v8375 = vpack.c.bf16 %v8348, %v8345
      %v8376 = vpack.c.bf16 %v8356, %v8353
      %v8377 = vpack.c.bf16 %v8364, %v8361
      %s8378 = scalar_lea.vmem %s9, 528
      %v8379 = vld [vmem:[%s8378] sm:$0xff]
      %v8380 = vld [vmem:[%s8378 + $0x8] sm:$0xff]
      %v8381 = vld [vmem:[%s8378 + $0x10] sm:$0xff]
      %v8382 = vld [vmem:[%s8378 + $0x18] sm:$0xff]
      %v8383 = vld [vmem:[%s8378 + $0x20] sm:$0xff]
      %v8384 = vld [vmem:[%s8378 + $0x28] sm:$0xff]
      %v8385 = vld [vmem:[%s8378 + $0x30] sm:$0xff]
      %v8386 = vld [vmem:[%s8378 + $0x38] sm:$0xff]
      %v8387 = vld [vmem:[%s8378 + $0x40] sm:$0xff]
      %v8388 = vld [vmem:[%s8378 + $0x48] sm:$0xff]
      %v8389 = vld [vmem:[%s8378 + $0x50] sm:$0xff]
      %v8390 = vld [vmem:[%s8378 + $0x58] sm:$0xff]
      %v8391 = vld [vmem:[%s8378 + $0x60] sm:$0xff]
      %v8392 = vld [vmem:[%s8378 + $0x68] sm:$0xff]
      %v8393 = vld [vmem:[%s8378 + $0x70] sm:$0xff]
      %v8394 = vld [vmem:[%s8378 + $0x78] sm:$0xff]
      %v8395 = vld [vmem:[%s8378 + $0x80] sm:$0xff]
      %v8396 = vld [vmem:[%s8378 + $0x88] sm:$0xff]
      %v8397 = vld [vmem:[%s8378 + $0x90] sm:$0xff]
      %v8398 = vld [vmem:[%s8378 + $0x98] sm:$0xff]
      %v8399 = vld [vmem:[%s8378 + $0xa0] sm:$0xff]
      %v8400 = vld [vmem:[%s8378 + $0xa8] sm:$0x11]
      %v8401 = vunpack.c.l.bf16 %v8379
      %v8402 = vunpack.c.h.bf16 %v8379
      %v8403 = vunpack.c.l.bf16 %v8380
      %v8404 = vunpack.c.h.bf16 %v8380
      %v8405 = vunpack.c.l.bf16 %v8381
      %v8406 = vunpack.c.h.bf16 %v8381
      %v8407 = vunpack.c.l.bf16 %v8382
      %v8408 = vunpack.c.h.bf16 %v8382
      %v8409 = vunpack.c.l.bf16 %v8383
      %v8410 = vunpack.c.h.bf16 %v8383
      %v8411 = vunpack.c.l.bf16 %v8384
      %v8412 = vunpack.c.h.bf16 %v8384
      %v8413 = vunpack.c.l.bf16 %v8385
      %v8414 = vunpack.c.h.bf16 %v8385
      %v8415 = vunpack.c.l.bf16 %v8386
      %v8416 = vunpack.c.h.bf16 %v8386
      %v8417 = vunpack.c.l.bf16 %v8387
      %v8418 = vunpack.c.h.bf16 %v8387
      %v8419 = vunpack.c.l.bf16 %v8388
      %v8420 = vunpack.c.h.bf16 %v8388
      %v8421 = vunpack.c.l.bf16 %v8389
      %v8422 = vunpack.c.h.bf16 %v8389
      %v8423 = vunpack.c.l.bf16 %v8390
      %v8424 = vunpack.c.h.bf16 %v8390
      %v8425 = vunpack.c.l.bf16 %v8391
      %v8426 = vunpack.c.h.bf16 %v8391
      %v8427 = vunpack.c.l.bf16 %v8392
      %v8428 = vunpack.c.h.bf16 %v8392
      %v8429 = vunpack.c.l.bf16 %v8393
      %v8430 = vunpack.c.h.bf16 %v8393
      %v8431 = vunpack.c.l.bf16 %v8394
      %v8432 = vunpack.c.h.bf16 %v8394
      %v8433 = vunpack.c.l.bf16 %v8395
      %v8434 = vunpack.c.h.bf16 %v8395
      %v8435 = vunpack.c.l.bf16 %v8396
      %v8436 = vunpack.c.h.bf16 %v8396
      %v8437 = vunpack.c.l.bf16 %v8397
      %v8438 = vunpack.c.h.bf16 %v8397
      %v8439 = vunpack.c.l.bf16 %v8398
      %v8440 = vunpack.c.h.bf16 %v8398
      %v8441 = vunpack.c.l.bf16 %v8399
      %v8442 = vunpack.c.h.bf16 %v8399
      %v8443 = vunpack.c.l.bf16 %v8400
      %v8444 = vunpack.c.h.bf16 %v8400
      %v8446 = vsel %vm2077, %v8130, 0
      %v8449 = vsel %vm2077, %v8131, 0
      %v8452 = vsel %vm2077, %v8132, 0
      %v8455 = vsel %vm2077, %v8133, 0
      %v8458 = vsel %vm2077, %v8134, 0
      %v8461 = vsel %vm2077, %v8135, 0
      %v8464 = vsel %vm2077, %v8136, 0
      %v8467 = vsel %vm2077, %v8137, 0
      %v8470 = vsel %vm2077, %v8138, 0
      %v8473 = vsel %vm2077, %v8139, 0
      %v8476 = vsel %vm2077, %v8140, 0
      %v8479 = vsel %vm2111, %v8187, 0
      %v8482 = vsel %vm2111, %v8188, 0
      %8484 = vmatprep.subr.bf16.mxu0 %v8482
      %8485 = vmatpush1.bf16.msra.mxu0 %v8479
      %8486 = vmatprep.subr.bf16.mxu0 0
      %8487 = vmatpush1.bf16.msra.mxu0 0
      %8488 = vmatprep.subr.bf16.mxu0 0
      %8489 = vmatpush1.bf16.msra.mxu0 0
      %8490 = vmatprep.subr.bf16.mxu0 0
      %8491 = vmatpush1.bf16.msra.mxu0 0
      %8492 = vmatprep.subr.bf16.mxu0 0
      %8493 = vmatpush1.bf16.msra.mxu0 0
      %8494 = vmatprep.subr.bf16.mxu0 0
      %8495 = vmatpush1.bf16.msra.mxu0 0
      %8496 = vmatprep.subr.bf16.mxu0 0
      %8497 = vmatpush1.bf16.msra.mxu0 0
      %8498 = vmatprep.subr.bf16.mxu0 0
      %8499 = vmatpush1.bf16.msra.mxu0 0
      %8500 = vmatprep.subr.bf16.mxu0 0
      %8501 = vmatpush1.bf16.msra.mxu0 0
      %8502 = vmatprep.subr.bf16.mxu0 0
      %8503 = vmatpush1.bf16.msra.mxu0 0
      %8504 = vmatprep.subr.bf16.mxu0 0
      %8505 = vmatpush1.bf16.msra.mxu0 0
      %8506 = vmatprep.subr.bf16.mxu0 0
      %8507 = vmatpush1.bf16.msra.mxu0 0
      %8508 = vmatprep.subr.bf16.mxu0 0
      %8509 = vmatpush1.bf16.msra.mxu0 0
      %8510 = vmatprep.subr.bf16.mxu0 0
      %8511 = vmatpush1.bf16.msra.mxu0 0
      %8512 = vmatprep.subr.bf16.mxu0 0
      %8513 = vmatpush1.bf16.msra.mxu0 0
      %8514 = vmatprep.subr.bf16.mxu0 0
      %8515 = vmatpush1.bf16.msra.mxu0 0
      %8516 = vmatprep.mubr.bf16.mxu0 0
      %8517 = vmatmul.mubr.bf16.gmra.mrb[0].mxu0 %v8446
      %v8518 = vpop.f32.mrb[0].mxu0
      %v8519 = vadd.f32 %v8401, %v8518
      %v8520 = vpop.f32.mrb[0].mxu0
      %v8521 = vadd.f32 %v8402, %v8520
      %v8522 = vpop.f32.mrb[0].mxu0
      %v8523 = vadd.f32 %v8403, %v8522
      %v8524 = vpop.f32.mrb[0].mxu0
      %v8525 = vadd.f32 %v8404, %v8524
      %8526 = vmatprep.mubr.bf16.mxu0 0
      %8527 = vmatmul.mubr.bf16.gmra.mrb[0].mxu0 %v8449
      %v8528 = vpop.f32.mrb[0].mxu0
      %v8529 = vadd.f32 %v8405, %v8528
      %v8530 = vpop.f32.mrb[0].mxu0
      %v8531 = vadd.f32 %v8406, %v8530
      %v8532 = vpop.f32.mrb[0].mxu0
      %v8533 = vadd.f32 %v8407, %v8532
      %v8534 = vpop.f32.mrb[0].mxu0
      %v8535 = vadd.f32 %v8408, %v8534
      %8536 = vmatprep.mubr.bf16.mxu0 0
      %8537 = vmatmul.mubr.bf16.gmra.mrb[0].mxu0 %v8452
      %v8538 = vpop.f32.mrb[0].mxu0
      %v8539 = vadd.f32 %v8409, %v8538
      %v8540 = vpop.f32.mrb[0].mxu0
      %v8541 = vadd.f32 %v8410, %v8540
      %v8542 = vpop.f32.mrb[0].mxu0
      %v8543 = vadd.f32 %v8411, %v8542
      %v8544 = vpop.f32.mrb[0].mxu0
      %v8545 = vadd.f32 %v8412, %v8544
      %8546 = vmatprep.mubr.bf16.mxu0 0
      %8547 = vmatmul.mubr.bf16.gmra.mrb[0].mxu0 %v8455
      %v8548 = vpop.f32.mrb[0].mxu0
      %v8549 = vadd.f32 %v8413, %v8548
      %v8550 = vpop.f32.mrb[0].mxu0
      %v8551 = vadd.f32 %v8414, %v8550
      %v8552 = vpop.f32.mrb[0].mxu0
      %v8553 = vadd.f32 %v8415, %v8552
      %v8554 = vpop.f32.mrb[0].mxu0
      %v8555 = vadd.f32 %v8416, %v8554
      %8556 = vmatprep.mubr.bf16.mxu0 0
      %8557 = vmatmul.mubr.bf16.gmra.mrb[0].mxu0 %v8458
      %v8558 = vpop.f32.mrb[0].mxu0
      %v8559 = vadd.f32 %v8417, %v8558
      %v8560 = vpop.f32.mrb[0].mxu0
      %v8561 = vadd.f32 %v8418, %v8560
      %v8562 = vpop.f32.mrb[0].mxu0
      %v8563 = vadd.f32 %v8419, %v8562
      %v8564 = vpop.f32.mrb[0].mxu0
      %v8565 = vadd.f32 %v8420, %v8564
      %8566 = vmatprep.mubr.bf16.mxu0 0
      %8567 = vmatmul.mubr.bf16.gmra.mrb[0].mxu0 %v8461
      %v8568 = vpop.f32.mrb[0].mxu0
      %v8569 = vadd.f32 %v8421, %v8568
      %v8570 = vpop.f32.mrb[0].mxu0
      %v8571 = vadd.f32 %v8422, %v8570
      %v8572 = vpop.f32.mrb[0].mxu0
      %v8573 = vadd.f32 %v8423, %v8572
      %v8574 = vpop.f32.mrb[0].mxu0
      %v8575 = vadd.f32 %v8424, %v8574
      %8576 = vmatprep.mubr.bf16.mxu0 0
      %8577 = vmatmul.mubr.bf16.gmra.mrb[0].mxu0 %v8464
      %v8578 = vpop.f32.mrb[0].mxu0
      %v8579 = vadd.f32 %v8425, %v8578
      %v8580 = vpop.f32.mrb[0].mxu0
      %v8581 = vadd.f32 %v8426, %v8580
      %v8582 = vpop.f32.mrb[0].mxu0
      %v8583 = vadd.f32 %v8427, %v8582
      %v8584 = vpop.f32.mrb[0].mxu0
      %v8585 = vadd.f32 %v8428, %v8584
      %8586 = vmatprep.mubr.bf16.mxu0 0
      %8587 = vmatmul.mubr.bf16.gmra.mrb[0].mxu0 %v8467
      %v8588 = vpop.f32.mrb[0].mxu0
      %v8589 = vadd.f32 %v8429, %v8588
      %v8590 = vpop.f32.mrb[0].mxu0
      %v8591 = vadd.f32 %v8430, %v8590
      %v8592 = vpop.f32.mrb[0].mxu0
      %v8593 = vadd.f32 %v8431, %v8592
      %v8594 = vpop.f32.mrb[0].mxu0
      %v8595 = vadd.f32 %v8432, %v8594
      %8596 = vmatprep.mubr.bf16.mxu0 0
      %8597 = vmatmul.mubr.bf16.gmra.mrb[0].mxu0 %v8470
      %v8598 = vpop.f32.mrb[0].mxu0
      %v8599 = vadd.f32 %v8433, %v8598
      %v8600 = vpop.f32.mrb[0].mxu0
      %v8601 = vadd.f32 %v8434, %v8600
      %v8602 = vpop.f32.mrb[0].mxu0
      %v8603 = vadd.f32 %v8435, %v8602
      %v8604 = vpop.f32.mrb[0].mxu0
      %v8605 = vadd.f32 %v8436, %v8604
      %8606 = vmatprep.mubr.bf16.mxu0 0
      %8607 = vmatmul.mubr.bf16.gmra.mrb[0].mxu0 %v8473
      %v8608 = vpop.f32.mrb[0].mxu0
      %v8609 = vadd.f32 %v8437, %v8608
      %v8610 = vpop.f32.mrb[0].mxu0
      %v8611 = vadd.f32 %v8438, %v8610
      %v8612 = vpop.f32.mrb[0].mxu0
      %v8613 = vadd.f32 %v8439, %v8612
      %v8614 = vpop.f32.mrb[0].mxu0
      %v8615 = vadd.f32 %v8440, %v8614
      %8616 = vmatprep.mubr.bf16.mxu0 0
      %8617 = vmatmul.mubr.bf16.gmra.mrb[0].mxu0 %v8476
      %v8618 = vpop.f32.mrb[0].mxu0
      %v8619 = vadd.f32 %v8441, %v8618
      %v8620 = vpop.f32.mrb[0].mxu0
      %v8621 = vadd.f32 %v8442, %v8620
      %v8622 = vpop.f32.mrb[0].mxu0
      %v8623 = vadd.f32 %v8443, %v8622
      %v8624 = vpop.f32.mrb[0].mxu0
      %v8625 = vadd.f32 %v8444, %v8624
      %8626 = vdwg.mxu0
      %v8627 = vsel %vm2261, %v8521, -inf
      %v8628 = vmax.f32 %v8519, %v8627
      %8629 = vmax.xlane.f32.xlu0 %v8628
      %v8630 = vpop.xlane.xlu0 %8629
      %v8631 = vsel %vm2261, %v8525, -inf
      %v8632 = vmax.f32 %v8523, %v8631
      %8633 = vmax.xlane.f32.xlu0 %v8632
      %v8634 = vpop.xlane.xlu0 %8633
      %v8635 = vsel %vm2261, %v8531, -inf
      %v8636 = vmax.f32 %v8529, %v8635
      %8637 = vmax.xlane.f32.xlu0 %v8636
      %v8638 = vpop.xlane.xlu0 %8637
      %v8639 = vsel %vm2261, %v8535, -inf
      %v8640 = vmax.f32 %v8533, %v8639
      %8641 = vmax.xlane.f32.xlu0 %v8640
      %v8642 = vpop.xlane.xlu0 %8641
      %v8643 = vsel %vm2261, %v8541, -inf
      %v8644 = vmax.f32 %v8539, %v8643
      %8645 = vmax.xlane.f32.xlu0 %v8644
      %v8646 = vpop.xlane.xlu0 %8645
      %v8647 = vsel %vm2261, %v8545, -inf
      %v8648 = vmax.f32 %v8543, %v8647
      %8649 = vmax.xlane.f32.xlu0 %v8648
      %v8650 = vpop.xlane.xlu0 %8649
      %v8651 = vsel %vm2261, %v8551, -inf
      %v8652 = vmax.f32 %v8549, %v8651
      %8653 = vmax.xlane.f32.xlu0 %v8652
      %v8654 = vpop.xlane.xlu0 %8653
      %v8655 = vsel %vm2261, %v8555, -inf
      %v8656 = vmax.f32 %v8553, %v8655
      %8657 = vmax.xlane.f32.xlu0 %v8656
      %v8658 = vpop.xlane.xlu0 %8657
      %v8659 = vsel %vm2261, %v8561, -inf
      %v8660 = vmax.f32 %v8559, %v8659
      %8661 = vmax.xlane.f32.xlu0 %v8660
      %v8662 = vpop.xlane.xlu0 %8661
      %v8663 = vsel %vm2261, %v8565, -inf
      %v8664 = vmax.f32 %v8563, %v8663
      %8665 = vmax.xlane.f32.xlu0 %v8664
      %v8666 = vpop.xlane.xlu0 %8665
      %v8667 = vsel %vm2261, %v8571, -inf
      %v8668 = vmax.f32 %v8569, %v8667
      %8669 = vmax.xlane.f32.xlu0 %v8668
      %v8670 = vpop.xlane.xlu0 %8669
      %v8671 = vsel %vm2261, %v8575, -inf
      %v8672 = vmax.f32 %v8573, %v8671
      %8673 = vmax.xlane.f32.xlu0 %v8672
      %v8674 = vpop.xlane.xlu0 %8673
      %v8675 = vsel %vm2261, %v8581, -inf
      %v8676 = vmax.f32 %v8579, %v8675
      %8677 = vmax.xlane.f32.xlu0 %v8676
      %v8678 = vpop.xlane.xlu0 %8677
      %v8679 = vsel %vm2261, %v8585, -inf
      %v8680 = vmax.f32 %v8583, %v8679
      %8681 = vmax.xlane.f32.xlu0 %v8680
      %v8682 = vpop.xlane.xlu0 %8681
      %v8683 = vsel %vm2261, %v8591, -inf
      %v8684 = vmax.f32 %v8589, %v8683
      %8685 = vmax.xlane.f32.xlu0 %v8684
      %v8686 = vpop.xlane.xlu0 %8685
      %v8687 = vsel %vm2261, %v8595, -inf
      %v8688 = vmax.f32 %v8593, %v8687
      %8689 = vmax.xlane.f32.xlu0 %v8688
      %v8690 = vpop.xlane.xlu0 %8689
      %v8691 = vsel %vm2261, %v8601, -inf
      %v8692 = vmax.f32 %v8599, %v8691
      %8693 = vmax.xlane.f32.xlu0 %v8692
      %v8694 = vpop.xlane.xlu0 %8693
      %v8695 = vsel %vm2261, %v8605, -inf
      %v8696 = vmax.f32 %v8603, %v8695
      %8697 = vmax.xlane.f32.xlu0 %v8696
      %v8698 = vpop.xlane.xlu0 %8697
      %v8699 = vsel %vm2261, %v8611, -inf
      %v8700 = vmax.f32 %v8609, %v8699
      %8701 = vmax.xlane.f32.xlu0 %v8700
      %v8702 = vpop.xlane.xlu0 %8701
      %v8703 = vsel %vm2261, %v8615, -inf
      %v8704 = vmax.f32 %v8613, %v8703
      %8705 = vmax.xlane.f32.xlu0 %v8704
      %v8706 = vpop.xlane.xlu0 %8705
      %v8707 = vsel %vm2261, %v8621, -inf
      %v8708 = vmax.f32 %v8619, %v8707
      %8709 = vmax.xlane.f32.xlu0 %v8708
      %v8710 = vpop.xlane.xlu0 %8709
      %v8711 = vsel %vm2346, %v8623, -inf
      %v8712 = vsel %vm2348, %v8625, -inf
      %v8713 = vmax.f32 %v8711, %v8712
      %8714 = vmax.xlane.f32.xlu0 %v8713
      %v8715 = vpop.xlane.xlu0 %8714
      %v8716 = vsub.f32 %v8519, %v8630
      %v8717 = vsub.f32 %v8521, %v8630
      %v8718 = vsub.f32 %v8523, %v8634
      %v8719 = vsub.f32 %v8525, %v8634
      %v8720 = vsub.f32 %v8529, %v8638
      %v8721 = vsub.f32 %v8531, %v8638
      %v8722 = vsub.f32 %v8533, %v8642
      %v8723 = vsub.f32 %v8535, %v8642
      %v8724 = vsub.f32 %v8539, %v8646
      %v8725 = vsub.f32 %v8541, %v8646
      %v8726 = vsub.f32 %v8543, %v8650
      %v8727 = vsub.f32 %v8545, %v8650
      %v8728 = vsub.f32 %v8549, %v8654
      %v8729 = vsub.f32 %v8551, %v8654
      %v8730 = vsub.f32 %v8553, %v8658
      %v8731 = vsub.f32 %v8555, %v8658
      %v8732 = vsub.f32 %v8559, %v8662
      %v8733 = vsub.f32 %v8561, %v8662
      %v8734 = vsub.f32 %v8563, %v8666
      %v8735 = vsub.f32 %v8565, %v8666
      %v8736 = vsub.f32 %v8569, %v8670
      %v8737 = vsub.f32 %v8571, %v8670
      %v8738 = vsub.f32 %v8573, %v8674
      %v8739 = vsub.f32 %v8575, %v8674
      %v8740 = vsub.f32 %v8579, %v8678
      %v8741 = vsub.f32 %v8581, %v8678
      %v8742 = vsub.f32 %v8583, %v8682
      %v8743 = vsub.f32 %v8585, %v8682
      %v8744 = vsub.f32 %v8589, %v8686
      %v8745 = vsub.f32 %v8591, %v8686
      %v8746 = vsub.f32 %v8593, %v8690
      %v8747 = vsub.f32 %v8595, %v8690
      %v8748 = vsub.f32 %v8599, %v8694
      %v8749 = vsub.f32 %v8601, %v8694
      %v8750 = vsub.f32 %v8603, %v8698
      %v8751 = vsub.f32 %v8605, %v8698
      %v8752 = vsub.f32 %v8609, %v8702
      %v8753 = vsub.f32 %v8611, %v8702
      %v8754 = vsub.f32 %v8613, %v8706
      %v8755 = vsub.f32 %v8615, %v8706
      %v8756 = vsub.f32 %v8619, %v8710
      %v8757 = vsub.f32 %v8621, %v8710
      %v8758 = vsub.f32 %v8623, %v8715
      %v8759 = vsub.f32 %v8625, %v8715
      %v8760 = vmul.f32 %v8716, 1.442695
      %v8761 = vpow.pop %v8760
      %v8762 = vmul.f32 %v8717, 1.442695
      %v8763 = vpow.pop %v8762
      %v8764 = vmul.f32 %v8718, 1.442695
      %v8765 = vpow.pop %v8764
      %v8766 = vmul.f32 %v8719, 1.442695
      %v8767 = vpow.pop %v8766
      %v8768 = vmul.f32 %v8720, 1.442695
      %v8769 = vpow.pop %v8768
      %v8770 = vmul.f32 %v8721, 1.442695
      %v8771 = vpow.pop %v8770
      %v8772 = vmul.f32 %v8722, 1.442695
      %v8773 = vpow.pop %v8772
      %v8774 = vmul.f32 %v8723, 1.442695
      %v8775 = vpow.pop %v8774
      %v8776 = vmul.f32 %v8724, 1.442695
      %v8777 = vpow.pop %v8776
      %v8778 = vmul.f32 %v8725, 1.442695
      %v8779 = vpow.pop %v8778
      %v8780 = vmul.f32 %v8726, 1.442695
      %v8781 = vpow.pop %v8780
      %v8782 = vmul.f32 %v8727, 1.442695
      %v8783 = vpow.pop %v8782
      %v8784 = vmul.f32 %v8728, 1.442695
      %v8785 = vpow.pop %v8784
      %v8786 = vmul.f32 %v8729, 1.442695
      %v8787 = vpow.pop %v8786
      %v8788 = vmul.f32 %v8730, 1.442695
      %v8789 = vpow.pop %v8788
      %v8790 = vmul.f32 %v8731, 1.442695
      %v8791 = vpow.pop %v8790
      %v8792 = vmul.f32 %v8732, 1.442695
      %v8793 = vpow.pop %v8792
      %v8794 = vmul.f32 %v8733, 1.442695
      %v8795 = vpow.pop %v8794
      %v8796 = vmul.f32 %v8734, 1.442695
      %v8797 = vpow.pop %v8796
      %v8798 = vmul.f32 %v8735, 1.442695
      %v8799 = vpow.pop %v8798
      %v8800 = vmul.f32 %v8736, 1.442695
      %v8801 = vpow.pop %v8800
      %v8802 = vmul.f32 %v8737, 1.442695
      %v8803 = vpow.pop %v8802
      %v8804 = vmul.f32 %v8738, 1.442695
      %v8805 = vpow.pop %v8804
      %v8806 = vmul.f32 %v8739, 1.442695
      %v8807 = vpow.pop %v8806
      %v8808 = vmul.f32 %v8740, 1.442695
      %v8809 = vpow.pop %v8808
      %v8810 = vmul.f32 %v8741, 1.442695
      %v8811 = vpow.pop %v8810
      %v8812 = vmul.f32 %v8742, 1.442695
      %v8813 = vpow.pop %v8812
      %v8814 = vmul.f32 %v8743, 1.442695
      %v8815 = vpow.pop %v8814
      %v8816 = vmul.f32 %v8744, 1.442695
      %v8817 = vpow.pop %v8816
      %v8818 = vmul.f32 %v8745, 1.442695
      %v8819 = vpow.pop %v8818
      %v8820 = vmul.f32 %v8746, 1.442695
      %v8821 = vpow.pop %v8820
      %v8822 = vmul.f32 %v8747, 1.442695
      %v8823 = vpow.pop %v8822
      %v8824 = vmul.f32 %v8748, 1.442695
      %v8825 = vpow.pop %v8824
      %v8826 = vmul.f32 %v8749, 1.442695
      %v8827 = vpow.pop %v8826
      %v8828 = vmul.f32 %v8750, 1.442695
      %v8829 = vpow.pop %v8828
      %v8830 = vmul.f32 %v8751, 1.442695
      %v8831 = vpow.pop %v8830
      %v8832 = vmul.f32 %v8752, 1.442695
      %v8833 = vpow.pop %v8832
      %v8834 = vmul.f32 %v8753, 1.442695
      %v8835 = vpow.pop %v8834
      %v8836 = vmul.f32 %v8754, 1.442695
      %v8837 = vpow.pop %v8836
      %v8838 = vmul.f32 %v8755, 1.442695
      %v8839 = vpow.pop %v8838
      %v8840 = vmul.f32 %v8756, 1.442695
      %v8841 = vpow.pop %v8840
      %v8842 = vmul.f32 %v8757, 1.442695
      %v8843 = vpow.pop %v8842
      %v8844 = vmul.f32 %v8758, 1.442695
      %v8845 = vpow.pop %v8844
      %v8846 = vmul.f32 %v8759, 1.442695
      %v8847 = vpow.pop %v8846
      %v8848 = vsel %vm2261, %v8763, 0.0
      %v8849 = vadd.f32 %v8761, %v8848
      %8850 = vadd.xlane.f32.xlu0 %v8849
      %v8851 = vpop.xlane.xlu0 %8850
      %v8852 = vsel %vm2261, %v8767, 0.0
      %v8853 = vadd.f32 %v8765, %v8852
      %8854 = vadd.xlane.f32.xlu0 %v8853
      %v8855 = vpop.xlane.xlu0 %8854
      %v8856 = vsel %vm2261, %v8771, 0.0
      %v8857 = vadd.f32 %v8769, %v8856
      %8858 = vadd.xlane.f32.xlu0 %v8857
      %v8859 = vpop.xlane.xlu0 %8858
      %v8860 = vsel %vm2261, %v8775, 0.0
      %v8861 = vadd.f32 %v8773, %v8860
      %8862 = vadd.xlane.f32.xlu0 %v8861
      %v8863 = vpop.xlane.xlu0 %8862
      %v8864 = vsel %vm2261, %v8779, 0.0
      %v8865 = vadd.f32 %v8777, %v8864
      %8866 = vadd.xlane.f32.xlu0 %v8865
      %v8867 = vpop.xlane.xlu0 %8866
      %v8868 = vsel %vm2261, %v8783, 0.0
      %v8869 = vadd.f32 %v8781, %v8868
      %8870 = vadd.xlane.f32.xlu0 %v8869
      %v8871 = vpop.xlane.xlu0 %8870
      %v8872 = vsel %vm2261, %v8787, 0.0
      %v8873 = vadd.f32 %v8785, %v8872
      %8874 = vadd.xlane.f32.xlu0 %v8873
      %v8875 = vpop.xlane.xlu0 %8874
      %v8876 = vsel %vm2261, %v8791, 0.0
      %v8877 = vadd.f32 %v8789, %v8876
      %8878 = vadd.xlane.f32.xlu0 %v8877
      %v8879 = vpop.xlane.xlu0 %8878
      %v8880 = vsel %vm2261, %v8795, 0.0
      %v8881 = vadd.f32 %v8793, %v8880
      %8882 = vadd.xlane.f32.xlu0 %v8881
      %v8883 = vpop.xlane.xlu0 %8882
      %v8884 = vsel %vm2261, %v8799, 0.0
      %v8885 = vadd.f32 %v8797, %v8884
      %8886 = vadd.xlane.f32.xlu0 %v8885
      %v8887 = vpop.xlane.xlu0 %8886
      %v8888 = vsel %vm2261, %v8803, 0.0
      %v8889 = vadd.f32 %v8801, %v8888
      %8890 = vadd.xlane.f32.xlu0 %v8889
      %v8891 = vpop.xlane.xlu0 %8890
      %v8892 = vsel %vm2261, %v8807, 0.0
      %v8893 = vadd.f32 %v8805, %v8892
      %8894 = vadd.xlane.f32.xlu0 %v8893
      %v8895 = vpop.xlane.xlu0 %8894
      %v8896 = vsel %vm2261, %v8811, 0.0
      %v8897 = vadd.f32 %v8809, %v8896
      %8898 = vadd.xlane.f32.xlu0 %v8897
      %v8899 = vpop.xlane.xlu0 %8898
      %v8900 = vsel %vm2261, %v8815, 0.0
      %v8901 = vadd.f32 %v8813, %v8900
      %8902 = vadd.xlane.f32.xlu0 %v8901
      %v8903 = vpop.xlane.xlu0 %8902
      %v8904 = vsel %vm2261, %v8819, 0.0
      %v8905 = vadd.f32 %v8817, %v8904
      %8906 = vadd.xlane.f32.xlu0 %v8905
      %v8907 = vpop.xlane.xlu0 %8906
      %v8908 = vsel %vm2261, %v8823, 0.0
      %v8909 = vadd.f32 %v8821, %v8908
      %8910 = vadd.xlane.f32.xlu0 %v8909
      %v8911 = vpop.xlane.xlu0 %8910
      %v8912 = vsel %vm2261, %v8827, 0.0
      %v8913 = vadd.f32 %v8825, %v8912
      %8914 = vadd.xlane.f32.xlu0 %v8913
      %v8915 = vpop.xlane.xlu0 %8914
      %v8916 = vsel %vm2261, %v8831, 0.0
      %v8917 = vadd.f32 %v8829, %v8916
      %8918 = vadd.xlane.f32.xlu0 %v8917
      %v8919 = vpop.xlane.xlu0 %8918
      %v8920 = vsel %vm2261, %v8835, 0.0
      %v8921 = vadd.f32 %v8833, %v8920
      %8922 = vadd.xlane.f32.xlu0 %v8921
      %v8923 = vpop.xlane.xlu0 %8922
      %v8924 = vsel %vm2261, %v8839, 0.0
      %v8925 = vadd.f32 %v8837, %v8924
      %8926 = vadd.xlane.f32.xlu0 %v8925
      %v8927 = vpop.xlane.xlu0 %8926
      %v8928 = vsel %vm2261, %v8843, 0.0
      %v8929 = vadd.f32 %v8841, %v8928
      %8930 = vadd.xlane.f32.xlu0 %v8929
      %v8931 = vpop.xlane.xlu0 %8930
      %v8932 = vsel %vm2346, %v8845, 0.0
      %v8933 = vsel %vm2348, %v8847, 0.0
      %v8934 = vadd.f32 %v8932, %v8933
      %8935 = vadd.xlane.f32.xlu0 %v8934
      %v8936 = vpop.xlane.xlu0 %8935
      %v8937 = vrcp.pop %v8851
      %v8938 = vrcp.pop %v8855
      %v8939 = vrcp.pop %v8859
      %v8940 = vrcp.pop %v8863
      %v8941 = vrcp.pop %v8867
      %v8942 = vrcp.pop %v8871
      %v8943 = vrcp.pop %v8875
      %v8944 = vrcp.pop %v8879
      %v8945 = vrcp.pop %v8883
      %v8946 = vrcp.pop %v8887
      %v8947 = vrcp.pop %v8891
      %v8948 = vrcp.pop %v8895
      %v8949 = vrcp.pop %v8899
      %v8950 = vrcp.pop %v8903
      %v8951 = vrcp.pop %v8907
      %v8952 = vrcp.pop %v8911
      %v8953 = vrcp.pop %v8915
      %v8954 = vrcp.pop %v8919
      %v8955 = vrcp.pop %v8923
      %v8956 = vrcp.pop %v8927
      %v8957 = vrcp.pop %v8931
      %v8958 = vrcp.pop %v8936
      %v8959 = vpack.c.bf16 %v8765, %v8761
      %v8960 = vpack.c.bf16 %v8767, %v8763
      %v8961 = vpack.c.bf16 %v8773, %v8769
      %v8962 = vpack.c.bf16 %v8775, %v8771
      %v8963 = vpack.c.bf16 %v8781, %v8777
      %v8964 = vpack.c.bf16 %v8783, %v8779
      %v8965 = vpack.c.bf16 %v8789, %v8785
      %v8966 = vpack.c.bf16 %v8791, %v8787
      %v8967 = vpack.c.bf16 %v8797, %v8793
      %v8968 = vpack.c.bf16 %v8799, %v8795
      %v8969 = vpack.c.bf16 %v8805, %v8801
      %v8970 = vpack.c.bf16 %v8807, %v8803
      %v8971 = vpack.c.bf16 %v8813, %v8809
      %v8972 = vpack.c.bf16 %v8815, %v8811
      %v8973 = vpack.c.bf16 %v8821, %v8817
      %v8974 = vpack.c.bf16 %v8823, %v8819
      %v8975 = vpack.c.bf16 %v8829, %v8825
      %v8976 = vpack.c.bf16 %v8831, %v8827
      %v8977 = vpack.c.bf16 %v8837, %v8833
      %v8978 = vpack.c.bf16 %v8839, %v8835
      %v8979 = vpack.c.bf16 %v8845, %v8841
      %v8980 = vpack.c.bf16 %v8847, %v8843
      %v8982 = vsel %vm2261, %v8960, 0
      %v8985 = vsel %vm2261, %v8962, 0
      %v8988 = vsel %vm2261, %v8964, 0
      %v8991 = vsel %vm2261, %v8966, 0
      %v8994 = vsel %vm2261, %v8968, 0
      %v8997 = vsel %vm2261, %v8970, 0
      %v9000 = vsel %vm2261, %v8972, 0
      %v9003 = vsel %vm2261, %v8974, 0
      %v9006 = vsel %vm2261, %v8976, 0
      %v9009 = vsel %vm2261, %v8978, 0
      %v9012 = vsel %vm2261, %v8980, 0
      %v9015 = vand.u32 %v8377, %v2654
      %9017 = vmatprep.subr.bf16.mxu0 0
      %9018 = vmatpush1.bf16.msra.mxu0 %v8367
      %9019 = vmatprep.subr.bf16.mxu0 0
      %9020 = vmatpush1.bf16.msra.mxu0 %v8368
      %9021 = vmatprep.subr.bf16.mxu0 0
      %9022 = vmatpush1.bf16.msra.mxu0 %v8369
      %9023 = vmatprep.subr.bf16.mxu0 0
      %9024 = vmatpush1.bf16.msra.mxu0 %v8370
      %9025 = vmatprep.subr.bf16.mxu0 0
      %9026 = vmatpush1.bf16.msra.mxu0 %v8371
      %9027 = vmatprep.subr.bf16.mxu0 0
      %9028 = vmatpush1.bf16.msra.mxu0 %v8372
      %9029 = vmatprep.subr.bf16.mxu0 0
      %9030 = vmatpush1.bf16.msra.mxu0 %v8373
      %9031 = vmatprep.subr.bf16.mxu0 0
      %9032 = vmatpush1.bf16.msra.mxu0 %v8374
      %9033 = vmatprep.subr.bf16.mxu0 0
      %9034 = vmatpush1.bf16.msra.mxu0 %v8375
      %9035 = vmatprep.subr.bf16.mxu0 0
      %9036 = vmatpush1.bf16.msra.mxu0 %v8376
      %9037 = vmatprep.subr.bf16.mxu0 0
      %9038 = vmatpush1.bf16.msra.mxu0 %v9015
      %9039 = vmatprep.subr.bf16.mxu0 0
      %9040 = vmatpush1.bf16.msra.mxu0 0
      %9041 = vmatprep.subr.bf16.mxu0 0
      %9042 = vmatpush1.bf16.msra.mxu0 0
      %9043 = vmatprep.subr.bf16.mxu0 0
      %9044 = vmatpush1.bf16.msra.mxu0 0
      %9045 = vmatprep.subr.bf16.mxu0 0
      %9046 = vmatpush1.bf16.msra.mxu0 0
      %9047 = vmatprep.subr.bf16.mxu0 0
      %9048 = vmatpush1.bf16.msra.mxu0 0
      %9049 = vmatprep.mubr.bf16.mxu0 %v8982
      %9050 = vmatmul.mubr.bf16.gmra.mrb[0].mxu0 %v8959
      %v9051 = vpop.f32.mrb[0].mxu0
      %v9052 = vadd.f32 0.0, %v9051
      %v9053 = vpop.f32.mrb[0].mxu0
      %v9054 = vpop.f32.mrb[0].mxu0
      %v9055 = vadd.f32 0.0, %v9054
      %v9056 = vpop.f32.mrb[0].mxu0
      %9057 = vmatprep.mubr.bf16.mxu0 %v8985
      %9058 = vmatmul.mubr.bf16.gmra.mrb[0].mxu0 %v8961
      %v9059 = vpop.f32.mrb[0].mxu0
      %v9060 = vadd.f32 0.0, %v9059
      %v9061 = vpop.f32.mrb[0].mxu0
      %v9062 = vpop.f32.mrb[0].mxu0
      %v9063 = vadd.f32 0.0, %v9062
      %v9064 = vpop.f32.mrb[0].mxu0
      %9065 = vmatprep.mubr.bf16.mxu0 %v8988
      %9066 = vmatmul.mubr.bf16.gmra.mrb[0].mxu0 %v8963
      %v9067 = vpop.f32.mrb[0].mxu0
      %v9068 = vadd.f32 0.0, %v9067
      %v9069 = vpop.f32.mrb[0].mxu0
      %v9070 = vpop.f32.mrb[0].mxu0
      %v9071 = vadd.f32 0.0, %v9070
      %v9072 = vpop.f32.mrb[0].mxu0
      %9073 = vmatprep.mubr.bf16.mxu0 %v8991
      %9074 = vmatmul.mubr.bf16.gmra.mrb[0].mxu0 %v8965
      %v9075 = vpop.f32.mrb[0].mxu0
      %v9076 = vadd.f32 0.0, %v9075
      %v9077 = vpop.f32.mrb[0].mxu0
      %v9078 = vpop.f32.mrb[0].mxu0
      %v9079 = vadd.f32 0.0, %v9078
      %v9080 = vpop.f32.mrb[0].mxu0
      %9081 = vmatprep.mubr.bf16.mxu0 %v8994
      %9082 = vmatmul.mubr.bf16.gmra.mrb[0].mxu0 %v8967
      %v9083 = vpop.f32.mrb[0].mxu0
      %v9084 = vadd.f32 0.0, %v9083
      %v9085 = vpop.f32.mrb[0].mxu0
      %v9086 = vpop.f32.mrb[0].mxu0
      %v9087 = vadd.f32 0.0, %v9086
      %v9088 = vpop.f32.mrb[0].mxu0
      %9089 = vmatprep.mubr.bf16.mxu0 %v8997
      %9090 = vmatmul.mubr.bf16.gmra.mrb[0].mxu0 %v8969
      %v9091 = vpop.f32.mrb[0].mxu0
      %v9092 = vadd.f32 0.0, %v9091
      %v9093 = vpop.f32.mrb[0].mxu0
      %v9094 = vpop.f32.mrb[0].mxu0
      %v9095 = vadd.f32 0.0, %v9094
      %v9096 = vpop.f32.mrb[0].mxu0
      %9097 = vmatprep.mubr.bf16.mxu0 %v9000
      %9098 = vmatmul.mubr.bf16.gmra.mrb[0].mxu0 %v8971
      %v9099 = vpop.f32.mrb[0].mxu0
      %v9100 = vadd.f32 0.0, %v9099
      %v9101 = vpop.f32.mrb[0].mxu0
      %v9102 = vpop.f32.mrb[0].mxu0
      %v9103 = vadd.f32 0.0, %v9102
      %v9104 = vpop.f32.mrb[0].mxu0
      %9105 = vmatprep.mubr.bf16.mxu0 %v9003
      %9106 = vmatmul.mubr.bf16.gmra.mrb[0].mxu0 %v8973
      %v9107 = vpop.f32.mrb[0].mxu0
      %v9108 = vadd.f32 0.0, %v9107
      %v9109 = vpop.f32.mrb[0].mxu0
      %v9110 = vpop.f32.mrb[0].mxu0
      %v9111 = vadd.f32 0.0, %v9110
      %v9112 = vpop.f32.mrb[0].mxu0
      %9113 = vmatprep.mubr.bf16.mxu0 %v9006
      %9114 = vmatmul.mubr.bf16.gmra.mrb[0].mxu0 %v8975
      %v9115 = vpop.f32.mrb[0].mxu0
      %v9116 = vadd.f32 0.0, %v9115
      %v9117 = vpop.f32.mrb[0].mxu0
      %v9118 = vpop.f32.mrb[0].mxu0
      %v9119 = vadd.f32 0.0, %v9118
      %v9120 = vpop.f32.mrb[0].mxu0
      %9121 = vmatprep.mubr.bf16.mxu0 %v9009
      %9122 = vmatmul.mubr.bf16.gmra.mrb[0].mxu0 %v8977
      %v9123 = vpop.f32.mrb[0].mxu0
      %v9124 = vadd.f32 0.0, %v9123
      %v9125 = vpop.f32.mrb[0].mxu0
      %v9126 = vpop.f32.mrb[0].mxu0
      %v9127 = vadd.f32 0.0, %v9126
      %v9128 = vpop.f32.mrb[0].mxu0
      %9129 = vmatprep.mubr.bf16.mxu0 %v9012
      %9130 = vmatmul.mubr.bf16.gmra.mrb[0].mxu0 %v8979
      %v9131 = vpop.f32.mrb[0].mxu0
      %v9132 = vadd.f32 0.0, %v9131
      %v9133 = vpop.f32.mrb[0].mxu0
      %v9134 = vpop.f32.mrb[0].mxu0
      %v9135 = vadd.f32 0.0, %v9134
      %v9136 = vpop.f32.mrb[0].mxu0
      %9137 = vdwg.mxu0
      %v9138 = vmul.f32 %v9052, %v8937
      %v9139 = vmul.f32 %v9055, %v8938
      %v9140 = vmul.f32 %v9060, %v8939
      %v9141 = vmul.f32 %v9063, %v8940
      %v9142 = vmul.f32 %v9068, %v8941
      %v9143 = vmul.f32 %v9071, %v8942
      %v9144 = vmul.f32 %v9076, %v8943
      %v9145 = vmul.f32 %v9079, %v8944
      %v9146 = vmul.f32 %v9084, %v8945
      %v9147 = vmul.f32 %v9087, %v8946
      %v9148 = vmul.f32 %v9092, %v8947
      %v9149 = vmul.f32 %v9095, %v8948
      %v9150 = vmul.f32 %v9100, %v8949
      %v9151 = vmul.f32 %v9103, %v8950
      %v9152 = vmul.f32 %v9108, %v8951
      %v9153 = vmul.f32 %v9111, %v8952
      %v9154 = vmul.f32 %v9116, %v8953
      %v9155 = vmul.f32 %v9119, %v8954
      %v9156 = vmul.f32 %v9124, %v8955
      %v9157 = vmul.f32 %v9127, %v8956
      %v9158 = vmul.f32 %v9132, %v8957
      %v9159 = vmul.f32 %v9135, %v8958
      %s9160 = scalar_lea.vmem %s10, 528
      %v9161 = vld [vmem:[%s9160] sm:$0xff]
      %v9162 = vld [vmem:[%s9160 + $0x8] sm:$0xff]
      %v9163 = vld [vmem:[%s9160 + $0x10] sm:$0xff]
      %v9164 = vld [vmem:[%s9160 + $0x18] sm:$0xff]
      %v9165 = vld [vmem:[%s9160 + $0x20] sm:$0xff]
      %v9166 = vld [vmem:[%s9160 + $0x28] sm:$0xff]
      %v9167 = vld [vmem:[%s9160 + $0x30] sm:$0xff]
      %v9168 = vld [vmem:[%s9160 + $0x38] sm:$0xff]
      %v9169 = vld [vmem:[%s9160 + $0x40] sm:$0xff]
      %v9170 = vld [vmem:[%s9160 + $0x48] sm:$0xff]
      %v9171 = vld [vmem:[%s9160 + $0x50] sm:$0xff]
      %v9172 = vld [vmem:[%s9160 + $0x58] sm:$0xff]
      %v9173 = vld [vmem:[%s9160 + $0x60] sm:$0xff]
      %v9174 = vld [vmem:[%s9160 + $0x68] sm:$0xff]
      %v9175 = vld [vmem:[%s9160 + $0x70] sm:$0xff]
      %v9176 = vld [vmem:[%s9160 + $0x78] sm:$0xff]
      %v9177 = vld [vmem:[%s9160 + $0x80] sm:$0xff]
      %v9178 = vld [vmem:[%s9160 + $0x88] sm:$0xff]
      %v9179 = vld [vmem:[%s9160 + $0x90] sm:$0xff]
      %v9180 = vld [vmem:[%s9160 + $0x98] sm:$0xff]
      %v9181 = vld [vmem:[%s9160 + $0xa0] sm:$0xff]
      %v9182 = vld [vmem:[%s9160 + $0xa8] sm:$0x11]
      %v9183 = vunpack.c.l.bf16 %v9161
      %v9184 = vunpack.c.h.bf16 %v9161
      %v9185 = vunpack.c.l.bf16 %v9162
      %v9186 = vunpack.c.h.bf16 %v9162
      %v9187 = vunpack.c.l.bf16 %v9163
      %v9188 = vunpack.c.h.bf16 %v9163
      %v9189 = vunpack.c.l.bf16 %v9164
      %v9190 = vunpack.c.h.bf16 %v9164
      %v9191 = vunpack.c.l.bf16 %v9165
      %v9192 = vunpack.c.h.bf16 %v9165
      %v9193 = vunpack.c.l.bf16 %v9166
      %v9194 = vunpack.c.h.bf16 %v9166
      %v9195 = vunpack.c.l.bf16 %v9167
      %v9196 = vunpack.c.h.bf16 %v9167
      %v9197 = vunpack.c.l.bf16 %v9168
      %v9198 = vunpack.c.h.bf16 %v9168
      %v9199 = vunpack.c.l.bf16 %v9169
      %v9200 = vunpack.c.h.bf16 %v9169
      %v9201 = vunpack.c.l.bf16 %v9170
      %v9202 = vunpack.c.h.bf16 %v9170
      %v9203 = vunpack.c.l.bf16 %v9171
      %v9204 = vunpack.c.h.bf16 %v9171
      %v9205 = vunpack.c.l.bf16 %v9172
      %v9206 = vunpack.c.h.bf16 %v9172
      %v9207 = vunpack.c.l.bf16 %v9173
      %v9208 = vunpack.c.h.bf16 %v9173
      %v9209 = vunpack.c.l.bf16 %v9174
      %v9210 = vunpack.c.h.bf16 %v9174
      %v9211 = vunpack.c.l.bf16 %v9175
      %v9212 = vunpack.c.h.bf16 %v9175
      %v9213 = vunpack.c.l.bf16 %v9176
      %v9214 = vunpack.c.h.bf16 %v9176
      %v9215 = vunpack.c.l.bf16 %v9177
      %v9216 = vunpack.c.h.bf16 %v9177
      %v9217 = vunpack.c.l.bf16 %v9178
      %v9218 = vunpack.c.h.bf16 %v9178
      %v9219 = vunpack.c.l.bf16 %v9179
      %v9220 = vunpack.c.h.bf16 %v9179
      %v9221 = vunpack.c.l.bf16 %v9180
      %v9222 = vunpack.c.h.bf16 %v9180
      %v9223 = vunpack.c.l.bf16 %v9181
      %v9224 = vunpack.c.h.bf16 %v9181
      %v9225 = vunpack.c.l.bf16 %v9182
      %v9226 = vunpack.c.h.bf16 %v9182
      %v9228 = vsel %vm2111, %v8235, 0
      %v9231 = vsel %vm2111, %v8236, 0
      %9233 = vmatprep.subr.bf16.mxu0 %v9231
      %9234 = vmatpush1.bf16.msra.mxu0 %v9228
      %9235 = vmatprep.subr.bf16.mxu0 0
      %9236 = vmatpush1.bf16.msra.mxu0 0
      %9237 = vmatprep.subr.bf16.mxu0 0
      %9238 = vmatpush1.bf16.msra.mxu0 0
      %9239 = vmatprep.subr.bf16.mxu0 0
      %9240 = vmatpush1.bf16.msra.mxu0 0
      %9241 = vmatprep.subr.bf16.mxu0 0
      %9242 = vmatpush1.bf16.msra.mxu0 0
      %9243 = vmatprep.subr.bf16.mxu0 0
      %9244 = vmatpush1.bf16.msra.mxu0 0
      %9245 = vmatprep.subr.bf16.mxu0 0
      %9246 = vmatpush1.bf16.msra.mxu0 0
      %9247 = vmatprep.subr.bf16.mxu0 0
      %9248 = vmatpush1.bf16.msra.mxu0 0
      %9249 = vmatprep.subr.bf16.mxu0 0
      %9250 = vmatpush1.bf16.msra.mxu0 0
      %9251 = vmatprep.subr.bf16.mxu0 0
      %9252 = vmatpush1.bf16.msra.mxu0 0
      %9253 = vmatprep.subr.bf16.mxu0 0
      %9254 = vmatpush1.bf16.msra.mxu0 0
      %9255 = vmatprep.subr.bf16.mxu0 0
      %9256 = vmatpush1.bf16.msra.mxu0 0
      %9257 = vmatprep.subr.bf16.mxu0 0
      %9258 = vmatpush1.bf16.msra.mxu0 0
      %9259 = vmatprep.subr.bf16.mxu0 0
      %9260 = vmatpush1.bf16.msra.mxu0 0
      %9261 = vmatprep.subr.bf16.mxu0 0
      %9262 = vmatpush1.bf16.msra.mxu0 0
      %9263 = vmatprep.subr.bf16.mxu0 0
      %9264 = vmatpush1.bf16.msra.mxu0 0
      %9265 = vmatprep.mubr.bf16.mxu0 0
      %9266 = vmatmul.mubr.bf16.gmra.mrb[0].mxu0 %v8446
      %v9267 = vpop.f32.mrb[0].mxu0
      %v9268 = vadd.f32 %v9183, %v9267
      %v9269 = vpop.f32.mrb[0].mxu0
      %v9270 = vadd.f32 %v9184, %v9269
      %v9271 = vpop.f32.mrb[0].mxu0
      %v9272 = vadd.f32 %v9185, %v9271
      %v9273 = vpop.f32.mrb[0].mxu0
      %v9274 = vadd.f32 %v9186, %v9273
      %9275 = vmatprep.mubr.bf16.mxu0 0
      %9276 = vmatmul.mubr.bf16.gmra.mrb[0].mxu0 %v8449
      %v9277 = vpop.f32.mrb[0].mxu0
      %v9278 = vadd.f32 %v9187, %v9277
      %v9279 = vpop.f32.mrb[0].mxu0
      %v9280 = vadd.f32 %v9188, %v9279
      %v9281 = vpop.f32.mrb[0].mxu0
      %v9282 = vadd.f32 %v9189, %v9281
      %v9283 = vpop.f32.mrb[0].mxu0
      %v9284 = vadd.f32 %v9190, %v9283
      %9285 = vmatprep.mubr.bf16.mxu0 0
      %9286 = vmatmul.mubr.bf16.gmra.mrb[0].mxu0 %v8452
      %v9287 = vpop.f32.mrb[0].mxu0
      %v9288 = vadd.f32 %v9191, %v9287
      %v9289 = vpop.f32.mrb[0].mxu0
      %v9290 = vadd.f32 %v9192, %v9289
      %v9291 = vpop.f32.mrb[0].mxu0
      %v9292 = vadd.f32 %v9193, %v9291
      %v9293 = vpop.f32.mrb[0].mxu0
      %v9294 = vadd.f32 %v9194, %v9293
      %9295 = vmatprep.mubr.bf16.mxu0 0
      %9296 = vmatmul.mubr.bf16.gmra.mrb[0].mxu0 %v8455
      %v9297 = vpop.f32.mrb[0].mxu0
      %v9298 = vadd.f32 %v9195, %v9297
      %v9299 = vpop.f32.mrb[0].mxu0
      %v9300 = vadd.f32 %v9196, %v9299
      %v9301 = vpop.f32.mrb[0].mxu0
      %v9302 = vadd.f32 %v9197, %v9301
      %v9303 = vpop.f32.mrb[0].mxu0
      %v9304 = vadd.f32 %v9198, %v9303
      %9305 = vmatprep.mubr.bf16.mxu0 0
      %9306 = vmatmul.mubr.bf16.gmra.mrb[0].mxu0 %v8458
      %v9307 = vpop.f32.mrb[0].mxu0
      %v9308 = vadd.f32 %v9199, %v9307
      %v9309 = vpop.f32.mrb[0].mxu0
      %v9310 = vadd.f32 %v9200, %v9309
      %v9311 = vpop.f32.mrb[0].mxu0
      %v9312 = vadd.f32 %v9201, %v9311
      %v9313 = vpop.f32.mrb[0].mxu0
      %v9314 = vadd.f32 %v9202, %v9313
      %9315 = vmatprep.mubr.bf16.mxu0 0
      %9316 = vmatmul.mubr.bf16.gmra.mrb[0].mxu0 %v8461
      %v9317 = vpop.f32.mrb[0].mxu0
      %v9318 = vadd.f32 %v9203, %v9317
      %v9319 = vpop.f32.mrb[0].mxu0
      %v9320 = vadd.f32 %v9204, %v9319
      %v9321 = vpop.f32.mrb[0].mxu0
      %v9322 = vadd.f32 %v9205, %v9321
      %v9323 = vpop.f32.mrb[0].mxu0
      %v9324 = vadd.f32 %v9206, %v9323
      %9325 = vmatprep.mubr.bf16.mxu0 0
      %9326 = vmatmul.mubr.bf16.gmra.mrb[0].mxu0 %v8464
      %v9327 = vpop.f32.mrb[0].mxu0
      %v9328 = vadd.f32 %v9207, %v9327
      %v9329 = vpop.f32.mrb[0].mxu0
      %v9330 = vadd.f32 %v9208, %v9329
      %v9331 = vpop.f32.mrb[0].mxu0
      %v9332 = vadd.f32 %v9209, %v9331
      %v9333 = vpop.f32.mrb[0].mxu0
      %v9334 = vadd.f32 %v9210, %v9333
      %9335 = vmatprep.mubr.bf16.mxu0 0
      %9336 = vmatmul.mubr.bf16.gmra.mrb[0].mxu0 %v8467
      %v9337 = vpop.f32.mrb[0].mxu0
      %v9338 = vadd.f32 %v9211, %v9337
      %v9339 = vpop.f32.mrb[0].mxu0
      %v9340 = vadd.f32 %v9212, %v9339
      %v9341 = vpop.f32.mrb[0].mxu0
      %v9342 = vadd.f32 %v9213, %v9341
      %v9343 = vpop.f32.mrb[0].mxu0
      %v9344 = vadd.f32 %v9214, %v9343
      %9345 = vmatprep.mubr.bf16.mxu0 0
      %9346 = vmatmul.mubr.bf16.gmra.mrb[0].mxu0 %v8470
      %v9347 = vpop.f32.mrb[0].mxu0
      %v9348 = vadd.f32 %v9215, %v9347
      %v9349 = vpop.f32.mrb[0].mxu0
      %v9350 = vadd.f32 %v9216, %v9349
      %v9351 = vpop.f32.mrb[0].mxu0
      %v9352 = vadd.f32 %v9217, %v9351
      %v9353 = vpop.f32.mrb[0].mxu0
      %v9354 = vadd.f32 %v9218, %v9353
      %9355 = vmatprep.mubr.bf16.mxu0 0
      %9356 = vmatmul.mubr.bf16.gmra.mrb[0].mxu0 %v8473
      %v9357 = vpop.f32.mrb[0].mxu0
      %v9358 = vadd.f32 %v9219, %v9357
      %v9359 = vpop.f32.mrb[0].mxu0
      %v9360 = vadd.f32 %v9220, %v9359
      %v9361 = vpop.f32.mrb[0].mxu0
      %v9362 = vadd.f32 %v9221, %v9361
      %v9363 = vpop.f32.mrb[0].mxu0
      %v9364 = vadd.f32 %v9222, %v9363
      %9365 = vmatprep.mubr.bf16.mxu0 0
      %9366 = vmatmul.mubr.bf16.gmra.mrb[0].mxu0 %v8476
      %v9367 = vpop.f32.mrb[0].mxu0
      %v9368 = vadd.f32 %v9223, %v9367
      %v9369 = vpop.f32.mrb[0].mxu0
      %v9370 = vadd.f32 %v9224, %v9369
      %v9371 = vpop.f32.mrb[0].mxu0
      %v9372 = vadd.f32 %v9225, %v9371
      %v9373 = vpop.f32.mrb[0].mxu0
      %v9374 = vadd.f32 %v9226, %v9373
      %9375 = vdwg.mxu0
      %v9376 = vsel %vm2261, %v9270, -inf
      %v9377 = vmax.f32 %v9268, %v9376
      %9378 = vmax.xlane.f32.xlu0 %v9377
      %v9379 = vpop.xlane.xlu0 %9378
      %v9380 = vsel %vm2261, %v9274, -inf
      %v9381 = vmax.f32 %v9272, %v9380
      %9382 = vmax.xlane.f32.xlu0 %v9381
      %v9383 = vpop.xlane.xlu0 %9382
      %v9384 = vsel %vm2261, %v9280, -inf
      %v9385 = vmax.f32 %v9278, %v9384
      %9386 = vmax.xlane.f32.xlu0 %v9385
      %v9387 = vpop.xlane.xlu0 %9386
      %v9388 = vsel %vm2261, %v9284, -inf
      %v9389 = vmax.f32 %v9282, %v9388
      %9390 = vmax.xlane.f32.xlu0 %v9389
      %v9391 = vpop.xlane.xlu0 %9390
      %v9392 = vsel %vm2261, %v9290, -inf
      %v9393 = vmax.f32 %v9288, %v9392
      %9394 = vmax.xlane.f32.xlu0 %v9393
      %v9395 = vpop.xlane.xlu0 %9394
      %v9396 = vsel %vm2261, %v9294, -inf
      %v9397 = vmax.f32 %v9292, %v9396
      %9398 = vmax.xlane.f32.xlu0 %v9397
      %v9399 = vpop.xlane.xlu0 %9398
      %v9400 = vsel %vm2261, %v9300, -inf
      %v9401 = vmax.f32 %v9298, %v9400
      %9402 = vmax.xlane.f32.xlu0 %v9401
      %v9403 = vpop.xlane.xlu0 %9402
      %v9404 = vsel %vm2261, %v9304, -inf
      %v9405 = vmax.f32 %v9302, %v9404
      %9406 = vmax.xlane.f32.xlu0 %v9405
      %v9407 = vpop.xlane.xlu0 %9406
      %v9408 = vsel %vm2261, %v9310, -inf
      %v9409 = vmax.f32 %v9308, %v9408
      %9410 = vmax.xlane.f32.xlu0 %v9409
      %v9411 = vpop.xlane.xlu0 %9410
      %v9412 = vsel %vm2261, %v9314, -inf
      %v9413 = vmax.f32 %v9312, %v9412
      %9414 = vmax.xlane.f32.xlu0 %v9413
      %v9415 = vpop.xlane.xlu0 %9414
      %v9416 = vsel %vm2261, %v9320, -inf
      %v9417 = vmax.f32 %v9318, %v9416
      %9418 = vmax.xlane.f32.xlu0 %v9417
      %v9419 = vpop.xlane.xlu0 %9418
      %v9420 = vsel %vm2261, %v9324, -inf
      %v9421 = vmax.f32 %v9322, %v9420
      %9422 = vmax.xlane.f32.xlu0 %v9421
      %v9423 = vpop.xlane.xlu0 %9422
      %v9424 = vsel %vm2261, %v9330, -inf
      %v9425 = vmax.f32 %v9328, %v9424
      %9426 = vmax.xlane.f32.xlu0 %v9425
      %v9427 = vpop.xlane.xlu0 %9426
      %v9428 = vsel %vm2261, %v9334, -inf
      %v9429 = vmax.f32 %v9332, %v9428
      %9430 = vmax.xlane.f32.xlu0 %v9429
      %v9431 = vpop.xlane.xlu0 %9430
      %v9432 = vsel %vm2261, %v9340, -inf
      %v9433 = vmax.f32 %v9338, %v9432
      %9434 = vmax.xlane.f32.xlu0 %v9433
      %v9435 = vpop.xlane.xlu0 %9434
      %v9436 = vsel %vm2261, %v9344, -inf
      %v9437 = vmax.f32 %v9342, %v9436
      %9438 = vmax.xlane.f32.xlu0 %v9437
      %v9439 = vpop.xlane.xlu0 %9438
      %v9440 = vsel %vm2261, %v9350, -inf
      %v9441 = vmax.f32 %v9348, %v9440
      %9442 = vmax.xlane.f32.xlu0 %v9441
      %v9443 = vpop.xlane.xlu0 %9442
      %v9444 = vsel %vm2261, %v9354, -inf
      %v9445 = vmax.f32 %v9352, %v9444
      %9446 = vmax.xlane.f32.xlu0 %v9445
      %v9447 = vpop.xlane.xlu0 %9446
      %v9448 = vsel %vm2261, %v9360, -inf
      %v9449 = vmax.f32 %v9358, %v9448
      %9450 = vmax.xlane.f32.xlu0 %v9449
      %v9451 = vpop.xlane.xlu0 %9450
      %v9452 = vsel %vm2261, %v9364, -inf
      %v9453 = vmax.f32 %v9362, %v9452
      %9454 = vmax.xlane.f32.xlu0 %v9453
      %v9455 = vpop.xlane.xlu0 %9454
      %v9456 = vsel %vm2261, %v9370, -inf
      %v9457 = vmax.f32 %v9368, %v9456
      %9458 = vmax.xlane.f32.xlu0 %v9457
      %v9459 = vpop.xlane.xlu0 %9458
      %v9460 = vsel %vm2346, %v9372, -inf
      %v9461 = vsel %vm2348, %v9374, -inf
      %v9462 = vmax.f32 %v9460, %v9461
      %9463 = vmax.xlane.f32.xlu0 %v9462
      %v9464 = vpop.xlane.xlu0 %9463
      %v9465 = vsub.f32 %v9268, %v9379
      %v9466 = vsub.f32 %v9270, %v9379
      %v9467 = vsub.f32 %v9272, %v9383
      %v9468 = vsub.f32 %v9274, %v9383
      %v9469 = vsub.f32 %v9278, %v9387
      %v9470 = vsub.f32 %v9280, %v9387
      %v9471 = vsub.f32 %v9282, %v9391
      %v9472 = vsub.f32 %v9284, %v9391
      %v9473 = vsub.f32 %v9288, %v9395
      %v9474 = vsub.f32 %v9290, %v9395
      %v9475 = vsub.f32 %v9292, %v9399
      %v9476 = vsub.f32 %v9294, %v9399
      %v9477 = vsub.f32 %v9298, %v9403
      %v9478 = vsub.f32 %v9300, %v9403
      %v9479 = vsub.f32 %v9302, %v9407
      %v9480 = vsub.f32 %v9304, %v9407
      %v9481 = vsub.f32 %v9308, %v9411
      %v9482 = vsub.f32 %v9310, %v9411
      %v9483 = vsub.f32 %v9312, %v9415
      %v9484 = vsub.f32 %v9314, %v9415
      %v9485 = vsub.f32 %v9318, %v9419
      %v9486 = vsub.f32 %v9320, %v9419
      %v9487 = vsub.f32 %v9322, %v9423
      %v9488 = vsub.f32 %v9324, %v9423
      %v9489 = vsub.f32 %v9328, %v9427
      %v9490 = vsub.f32 %v9330, %v9427
      %v9491 = vsub.f32 %v9332, %v9431
      %v9492 = vsub.f32 %v9334, %v9431
      %v9493 = vsub.f32 %v9338, %v9435
      %v9494 = vsub.f32 %v9340, %v9435
      %v9495 = vsub.f32 %v9342, %v9439
      %v9496 = vsub.f32 %v9344, %v9439
      %v9497 = vsub.f32 %v9348, %v9443
      %v9498 = vsub.f32 %v9350, %v9443
      %v9499 = vsub.f32 %v9352, %v9447
      %v9500 = vsub.f32 %v9354, %v9447
      %v9501 = vsub.f32 %v9358, %v9451
      %v9502 = vsub.f32 %v9360, %v9451
      %v9503 = vsub.f32 %v9362, %v9455
      %v9504 = vsub.f32 %v9364, %v9455
      %v9505 = vsub.f32 %v9368, %v9459
      %v9506 = vsub.f32 %v9370, %v9459
      %v9507 = vsub.f32 %v9372, %v9464
      %v9508 = vsub.f32 %v9374, %v9464
      %v9509 = vmul.f32 %v9465, 1.442695
      %v9510 = vpow.pop %v9509
      %v9511 = vmul.f32 %v9466, 1.442695
      %v9512 = vpow.pop %v9511
      %v9513 = vmul.f32 %v9467, 1.442695
      %v9514 = vpow.pop %v9513
      %v9515 = vmul.f32 %v9468, 1.442695
      %v9516 = vpow.pop %v9515
      %v9517 = vmul.f32 %v9469, 1.442695
      %v9518 = vpow.pop %v9517
      %v9519 = vmul.f32 %v9470, 1.442695
      %v9520 = vpow.pop %v9519
      %v9521 = vmul.f32 %v9471, 1.442695
      %v9522 = vpow.pop %v9521
      %v9523 = vmul.f32 %v9472, 1.442695
      %v9524 = vpow.pop %v9523
      %v9525 = vmul.f32 %v9473, 1.442695
      %v9526 = vpow.pop %v9525
      %v9527 = vmul.f32 %v9474, 1.442695
      %v9528 = vpow.pop %v9527
      %v9529 = vmul.f32 %v9475, 1.442695
      %v9530 = vpow.pop %v9529
      %v9531 = vmul.f32 %v9476, 1.442695
      %v9532 = vpow.pop %v9531
      %v9533 = vmul.f32 %v9477, 1.442695
      %v9534 = vpow.pop %v9533
      %v9535 = vmul.f32 %v9478, 1.442695
      %v9536 = vpow.pop %v9535
      %v9537 = vmul.f32 %v9479, 1.442695
      %v9538 = vpow.pop %v9537
      %v9539 = vmul.f32 %v9480, 1.442695
      %v9540 = vpow.pop %v9539
      %v9541 = vmul.f32 %v9481, 1.442695
      %v9542 = vpow.pop %v9541
      %v9543 = vmul.f32 %v9482, 1.442695
      %v9544 = vpow.pop %v9543
      %v9545 = vmul.f32 %v9483, 1.442695
      %v9546 = vpow.pop %v9545
      %v9547 = vmul.f32 %v9484, 1.442695
      %v9548 = vpow.pop %v9547
      %v9549 = vmul.f32 %v9485, 1.442695
      %v9550 = vpow.pop %v9549
      %v9551 = vmul.f32 %v9486, 1.442695
      %v9552 = vpow.pop %v9551
      %v9553 = vmul.f32 %v9487, 1.442695
      %v9554 = vpow.pop %v9553
      %v9555 = vmul.f32 %v9488, 1.442695
      %v9556 = vpow.pop %v9555
      %v9557 = vmul.f32 %v9489, 1.442695
      %v9558 = vpow.pop %v9557
      %v9559 = vmul.f32 %v9490, 1.442695
      %v9560 = vpow.pop %v9559
      %v9561 = vmul.f32 %v9491, 1.442695
      %v9562 = vpow.pop %v9561
      %v9563 = vmul.f32 %v9492, 1.442695
      %v9564 = vpow.pop %v9563
      %v9565 = vmul.f32 %v9493, 1.442695
      %v9566 = vpow.pop %v9565
      %v9567 = vmul.f32 %v9494, 1.442695
      %v9568 = vpow.pop %v9567
      %v9569 = vmul.f32 %v9495, 1.442695
      %v9570 = vpow.pop %v9569
      %v9571 = vmul.f32 %v9496, 1.442695
      %v9572 = vpow.pop %v9571
      %v9573 = vmul.f32 %v9497, 1.442695
      %v9574 = vpow.pop %v9573
      %v9575 = vmul.f32 %v9498, 1.442695
      %v9576 = vpow.pop %v9575
      %v9577 = vmul.f32 %v9499, 1.442695
      %v9578 = vpow.pop %v9577
      %v9579 = vmul.f32 %v9500, 1.442695
      %v9580 = vpow.pop %v9579
      %v9581 = vmul.f32 %v9501, 1.442695
      %v9582 = vpow.pop %v9581
      %v9583 = vmul.f32 %v9502, 1.442695
      %v9584 = vpow.pop %v9583
      %v9585 = vmul.f32 %v9503, 1.442695
      %v9586 = vpow.pop %v9585
      %v9587 = vmul.f32 %v9504, 1.442695
      %v9588 = vpow.pop %v9587
      %v9589 = vmul.f32 %v9505, 1.442695
      %v9590 = vpow.pop %v9589
      %v9591 = vmul.f32 %v9506, 1.442695
      %v9592 = vpow.pop %v9591
      %v9593 = vmul.f32 %v9507, 1.442695
      %v9594 = vpow.pop %v9593
      %v9595 = vmul.f32 %v9508, 1.442695
      %v9596 = vpow.pop %v9595
      %v9597 = vsel %vm2261, %v9512, 0.0
      %v9598 = vadd.f32 %v9510, %v9597
      %9599 = vadd.xlane.f32.xlu0 %v9598
      %v9600 = vpop.xlane.xlu0 %9599
      %v9601 = vsel %vm2261, %v9516, 0.0
      %v9602 = vadd.f32 %v9514, %v9601
      %9603 = vadd.xlane.f32.xlu0 %v9602
      %v9604 = vpop.xlane.xlu0 %9603
      %v9605 = vsel %vm2261, %v9520, 0.0
      %v9606 = vadd.f32 %v9518, %v9605
      %9607 = vadd.xlane.f32.xlu0 %v9606
      %v9608 = vpop.xlane.xlu0 %9607
      %v9609 = vsel %vm2261, %v9524, 0.0
      %v9610 = vadd.f32 %v9522, %v9609
      %9611 = vadd.xlane.f32.xlu0 %v9610
      %v9612 = vpop.xlane.xlu0 %9611
      %v9613 = vsel %vm2261, %v9528, 0.0
      %v9614 = vadd.f32 %v9526, %v9613
      %9615 = vadd.xlane.f32.xlu0 %v9614
      %v9616 = vpop.xlane.xlu0 %9615
      %v9617 = vsel %vm2261, %v9532, 0.0
      %v9618 = vadd.f32 %v9530, %v9617
      %9619 = vadd.xlane.f32.xlu0 %v9618
      %v9620 = vpop.xlane.xlu0 %9619
      %v9621 = vsel %vm2261, %v9536, 0.0
      %v9622 = vadd.f32 %v9534, %v9621
      %9623 = vadd.xlane.f32.xlu0 %v9622
      %v9624 = vpop.xlane.xlu0 %9623
      %v9625 = vsel %vm2261, %v9540, 0.0
      %v9626 = vadd.f32 %v9538, %v9625
      %9627 = vadd.xlane.f32.xlu0 %v9626
      %v9628 = vpop.xlane.xlu0 %9627
      %v9629 = vsel %vm2261, %v9544, 0.0
      %v9630 = vadd.f32 %v9542, %v9629
      %9631 = vadd.xlane.f32.xlu0 %v9630
      %v9632 = vpop.xlane.xlu0 %9631
      %v9633 = vsel %vm2261, %v9548, 0.0
      %v9634 = vadd.f32 %v9546, %v9633
      %9635 = vadd.xlane.f32.xlu0 %v9634
      %v9636 = vpop.xlane.xlu0 %9635
      %v9637 = vsel %vm2261, %v9552, 0.0
      %v9638 = vadd.f32 %v9550, %v9637
      %9639 = vadd.xlane.f32.xlu0 %v9638
      %v9640 = vpop.xlane.xlu0 %9639
      %v9641 = vsel %vm2261, %v9556, 0.0
      %v9642 = vadd.f32 %v9554, %v9641
      %9643 = vadd.xlane.f32.xlu0 %v9642
      %v9644 = vpop.xlane.xlu0 %9643
      %v9645 = vsel %vm2261, %v9560, 0.0
      %v9646 = vadd.f32 %v9558, %v9645
      %9647 = vadd.xlane.f32.xlu0 %v9646
      %v9648 = vpop.xlane.xlu0 %9647
      %v9649 = vsel %vm2261, %v9564, 0.0
      %v9650 = vadd.f32 %v9562, %v9649
      %9651 = vadd.xlane.f32.xlu0 %v9650
      %v9652 = vpop.xlane.xlu0 %9651
      %v9653 = vsel %vm2261, %v9568, 0.0
      %v9654 = vadd.f32 %v9566, %v9653
      %9655 = vadd.xlane.f32.xlu0 %v9654
      %v9656 = vpop.xlane.xlu0 %9655
      %v9657 = vsel %vm2261, %v9572, 0.0
      %v9658 = vadd.f32 %v9570, %v9657
      %9659 = vadd.xlane.f32.xlu0 %v9658
      %v9660 = vpop.xlane.xlu0 %9659
      %v9661 = vsel %vm2261, %v9576, 0.0
      %v9662 = vadd.f32 %v9574, %v9661
      %9663 = vadd.xlane.f32.xlu0 %v9662
      %v9664 = vpop.xlane.xlu0 %9663
      %v9665 = vsel %vm2261, %v9580, 0.0
      %v9666 = vadd.f32 %v9578, %v9665
      %9667 = vadd.xlane.f32.xlu0 %v9666
      %v9668 = vpop.xlane.xlu0 %9667
      %v9669 = vsel %vm2261, %v9584, 0.0
      %v9670 = vadd.f32 %v9582, %v9669
      %9671 = vadd.xlane.f32.xlu0 %v9670
      %v9672 = vpop.xlane.xlu0 %9671
      %v9673 = vsel %vm2261, %v9588, 0.0
      %v9674 = vadd.f32 %v9586, %v9673
      %9675 = vadd.xlane.f32.xlu0 %v9674
      %v9676 = vpop.xlane.xlu0 %9675
      %v9677 = vsel %vm2261, %v9592, 0.0
      %v9678 = vadd.f32 %v9590, %v9677
      %9679 = vadd.xlane.f32.xlu0 %v9678
      %v9680 = vpop.xlane.xlu0 %9679
      %v9681 = vsel %vm2346, %v9594, 0.0
      %v9682 = vsel %vm2348, %v9596, 0.0
      %v9683 = vadd.f32 %v9681, %v9682
      %9684 = vadd.xlane.f32.xlu0 %v9683
      %v9685 = vpop.xlane.xlu0 %9684
      %v9686 = vrcp.pop %v9600
      %v9687 = vrcp.pop %v9604
      %v9688 = vrcp.pop %v9608
      %v9689 = vrcp.pop %v9612
      %v9690 = vrcp.pop %v9616
      %v9691 = vrcp.pop %v9620
      %v9692 = vrcp.pop %v9624
      %v9693 = vrcp.pop %v9628
      %v9694 = vrcp.pop %v9632
      %v9695 = vrcp.pop %v9636
      %v9696 = vrcp.pop %v9640
      %v9697 = vrcp.pop %v9644
      %v9698 = vrcp.pop %v9648
      %v9699 = vrcp.pop %v9652
      %v9700 = vrcp.pop %v9656
      %v9701 = vrcp.pop %v9660
      %v9702 = vrcp.pop %v9664
      %v9703 = vrcp.pop %v9668
      %v9704 = vrcp.pop %v9672
      %v9705 = vrcp.pop %v9676
      %v9706 = vrcp.pop %v9680
      %v9707 = vrcp.pop %v9685
      %v9708 = vpack.c.bf16 %v9514, %v9510
      %v9709 = vpack.c.bf16 %v9516, %v9512
      %v9710 = vpack.c.bf16 %v9522, %v9518
      %v9711 = vpack.c.bf16 %v9524, %v9520
      %v9712 = vpack.c.bf16 %v9530, %v9526
      %v9713 = vpack.c.bf16 %v9532, %v9528
      %v9714 = vpack.c.bf16 %v9538, %v9534
      %v9715 = vpack.c.bf16 %v9540, %v9536
      %v9716 = vpack.c.bf16 %v9546, %v9542
      %v9717 = vpack.c.bf16 %v9548, %v9544
      %v9718 = vpack.c.bf16 %v9554, %v9550
      %v9719 = vpack.c.bf16 %v9556, %v9552
      %v9720 = vpack.c.bf16 %v9562, %v9558
      %v9721 = vpack.c.bf16 %v9564, %v9560
      %v9722 = vpack.c.bf16 %v9570, %v9566
      %v9723 = vpack.c.bf16 %v9572, %v9568
      %v9724 = vpack.c.bf16 %v9578, %v9574
      %v9725 = vpack.c.bf16 %v9580, %v9576
      %v9726 = vpack.c.bf16 %v9586, %v9582
      %v9727 = vpack.c.bf16 %v9588, %v9584
      %v9728 = vpack.c.bf16 %v9594, %v9590
      %v9729 = vpack.c.bf16 %v9596, %v9592
      %v9730 = vpack.c.bf16 %v9139, %v9138
      %v9731 = vpack.c.bf16 %v9141, %v9140
      %v9732 = vpack.c.bf16 %v9143, %v9142
      %v9733 = vpack.c.bf16 %v9145, %v9144
      %v9734 = vpack.c.bf16 %v9147, %v9146
      %v9735 = vpack.c.bf16 %v9149, %v9148
      %v9736 = vpack.c.bf16 %v9151, %v9150
      %v9737 = vpack.c.bf16 %v9153, %v9152
      %v9738 = vpack.c.bf16 %v9155, %v9154
      %v9739 = vpack.c.bf16 %v9157, %v9156
      %v9740 = vpack.c.bf16 %v9159, %v9158
      %v9742 = vsel %vm2261, %v9709, 0
      %v9745 = vsel %vm2261, %v9711, 0
      %v9748 = vsel %vm2261, %v9713, 0
      %v9751 = vsel %vm2261, %v9715, 0
      %v9754 = vsel %vm2261, %v9717, 0
      %v9757 = vsel %vm2261, %v9719, 0
      %v9760 = vsel %vm2261, %v9721, 0
      %v9763 = vsel %vm2261, %v9723, 0
      %v9766 = vsel %vm2261, %v9725, 0
      %v9769 = vsel %vm2261, %v9727, 0
      %v9772 = vsel %vm2261, %v9729, 0
      %v9775 = vand.u32 %v9740, %v2654
      %9777 = vmatprep.subr.bf16.mxu0 0
      %9778 = vmatpush1.bf16.msra.mxu0 %v9730
      %9779 = vmatprep.subr.bf16.mxu0 0
      %9780 = vmatpush1.bf16.msra.mxu0 %v9731
      %9781 = vmatprep.subr.bf16.mxu0 0
      %9782 = vmatpush1.bf16.msra.mxu0 %v9732
      %9783 = vmatprep.subr.bf16.mxu0 0
      %9784 = vmatpush1.bf16.msra.mxu0 %v9733
      %9785 = vmatprep.subr.bf16.mxu0 0
      %9786 = vmatpush1.bf16.msra.mxu0 %v9734
      %9787 = vmatprep.subr.bf16.mxu0 0
      %9788 = vmatpush1.bf16.msra.mxu0 %v9735
      %9789 = vmatprep.subr.bf16.mxu0 0
      %9790 = vmatpush1.bf16.msra.mxu0 %v9736
      %9791 = vmatprep.subr.bf16.mxu0 0
      %9792 = vmatpush1.bf16.msra.mxu0 %v9737
      %9793 = vmatprep.subr.bf16.mxu0 0
      %9794 = vmatpush1.bf16.msra.mxu0 %v9738
      %9795 = vmatprep.subr.bf16.mxu0 0
      %9796 = vmatpush1.bf16.msra.mxu0 %v9739
      %9797 = vmatprep.subr.bf16.mxu0 0
      %9798 = vmatpush1.bf16.msra.mxu0 %v9775
      %9799 = vmatprep.subr.bf16.mxu0 0
      %9800 = vmatpush1.bf16.msra.mxu0 0
      %9801 = vmatprep.subr.bf16.mxu0 0
      %9802 = vmatpush1.bf16.msra.mxu0 0
      %9803 = vmatprep.subr.bf16.mxu0 0
      %9804 = vmatpush1.bf16.msra.mxu0 0
      %9805 = vmatprep.subr.bf16.mxu0 0
      %9806 = vmatpush1.bf16.msra.mxu0 0
      %9807 = vmatprep.subr.bf16.mxu0 0
      %9808 = vmatpush1.bf16.msra.mxu0 0
      %9809 = vmatprep.mubr.bf16.mxu0 %v9742
      %9810 = vmatmul.mubr.bf16.gmra.mrb[0].mxu0 %v9708
      %v9811 = vpop.f32.mrb[0].mxu0
      %v9812 = vadd.f32 0.0, %v9811
      %v9813 = vpop.f32.mrb[0].mxu0
      %v9814 = vpop.f32.mrb[0].mxu0
      %v9815 = vadd.f32 0.0, %v9814
      %v9816 = vpop.f32.mrb[0].mxu0
      %9817 = vmatprep.mubr.bf16.mxu0 %v9745
      %9818 = vmatmul.mubr.bf16.gmra.mrb[0].mxu0 %v9710
      %v9819 = vpop.f32.mrb[0].mxu0
      %v9820 = vadd.f32 0.0, %v9819
      %v9821 = vpop.f32.mrb[0].mxu0
      %v9822 = vpop.f32.mrb[0].mxu0
      %v9823 = vadd.f32 0.0, %v9822
      %v9824 = vpop.f32.mrb[0].mxu0
      %9825 = vmatprep.mubr.bf16.mxu0 %v9748
      %9826 = vmatmul.mubr.bf16.gmra.mrb[0].mxu0 %v9712
      %v9827 = vpop.f32.mrb[0].mxu0
      %v9828 = vadd.f32 0.0, %v9827
      %v9829 = vpop.f32.mrb[0].mxu0
      %v9830 = vpop.f32.mrb[0].mxu0
      %v9831 = vadd.f32 0.0, %v9830
      %v9832 = vpop.f32.mrb[0].mxu0
      %9833 = vmatprep.mubr.bf16.mxu0 %v9751
      %9834 = vmatmul.mubr.bf16.gmra.mrb[0].mxu0 %v9714
      %v9835 = vpop.f32.mrb[0].mxu0
      %v9836 = vadd.f32 0.0, %v9835
      %v9837 = vpop.f32.mrb[0].mxu0
      %v9838 = vpop.f32.mrb[0].mxu0
      %v9839 = vadd.f32 0.0, %v9838
      %v9840 = vpop.f32.mrb[0].mxu0
      %9841 = vmatprep.mubr.bf16.mxu0 %v9754
      %9842 = vmatmul.mubr.bf16.gmra.mrb[0].mxu0 %v9716
      %v9843 = vpop.f32.mrb[0].mxu0
      %v9844 = vadd.f32 0.0, %v9843
      %v9845 = vpop.f32.mrb[0].mxu0
      %v9846 = vpop.f32.mrb[0].mxu0
      %v9847 = vadd.f32 0.0, %v9846
      %v9848 = vpop.f32.mrb[0].mxu0
      %9849 = vmatprep.mubr.bf16.mxu0 %v9757
      %9850 = vmatmul.mubr.bf16.gmra.mrb[0].mxu0 %v9718
      %v9851 = vpop.f32.mrb[0].mxu0
      %v9852 = vadd.f32 0.0, %v9851
      %v9853 = vpop.f32.mrb[0].mxu0
      %v9854 = vpop.f32.mrb[0].mxu0
      %v9855 = vadd.f32 0.0, %v9854
      %v9856 = vpop.f32.mrb[0].mxu0
      %9857 = vmatprep.mubr.bf16.mxu0 %v9760
      %9858 = vmatmul.mubr.bf16.gmra.mrb[0].mxu0 %v9720
      %v9859 = vpop.f32.mrb[0].mxu0
      %v9860 = vadd.f32 0.0, %v9859
      %v9861 = vpop.f32.mrb[0].mxu0
      %v9862 = vpop.f32.mrb[0].mxu0
      %v9863 = vadd.f32 0.0, %v9862
      %v9864 = vpop.f32.mrb[0].mxu0
      %9865 = vmatprep.mubr.bf16.mxu0 %v9763
      %9866 = vmatmul.mubr.bf16.gmra.mrb[0].mxu0 %v9722
      %v9867 = vpop.f32.mrb[0].mxu0
      %v9868 = vadd.f32 0.0, %v9867
      %v9869 = vpop.f32.mrb[0].mxu0
      %v9870 = vpop.f32.mrb[0].mxu0
      %v9871 = vadd.f32 0.0, %v9870
      %v9872 = vpop.f32.mrb[0].mxu0
      %9873 = vmatprep.mubr.bf16.mxu0 %v9766
      %9874 = vmatmul.mubr.bf16.gmra.mrb[0].mxu0 %v9724
      %v9875 = vpop.f32.mrb[0].mxu0
      %v9876 = vadd.f32 0.0, %v9875
      %v9877 = vpop.f32.mrb[0].mxu0
      %v9878 = vpop.f32.mrb[0].mxu0
      %v9879 = vadd.f32 0.0, %v9878
      %v9880 = vpop.f32.mrb[0].mxu0
      %9881 = vmatprep.mubr.bf16.mxu0 %v9769
      %9882 = vmatmul.mubr.bf16.gmra.mrb[0].mxu0 %v9726
      %v9883 = vpop.f32.mrb[0].mxu0
      %v9884 = vadd.f32 0.0, %v9883
      %v9885 = vpop.f32.mrb[0].mxu0
      %v9886 = vpop.f32.mrb[0].mxu0
      %v9887 = vadd.f32 0.0, %v9886
      %v9888 = vpop.f32.mrb[0].mxu0
      %9889 = vmatprep.mubr.bf16.mxu0 %v9772
      %9890 = vmatmul.mubr.bf16.gmra.mrb[0].mxu0 %v9728
      %v9891 = vpop.f32.mrb[0].mxu0
      %v9892 = vadd.f32 0.0, %v9891
      %v9893 = vpop.f32.mrb[0].mxu0
      %v9894 = vpop.f32.mrb[0].mxu0
      %v9895 = vadd.f32 0.0, %v9894
      %v9896 = vpop.f32.mrb[0].mxu0
      %9897 = vdwg.mxu0
      %v9898 = vmul.f32 %v9812, %v9686
      %v9899 = vmul.f32 %v9815, %v9687
      %v9900 = vmul.f32 %v9820, %v9688
      %v9901 = vmul.f32 %v9823, %v9689
      %v9902 = vmul.f32 %v9828, %v9690
      %v9903 = vmul.f32 %v9831, %v9691
      %v9904 = vmul.f32 %v9836, %v9692
      %v9905 = vmul.f32 %v9839, %v9693
      %v9906 = vmul.f32 %v9844, %v9694
      %v9907 = vmul.f32 %v9847, %v9695
      %v9908 = vmul.f32 %v9852, %v9696
      %v9909 = vmul.f32 %v9855, %v9697
      %v9910 = vmul.f32 %v9860, %v9698
      %v9911 = vmul.f32 %v9863, %v9699
      %v9912 = vmul.f32 %v9868, %v9700
      %v9913 = vmul.f32 %v9871, %v9701
      %v9914 = vmul.f32 %v9876, %v9702
      %v9915 = vmul.f32 %v9879, %v9703
      %v9916 = vmul.f32 %v9884, %v9704
      %v9917 = vmul.f32 %v9887, %v9705
      %v9918 = vmul.f32 %v9892, %v9706
      %v9919 = vmul.f32 %v9895, %v9707
      %v9920 = vpack.c.bf16 %v9899, %v9898
      %v9921 = vpack.c.bf16 %v9901, %v9900
      %v9922 = vpack.c.bf16 %v9903, %v9902
      %v9923 = vpack.c.bf16 %v9905, %v9904
      %v9924 = vpack.c.bf16 %v9907, %v9906
      %v9925 = vpack.c.bf16 %v9909, %v9908
      %v9926 = vpack.c.bf16 %v9911, %v9910
      %v9927 = vpack.c.bf16 %v9913, %v9912
      %v9928 = vpack.c.bf16 %v9915, %v9914
      %v9929 = vpack.c.bf16 %v9917, %v9916
      %v9930 = vpack.c.bf16 %v9919, %v9918
      %s9931 = scalar_lea.vmem %s8, 6
      %v9932 = vld [vmem:[%s9931] sm:$0x3]
      %v9934 = vsel %vm2077, %v9920, 0
      %v9937 = vsel %vm2077, %v9921, 0
      %v9940 = vsel %vm2077, %v9922, 0
      %v9943 = vsel %vm2077, %v9923, 0
      %v9946 = vsel %vm2077, %v9924, 0
      %v9949 = vsel %vm2077, %v9925, 0
      %v9952 = vsel %vm2077, %v9926, 0
      %v9955 = vsel %vm2077, %v9927, 0
      %v9958 = vsel %vm2077, %v9928, 0
      %v9961 = vsel %vm2077, %v9929, 0
      %v9964 = vsel %vm2077, %v9930, 0
      %v9967 = vsel %vm2111, %v9932, 0
      %9969 = vmatprep.subr.bf16.mxu0 0
      %9970 = vmatpush1.bf16.msra.mxu0 %v9967
      %9971 = vmatprep.subr.bf16.mxu0 0
      %9972 = vmatpush1.bf16.msra.mxu0 0
      %9973 = vmatprep.subr.bf16.mxu0 0
      %9974 = vmatpush1.bf16.msra.mxu0 0
      %9975 = vmatprep.subr.bf16.mxu0 0
      %9976 = vmatpush1.bf16.msra.mxu0 0
      %9977 = vmatprep.subr.bf16.mxu0 0
      %9978 = vmatpush1.bf16.msra.mxu0 0
      %9979 = vmatprep.subr.bf16.mxu0 0
      %9980 = vmatpush1.bf16.msra.mxu0 0
      %9981 = vmatprep.subr.bf16.mxu0 0
      %9982 = vmatpush1.bf16.msra.mxu0 0
      %9983 = vmatprep.subr.bf16.mxu0 0
      %9984 = vmatpush1.bf16.msra.mxu0 0
      %9985 = vmatprep.subr.bf16.mxu0 0
      %9986 = vmatpush1.bf16.msra.mxu0 0
      %9987 = vmatprep.subr.bf16.mxu0 0
      %9988 = vmatpush1.bf16.msra.mxu0 0
      %9989 = vmatprep.subr.bf16.mxu0 0
      %9990 = vmatpush1.bf16.msra.mxu0 0
      %9991 = vmatprep.subr.bf16.mxu0 0
      %9992 = vmatpush1.bf16.msra.mxu0 0
      %9993 = vmatprep.subr.bf16.mxu0 0
      %9994 = vmatpush1.bf16.msra.mxu0 0
      %9995 = vmatprep.subr.bf16.mxu0 0
      %9996 = vmatpush1.bf16.msra.mxu0 0
      %9997 = vmatprep.subr.bf16.mxu0 0
      %9998 = vmatpush1.bf16.msra.mxu0 0
      %9999 = vmatprep.subr.bf16.mxu0 0
      %10000 = vmatpush1.bf16.msra.mxu0 0
      %10001 = vmatprep.mubr.bf16.mxu0 0
      %10002 = vmatmul.mubr.bf16.gmra.mrb[0].mxu0 %v9934
      %v10003 = vpop.f32.mrb[0].mxu0
      %v10004 = vadd.f32 0.0, %v10003
      %v10005 = vpop.f32.mrb[0].mxu0
      %v10006 = vpop.f32.mrb[0].mxu0
      %v10007 = vadd.f32 0.0, %v10006
      %v10008 = vpop.f32.mrb[0].mxu0
      %10009 = vmatprep.mubr.bf16.mxu0 0
      %10010 = vmatmul.mubr.bf16.gmra.mrb[0].mxu0 %v9937
      %v10011 = vpop.f32.mrb[0].mxu0
      %v10012 = vadd.f32 0.0, %v10011
      %v10013 = vpop.f32.mrb[0].mxu0
      %v10014 = vpop.f32.mrb[0].mxu0
      %v10015 = vadd.f32 0.0, %v10014
      %v10016 = vpop.f32.mrb[0].mxu0
      %10017 = vmatprep.mubr.bf16.mxu0 0
      %10018 = vmatmul.mubr.bf16.gmra.mrb[0].mxu0 %v9940
      %v10019 = vpop.f32.mrb[0].mxu0
      %v10020 = vadd.f32 0.0, %v10019
      %v10021 = vpop.f32.mrb[0].mxu0
      %v10022 = vpop.f32.mrb[0].mxu0
      %v10023 = vadd.f32 0.0, %v10022
      %v10024 = vpop.f32.mrb[0].mxu0
      %10025 = vmatprep.mubr.bf16.mxu0 0
      %10026 = vmatmul.mubr.bf16.gmra.mrb[0].mxu0 %v9943
      %v10027 = vpop.f32.mrb[0].mxu0
      %v10028 = vadd.f32 0.0, %v10027
      %v10029 = vpop.f32.mrb[0].mxu0
      %v10030 = vpop.f32.mrb[0].mxu0
      %v10031 = vadd.f32 0.0, %v10030
      %v10032 = vpop.f32.mrb[0].mxu0
      %10033 = vmatprep.mubr.bf16.mxu0 0
      %10034 = vmatmul.mubr.bf16.gmra.mrb[0].mxu0 %v9946
      %v10035 = vpop.f32.mrb[0].mxu0
      %v10036 = vadd.f32 0.0, %v10035
      %v10037 = vpop.f32.mrb[0].mxu0
      %v10038 = vpop.f32.mrb[0].mxu0
      %v10039 = vadd.f32 0.0, %v10038
      %v10040 = vpop.f32.mrb[0].mxu0
      %10041 = vmatprep.mubr.bf16.mxu0 0
      %10042 = vmatmul.mubr.bf16.gmra.mrb[0].mxu0 %v9949
      %v10043 = vpop.f32.mrb[0].mxu0
      %v10044 = vadd.f32 0.0, %v10043
      %v10045 = vpop.f32.mrb[0].mxu0
      %v10046 = vpop.f32.mrb[0].mxu0
      %v10047 = vadd.f32 0.0, %v10046
      %v10048 = vpop.f32.mrb[0].mxu0
      %10049 = vmatprep.mubr.bf16.mxu0 0
      %10050 = vmatmul.mubr.bf16.gmra.mrb[0].mxu0 %v9952
      %v10051 = vpop.f32.mrb[0].mxu0
      %v10052 = vadd.f32 0.0, %v10051
      %v10053 = vpop.f32.mrb[0].mxu0
      %v10054 = vpop.f32.mrb[0].mxu0
      %v10055 = vadd.f32 0.0, %v10054
      %v10056 = vpop.f32.mrb[0].mxu0
      %10057 = vmatprep.mubr.bf16.mxu0 0
      %10058 = vmatmul.mubr.bf16.gmra.mrb[0].mxu0 %v9955
      %v10059 = vpop.f32.mrb[0].mxu0
      %v10060 = vadd.f32 0.0, %v10059
      %v10061 = vpop.f32.mrb[0].mxu0
      %v10062 = vpop.f32.mrb[0].mxu0
      %v10063 = vadd.f32 0.0, %v10062
      %v10064 = vpop.f32.mrb[0].mxu0
      %10065 = vmatprep.mubr.bf16.mxu0 0
      %10066 = vmatmul.mubr.bf16.gmra.mrb[0].mxu0 %v9958
      %v10067 = vpop.f32.mrb[0].mxu0
      %v10068 = vadd.f32 0.0, %v10067
      %v10069 = vpop.f32.mrb[0].mxu0
      %v10070 = vpop.f32.mrb[0].mxu0
      %v10071 = vadd.f32 0.0, %v10070
      %v10072 = vpop.f32.mrb[0].mxu0
      %10073 = vmatprep.mubr.bf16.mxu0 0
      %10074 = vmatmul.mubr.bf16.gmra.mrb[0].mxu0 %v9961
      %v10075 = vpop.f32.mrb[0].mxu0
      %v10076 = vadd.f32 0.0, %v10075
      %v10077 = vpop.f32.mrb[0].mxu0
      %v10078 = vpop.f32.mrb[0].mxu0
      %v10079 = vadd.f32 0.0, %v10078
      %v10080 = vpop.f32.mrb[0].mxu0
      %10081 = vmatprep.mubr.bf16.mxu0 0
      %10082 = vmatmul.mubr.bf16.gmra.mrb[0].mxu0 %v9964
      %v10083 = vpop.f32.mrb[0].mxu0
      %v10084 = vadd.f32 0.0, %v10083
      %v10085 = vpop.f32.mrb[0].mxu0
      %v10086 = vpop.f32.mrb[0].mxu0
      %v10087 = vadd.f32 0.0, %v10086
      %v10088 = vpop.f32.mrb[0].mxu0
      %10089 = vdwg.mxu0
      %v10091 = vsel %vm2077, %v5831, 0
      %v10094 = vsel %vm2077, %v5832, 0
      %v10097 = vsel %vm2077, %v5833, 0
      %v10100 = vsel %vm2077, %v5834, 0
      %v10103 = vsel %vm2077, %v5835, 0
      %v10106 = vsel %vm2077, %v5836, 0
      %v10109 = vsel %vm2077, %v5837, 0
      %v10112 = vsel %vm2077, %v5838, 0
      %v10115 = vsel %vm2077, %v5839, 0
      %v10118 = vsel %vm2077, %v5840, 0
      %v10121 = vsel %vm2077, %v5841, 0
      %v10124 = vsel %vm2111, %v5843, 0
      %10126 = vmatprep.subr.bf16.mxu0 0
      %10127 = vmatpush1.bf16.msra.mxu0 %v10124
      %10128 = vmatprep.subr.bf16.mxu0 0
      %10129 = vmatpush1.bf16.msra.mxu0 0
      %10130 = vmatprep.subr.bf16.mxu0 0
      %10131 = vmatpush1.bf16.msra.mxu0 0
      %10132 = vmatprep.subr.bf16.mxu0 0
      %10133 = vmatpush1.bf16.msra.mxu0 0
      %10134 = vmatprep.subr.bf16.mxu0 0
      %10135 = vmatpush1.bf16.msra.mxu0 0
      %10136 = vmatprep.subr.bf16.mxu0 0
      %10137 = vmatpush1.bf16.msra.mxu0 0
      %10138 = vmatprep.subr.bf16.mxu0 0
      %10139 = vmatpush1.bf16.msra.mxu0 0
      %10140 = vmatprep.subr.bf16.mxu0 0
      %10141 = vmatpush1.bf16.msra.mxu0 0
      %10142 = vmatprep.subr.bf16.mxu0 0
      %10143 = vmatpush1.bf16.msra.mxu0 0
      %10144 = vmatprep.subr.bf16.mxu0 0
      %10145 = vmatpush1.bf16.msra.mxu0 0
      %10146 = vmatprep.subr.bf16.mxu0 0
      %10147 = vmatpush1.bf16.msra.mxu0 0
      %10148 = vmatprep.subr.bf16.mxu0 0
      %10149 = vmatpush1.bf16.msra.mxu0 0
      %10150 = vmatprep.subr.bf16.mxu0 0
      %10151 = vmatpush1.bf16.msra.mxu0 0
      %10152 = vmatprep.subr.bf16.mxu0 0
      %10153 = vmatpush1.bf16.msra.mxu0 0
      %10154 = vmatprep.subr.bf16.mxu0 0
      %10155 = vmatpush1.bf16.msra.mxu0 0
      %10156 = vmatprep.subr.bf16.mxu0 0
      %10157 = vmatpush1.bf16.msra.mxu0 0
      %10158 = vmatprep.mubr.bf16.mxu0 0
      %10159 = vmatmul.mubr.bf16.gmra.mrb[0].mxu0 %v10091
      %v10160 = vpop.f32.mrb[0].mxu0
      %v10161 = vadd.f32 %v10004, %v10160
      %v10162 = vpop.f32.mrb[0].mxu0
      %v10163 = vpop.f32.mrb[0].mxu0
      %v10164 = vadd.f32 %v10007, %v10163
      %v10165 = vpop.f32.mrb[0].mxu0
      %10166 = vmatprep.mubr.bf16.mxu0 0
      %10167 = vmatmul.mubr.bf16.gmra.mrb[0].mxu0 %v10094
      %v10168 = vpop.f32.mrb[0].mxu0
      %v10169 = vadd.f32 %v10012, %v10168
      %v10170 = vpop.f32.mrb[0].mxu0
      %v10171 = vpop.f32.mrb[0].mxu0
      %v10172 = vadd.f32 %v10015, %v10171
      %v10173 = vpop.f32.mrb[0].mxu0
      %10174 = vmatprep.mubr.bf16.mxu0 0
      %10175 = vmatmul.mubr.bf16.gmra.mrb[0].mxu0 %v10097
      %v10176 = vpop.f32.mrb[0].mxu0
      %v10177 = vadd.f32 %v10020, %v10176
      %v10178 = vpop.f32.mrb[0].mxu0
      %v10179 = vpop.f32.mrb[0].mxu0
      %v10180 = vadd.f32 %v10023, %v10179
      %v10181 = vpop.f32.mrb[0].mxu0
      %10182 = vmatprep.mubr.bf16.mxu0 0
      %10183 = vmatmul.mubr.bf16.gmra.mrb[0].mxu0 %v10100
      %v10184 = vpop.f32.mrb[0].mxu0
      %v10185 = vadd.f32 %v10028, %v10184
      %v10186 = vpop.f32.mrb[0].mxu0
      %v10187 = vpop.f32.mrb[0].mxu0
      %v10188 = vadd.f32 %v10031, %v10187
      %v10189 = vpop.f32.mrb[0].mxu0
      %10190 = vmatprep.mubr.bf16.mxu0 0
      %10191 = vmatmul.mubr.bf16.gmra.mrb[0].mxu0 %v10103
      %v10192 = vpop.f32.mrb[0].mxu0
      %v10193 = vadd.f32 %v10036, %v10192
      %v10194 = vpop.f32.mrb[0].mxu0
      %v10195 = vpop.f32.mrb[0].mxu0
      %v10196 = vadd.f32 %v10039, %v10195
      %v10197 = vpop.f32.mrb[0].mxu0
      %10198 = vmatprep.mubr.bf16.mxu0 0
      %10199 = vmatmul.mubr.bf16.gmra.mrb[0].mxu0 %v10106
      %v10200 = vpop.f32.mrb[0].mxu0
      %v10201 = vadd.f32 %v10044, %v10200
      %v10202 = vpop.f32.mrb[0].mxu0
      %v10203 = vpop.f32.mrb[0].mxu0
      %v10204 = vadd.f32 %v10047, %v10203
      %v10205 = vpop.f32.mrb[0].mxu0
      %10206 = vmatprep.mubr.bf16.mxu0 0
      %10207 = vmatmul.mubr.bf16.gmra.mrb[0].mxu0 %v10109
      %v10208 = vpop.f32.mrb[0].mxu0
      %v10209 = vadd.f32 %v10052, %v10208
      %v10210 = vpop.f32.mrb[0].mxu0
      %v10211 = vpop.f32.mrb[0].mxu0
      %v10212 = vadd.f32 %v10055, %v10211
      %v10213 = vpop.f32.mrb[0].mxu0
      %10214 = vmatprep.mubr.bf16.mxu0 0
      %10215 = vmatmul.mubr.bf16.gmra.mrb[0].mxu0 %v10112
      %v10216 = vpop.f32.mrb[0].mxu0
      %v10217 = vadd.f32 %v10060, %v10216
      %v10218 = vpop.f32.mrb[0].mxu0
      %v10219 = vpop.f32.mrb[0].mxu0
      %v10220 = vadd.f32 %v10063, %v10219
      %v10221 = vpop.f32.mrb[0].mxu0
      %10222 = vmatprep.mubr.bf16.mxu0 0
      %10223 = vmatmul.mubr.bf16.gmra.mrb[0].mxu0 %v10115
      %v10224 = vpop.f32.mrb[0].mxu0
      %v10225 = vadd.f32 %v10068, %v10224
      %v10226 = vpop.f32.mrb[0].mxu0
      %v10227 = vpop.f32.mrb[0].mxu0
      %v10228 = vadd.f32 %v10071, %v10227
      %v10229 = vpop.f32.mrb[0].mxu0
      %10230 = vmatprep.mubr.bf16.mxu0 0
      %10231 = vmatmul.mubr.bf16.gmra.mrb[0].mxu0 %v10118
      %v10232 = vpop.f32.mrb[0].mxu0
      %v10233 = vadd.f32 %v10076, %v10232
      %v10234 = vpop.f32.mrb[0].mxu0
      %v10235 = vpop.f32.mrb[0].mxu0
      %v10236 = vadd.f32 %v10079, %v10235
      %v10237 = vpop.f32.mrb[0].mxu0
      %10238 = vmatprep.mubr.bf16.mxu0 0
      %10239 = vmatmul.mubr.bf16.gmra.mrb[0].mxu0 %v10121
      %v10240 = vpop.f32.mrb[0].mxu0
      %v10241 = vadd.f32 %v10084, %v10240
      %v10242 = vpop.f32.mrb[0].mxu0
      %v10243 = vpop.f32.mrb[0].mxu0
      %v10244 = vadd.f32 %v10087, %v10243
      %v10245 = vpop.f32.mrb[0].mxu0
      %10246 = vdwg.mxu0
      %v10247 = vadd.f32 %v7956, %v10161
      %v10248 = vadd.f32 %v7957, %v10164
      %v10249 = vadd.f32 %v7958, %v10169
      %v10250 = vadd.f32 %v7959, %v10172
      %v10251 = vadd.f32 %v7960, %v10177
      %v10252 = vadd.f32 %v7961, %v10180
      %v10253 = vadd.f32 %v7962, %v10185
      %v10254 = vadd.f32 %v7963, %v10188
      %v10255 = vadd.f32 %v7964, %v10193
      %v10256 = vadd.f32 %v7965, %v10196
      %v10257 = vadd.f32 %v7966, %v10201
      %v10258 = vadd.f32 %v7967, %v10204
      %v10259 = vadd.f32 %v7968, %v10209
      %v10260 = vadd.f32 %v7969, %v10212
      %v10261 = vadd.f32 %v7970, %v10217
      %v10262 = vadd.f32 %v7971, %v10220
      %v10263 = vadd.f32 %v7972, %v10225
      %v10264 = vadd.f32 %v7973, %v10228
      %v10265 = vadd.f32 %v7974, %v10233
      %v10266 = vadd.f32 %v7975, %v10236
      %v10267 = vadd.f32 %v7976, %v10241
      %v10268 = vadd.f32 %v7977, %v10244
      %v10270 = vlaneseq
      %v10271 = vshrl.u32 %v10270, 7
      %v10272 = vsub.s32 0, %v10271
      %v10273 = vrot.slane %v492, %v10272
      %v10275 = vadd.f32 %v10247, %v10273
      %v10276 = vadd.f32 %v10248, %v10273
      %v10277 = vadd.f32 %v10249, %v10273
      %v10278 = vadd.f32 %v10250, %v10273
      %v10279 = vadd.f32 %v10251, %v10273
      %v10280 = vadd.f32 %v10252, %v10273
      %v10281 = vadd.f32 %v10253, %v10273
      %v10282 = vadd.f32 %v10254, %v10273
      %v10283 = vadd.f32 %v10255, %v10273
      %v10284 = vadd.f32 %v10256, %v10273
      %v10285 = vadd.f32 %v10257, %v10273
      %v10286 = vadd.f32 %v10258, %v10273
      %v10287 = vadd.f32 %v10259, %v10273
      %v10288 = vadd.f32 %v10260, %v10273
      %v10289 = vadd.f32 %v10261, %v10273
      %v10290 = vadd.f32 %v10262, %v10273
      %v10291 = vadd.f32 %v10263, %v10273
      %v10292 = vadd.f32 %v10264, %v10273
      %v10293 = vadd.f32 %v10265, %v10273
      %v10294 = vadd.f32 %v10266, %v10273
      %v10295 = vadd.f32 %v10267, %v10273
      %v10296 = vadd.f32 %v10268, %v10273
      %10297 = vst.msk [vmem:[%s487] sm:$0xff] %vm493, %v10275
      %10298 = vst.msk [vmem:[%s487 + $0x8] sm:$0xff] %vm493, %v10276
      %10299 = vst.msk [vmem:[%s487 + $0x10] sm:$0xff] %vm493, %v10277
      %10300 = vst.msk [vmem:[%s487 + $0x18] sm:$0xff] %vm493, %v10278
      %10301 = vst.msk [vmem:[%s487 + $0x20] sm:$0xff] %vm493, %v10279
      %10302 = vst.msk [vmem:[%s487 + $0x28] sm:$0xff] %vm493, %v10280
      %10303 = vst.msk [vmem:[%s487 + $0x30] sm:$0xff] %vm493, %v10281
      %10304 = vst.msk [vmem:[%s487 + $0x38] sm:$0xff] %vm493, %v10282
      %10305 = vst.msk [vmem:[%s487 + $0x40] sm:$0xff] %vm493, %v10283
      %10306 = vst.msk [vmem:[%s487 + $0x48] sm:$0xff] %vm493, %v10284
      %10307 = vst.msk [vmem:[%s487 + $0x50] sm:$0xff] %vm493, %v10285
      %10308 = vst.msk [vmem:[%s487 + $0x58] sm:$0xff] %vm493, %v10286
      %10309 = vst.msk [vmem:[%s487 + $0x60] sm:$0xff] %vm493, %v10287
      %10310 = vst.msk [vmem:[%s487 + $0x68] sm:$0xff] %vm493, %v10288
      %10311 = vst.msk [vmem:[%s487 + $0x70] sm:$0xff] %vm493, %v10289
      %10312 = vst.msk [vmem:[%s487 + $0x78] sm:$0xff] %vm493, %v10290
      %10313 = vst.msk [vmem:[%s487 + $0x80] sm:$0xff] %vm493, %v10291
      %10314 = vst.msk [vmem:[%s487 + $0x88] sm:$0xff] %vm493, %v10292
      %10315 = vst.msk [vmem:[%s487 + $0x90] sm:$0xff] %vm493, %v10293
      %10316 = vst.msk [vmem:[%s487 + $0x98] sm:$0xff] %vm493, %v10294
      %10317 = vst.msk [vmem:[%s487 + $0xa0] sm:$0xff] %vm493, %v10295
      %10318 = vst.msk [vmem:[%s487 + $0xa8] sm:$0x1] %vm782, %v10296
      %p10319 = scmp.lt.s32.totalorder %s25, 1
      %s10320 = scalar_select %p10319, %s25, 1
      %s10321 = smul.addr %s10320, 22
      %s10322 = smul.addr %s10321, 8
      %s10323 = scalar_lea.vmem %s14, %s10322
      // Predicated region
      $region77: #{agent_attention.1} parent=75 // pred_check
        %p10324 = pneg %p347
      $region78: #{agent_attention.1} parent=75 // pred_check_branch
        %10326 = sbr.rel (%p10324) target = $region80
      $region79: #{agent_attention.1} parent=75 // pred_region
        _
      $region80: #{agent_attention.1} parent=75 // pred_fallthru
        _
    $region76: #{agent_attention.1} parent=5 // pred_fallthru
      _
    %p10327 = scmp.le.s32.totalorder 2, %s20
    // Predicated region
    $region81: #{agent_attention.1} parent=5 // pred_check
      %p10328 = pneg %p10327
    $region82: #{agent_attention.1} parent=5 // pred_check_branch
      %10330 = sbr.rel (%p10328) target = $region84
    $region83: #{agent_attention.1} parent=5 // pred_region
      %s10331 = ssub.s32 %s20, 2
      // Predicated region
      $region85: #{agent_attention.1} parent=83 // pred_check
        %p10332 = pneg %p353
      $region86: #{agent_attention.1} parent=83 // pred_check_branch
        %10334 = sbr.rel (%p10332) target = $region88
      $region87: #{agent_attention.1} parent=83 // pred_region
        %p10335 = scmp.lt.s32.totalorder %s26, 1
        %s10336 = scalar_select %p10335, %s26, 1
        %s10337 = smul.addr %s10336, 22
        %s10338 = smul.addr %s10337, 8
        %s10339 = scalar_lea.vmem %s14, %s10338
      $region88: #{agent_attention.1} parent=83 // pred_fallthru
        _
    $region84: #{agent_attention.1} parent=5 // pred_fallthru
      _
  $region6: #{agent_attention.1} parent=0 // loop_footer
    %s24 = sadd.s32 1, %s20
  $region7: #{agent_attention.1} parent=0 // loop_footer_branch
    %19 = sbr.rel target = $region3
  $region8: #{agent_attention.1} parent=0 // loop_exit
    _

</llo_original>
